<compile_context>
chip_gen: v7x
topology: tpu7x:2x2x1
jax: 0.10.0
libtpu: 0.0.40
codegen_flags: <defaults>
</compile_context>

<pallas_src>
import jax
import jax.numpy as jnp
from jax import lax
from jax.experimental import pallas as pl
from jax.experimental.pallas import tpu as pltpu

# ----------------------------- configuration -------------------------------
B = 8          # batch (packed to fill the 8 f32 sublanes)
T = 32         # max_sequence_size (time samples)
C_IN = 8       # input_size (EEG channels)
H = 32         # lstm_hidden_size  (4H = 128 -> gates exactly fill one vreg)
C1, C2, C3 = 32, 64, 32          # conv1_size, conv2_size, conv3_size
K1, K2, K3 = 8, 5, 3             # conv kernels
NCLS = 5                         # output_classn
RED = 16                         # SE reduction
EPS = 1e-5                       # BatchNorm eps (PyTorch default)


# ------------------------------ fused kernel --------------------------------
def mlstm_fcn_kernel(
        x_ref, lens_ref, wih_ref, blstm_ref, whh_ref,          # LSTM branch
        w1_ref, pk1_ref, se1a_ref, se1b_ref,                   # conv block 1
        w2_ref, pk2_ref, se2a_ref, se2b_ref,                   # conv block 2
        w3_ref, pk3_ref,                                       # conv block 3
        whead_ref, bhead_ref,                                  # classifier head
        out_ref,                                               # (B, NCLS)
        xw_scr, hh_scr):                                       # (T, B, 4H) VMEM x2
    bf16 = jnp.bfloat16
    f32 = jnp.float32

    x_tbc = x_ref[...]                                         # (T, B, C_IN) f32

    # ------------------------- LSTM branch ---------------------------------
    # (a) hoisted input projection + bias: one bf16 matmul off the serial path.
    xw_scr[...] = (jnp.einsum('tbc,cg->tbg', x_tbc.astype(bf16), wih_ref[...],
                              preferred_element_type=f32)
                   + blstm_ref[...])

    # (b) recurrence.  W_hh is wide (4H,4H) bf16 with only rows [2H:3H] real;
    #     the state is kept wide (B,4H) and i/f/o are aligned onto the g-block
    #     lanes [2H:3H] with XLU rolls (no sub-128-lane slices on the chain).
    whh = whh_ref[...]                                         # bf16 (4H, 4H)
    zeros = jnp.zeros((B, 4 * H), f32)

    def step(t, carry):
        h, c = carry
        g_lin = xw_scr[t] + jnp.dot(h.astype(bf16), whh,
                                    preferred_element_type=f32)
        sig = jax.nn.sigmoid(g_lin)             # i | f | (unused) | o blocks
        th = jnp.tanh(g_lin)                    # g block valid at [2H:3H]
        i_al = pltpu.roll(sig, shift=2 * H, axis=1)
        f_al = pltpu.roll(sig, shift=H, axis=1)
        o_al = pltpu.roll(sig, shift=3 * H, axis=1)     # == roll by -H
        c = f_al * c + i_al * th                # lanes [2H:3H] carry the real c
        h = o_al * jnp.tanh(c)                  # lanes [2H:3H] carry the real h
        hh_scr[t] = h                           # history store, off the chain
        return h, c

    lax.fori_loop(0, T, step, (zeros, zeros), unroll=True)

    # pack_padded h_n: one masked select after the loop (nothing per-step).
    t_iota = lax.broadcasted_iota(jnp.int32, (T, B), 0)
    sel = (t_iota == (lens_ref[...] - 1)).astype(f32)          # (T, B) one-hot
    h_last = jnp.sum(sel[:, :, None] * hh_scr[...], axis=0)    # (B, 4H) wide

    # -------------------------- FCN branch ----------------------------------
    # Time-major (L, B, C): every (B, C) slice is a clean (8, <=128) tile and
    # conv taps slice the leading dim (no sublane-crossing copies).  The branch
    # is independent of the recurrence -> hidden under the serial LSTM chain
    # (EUP usage here is minimal: 2 SE sigmoids + 3 per-channel rsqrt).
    def conv_bn_relu(xin, w_ref2, pk_ref2):
        w = w_ref2[...]                         # (K, Cin, Cout) bf16
        pk = pk_ref2[...]                       # (3, Cout): bias, gamma, beta
        k_taps = w.shape[0]
        l_out = xin.shape[0] - k_taps + 1
        xb = xin.astype(bf16)
        acc = jnp.zeros((l_out, xin.shape[1], w.shape[2]), f32)
        for k in range(k_taps):                 # K independent MXU matmuls
            acc = acc + jnp.einsum('lbc,co->lbo', xb[k:k + l_out], w[k],
                                   preferred_element_type=f32)
        y = acc + pk[0:1, :]                    # conv bias
        mean = jnp.mean(y, axis=(0, 1), keepdims=True)          # batch stats
        var = jnp.mean((y - mean) ** 2, axis=(0, 1), keepdims=True)
        y = (y - mean) * lax.rsqrt(var + EPS) * pk[1:2, :] + pk[2:3, :]
        return jnp.maximum(y, 0.0)

    def se_layer(y, wa_ref, wb_ref):
        pooled = jnp.mean(y, axis=0)            # AdaptiveAvgPool1d(1) -> (B, C)
        z = jnp.maximum(jnp.dot(pooled.astype(bf16), wa_ref[...],
                                preferred_element_type=f32), 0.0)
        s = jax.nn.sigmoid(jnp.dot(z.astype(bf16), wb_ref[...],
                                   preferred_element_type=f32))
        return y * s[None, :, :]

    y = conv_bn_relu(x_tbc, w1_ref, pk1_ref)
    y = se_layer(y, se1a_ref, se1b_ref)
    y = conv_bn_relu(y, w2_ref, pk2_ref)
    y = se_layer(y, se2a_ref, se2b_ref)
    y = conv_bn_relu(y, w3_ref, pk3_ref)
    fcn_feat = jnp.mean(y, axis=0)              # global average pool -> (B, C3)

    # --------------------------- classifier head ----------------------------
    # whead rows outside [2H:3H] of the LSTM block are zero, so the wide-state
    # junk lanes (bounded in [-1,1], never NaN) contribute exactly 0.
    feat = jnp.concatenate([h_last, fcn_feat], axis=-1).astype(bf16)
    logits = (jnp.dot(feat, whead_ref[...], preferred_element_type=f32)
              + bhead_ref[...])
    m = jnp.max(logits, axis=1, keepdims=True)
    shifted = logits - m
    lse = jnp.log(jnp.sum(jnp.exp(shifted), axis=1, keepdims=True))
    out_ref[...] = shifted - lse                # log_softmax(dim=1)


# ------------------------------- wrappers -----------------------------------
_VMEM = pl.BlockSpec(memory_space=pltpu.MemorySpace.VMEM)


def init_params(key):
    ks = jax.random.split(key, 22)
    s = 0.1
    n = lambda k, shape: s * jax.random.normal(k, shape, jnp.float32)

    # W_hh^T (PyTorch gate order i, f, g, o along 4H) embedded into rows
    # [2H:3H] of a zero (4H, 4H) matrix.
    # INVARIANT: rows outside [2H:3H] of whh_wide, and rows outside
    # [2H:3H] / [4H:] of w_head, MUST stay exactly zero -- they multiply the
    # wide-state junk lanes.
    whh_wide = jnp.zeros((4 * H, 4 * H), jnp.float32)
    whh_wide = whh_wide.at[2 * H:3 * H, :].set(n(ks[2], (H, 4 * H)))

    def pack_bn(kb, kg, kbe, c):   # rows: [conv bias, bn gamma, bn beta]
        return jnp.concatenate(
            [n(kb, (1, c)), 1.0 + n(kg, (1, c)), n(kbe, (1, c))], axis=0)

    w_head = jnp.zeros((4 * H + C3, NCLS), jnp.float32)
    w_head = w_head.at[2 * H:3 * H, :].set(n(ks[19], (H, NCLS)))
    w_head = w_head.at[4 * H:, :].set(n(ks[20], (C3, NCLS)))

    return {
        "wih": n(ks[0], (C_IN, 4 * H)),          # W_ih^T
        "b_lstm": n(ks[1], (1, 1, 4 * H)),       # b_ih + b_hh folded together
        "whh_wide": whh_wide,
        "w1": n(ks[3], (K1, C_IN, C1)), "pk1": pack_bn(ks[4], ks[5], ks[6], C1),
        "se1a": n(ks[7], (C1, C1 // RED)), "se1b": n(ks[8], (C1 // RED, C1)),
        "w2": n(ks[9], (K2, C1, C2)), "pk2": pack_bn(ks[10], ks[11], ks[12], C2),
        "se2a": n(ks[13], (C2, C2 // RED)), "se2b": n(ks[14], (C2 // RED, C2)),
        "w3": n(ks[15], (K3, C2, C3)), "pk3": pack_bn(ks[16], ks[17], ks[18], C3),
        "w_head": w_head, "b_head": n(ks[21], (1, NCLS)),
    }


@jax.jit
def mlstm_fcn_forward(x, batch_tlength, p):
    # x: (B, T, C_IN)  ==  PyTorch "Batch x time sample x EEG channel"
    bf = jnp.bfloat16
    x_tbc = jnp.transpose(x, (1, 0, 2))                        # (T, B, C_IN)
    # pack_padded_sequence requires length >= 1; clamp to [1, T].
    lens = jnp.clip(batch_tlength, 1, T).astype(jnp.int32).reshape(1, B)

    args = (x_tbc, lens,
            p["wih"].astype(bf), p["b_lstm"], p["whh_wide"].astype(bf),
            p["w1"].astype(bf), p["pk1"], p["se1a"].astype(bf), p["se1b"].astype(bf),
            p["w2"].astype(bf), p["pk2"], p["se2a"].astype(bf), p["se2b"].astype(bf),
            p["w3"].astype(bf), p["pk3"],
            p["w_head"].astype(bf), p["b_head"])

    return pl.pallas_call(
        mlstm_fcn_kernel,
        out_shape=jax.ShapeDtypeStruct((B, NCLS), jnp.float32),
        in_specs=[_VMEM] * len(args),
        out_specs=_VMEM,
        scratch_shapes=[pltpu.VMEM((T, B, 4 * H), jnp.float32),   # xw history
                        pltpu.VMEM((T, B, 4 * H), jnp.float32)],  # h history
    )(*args)


@jax.jit
def mlstm_fcn_reference(x, batch_tlength, p):
    """Pure-JAX reference: standard narrow-state LSTM (no wide state, no lane
    rolls, no zero-padded weights) with the same bf16-MXU / f32-accumulate
    numerics as the kernel."""
    bf = jnp.bfloat16
    f32 = jnp.float32
    mm = lambda a, b: jnp.dot(a.astype(bf), b.astype(bf), preferred_element_type=f32)

    lens = jnp.clip(batch_tlength, 1, T).astype(jnp.int32)

    # ----- LSTM -----
    whh = p["whh_wide"][2 * H:3 * H, :]                          # (H, 4H)
    xw = jnp.einsum('btc,cg->btg', x.astype(bf), p["wih"].astype(bf),
                    preferred_element_type=f32) + p["b_lstm"].reshape(1, 1, 4 * H)

    def step(carry, xw_t):
        h, c = carry
        g = xw_t + mm(h, whh)
        i = jax.nn.sigmoid(g[:, 0:H])
        f = jax.nn.sigmoid(g[:, H:2 * H])
        gg = jnp.tanh(g[:, 2 * H:3 * H])
        o = jax.nn.sigmoid(g[:, 3 * H:4 * H])
        c = f * c + i * gg
        h = o * jnp.tanh(c)
        return (h, c), h

    (_, _), hs = lax.scan(step,
                          (jnp.zeros((B, H), f32), jnp.zeros((B, H), f32)),
                          jnp.swapaxes(xw, 0, 1))
    sel = (jnp.arange(T)[:, None] == (lens[None, :] - 1)).astype(f32)   # (T, B)
    h_last = jnp.sum(sel[:, :, None] * hs, axis=0)                       # (B, H)

    # ----- FCN -----
    def conv_bn_relu(xin, w, pk):
        k_taps = w.shape[0]
        l_out = xin.shape[1] - k_taps + 1
        xb = xin.astype(bf)
        acc = jnp.zeros((xin.shape[0], l_out, w.shape[2]), f32)
        for k in range(k_taps):
            acc = acc + jnp.einsum('blc,co->blo', xb[:, k:k + l_out, :],
                                   w[k].astype(bf), preferred_element_type=f32)
        y = acc + pk[0:1, :]
        mean = jnp.mean(y, axis=(0, 1), keepdims=True)
        var = jnp.mean((y - mean) ** 2, axis=(0, 1), keepdims=True)
        y = (y - mean) * lax.rsqrt(var + EPS) * pk[1:2, :] + pk[2:3, :]
        return jnp.maximum(y, 0.0)

    def se(y, wa, wb):
        pooled = jnp.mean(y, axis=1)
        z = jnp.maximum(mm(pooled, wa), 0.0)
        s = jax.nn.sigmoid(mm(z, wb))
        return y * s[:, None, :]

    y = conv_bn_relu(x, p["w1"], p["pk1"])
    y = se(y, p["se1a"], p["se1b"])
    y = conv_bn_relu(y, p["w2"], p["pk2"])
    y = se(y, p["se2a"], p["se2b"])
    y = conv_bn_relu(y, p["w3"], p["pk3"])
    fcn_feat = jnp.mean(y, axis=1)

    logits = (mm(h_last, p["w_head"][2 * H:3 * H, :])
              + mm(fcn_feat, p["w_head"][4 * H:, :]) + p["b_head"])
    return jax.nn.log_softmax(logits, axis=1)


if __name__ == "__main__":
    key = jax.random.PRNGKey(0)
    k_x, k_p = jax.random.split(key)
    x = jax.random.normal(k_x, (B, T, C_IN), jnp.float32)
    batch_tlength = jnp.array([32, 20, 7, 32, 1, 25, 31, 12], jnp.int32)
    params = init_params(k_p)

    out = mlstm_fcn_forward(x, batch_tlength, params)
    ref = mlstm_fcn_reference(x, batch_tlength, params)
    out, ref = jax.block_until_ready((out, ref))

    assert out.shape == (B, NCLS)
    assert bool(jnp.all(jnp.isfinite(out)))
    # rows of log_softmax must sum to ~1 in prob space
    assert bool(jnp.allclose(jnp.sum(jnp.exp(out), axis=1), 1.0, atol=1e-4))
    # numerical check against the pure-JAX reference (validates the roll
    # alignment, wide-state zero-padding and selector semantics)
    max_err = float(jnp.max(jnp.abs(out - ref)))
    assert max_err < 2e-2, f"kernel vs reference mismatch: max |diff| = {max_err}"
    print("KERNEL_OK")
</pallas_src>

<mosaic_0001>
module attributes {stable_mosaic.version = 11 : i64} {
  func.func @mlstm_fcn_kernel(%arg0: memref<32x8x8xf32, #tpu.memory_space<vmem>>, %arg1: memref<1x8xi32, #tpu.memory_space<vmem>>, %arg2: memref<8x128xbf16, #tpu.memory_space<vmem>>, %arg3: memref<1x1x128xf32, #tpu.memory_space<vmem>>, %arg4: memref<128x128xbf16, #tpu.memory_space<vmem>>, %arg5: memref<8x8x32xbf16, #tpu.memory_space<vmem>>, %arg6: memref<3x32xf32, #tpu.memory_space<vmem>>, %arg7: memref<32x2xbf16, #tpu.memory_space<vmem>>, %arg8: memref<2x32xbf16, #tpu.memory_space<vmem>>, %arg9: memref<5x32x64xbf16, #tpu.memory_space<vmem>>, %arg10: memref<3x64xf32, #tpu.memory_space<vmem>>, %arg11: memref<64x4xbf16, #tpu.memory_space<vmem>>, %arg12: memref<4x64xbf16, #tpu.memory_space<vmem>>, %arg13: memref<3x64x32xbf16, #tpu.memory_space<vmem>>, %arg14: memref<3x32xf32, #tpu.memory_space<vmem>>, %arg15: memref<160x5xbf16, #tpu.memory_space<vmem>>, %arg16: memref<1x5xf32, #tpu.memory_space<vmem>>, %arg17: memref<8x5xf32, #tpu.memory_space<vmem>>, %arg18: memref<32x8x128xf32, #tpu.memory_space<vmem>>, %arg19: memref<32x8x128xf32, #tpu.memory_space<vmem>>) attributes {dimension_semantics = [], scalar_prefetch = 0 : i64, scratch_operands = 2 : i64, tpu.core_type = #tpu.core_type<tc>} {
    %c0 = arith.constant 0 : index
    %c0_0 = arith.constant 0 : index
    %c0_1 = arith.constant 0 : index
    %0 = vector.load %arg0[%c0, %c0_0, %c0_1] : memref<32x8x8xf32, #tpu.memory_space<vmem>>, vector<32x8x8xf32>
    %1 = arith.truncf %0 : vector<32x8x8xf32> to vector<32x8x8xbf16>
    %c0_2 = arith.constant 0 : index
    %c0_3 = arith.constant 0 : index
    %2 = vector.load %arg2[%c0_2, %c0_3] : memref<8x128xbf16, #tpu.memory_space<vmem>>, vector<8x128xbf16>
    "tpu.trace_start"() <{level = 10 : i32, message = "tbc,cg->tbg"}> : () -> ()
    %cst = arith.constant dense<0.000000e+00> : vector<32x8x128xf32>
    %3 = tpu.matmul %1, %2, %cst {dimension_numbers = #tpu.dot_dimension_numbers<[2], [0], [0, 1], [1], [0, 0, 0, 1, 1, 1], [], []>} : vector<32x8x8xbf16>, vector<8x128xbf16>, vector<32x8x128xf32> -> vector<32x8x128xf32>
    "tpu.trace_stop"() : () -> ()
    %c0_4 = arith.constant 0 : index
    %c0_5 = arith.constant 0 : index
    %c0_6 = arith.constant 0 : index
    %4 = vector.load %arg3[%c0_4, %c0_5, %c0_6] : memref<1x1x128xf32, #tpu.memory_space<vmem>>, vector<1x1x128xf32>
    %5 = vector.broadcast %4 : vector<1x1x128xf32> to vector<32x8x128xf32>
    %6 = arith.addf %3, %5 : vector<32x8x128xf32>
    %c0_7 = arith.constant 0 : index
    %c0_8 = arith.constant 0 : index
    %c0_9 = arith.constant 0 : index
    %7 = vector.load %arg18[%c0_7, %c0_8, %c0_9] : memref<32x8x128xf32, #tpu.memory_space<vmem>>, vector<32x8x128xf32>
    tpu.vector_store %arg18[%c0_7, %c0_8, %c0_9], %6 {strides = array<i32>} : memref<32x8x128xf32, #tpu.memory_space<vmem>>, vector<32x8x128xf32>,
    %c0_10 = arith.constant 0 : index
    %c0_11 = arith.constant 0 : index
    %8 = vector.load %arg4[%c0_10, %c0_11] : memref<128x128xbf16, #tpu.memory_space<vmem>>, vector<128x128xbf16>
    %cst_12 = arith.constant 0.000000e+00 : f32
    %9 = vector.broadcast %cst_12 : f32 to vector<8x128xf32>
    %c0_i32 = arith.constant 0 : i32
    %10 = arith.index_cast %c0_i32 : i32 to index
    %c0_13 = arith.constant 0 : index
    %c0_14 = arith.constant 0 : index
    %11 = vector.load %arg18[%10, %c0_13, %c0_14] : memref<32x8x128xf32, #tpu.memory_space<vmem>>, vector<1x8x128xf32>
    %12 = vector.shape_cast %11 : vector<1x8x128xf32> to vector<8x128xf32>
    %13 = arith.truncf %9 : vector<8x128xf32> to vector<8x128xbf16>
    %cst_15 = arith.constant dense<0.000000e+00> : vector<8x128xf32>
    %14 = tpu.matmul %13, %8, %cst_15 {dimension_numbers = #tpu.dot_dimension_numbers<[1], [0], [0], [1], [0, 0, 1, 1], [], []>} : vector<8x128xbf16>, vector<128x128xbf16>, vector<8x128xf32> -> vector<8x128xf32>
    %15 = arith.addf %12, %14 : vector<8x128xf32>
    %16 = arith.negf %15 : vector<8x128xf32>
    %17 = math.exp %16 : vector<8x128xf32>
    %cst_16 = arith.constant 1.000000e+00 : f32
    %18 = vector.broadcast %cst_16 : f32 to vector<8x128xf32>
    %19 = arith.addf %18, %17 : vector<8x128xf32>
    %20 = arith.divf %18, %19 : vector<8x128xf32>
    %21 = math.tanh %15 : vector<8x128xf32>
    %c64_i32 = arith.constant 64 : i32
    %22 = tpu.dynamic_rotate %20 by %c64_i32 dim 1 : vector<8x128xf32>, i32 -> vector<8x128xf32>
    %c32_i32 = arith.constant 32 : i32
    %23 = tpu.dynamic_rotate %20 by %c32_i32 dim 1 : vector<8x128xf32>, i32 -> vector<8x128xf32>
    %c96_i32 = arith.constant 96 : i32
    %24 = tpu.dynamic_rotate %20 by %c96_i32 dim 1 : vector<8x128xf32>, i32 -> vector<8x128xf32>
    %25 = arith.mulf %23, %9 : vector<8x128xf32>
    %26 = arith.mulf %22, %21 : vector<8x128xf32>
    %27 = arith.addf %25, %26 : vector<8x128xf32>
    %28 = math.tanh %27 : vector<8x128xf32>
    %29 = arith.mulf %24, %28 : vector<8x128xf32>
    %30 = arith.index_cast %c0_i32 : i32 to index
    %c0_17 = arith.constant 0 : index
    %c0_18 = arith.constant 0 : index
    %31 = vector.load %arg19[%30, %c0_17, %c0_18] : memref<32x8x128xf32, #tpu.memory_space<vmem>>, vector<1x8x128xf32>
    %32 = vector.shape_cast %31 : vector<1x8x128xf32> to vector<8x128xf32>
    %33 = vector.shape_cast %29 : vector<8x128xf32> to vector<1x8x128xf32>
    tpu.vector_store %arg19[%30, %c0_17, %c0_18], %33 {strides = array<i32>} : memref<32x8x128xf32, #tpu.memory_space<vmem>>, vector<1x8x128xf32>,
    %c1_i32 = arith.constant 1 : i32
    %34 = arith.index_cast %c1_i32 : i32 to index
    %c0_19 = arith.constant 0 : index
    %c0_20 = arith.constant 0 : index
    %35 = vector.load %arg18[%34, %c0_19, %c0_20] : memref<32x8x128xf32, #tpu.memory_space<vmem>>, vector<1x8x128xf32>
    %36 = vector.shape_cast %35 : vector<1x8x128xf32> to vector<8x128xf32>
    %37 = arith.truncf %29 : vector<8x128xf32> to vector<8x128xbf16>
    %cst_21 = arith.constant dense<0.000000e+00> : vector<8x128xf32>
    %38 = tpu.matmul %37, %8, %cst_21 {dimension_numbers = #tpu.dot_dimension_numbers<[1], [0], [0], [1], [0, 0, 1, 1], [], []>} : vector<8x128xbf16>, vector<128x128xbf16>, vector<8x128xf32> -> vector<8x128xf32>
    %39 = arith.addf %36, %38 : vector<8x128xf32>
    %40 = arith.negf %39 : vector<8x128xf32>
    %41 = math.exp %40 : vector<8x128xf32>
    %cst_22 = arith.constant 1.000000e+00 : f32
    %42 = vector.broadcast %cst_22 : f32 to vector<8x128xf32>
    %43 = arith.addf %42, %41 : vector<8x128xf32>
    %44 = arith.divf %42, %43 : vector<8x128xf32>
    %45 = math.tanh %39 : vector<8x128xf32>
    %c64_i32_23 = arith.constant 64 : i32
    %46 = tpu.dynamic_rotate %44 by %c64_i32_23 dim 1 : vector<8x128xf32>, i32 -> vector<8x128xf32>
    %c32_i32_24 = arith.constant 32 : i32
    %47 = tpu.dynamic_rotate %44 by %c32_i32_24 dim 1 : vector<8x128xf32>, i32 -> vector<8x128xf32>
    %c96_i32_25 = arith.constant 96 : i32
    %48 = tpu.dynamic_rotate %44 by %c96_i32_25 dim 1 : vector<8x128xf32>, i32 -> vector<8x128xf32>
    %49 = arith.mulf %47, %27 : vector<8x128xf32>
    %50 = arith.mulf %46, %45 : vector<8x128xf32>
    %51 = arith.addf %49, %50 : vector<8x128xf32>
    %52 = math.tanh %51 : vector<8x128xf32>
    %53 = arith.mulf %48, %52 : vector<8x128xf32>
    %54 = arith.index_cast %c1_i32 : i32 to index
    %c0_26 = arith.constant 0 : index
    %c0_27 = arith.constant 0 : index
    %55 = vector.load %arg19[%54, %c0_26, %c0_27] : memref<32x8x128xf32, #tpu.memory_space<vmem>>, vector<1x8x128xf32>
    %56 = vector.shape_cast %55 : vector<1x8x128xf32> to vector<8x128xf32>
    %57 = vector.shape_cast %53 : vector<8x128xf32> to vector<1x8x128xf32>
    tpu.vector_store %arg19[%54, %c0_26, %c0_27], %57 {strides = array<i32>} : memref<32x8x128xf32, #tpu.memory_space<vmem>>, vector<1x8x128xf32>,
    %c2_i32 = arith.constant 2 : i32
    %58 = arith.index_cast %c2_i32 : i32 to index
    %c0_28 = arith.constant 0 : index
    %c0_29 = arith.constant 0 : index
    %59 = vector.load %arg18[%58, %c0_28, %c0_29] : memref<32x8x128xf32, #tpu.memory_space<vmem>>, vector<1x8x128xf32>
    %60 = vector.shape_cast %59 : vector<1x8x128xf32> to vector<8x128xf32>
    %61 = arith.truncf %53 : vector<8x128xf32> to vector<8x128xbf16>
    %cst_30 = arith.constant dense<0.000000e+00> : vector<8x128xf32>
    %62 = tpu.matmul %61, %8, %cst_30 {dimension_numbers = #tpu.dot_dimension_numbers<[1], [0], [0], [1], [0, 0, 1, 1], [], []>} : vector<8x128xbf16>, vector<128x128xbf16>, vector<8x128xf32> -> vector<8x128xf32>
    %63 = arith.addf %60, %62 : vector<8x128xf32>
    %64 = arith.negf %63 : vector<8x128xf32>
    %65 = math.exp %64 : vector<8x128xf32>
    %cst_31 = arith.constant 1.000000e+00 : f32
    %66 = vector.broadcast %cst_31 : f32 to vector<8x128xf32>
    %67 = arith.addf %66, %65 : vector<8x128xf32>
    %68 = arith.divf %66, %67 : vector<8x128xf32>
    %69 = math.tanh %63 : vector<8x128xf32>
    %c64_i32_32 = arith.constant 64 : i32
    %70 = tpu.dynamic_rotate %68 by %c64_i32_32 dim 1 : vector<8x128xf32>, i32 -> vector<8x128xf32>
    %c32_i32_33 = arith.constant 32 : i32
    %71 = tpu.dynamic_rotate %68 by %c32_i32_33 dim 1 : vector<8x128xf32>, i32 -> vector<8x128xf32>
    %c96_i32_34 = arith.constant 96 : i32
    %72 = tpu.dynamic_rotate %68 by %c96_i32_34 dim 1 : vector<8x128xf32>, i32 -> vector<8x128xf32>
    %73 = arith.mulf %71, %51 : vector<8x128xf32>
    %74 = arith.mulf %70, %69 : vector<8x128xf32>
    %75 = arith.addf %73, %74 : vector<8x128xf32>
    %76 = math.tanh %75 : vector<8x128xf32>
    %77 = arith.mulf %72, %76 : vector<8x128xf32>
    %78 = arith.index_cast %c2_i32 : i32 to index
    %c0_35 = arith.constant 0 : index
    %c0_36 = arith.constant 0 : index
    %79 = vector.load %arg19[%78, %c0_35, %c0_36] : memref<32x8x128xf32, #tpu.memory_space<vmem>>, vector<1x8x128xf32>
    %80 = vector.shape_cast %79 : vector<1x8x128xf32> to vector<8x128xf32>
    %81 = vector.shape_cast %77 : vector<8x128xf32> to vector<1x8x128xf32>
    tpu.vector_store %arg19[%78, %c0_35, %c0_36], %81 {strides = array<i32>} : memref<32x8x128xf32, #tpu.memory_space<vmem>>, vector<1x8x128xf32>,
    %c3_i32 = arith.constant 3 : i32
    %82 = arith.index_cast %c3_i32 : i32 to index
    %c0_37 = arith.constant 0 : index
    %c0_38 = arith.constant 0 : index
    %83 = vector.load %arg18[%82, %c0_37, %c0_38] : memref<32x8x128xf32, #tpu.memory_space<vmem>>, vector<1x8x128xf32>
    %84 = vector.shape_cast %83 : vector<1x8x128xf32> to vector<8x128xf32>
    %85 = arith.truncf %77 : vector<8x128xf32> to vector<8x128xbf16>
    %cst_39 = arith.constant dense<0.000000e+00> : vector<8x128xf32>
    %86 = tpu.matmul %85, %8, %cst_39 {dimension_numbers = #tpu.dot_dimension_numbers<[1], [0], [0], [1], [0, 0, 1, 1], [], []>} : vector<8x128xbf16>, vector<128x128xbf16>, vector<8x128xf32> -> vector<8x128xf32>
    %87 = arith.addf %84, %86 : vector<8x128xf32>
    %88 = arith.negf %87 : vector<8x128xf32>
    %89 = math.exp %88 : vector<8x128xf32>
    %cst_40 = arith.constant 1.000000e+00 : f32
    %90 = vector.broadcast %cst_40 : f32 to vector<8x128xf32>
    %91 = arith.addf %90, %89 : vector<8x128xf32>
    %92 = arith.divf %90, %91 : vector<8x128xf32>
    %93 = math.tanh %87 : vector<8x128xf32>
    %c64_i32_41 = arith.constant 64 : i32
    %94 = tpu.dynamic_rotate %92 by %c64_i32_41 dim 1 : vector<8x128xf32>, i32 -> vector<8x128xf32>
    %c32_i32_42 = arith.constant 32 : i32
    %95 = tpu.dynamic_rotate %92 by %c32_i32_42 dim 1 : vector<8x128xf32>, i32 -> vector<8x128xf32>
    %c96_i32_43 = arith.constant 96 : i32
    %96 = tpu.dynamic_rotate %92 by %c96_i32_43 dim 1 : vector<8x128xf32>, i32 -> vector<8x128xf32>
    %97 = arith.mulf %95, %75 : vector<8x128xf32>
    %98 = arith.mulf %94, %93 : vector<8x128xf32>
    %99 = arith.addf %97, %98 : vector<8x128xf32>
    %100 = math.tanh %99 : vector<8x128xf32>
    %101 = arith.mulf %96, %100 : vector<8x128xf32>
    %102 = arith.index_cast %c3_i32 : i32 to index
    %c0_44 = arith.constant 0 : index
    %c0_45 = arith.constant 0 : index
    %103 = vector.load %arg19[%102, %c0_44, %c0_45] : memref<32x8x128xf32, #tpu.memory_space<vmem>>, vector<1x8x128xf32>
    %104 = vector.shape_cast %103 : vector<1x8x128xf32> to vector<8x128xf32>
    %105 = vector.shape_cast %101 : vector<8x128xf32> to vector<1x8x128xf32>
    tpu.vector_store %arg19[%102, %c0_44, %c0_45], %105 {strides = array<i32>} : memref<32x8x128xf32, #tpu.memory_space<vmem>>, vector<1x8x128xf32>,
    %c4_i32 = arith.constant 4 : i32
    %106 = arith.index_cast %c4_i32 : i32 to index
    %c0_46 = arith.constant 0 : index
    %c0_47 = arith.constant 0 : index
    %107 = vector.load %arg18[%106, %c0_46, %c0_47] : memref<32x8x128xf32, #tpu.memory_space<vmem>>, vector<1x8x128xf32>
    %108 = vector.shape_cast %107 : vector<1x8x128xf32> to vector<8x128xf32>
    %109 = arith.truncf %101 : vector<8x128xf32> to vector<8x128xbf16>
    %cst_48 = arith.constant dense<0.000000e+00> : vector<8x128xf32>
    %110 = tpu.matmul %109, %8, %cst_48 {dimension_numbers = #tpu.dot_dimension_numbers<[1], [0], [0], [1], [0, 0, 1, 1], [], []>} : vector<8x128xbf16>, vector<128x128xbf16>, vector<8x128xf32> -> vector<8x128xf32>
    %111 = arith.addf %108, %110 : vector<8x128xf32>
    %112 = arith.negf %111 : vector<8x128xf32>
    %113 = math.exp %112 : vector<8x128xf32>
    %cst_49 = arith.constant 1.000000e+00 : f32
    %114 = vector.broadcast %cst_49 : f32 to vector<8x128xf32>
    %115 = arith.addf %114, %113 : vector<8x128xf32>
    %116 = arith.divf %114, %115 : vector<8x128xf32>
    %117 = math.tanh %111 : vector<8x128xf32>
    %c64_i32_50 = arith.constant 64 : i32
    %118 = tpu.dynamic_rotate %116 by %c64_i32_50 dim 1 : vector<8x128xf32>, i32 -> vector<8x128xf32>
    %c32_i32_51 = arith.constant 32 : i32
    %119 = tpu.dynamic_rotate %116 by %c32_i32_51 dim 1 : vector<8x128xf32>, i32 -> vector<8x128xf32>
    %c96_i32_52 = arith.constant 96 : i32
    %120 = tpu.dynamic_rotate %116 by %c96_i32_52 dim 1 : vector<8x128xf32>, i32 -> vector<8x128xf32>
    %121 = arith.mulf %119, %99 : vector<8x128xf32>
    %122 = arith.mulf %118, %117 : vector<8x128xf32>
    %123 = arith.addf %121, %122 : vector<8x128xf32>
    %124 = math.tanh %123 : vector<8x128xf32>
    %125 = arith.mulf %120, %124 : vector<8x128xf32>
    %126 = arith.index_cast %c4_i32 : i32 to index
    %c0_53 = arith.constant 0 : index
    %c0_54 = arith.constant 0 : index
    %127 = vector.load %arg19[%126, %c0_53, %c0_54] : memref<32x8x128xf32, #tpu.memory_space<vmem>>, vector<1x8x128xf32>
    %128 = vector.shape_cast %127 : vector<1x8x128xf32> to vector<8x128xf32>
    %129 = vector.shape_cast %125 : vector<8x128xf32> to vector<1x8x128xf32>
    tpu.vector_store %arg19[%126, %c0_53, %c0_54], %129 {strides = array<i32>} : memref<32x8x128xf32, #tpu.memory_space<vmem>>, vector<1x8x128xf32>,
    %c5_i32 = arith.constant 5 : i32
    %130 = arith.index_cast %c5_i32 : i32 to index
    %c0_55 = arith.constant 0 : index
    %c0_56 = arith.constant 0 : index
    %131 = vector.load %arg18[%130, %c0_55, %c0_56] : memref<32x8x128xf32, #tpu.memory_space<vmem>>, vector<1x8x128xf32>
    %132 = vector.shape_cast %131 : vector<1x8x128xf32> to vector<8x128xf32>
    %133 = arith.truncf %125 : vector<8x128xf32> to vector<8x128xbf16>
    %cst_57 = arith.constant dense<0.000000e+00> : vector<8x128xf32>
    %134 = tpu.matmul %133, %8, %cst_57 {dimension_numbers = #tpu.dot_dimension_numbers<[1], [0], [0], [1], [0, 0, 1, 1], [], []>} : vector<8x128xbf16>, vector<128x128xbf16>, vector<8x128xf32> -> vector<8x128xf32>
    %135 = arith.addf %132, %134 : vector<8x128xf32>
    %136 = arith.negf %135 : vector<8x128xf32>
    %137 = math.exp %136 : vector<8x128xf32>
    %cst_58 = arith.constant 1.000000e+00 : f32
    %138 = vector.broadcast %cst_58 : f32 to vector<8x128xf32>
    %139 = arith.addf %138, %137 : vector<8x128xf32>
    %140 = arith.divf %138, %139 : vector<8x128xf32>
    %141 = math.tanh %135 : vector<8x128xf32>
    %c64_i32_59 = arith.constant 64 : i32
    %142 = tpu.dynamic_rotate %140 by %c64_i32_59 dim 1 : vector<8x128xf32>, i32 -> vector<8x128xf32>
    %c32_i32_60 = arith.constant 32 : i32
    %143 = tpu.dynamic_rotate %140 by %c32_i32_60 dim 1 : vector<8x128xf32>, i32 -> vector<8x128xf32>
    %c96_i32_61 = arith.constant 96 : i32
    %144 = tpu.dynamic_rotate %140 by %c96_i32_61 dim 1 : vector<8x128xf32>, i32 -> vector<8x128xf32>
    %145 = arith.mulf %143, %123 : vector<8x128xf32>
    %146 = arith.mulf %142, %141 : vector<8x128xf32>
    %147 = arith.addf %145, %146 : vector<8x128xf32>
    %148 = math.tanh %147 : vector<8x128xf32>
    %149 = arith.mulf %144, %148 : vector<8x128xf32>
    %150 = arith.index_cast %c5_i32 : i32 to index
    %c0_62 = arith.constant 0 : index
    %c0_63 = arith.constant 0 : index
    %151 = vector.load %arg19[%150, %c0_62, %c0_63] : memref<32x8x128xf32, #tpu.memory_space<vmem>>, vector<1x8x128xf32>
    %152 = vector.shape_cast %151 : vector<1x8x128xf32> to vector<8x128xf32>
    %153 = vector.shape_cast %149 : vector<8x128xf32> to vector<1x8x128xf32>
    tpu.vector_store %arg19[%150, %c0_62, %c0_63], %153 {strides = array<i32>} : memref<32x8x128xf32, #tpu.memory_space<vmem>>, vector<1x8x128xf32>,
    %c6_i32 = arith.constant 6 : i32
    %154 = arith.index_cast %c6_i32 : i32 to index
    %c0_64 = arith.constant 0 : index
    %c0_65 = arith.constant 0 : index
    %155 = vector.load %arg18[%154, %c0_64, %c0_65] : memref<32x8x128xf32, #tpu.memory_space<vmem>>, vector<1x8x128xf32>
    %156 = vector.shape_cast %155 : vector<1x8x128xf32> to vector<8x128xf32>
    %157 = arith.truncf %149 : vector<8x128xf32> to vector<8x128xbf16>
    %cst_66 = arith.constant dense<0.000000e+00> : vector<8x128xf32>
    %158 = tpu.matmul %157, %8, %cst_66 {dimension_numbers = #tpu.dot_dimension_numbers<[1], [0], [0], [1], [0, 0, 1, 1], [], []>} : vector<8x128xbf16>, vector<128x128xbf16>, vector<8x128xf32> -> vector<8x128xf32>
    %159 = arith.addf %156, %158 : vector<8x128xf32>
    %160 = arith.negf %159 : vector<8x128xf32>
    %161 = math.exp %160 : vector<8x128xf32>
    %cst_67 = arith.constant 1.000000e+00 : f32
    %162 = vector.broadcast %cst_67 : f32 to vector<8x128xf32>
    %163 = arith.addf %162, %161 : vector<8x128xf32>
    %164 = arith.divf %162, %163 : vector<8x128xf32>
    %165 = math.tanh %159 : vector<8x128xf32>
    %c64_i32_68 = arith.constant 64 : i32
    %166 = tpu.dynamic_rotate %164 by %c64_i32_68 dim 1 : vector<8x128xf32>, i32 -> vector<8x128xf32>
    %c32_i32_69 = arith.constant 32 : i32
    %167 = tpu.dynamic_rotate %164 by %c32_i32_69 dim 1 : vector<8x128xf32>, i32 -> vector<8x128xf32>
    %c96_i32_70 = arith.constant 96 : i32
    %168 = tpu.dynamic_rotate %164 by %c96_i32_70 dim 1 : vector<8x128xf32>, i32 -> vector<8x128xf32>
    %169 = arith.mulf %167, %147 : vector<8x128xf32>
    %170 = arith.mulf %166, %165 : vector<8x128xf32>
    %171 = arith.addf %169, %170 : vector<8x128xf32>
    %172 = math.tanh %171 : vector<8x128xf32>
    %173 = arith.mulf %168, %172 : vector<8x128xf32>
    %174 = arith.index_cast %c6_i32 : i32 to index
    %c0_71 = arith.constant 0 : index
    %c0_72 = arith.constant 0 : index
    %175 = vector.load %arg19[%174, %c0_71, %c0_72] : memref<32x8x128xf32, #tpu.memory_space<vmem>>, vector<1x8x128xf32>
    %176 = vector.shape_cast %175 : vector<1x8x128xf32> to vector<8x128xf32>
    %177 = vector.shape_cast %173 : vector<8x128xf32> to vector<1x8x128xf32>
    tpu.vector_store %arg19[%174, %c0_71, %c0_72], %177 {strides = array<i32>} : memref<32x8x128xf32, #tpu.memory_space<vmem>>, vector<1x8x128xf32>,
    %c7_i32 = arith.constant 7 : i32
    %178 = arith.index_cast %c7_i32 : i32 to index
    %c0_73 = arith.constant 0 : index
    %c0_74 = arith.constant 0 : index
    %179 = vector.load %arg18[%178, %c0_73, %c0_74] : memref<32x8x128xf32, #tpu.memory_space<vmem>>, vector<1x8x128xf32>
    %180 = vector.shape_cast %179 : vector<1x8x128xf32> to vector<8x128xf32>
    %181 = arith.truncf %173 : vector<8x128xf32> to vector<8x128xbf16>
    %cst_75 = arith.constant dense<0.000000e+00> : vector<8x128xf32>
    %182 = tpu.matmul %181, %8, %cst_75 {dimension_numbers = #tpu.dot_dimension_numbers<[1], [0], [0], [1], [0, 0, 1, 1], [], []>} : vector<8x128xbf16>, vector<128x128xbf16>, vector<8x128xf32> -> vector<8x128xf32>
    %183 = arith.addf %180, %182 : vector<8x128xf32>
    %184 = arith.negf %183 : vector<8x128xf32>
    %185 = math.exp %184 : vector<8x128xf32>
    %cst_76 = arith.constant 1.000000e+00 : f32
    %186 = vector.broadcast %cst_76 : f32 to vector<8x128xf32>
    %187 = arith.addf %186, %185 : vector<8x128xf32>
    %188 = arith.divf %186, %187 : vector<8x128xf32>
    %189 = math.tanh %183 : vector<8x128xf32>
    %c64_i32_77 = arith.constant 64 : i32
    %190 = tpu.dynamic_rotate %188 by %c64_i32_77 dim 1 : vector<8x128xf32>, i32 -> vector<8x128xf32>
    %c32_i32_78 = arith.constant 32 : i32
    %191 = tpu.dynamic_rotate %188 by %c32_i32_78 dim 1 : vector<8x128xf32>, i32 -> vector<8x128xf32>
    %c96_i32_79 = arith.constant 96 : i32
    %192 = tpu.dynamic_rotate %188 by %c96_i32_79 dim 1 : vector<8x128xf32>, i32 -> vector<8x128xf32>
    %193 = arith.mulf %191, %171 : vector<8x128xf32>
    %194 = arith.mulf %190, %189 : vector<8x128xf32>
    %195 = arith.addf %193, %194 : vector<8x128xf32>
    %196 = math.tanh %195 : vector<8x128xf32>
    %197 = arith.mulf %192, %196 : vector<8x128xf32>
    %198 = arith.index_cast %c7_i32 : i32 to index
    %c0_80 = arith.constant 0 : index
    %c0_81 = arith.constant 0 : index
    %199 = vector.load %arg19[%198, %c0_80, %c0_81] : memref<32x8x128xf32, #tpu.memory_space<vmem>>, vector<1x8x128xf32>
    %200 = vector.shape_cast %199 : vector<1x8x128xf32> to vector<8x128xf32>
    %201 = vector.shape_cast %197 : vector<8x128xf32> to vector<1x8x128xf32>
    tpu.vector_store %arg19[%198, %c0_80, %c0_81], %201 {strides = array<i32>} : memref<32x8x128xf32, #tpu.memory_space<vmem>>, vector<1x8x128xf32>,
    %c8_i32 = arith.constant 8 : i32
    %202 = arith.index_cast %c8_i32 : i32 to index
    %c0_82 = arith.constant 0 : index
    %c0_83 = arith.constant 0 : index
    %203 = vector.load %arg18[%202, %c0_82, %c0_83] : memref<32x8x128xf32, #tpu.memory_space<vmem>>, vector<1x8x128xf32>
    %204 = vector.shape_cast %203 : vector<1x8x128xf32> to vector<8x128xf32>
    %205 = arith.truncf %197 : vector<8x128xf32> to vector<8x128xbf16>
    %cst_84 = arith.constant dense<0.000000e+00> : vector<8x128xf32>
    %206 = tpu.matmul %205, %8, %cst_84 {dimension_numbers = #tpu.dot_dimension_numbers<[1], [0], [0], [1], [0, 0, 1, 1], [], []>} : vector<8x128xbf16>, vector<128x128xbf16>, vector<8x128xf32> -> vector<8x128xf32>
    %207 = arith.addf %204, %206 : vector<8x128xf32>
    %208 = arith.negf %207 : vector<8x128xf32>
    %209 = math.exp %208 : vector<8x128xf32>
    %cst_85 = arith.constant 1.000000e+00 : f32
    %210 = vector.broadcast %cst_85 : f32 to vector<8x128xf32>
    %211 = arith.addf %210, %209 : vector<8x128xf32>
    %212 = arith.divf %210, %211 : vector<8x128xf32>
    %213 = math.tanh %207 : vector<8x128xf32>
    %c64_i32_86 = arith.constant 64 : i32
    %214 = tpu.dynamic_rotate %212 by %c64_i32_86 dim 1 : vector<8x128xf32>, i32 -> vector<8x128xf32>
    %c32_i32_87 = arith.constant 32 : i32
    %215 = tpu.dynamic_rotate %212 by %c32_i32_87 dim 1 : vector<8x128xf32>, i32 -> vector<8x128xf32>
    %c96_i32_88 = arith.constant 96 : i32
    %216 = tpu.dynamic_rotate %212 by %c96_i32_88 dim 1 : vector<8x128xf32>, i32 -> vector<8x128xf32>
    %217 = arith.mulf %215, %195 : vector<8x128xf32>
    %218 = arith.mulf %214, %213 : vector<8x128xf32>
    %219 = arith.addf %217, %218 : vector<8x128xf32>
    %220 = math.tanh %219 : vector<8x128xf32>
    %221 = arith.mulf %216, %220 : vector<8x128xf32>
    %222 = arith.index_cast %c8_i32 : i32 to index
    %c0_89 = arith.constant 0 : index
    %c0_90 = arith.constant 0 : index
    %223 = vector.load %arg19[%222, %c0_89, %c0_90] : memref<32x8x128xf32, #tpu.memory_space<vmem>>, vector<1x8x128xf32>
    %224 = vector.shape_cast %223 : vector<1x8x128xf32> to vector<8x128xf32>
    %225 = vector.shape_cast %221 : vector<8x128xf32> to vector<1x8x128xf32>
    tpu.vector_store %arg19[%222, %c0_89, %c0_90], %225 {strides = array<i32>} : memref<32x8x128xf32, #tpu.memory_space<vmem>>, vector<1x8x128xf32>,
    %c9_i32 = arith.constant 9 : i32
    %226 = arith.index_cast %c9_i32 : i32 to index
    %c0_91 = arith.constant 0 : index
    %c0_92 = arith.constant 0 : index
    %227 = vector.load %arg18[%226, %c0_91, %c0_92] : memref<32x8x128xf32, #tpu.memory_space<vmem>>, vector<1x8x128xf32>
    %228 = vector.shape_cast %227 : vector<1x8x128xf32> to vector<8x128xf32>
    %229 = arith.truncf %221 : vector<8x128xf32> to vector<8x128xbf16>
    %cst_93 = arith.constant dense<0.000000e+00> : vector<8x128xf32>
    %230 = tpu.matmul %229, %8, %cst_93 {dimension_numbers = #tpu.dot_dimension_numbers<[1], [0], [0], [1], [0, 0, 1, 1], [], []>} : vector<8x128xbf16>, vector<128x128xbf16>, vector<8x128xf32> -> vector<8x128xf32>
    %231 = arith.addf %228, %230 : vector<8x128xf32>
    %232 = arith.negf %231 : vector<8x128xf32>
    %233 = math.exp %232 : vector<8x128xf32>
    %cst_94 = arith.constant 1.000000e+00 : f32
    %234 = vector.broadcast %cst_94 : f32 to vector<8x128xf32>
    %235 = arith.addf %234, %233 : vector<8x128xf32>
    %236 = arith.divf %234, %235 : vector<8x128xf32>
    %237 = math.tanh %231 : vector<8x128xf32>
    %c64_i32_95 = arith.constant 64 : i32
    %238 = tpu.dynamic_rotate %236 by %c64_i32_95 dim 1 : vector<8x128xf32>, i32 -> vector<8x128xf32>
    %c32_i32_96 = arith.constant 32 : i32
    %239 = tpu.dynamic_rotate %236 by %c32_i32_96 dim 1 : vector<8x128xf32>, i32 -> vector<8x128xf32>
    %c96_i32_97 = arith.constant 96 : i32
    %240 = tpu.dynamic_rotate %236 by %c96_i32_97 dim 1 : vector<8x128xf32>, i32 -> vector<8x128xf32>
    %241 = arith.mulf %239, %219 : vector<8x128xf32>
    %242 = arith.mulf %238, %237 : vector<8x128xf32>
    %243 = arith.addf %241, %242 : vector<8x128xf32>
    %244 = math.tanh %243 : vector<8x128xf32>
    %245 = arith.mulf %240, %244 : vector<8x128xf32>
    %246 = arith.index_cast %c9_i32 : i32 to index
    %c0_98 = arith.constant 0 : index
    %c0_99 = arith.constant 0 : index
    %247 = vector.load %arg19[%246, %c0_98, %c0_99] : memref<32x8x128xf32, #tpu.memory_space<vmem>>, vector<1x8x128xf32>
    %248 = vector.shape_cast %247 : vector<1x8x128xf32> to vector<8x128xf32>
    %249 = vector.shape_cast %245 : vector<8x128xf32> to vector<1x8x128xf32>
    tpu.vector_store %arg19[%246, %c0_98, %c0_99], %249 {strides = array<i32>} : memref<32x8x128xf32, #tpu.memory_space<vmem>>, vector<1x8x128xf32>,
    %c10_i32 = arith.constant 10 : i32
    %250 = arith.index_cast %c10_i32 : i32 to index
    %c0_100 = arith.constant 0 : index
    %c0_101 = arith.constant 0 : index
    %251 = vector.load %arg18[%250, %c0_100, %c0_101] : memref<32x8x128xf32, #tpu.memory_space<vmem>>, vector<1x8x128xf32>
    %252 = vector.shape_cast %251 : vector<1x8x128xf32> to vector<8x128xf32>
    %253 = arith.truncf %245 : vector<8x128xf32> to vector<8x128xbf16>
    %cst_102 = arith.constant dense<0.000000e+00> : vector<8x128xf32>
    %254 = tpu.matmul %253, %8, %cst_102 {dimension_numbers = #tpu.dot_dimension_numbers<[1], [0], [0], [1], [0, 0, 1, 1], [], []>} : vector<8x128xbf16>, vector<128x128xbf16>, vector<8x128xf32> -> vector<8x128xf32>
    %255 = arith.addf %252, %254 : vector<8x128xf32>
    %256 = arith.negf %255 : vector<8x128xf32>
    %257 = math.exp %256 : vector<8x128xf32>
    %cst_103 = arith.constant 1.000000e+00 : f32
    %258 = vector.broadcast %cst_103 : f32 to vector<8x128xf32>
    %259 = arith.addf %258, %257 : vector<8x128xf32>
    %260 = arith.divf %258, %259 : vector<8x128xf32>
    %261 = math.tanh %255 : vector<8x128xf32>
    %c64_i32_104 = arith.constant 64 : i32
    %262 = tpu.dynamic_rotate %260 by %c64_i32_104 dim 1 : vector<8x128xf32>, i32 -> vector<8x128xf32>
    %c32_i32_105 = arith.constant 32 : i32
    %263 = tpu.dynamic_rotate %260 by %c32_i32_105 dim 1 : vector<8x128xf32>, i32 -> vector<8x128xf32>
    %c96_i32_106 = arith.constant 96 : i32
    %264 = tpu.dynamic_rotate %260 by %c96_i32_106 dim 1 : vector<8x128xf32>, i32 -> vector<8x128xf32>
    %265 = arith.mulf %263, %243 : vector<8x128xf32>
    %266 = arith.mulf %262, %261 : vector<8x128xf32>
    %267 = arith.addf %265, %266 : vector<8x128xf32>
    %268 = math.tanh %267 : vector<8x128xf32>
    %269 = arith.mulf %264, %268 : vector<8x128xf32>
    %270 = arith.index_cast %c10_i32 : i32 to index
    %c0_107 = arith.constant 0 : index
    %c0_108 = arith.constant 0 : index
    %271 = vector.load %arg19[%270, %c0_107, %c0_108] : memref<32x8x128xf32, #tpu.memory_space<vmem>>, vector<1x8x128xf32>
    %272 = vector.shape_cast %271 : vector<1x8x128xf32> to vector<8x128xf32>
    %273 = vector.shape_cast %269 : vector<8x128xf32> to vector<1x8x128xf32>
    tpu.vector_store %arg19[%270, %c0_107, %c0_108], %273 {strides = array<i32>} : memref<32x8x128xf32, #tpu.memory_space<vmem>>, vector<1x8x128xf32>,
    %c11_i32 = arith.constant 11 : i32
    %274 = arith.index_cast %c11_i32 : i32 to index
    %c0_109 = arith.constant 0 : index
    %c0_110 = arith.constant 0 : index
    %275 = vector.load %arg18[%274, %c0_109, %c0_110] : memref<32x8x128xf32, #tpu.memory_space<vmem>>, vector<1x8x128xf32>
    %276 = vector.shape_cast %275 : vector<1x8x128xf32> to vector<8x128xf32>
    %277 = arith.truncf %269 : vector<8x128xf32> to vector<8x128xbf16>
    %cst_111 = arith.constant dense<0.000000e+00> : vector<8x128xf32>
    %278 = tpu.matmul %277, %8, %cst_111 {dimension_numbers = #tpu.dot_dimension_numbers<[1], [0], [0], [1], [0, 0, 1, 1], [], []>} : vector<8x128xbf16>, vector<128x128xbf16>, vector<8x128xf32> -> vector<8x128xf32>
    %279 = arith.addf %276, %278 : vector<8x128xf32>
    %280 = arith.negf %279 : vector<8x128xf32>
    %281 = math.exp %280 : vector<8x128xf32>
    %cst_112 = arith.constant 1.000000e+00 : f32
    %282 = vector.broadcast %cst_112 : f32 to vector<8x128xf32>
    %283 = arith.addf %282, %281 : vector<8x128xf32>
    %284 = arith.divf %282, %283 : vector<8x128xf32>
    %285 = math.tanh %279 : vector<8x128xf32>
    %c64_i32_113 = arith.constant 64 : i32
    %286 = tpu.dynamic_rotate %284 by %c64_i32_113 dim 1 : vector<8x128xf32>, i32 -> vector<8x128xf32>
    %c32_i32_114 = arith.constant 32 : i32
    %287 = tpu.dynamic_rotate %284 by %c32_i32_114 dim 1 : vector<8x128xf32>, i32 -> vector<8x128xf32>
    %c96_i32_115 = arith.constant 96 : i32
    %288 = tpu.dynamic_rotate %284 by %c96_i32_115 dim 1 : vector<8x128xf32>, i32 -> vector<8x128xf32>
    %289 = arith.mulf %287, %267 : vector<8x128xf32>
    %290 = arith.mulf %286, %285 : vector<8x128xf32>
    %291 = arith.addf %289, %290 : vector<8x128xf32>
    %292 = math.tanh %291 : vector<8x128xf32>
    %293 = arith.mulf %288, %292 : vector<8x128xf32>
    %294 = arith.index_cast %c11_i32 : i32 to index
    %c0_116 = arith.constant 0 : index
    %c0_117 = arith.constant 0 : index
    %295 = vector.load %arg19[%294, %c0_116, %c0_117] : memref<32x8x128xf32, #tpu.memory_space<vmem>>, vector<1x8x128xf32>
    %296 = vector.shape_cast %295 : vector<1x8x128xf32> to vector<8x128xf32>
    %297 = vector.shape_cast %293 : vector<8x128xf32> to vector<1x8x128xf32>
    tpu.vector_store %arg19[%294, %c0_116, %c0_117], %297 {strides = array<i32>} : memref<32x8x128xf32, #tpu.memory_space<vmem>>, vector<1x8x128xf32>,
    %c12_i32 = arith.constant 12 : i32
    %298 = arith.index_cast %c12_i32 : i32 to index
    %c0_118 = arith.constant 0 : index
    %c0_119 = arith.constant 0 : index
    %299 = vector.load %arg18[%298, %c0_118, %c0_119] : memref<32x8x128xf32, #tpu.memory_space<vmem>>, vector<1x8x128xf32>
    %300 = vector.shape_cast %299 : vector<1x8x128xf32> to vector<8x128xf32>
    %301 = arith.truncf %293 : vector<8x128xf32> to vector<8x128xbf16>
    %cst_120 = arith.constant dense<0.000000e+00> : vector<8x128xf32>
    %302 = tpu.matmul %301, %8, %cst_120 {dimension_numbers = #tpu.dot_dimension_numbers<[1], [0], [0], [1], [0, 0, 1, 1], [], []>} : vector<8x128xbf16>, vector<128x128xbf16>, vector<8x128xf32> -> vector<8x128xf32>
    %303 = arith.addf %300, %302 : vector<8x128xf32>
    %304 = arith.negf %303 : vector<8x128xf32>
    %305 = math.exp %304 : vector<8x128xf32>
    %cst_121 = arith.constant 1.000000e+00 : f32
    %306 = vector.broadcast %cst_121 : f32 to vector<8x128xf32>
    %307 = arith.addf %306, %305 : vector<8x128xf32>
    %308 = arith.divf %306, %307 : vector<8x128xf32>
    %309 = math.tanh %303 : vector<8x128xf32>
    %c64_i32_122 = arith.constant 64 : i32
    %310 = tpu.dynamic_rotate %308 by %c64_i32_122 dim 1 : vector<8x128xf32>, i32 -> vector<8x128xf32>
    %c32_i32_123 = arith.constant 32 : i32
    %311 = tpu.dynamic_rotate %308 by %c32_i32_123 dim 1 : vector<8x128xf32>, i32 -> vector<8x128xf32>
    %c96_i32_124 = arith.constant 96 : i32
    %312 = tpu.dynamic_rotate %308 by %c96_i32_124 dim 1 : vector<8x128xf32>, i32 -> vector<8x128xf32>
    %313 = arith.mulf %311, %291 : vector<8x128xf32>
    %314 = arith.mulf %310, %309 : vector<8x128xf32>
    %315 = arith.addf %313, %314 : vector<8x128xf32>
    %316 = math.tanh %315 : vector<8x128xf32>
    %317 = arith.mulf %312, %316 : vector<8x128xf32>
    %318 = arith.index_cast %c12_i32 : i32 to index
    %c0_125 = arith.constant 0 : index
    %c0_126 = arith.constant 0 : index
    %319 = vector.load %arg19[%318, %c0_125, %c0_126] : memref<32x8x128xf32, #tpu.memory_space<vmem>>, vector<1x8x128xf32>
    %320 = vector.shape_cast %319 : vector<1x8x128xf32> to vector<8x128xf32>
    %321 = vector.shape_cast %317 : vector<8x128xf32> to vector<1x8x128xf32>
    tpu.vector_store %arg19[%318, %c0_125, %c0_126], %321 {strides = array<i32>} : memref<32x8x128xf32, #tpu.memory_space<vmem>>, vector<1x8x128xf32>,
    %c13_i32 = arith.constant 13 : i32
    %322 = arith.index_cast %c13_i32 : i32 to index
    %c0_127 = arith.constant 0 : index
    %c0_128 = arith.constant 0 : index
    %323 = vector.load %arg18[%322, %c0_127, %c0_128] : memref<32x8x128xf32, #tpu.memory_space<vmem>>, vector<1x8x128xf32>
    %324 = vector.shape_cast %323 : vector<1x8x128xf32> to vector<8x128xf32>
    %325 = arith.truncf %317 : vector<8x128xf32> to vector<8x128xbf16>
    %cst_129 = arith.constant dense<0.000000e+00> : vector<8x128xf32>
    %326 = tpu.matmul %325, %8, %cst_129 {dimension_numbers = #tpu.dot_dimension_numbers<[1], [0], [0], [1], [0, 0, 1, 1], [], []>} : vector<8x128xbf16>, vector<128x128xbf16>, vector<8x128xf32> -> vector<8x128xf32>
    %327 = arith.addf %324, %326 : vector<8x128xf32>
    %328 = arith.negf %327 : vector<8x128xf32>
    %329 = math.exp %328 : vector<8x128xf32>
    %cst_130 = arith.constant 1.000000e+00 : f32
    %330 = vector.broadcast %cst_130 : f32 to vector<8x128xf32>
    %331 = arith.addf %330, %329 : vector<8x128xf32>
    %332 = arith.divf %330, %331 : vector<8x128xf32>
    %333 = math.tanh %327 : vector<8x128xf32>
    %c64_i32_131 = arith.constant 64 : i32
    %334 = tpu.dynamic_rotate %332 by %c64_i32_131 dim 1 : vector<8x128xf32>, i32 -> vector<8x128xf32>
    %c32_i32_132 = arith.constant 32 : i32
    %335 = tpu.dynamic_rotate %332 by %c32_i32_132 dim 1 : vector<8x128xf32>, i32 -> vector<8x128xf32>
    %c96_i32_133 = arith.constant 96 : i32
    %336 = tpu.dynamic_rotate %332 by %c96_i32_133 dim 1 : vector<8x128xf32>, i32 -> vector<8x128xf32>
    %337 = arith.mulf %335, %315 : vector<8x128xf32>
    %338 = arith.mulf %334, %333 : vector<8x128xf32>
    %339 = arith.addf %337, %338 : vector<8x128xf32>
    %340 = math.tanh %339 : vector<8x128xf32>
    %341 = arith.mulf %336, %340 : vector<8x128xf32>
    %342 = arith.index_cast %c13_i32 : i32 to index
    %c0_134 = arith.constant 0 : index
    %c0_135 = arith.constant 0 : index
    %343 = vector.load %arg19[%342, %c0_134, %c0_135] : memref<32x8x128xf32, #tpu.memory_space<vmem>>, vector<1x8x128xf32>
    %344 = vector.shape_cast %343 : vector<1x8x128xf32> to vector<8x128xf32>
    %345 = vector.shape_cast %341 : vector<8x128xf32> to vector<1x8x128xf32>
    tpu.vector_store %arg19[%342, %c0_134, %c0_135], %345 {strides = array<i32>} : memref<32x8x128xf32, #tpu.memory_space<vmem>>, vector<1x8x128xf32>,
    %c14_i32 = arith.constant 14 : i32
    %346 = arith.index_cast %c14_i32 : i32 to index
    %c0_136 = arith.constant 0 : index
    %c0_137 = arith.constant 0 : index
    %347 = vector.load %arg18[%346, %c0_136, %c0_137] : memref<32x8x128xf32, #tpu.memory_space<vmem>>, vector<1x8x128xf32>
    %348 = vector.shape_cast %347 : vector<1x8x128xf32> to vector<8x128xf32>
    %349 = arith.truncf %341 : vector<8x128xf32> to vector<8x128xbf16>
    %cst_138 = arith.constant dense<0.000000e+00> : vector<8x128xf32>
    %350 = tpu.matmul %349, %8, %cst_138 {dimension_numbers = #tpu.dot_dimension_numbers<[1], [0], [0], [1], [0, 0, 1, 1], [], []>} : vector<8x128xbf16>, vector<128x128xbf16>, vector<8x128xf32> -> vector<8x128xf32>
    %351 = arith.addf %348, %350 : vector<8x128xf32>
    %352 = arith.negf %351 : vector<8x128xf32>
    %353 = math.exp %352 : vector<8x128xf32>
    %cst_139 = arith.constant 1.000000e+00 : f32
    %354 = vector.broadcast %cst_139 : f32 to vector<8x128xf32>
    %355 = arith.addf %354, %353 : vector<8x128xf32>
    %356 = arith.divf %354, %355 : vector<8x128xf32>
    %357 = math.tanh %351 : vector<8x128xf32>
    %c64_i32_140 = arith.constant 64 : i32
    %358 = tpu.dynamic_rotate %356 by %c64_i32_140 dim 1 : vector<8x128xf32>, i32 -> vector<8x128xf32>
    %c32_i32_141 = arith.constant 32 : i32
    %359 = tpu.dynamic_rotate %356 by %c32_i32_141 dim 1 : vector<8x128xf32>, i32 -> vector<8x128xf32>
    %c96_i32_142 = arith.constant 96 : i32
    %360 = tpu.dynamic_rotate %356 by %c96_i32_142 dim 1 : vector<8x128xf32>, i32 -> vector<8x128xf32>
    %361 = arith.mulf %359, %339 : vector<8x128xf32>
    %362 = arith.mulf %358, %357 : vector<8x128xf32>
    %363 = arith.addf %361, %362 : vector<8x128xf32>
    %364 = math.tanh %363 : vector<8x128xf32>
    %365 = arith.mulf %360, %364 : vector<8x128xf32>
    %366 = arith.index_cast %c14_i32 : i32 to index
    %c0_143 = arith.constant 0 : index
    %c0_144 = arith.constant 0 : index
    %367 = vector.load %arg19[%366, %c0_143, %c0_144] : memref<32x8x128xf32, #tpu.memory_space<vmem>>, vector<1x8x128xf32>
    %368 = vector.shape_cast %367 : vector<1x8x128xf32> to vector<8x128xf32>
    %369 = vector.shape_cast %365 : vector<8x128xf32> to vector<1x8x128xf32>
    tpu.vector_store %arg19[%366, %c0_143, %c0_144], %369 {strides = array<i32>} : memref<32x8x128xf32, #tpu.memory_space<vmem>>, vector<1x8x128xf32>,
    %c15_i32 = arith.constant 15 : i32
    %370 = arith.index_cast %c15_i32 : i32 to index
    %c0_145 = arith.constant 0 : index
    %c0_146 = arith.constant 0 : index
    %371 = vector.load %arg18[%370, %c0_145, %c0_146] : memref<32x8x128xf32, #tpu.memory_space<vmem>>, vector<1x8x128xf32>
    %372 = vector.shape_cast %371 : vector<1x8x128xf32> to vector<8x128xf32>
    %373 = arith.truncf %365 : vector<8x128xf32> to vector<8x128xbf16>
    %cst_147 = arith.constant dense<0.000000e+00> : vector<8x128xf32>
    %374 = tpu.matmul %373, %8, %cst_147 {dimension_numbers = #tpu.dot_dimension_numbers<[1], [0], [0], [1], [0, 0, 1, 1], [], []>} : vector<8x128xbf16>, vector<128x128xbf16>, vector<8x128xf32> -> vector<8x128xf32>
    %375 = arith.addf %372, %374 : vector<8x128xf32>
    %376 = arith.negf %375 : vector<8x128xf32>
    %377 = math.exp %376 : vector<8x128xf32>
    %cst_148 = arith.constant 1.000000e+00 : f32
    %378 = vector.broadcast %cst_148 : f32 to vector<8x128xf32>
    %379 = arith.addf %378, %377 : vector<8x128xf32>
    %380 = arith.divf %378, %379 : vector<8x128xf32>
    %381 = math.tanh %375 : vector<8x128xf32>
    %c64_i32_149 = arith.constant 64 : i32
    %382 = tpu.dynamic_rotate %380 by %c64_i32_149 dim 1 : vector<8x128xf32>, i32 -> vector<8x128xf32>
    %c32_i32_150 = arith.constant 32 : i32
    %383 = tpu.dynamic_rotate %380 by %c32_i32_150 dim 1 : vector<8x128xf32>, i32 -> vector<8x128xf32>
    %c96_i32_151 = arith.constant 96 : i32
    %384 = tpu.dynamic_rotate %380 by %c96_i32_151 dim 1 : vector<8x128xf32>, i32 -> vector<8x128xf32>
    %385 = arith.mulf %383, %363 : vector<8x128xf32>
    %386 = arith.mulf %382, %381 : vector<8x128xf32>
    %387 = arith.addf %385, %386 : vector<8x128xf32>
    %388 = math.tanh %387 : vector<8x128xf32>
    %389 = arith.mulf %384, %388 : vector<8x128xf32>
    %390 = arith.index_cast %c15_i32 : i32 to index
    %c0_152 = arith.constant 0 : index
    %c0_153 = arith.constant 0 : index
    %391 = vector.load %arg19[%390, %c0_152, %c0_153] : memref<32x8x128xf32, #tpu.memory_space<vmem>>, vector<1x8x128xf32>
    %392 = vector.shape_cast %391 : vector<1x8x128xf32> to vector<8x128xf32>
    %393 = vector.shape_cast %389 : vector<8x128xf32> to vector<1x8x128xf32>
    tpu.vector_store %arg19[%390, %c0_152, %c0_153], %393 {strides = array<i32>} : memref<32x8x128xf32, #tpu.memory_space<vmem>>, vector<1x8x128xf32>,
    %c16_i32 = arith.constant 16 : i32
    %394 = arith.index_cast %c16_i32 : i32 to index
    %c0_154 = arith.constant 0 : index
    %c0_155 = arith.constant 0 : index
    %395 = vector.load %arg18[%394, %c0_154, %c0_155] : memref<32x8x128xf32, #tpu.memory_space<vmem>>, vector<1x8x128xf32>
    %396 = vector.shape_cast %395 : vector<1x8x128xf32> to vector<8x128xf32>
    %397 = arith.truncf %389 : vector<8x128xf32> to vector<8x128xbf16>
    %cst_156 = arith.constant dense<0.000000e+00> : vector<8x128xf32>
    %398 = tpu.matmul %397, %8, %cst_156 {dimension_numbers = #tpu.dot_dimension_numbers<[1], [0], [0], [1], [0, 0, 1, 1], [], []>} : vector<8x128xbf16>, vector<128x128xbf16>, vector<8x128xf32> -> vector<8x128xf32>
    %399 = arith.addf %396, %398 : vector<8x128xf32>
    %400 = arith.negf %399 : vector<8x128xf32>
    %401 = math.exp %400 : vector<8x128xf32>
    %cst_157 = arith.constant 1.000000e+00 : f32
    %402 = vector.broadcast %cst_157 : f32 to vector<8x128xf32>
    %403 = arith.addf %402, %401 : vector<8x128xf32>
    %404 = arith.divf %402, %403 : vector<8x128xf32>
    %405 = math.tanh %399 : vector<8x128xf32>
    %c64_i32_158 = arith.constant 64 : i32
    %406 = tpu.dynamic_rotate %404 by %c64_i32_158 dim 1 : vector<8x128xf32>, i32 -> vector<8x128xf32>
    %c32_i32_159 = arith.constant 32 : i32
    %407 = tpu.dynamic_rotate %404 by %c32_i32_159 dim 1 : vector<8x128xf32>, i32 -> vector<8x128xf32>
    %c96_i32_160 = arith.constant 96 : i32
    %408 = tpu.dynamic_rotate %404 by %c96_i32_160 dim 1 : vector<8x128xf32>, i32 -> vector<8x128xf32>
    %409 = arith.mulf %407, %387 : vector<8x128xf32>
    %410 = arith.mulf %406, %405 : vector<8x128xf32>
    %411 = arith.addf %409, %410 : vector<8x128xf32>
    %412 = math.tanh %411 : vector<8x128xf32>
    %413 = arith.mulf %408, %412 : vector<8x128xf32>
    %414 = arith.index_cast %c16_i32 : i32 to index
    %c0_161 = arith.constant 0 : index
    %c0_162 = arith.constant 0 : index
    %415 = vector.load %arg19[%414, %c0_161, %c0_162] : memref<32x8x128xf32, #tpu.memory_space<vmem>>, vector<1x8x128xf32>
    %416 = vector.shape_cast %415 : vector<1x8x128xf32> to vector<8x128xf32>
    %417 = vector.shape_cast %413 : vector<8x128xf32> to vector<1x8x128xf32>
    tpu.vector_store %arg19[%414, %c0_161, %c0_162], %417 {strides = array<i32>} : memref<32x8x128xf32, #tpu.memory_space<vmem>>, vector<1x8x128xf32>,
    %c17_i32 = arith.constant 17 : i32
    %418 = arith.index_cast %c17_i32 : i32 to index
    %c0_163 = arith.constant 0 : index
    %c0_164 = arith.constant 0 : index
    %419 = vector.load %arg18[%418, %c0_163, %c0_164] : memref<32x8x128xf32, #tpu.memory_space<vmem>>, vector<1x8x128xf32>
    %420 = vector.shape_cast %419 : vector<1x8x128xf32> to vector<8x128xf32>
    %421 = arith.truncf %413 : vector<8x128xf32> to vector<8x128xbf16>
    %cst_165 = arith.constant dense<0.000000e+00> : vector<8x128xf32>
    %422 = tpu.matmul %421, %8, %cst_165 {dimension_numbers = #tpu.dot_dimension_numbers<[1], [0], [0], [1], [0, 0, 1, 1], [], []>} : vector<8x128xbf16>, vector<128x128xbf16>, vector<8x128xf32> -> vector<8x128xf32>
    %423 = arith.addf %420, %422 : vector<8x128xf32>
    %424 = arith.negf %423 : vector<8x128xf32>
    %425 = math.exp %424 : vector<8x128xf32>
    %cst_166 = arith.constant 1.000000e+00 : f32
    %426 = vector.broadcast %cst_166 : f32 to vector<8x128xf32>
    %427 = arith.addf %426, %425 : vector<8x128xf32>
    %428 = arith.divf %426, %427 : vector<8x128xf32>
    %429 = math.tanh %423 : vector<8x128xf32>
    %c64_i32_167 = arith.constant 64 : i32
    %430 = tpu.dynamic_rotate %428 by %c64_i32_167 dim 1 : vector<8x128xf32>, i32 -> vector<8x128xf32>
    %c32_i32_168 = arith.constant 32 : i32
    %431 = tpu.dynamic_rotate %428 by %c32_i32_168 dim 1 : vector<8x128xf32>, i32 -> vector<8x128xf32>
    %c96_i32_169 = arith.constant 96 : i32
    %432 = tpu.dynamic_rotate %428 by %c96_i32_169 dim 1 : vector<8x128xf32>, i32 -> vector<8x128xf32>
    %433 = arith.mulf %431, %411 : vector<8x128xf32>
    %434 = arith.mulf %430, %429 : vector<8x128xf32>
    %435 = arith.addf %433, %434 : vector<8x128xf32>
    %436 = math.tanh %435 : vector<8x128xf32>
    %437 = arith.mulf %432, %436 : vector<8x128xf32>
    %438 = arith.index_cast %c17_i32 : i32 to index
    %c0_170 = arith.constant 0 : index
    %c0_171 = arith.constant 0 : index
    %439 = vector.load %arg19[%438, %c0_170, %c0_171] : memref<32x8x128xf32, #tpu.memory_space<vmem>>, vector<1x8x128xf32>
    %440 = vector.shape_cast %439 : vector<1x8x128xf32> to vector<8x128xf32>
    %441 = vector.shape_cast %437 : vector<8x128xf32> to vector<1x8x128xf32>
    tpu.vector_store %arg19[%438, %c0_170, %c0_171], %441 {strides = array<i32>} : memref<32x8x128xf32, #tpu.memory_space<vmem>>, vector<1x8x128xf32>,
    %c18_i32 = arith.constant 18 : i32
    %442 = arith.index_cast %c18_i32 : i32 to index
    %c0_172 = arith.constant 0 : index
    %c0_173 = arith.constant 0 : index
    %443 = vector.load %arg18[%442, %c0_172, %c0_173] : memref<32x8x128xf32, #tpu.memory_space<vmem>>, vector<1x8x128xf32>
    %444 = vector.shape_cast %443 : vector<1x8x128xf32> to vector<8x128xf32>
    %445 = arith.truncf %437 : vector<8x128xf32> to vector<8x128xbf16>
    %cst_174 = arith.constant dense<0.000000e+00> : vector<8x128xf32>
    %446 = tpu.matmul %445, %8, %cst_174 {dimension_numbers = #tpu.dot_dimension_numbers<[1], [0], [0], [1], [0, 0, 1, 1], [], []>} : vector<8x128xbf16>, vector<128x128xbf16>, vector<8x128xf32> -> vector<8x128xf32>
    %447 = arith.addf %444, %446 : vector<8x128xf32>
    %448 = arith.negf %447 : vector<8x128xf32>
    %449 = math.exp %448 : vector<8x128xf32>
    %cst_175 = arith.constant 1.000000e+00 : f32
    %450 = vector.broadcast %cst_175 : f32 to vector<8x128xf32>
    %451 = arith.addf %450, %449 : vector<8x128xf32>
    %452 = arith.divf %450, %451 : vector<8x128xf32>
    %453 = math.tanh %447 : vector<8x128xf32>
    %c64_i32_176 = arith.constant 64 : i32
    %454 = tpu.dynamic_rotate %452 by %c64_i32_176 dim 1 : vector<8x128xf32>, i32 -> vector<8x128xf32>
    %c32_i32_177 = arith.constant 32 : i32
    %455 = tpu.dynamic_rotate %452 by %c32_i32_177 dim 1 : vector<8x128xf32>, i32 -> vector<8x128xf32>
    %c96_i32_178 = arith.constant 96 : i32
    %456 = tpu.dynamic_rotate %452 by %c96_i32_178 dim 1 : vector<8x128xf32>, i32 -> vector<8x128xf32>
    %457 = arith.mulf %455, %435 : vector<8x128xf32>
    %458 = arith.mulf %454, %453 : vector<8x128xf32>
    %459 = arith.addf %457, %458 : vector<8x128xf32>
    %460 = math.tanh %459 : vector<8x128xf32>
    %461 = arith.mulf %456, %460 : vector<8x128xf32>
    %462 = arith.index_cast %c18_i32 : i32 to index
    %c0_179 = arith.constant 0 : index
    %c0_180 = arith.constant 0 : index
    %463 = vector.load %arg19[%462, %c0_179, %c0_180] : memref<32x8x128xf32, #tpu.memory_space<vmem>>, vector<1x8x128xf32>
    %464 = vector.shape_cast %463 : vector<1x8x128xf32> to vector<8x128xf32>
    %465 = vector.shape_cast %461 : vector<8x128xf32> to vector<1x8x128xf32>
    tpu.vector_store %arg19[%462, %c0_179, %c0_180], %465 {strides = array<i32>} : memref<32x8x128xf32, #tpu.memory_space<vmem>>, vector<1x8x128xf32>,
    %c19_i32 = arith.constant 19 : i32
    %466 = arith.index_cast %c19_i32 : i32 to index
    %c0_181 = arith.constant 0 : index
    %c0_182 = arith.constant 0 : index
    %467 = vector.load %arg18[%466, %c0_181, %c0_182] : memref<32x8x128xf32, #tpu.memory_space<vmem>>, vector<1x8x128xf32>
    %468 = vector.shape_cast %467 : vector<1x8x128xf32> to vector<8x128xf32>
    %469 = arith.truncf %461 : vector<8x128xf32> to vector<8x128xbf16>
    %cst_183 = arith.constant dense<0.000000e+00> : vector<8x128xf32>
    %470 = tpu.matmul %469, %8, %cst_183 {dimension_numbers = #tpu.dot_dimension_numbers<[1], [0], [0], [1], [0, 0, 1, 1], [], []>} : vector<8x128xbf16>, vector<128x128xbf16>, vector<8x128xf32> -> vector<8x128xf32>
    %471 = arith.addf %468, %470 : vector<8x128xf32>
    %472 = arith.negf %471 : vector<8x128xf32>
    %473 = math.exp %472 : vector<8x128xf32>
    %cst_184 = arith.constant 1.000000e+00 : f32
    %474 = vector.broadcast %cst_184 : f32 to vector<8x128xf32>
    %475 = arith.addf %474, %473 : vector<8x128xf32>
    %476 = arith.divf %474, %475 : vector<8x128xf32>
    %477 = math.tanh %471 : vector<8x128xf32>
    %c64_i32_185 = arith.constant 64 : i32
    %478 = tpu.dynamic_rotate %476 by %c64_i32_185 dim 1 : vector<8x128xf32>, i32 -> vector<8x128xf32>
    %c32_i32_186 = arith.constant 32 : i32
    %479 = tpu.dynamic_rotate %476 by %c32_i32_186 dim 1 : vector<8x128xf32>, i32 -> vector<8x128xf32>
    %c96_i32_187 = arith.constant 96 : i32
    %480 = tpu.dynamic_rotate %476 by %c96_i32_187 dim 1 : vector<8x128xf32>, i32 -> vector<8x128xf32>
    %481 = arith.mulf %479, %459 : vector<8x128xf32>
    %482 = arith.mulf %478, %477 : vector<8x128xf32>
    %483 = arith.addf %481, %482 : vector<8x128xf32>
    %484 = math.tanh %483 : vector<8x128xf32>
    %485 = arith.mulf %480, %484 : vector<8x128xf32>
    %486 = arith.index_cast %c19_i32 : i32 to index
    %c0_188 = arith.constant 0 : index
    %c0_189 = arith.constant 0 : index
    %487 = vector.load %arg19[%486, %c0_188, %c0_189] : memref<32x8x128xf32, #tpu.memory_space<vmem>>, vector<1x8x128xf32>
    %488 = vector.shape_cast %487 : vector<1x8x128xf32> to vector<8x128xf32>
    %489 = vector.shape_cast %485 : vector<8x128xf32> to vector<1x8x128xf32>
    tpu.vector_store %arg19[%486, %c0_188, %c0_189], %489 {strides = array<i32>} : memref<32x8x128xf32, #tpu.memory_space<vmem>>, vector<1x8x128xf32>,
    %c20_i32 = arith.constant 20 : i32
    %490 = arith.index_cast %c20_i32 : i32 to index
    %c0_190 = arith.constant 0 : index
    %c0_191 = arith.constant 0 : index
    %491 = vector.load %arg18[%490, %c0_190, %c0_191] : memref<32x8x128xf32, #tpu.memory_space<vmem>>, vector<1x8x128xf32>
    %492 = vector.shape_cast %491 : vector<1x8x128xf32> to vector<8x128xf32>
    %493 = arith.truncf %485 : vector<8x128xf32> to vector<8x128xbf16>
    %cst_192 = arith.constant dense<0.000000e+00> : vector<8x128xf32>
    %494 = tpu.matmul %493, %8, %cst_192 {dimension_numbers = #tpu.dot_dimension_numbers<[1], [0], [0], [1], [0, 0, 1, 1], [], []>} : vector<8x128xbf16>, vector<128x128xbf16>, vector<8x128xf32> -> vector<8x128xf32>
    %495 = arith.addf %492, %494 : vector<8x128xf32>
    %496 = arith.negf %495 : vector<8x128xf32>
    %497 = math.exp %496 : vector<8x128xf32>
    %cst_193 = arith.constant 1.000000e+00 : f32
    %498 = vector.broadcast %cst_193 : f32 to vector<8x128xf32>
    %499 = arith.addf %498, %497 : vector<8x128xf32>
    %500 = arith.divf %498, %499 : vector<8x128xf32>
    %501 = math.tanh %495 : vector<8x128xf32>
    %c64_i32_194 = arith.constant 64 : i32
    %502 = tpu.dynamic_rotate %500 by %c64_i32_194 dim 1 : vector<8x128xf32>, i32 -> vector<8x128xf32>
    %c32_i32_195 = arith.constant 32 : i32
    %503 = tpu.dynamic_rotate %500 by %c32_i32_195 dim 1 : vector<8x128xf32>, i32 -> vector<8x128xf32>
    %c96_i32_196 = arith.constant 96 : i32
    %504 = tpu.dynamic_rotate %500 by %c96_i32_196 dim 1 : vector<8x128xf32>, i32 -> vector<8x128xf32>
    %505 = arith.mulf %503, %483 : vector<8x128xf32>
    %506 = arith.mulf %502, %501 : vector<8x128xf32>
    %507 = arith.addf %505, %506 : vector<8x128xf32>
    %508 = math.tanh %507 : vector<8x128xf32>
    %509 = arith.mulf %504, %508 : vector<8x128xf32>
    %510 = arith.index_cast %c20_i32 : i32 to index
    %c0_197 = arith.constant 0 : index
    %c0_198 = arith.constant 0 : index
    %511 = vector.load %arg19[%510, %c0_197, %c0_198] : memref<32x8x128xf32, #tpu.memory_space<vmem>>, vector<1x8x128xf32>
    %512 = vector.shape_cast %511 : vector<1x8x128xf32> to vector<8x128xf32>
    %513 = vector.shape_cast %509 : vector<8x128xf32> to vector<1x8x128xf32>
    tpu.vector_store %arg19[%510, %c0_197, %c0_198], %513 {strides = array<i32>} : memref<32x8x128xf32, #tpu.memory_space<vmem>>, vector<1x8x128xf32>,
    %c21_i32 = arith.constant 21 : i32
    %514 = arith.index_cast %c21_i32 : i32 to index
    %c0_199 = arith.constant 0 : index
    %c0_200 = arith.constant 0 : index
    %515 = vector.load %arg18[%514, %c0_199, %c0_200] : memref<32x8x128xf32, #tpu.memory_space<vmem>>, vector<1x8x128xf32>
    %516 = vector.shape_cast %515 : vector<1x8x128xf32> to vector<8x128xf32>
    %517 = arith.truncf %509 : vector<8x128xf32> to vector<8x128xbf16>
    %cst_201 = arith.constant dense<0.000000e+00> : vector<8x128xf32>
    %518 = tpu.matmul %517, %8, %cst_201 {dimension_numbers = #tpu.dot_dimension_numbers<[1], [0], [0], [1], [0, 0, 1, 1], [], []>} : vector<8x128xbf16>, vector<128x128xbf16>, vector<8x128xf32> -> vector<8x128xf32>
    %519 = arith.addf %516, %518 : vector<8x128xf32>
    %520 = arith.negf %519 : vector<8x128xf32>
    %521 = math.exp %520 : vector<8x128xf32>
    %cst_202 = arith.constant 1.000000e+00 : f32
    %522 = vector.broadcast %cst_202 : f32 to vector<8x128xf32>
    %523 = arith.addf %522, %521 : vector<8x128xf32>
    %524 = arith.divf %522, %523 : vector<8x128xf32>
    %525 = math.tanh %519 : vector<8x128xf32>
    %c64_i32_203 = arith.constant 64 : i32
    %526 = tpu.dynamic_rotate %524 by %c64_i32_203 dim 1 : vector<8x128xf32>, i32 -> vector<8x128xf32>
    %c32_i32_204 = arith.constant 32 : i32
    %527 = tpu.dynamic_rotate %524 by %c32_i32_204 dim 1 : vector<8x128xf32>, i32 -> vector<8x128xf32>
    %c96_i32_205 = arith.constant 96 : i32
    %528 = tpu.dynamic_rotate %524 by %c96_i32_205 dim 1 : vector<8x128xf32>, i32 -> vector<8x128xf32>
    %529 = arith.mulf %527, %507 : vector<8x128xf32>
    %530 = arith.mulf %526, %525 : vector<8x128xf32>
    %531 = arith.addf %529, %530 : vector<8x128xf32>
    %532 = math.tanh %531 : vector<8x128xf32>
    %533 = arith.mulf %528, %532 : vector<8x128xf32>
    %534 = arith.index_cast %c21_i32 : i32 to index
    %c0_206 = arith.constant 0 : index
    %c0_207 = arith.constant 0 : index
    %535 = vector.load %arg19[%534, %c0_206, %c0_207] : memref<32x8x128xf32, #tpu.memory_space<vmem>>, vector<1x8x128xf32>
    %536 = vector.shape_cast %535 : vector<1x8x128xf32> to vector<8x128xf32>
    %537 = vector.shape_cast %533 : vector<8x128xf32> to vector<1x8x128xf32>
    tpu.vector_store %arg19[%534, %c0_206, %c0_207], %537 {strides = array<i32>} : memref<32x8x128xf32, #tpu.memory_space<vmem>>, vector<1x8x128xf32>,
    %c22_i32 = arith.constant 22 : i32
    %538 = arith.index_cast %c22_i32 : i32 to index
    %c0_208 = arith.constant 0 : index
    %c0_209 = arith.constant 0 : index
    %539 = vector.load %arg18[%538, %c0_208, %c0_209] : memref<32x8x128xf32, #tpu.memory_space<vmem>>, vector<1x8x128xf32>
    %540 = vector.shape_cast %539 : vector<1x8x128xf32> to vector<8x128xf32>
    %541 = arith.truncf %533 : vector<8x128xf32> to vector<8x128xbf16>
    %cst_210 = arith.constant dense<0.000000e+00> : vector<8x128xf32>
    %542 = tpu.matmul %541, %8, %cst_210 {dimension_numbers = #tpu.dot_dimension_numbers<[1], [0], [0], [1], [0, 0, 1, 1], [], []>} : vector<8x128xbf16>, vector<128x128xbf16>, vector<8x128xf32> -> vector<8x128xf32>
    %543 = arith.addf %540, %542 : vector<8x128xf32>
    %544 = arith.negf %543 : vector<8x128xf32>
    %545 = math.exp %544 : vector<8x128xf32>
    %cst_211 = arith.constant 1.000000e+00 : f32
    %546 = vector.broadcast %cst_211 : f32 to vector<8x128xf32>
    %547 = arith.addf %546, %545 : vector<8x128xf32>
    %548 = arith.divf %546, %547 : vector<8x128xf32>
    %549 = math.tanh %543 : vector<8x128xf32>
    %c64_i32_212 = arith.constant 64 : i32
    %550 = tpu.dynamic_rotate %548 by %c64_i32_212 dim 1 : vector<8x128xf32>, i32 -> vector<8x128xf32>
    %c32_i32_213 = arith.constant 32 : i32
    %551 = tpu.dynamic_rotate %548 by %c32_i32_213 dim 1 : vector<8x128xf32>, i32 -> vector<8x128xf32>
    %c96_i32_214 = arith.constant 96 : i32
    %552 = tpu.dynamic_rotate %548 by %c96_i32_214 dim 1 : vector<8x128xf32>, i32 -> vector<8x128xf32>
    %553 = arith.mulf %551, %531 : vector<8x128xf32>
    %554 = arith.mulf %550, %549 : vector<8x128xf32>
    %555 = arith.addf %553, %554 : vector<8x128xf32>
    %556 = math.tanh %555 : vector<8x128xf32>
    %557 = arith.mulf %552, %556 : vector<8x128xf32>
    %558 = arith.index_cast %c22_i32 : i32 to index
    %c0_215 = arith.constant 0 : index
    %c0_216 = arith.constant 0 : index
    %559 = vector.load %arg19[%558, %c0_215, %c0_216] : memref<32x8x128xf32, #tpu.memory_space<vmem>>, vector<1x8x128xf32>
    %560 = vector.shape_cast %559 : vector<1x8x128xf32> to vector<8x128xf32>
    %561 = vector.shape_cast %557 : vector<8x128xf32> to vector<1x8x128xf32>
    tpu.vector_store %arg19[%558, %c0_215, %c0_216], %561 {strides = array<i32>} : memref<32x8x128xf32, #tpu.memory_space<vmem>>, vector<1x8x128xf32>,
    %c23_i32 = arith.constant 23 : i32
    %562 = arith.index_cast %c23_i32 : i32 to index
    %c0_217 = arith.constant 0 : index
    %c0_218 = arith.constant 0 : index
    %563 = vector.load %arg18[%562, %c0_217, %c0_218] : memref<32x8x128xf32, #tpu.memory_space<vmem>>, vector<1x8x128xf32>
    %564 = vector.shape_cast %563 : vector<1x8x128xf32> to vector<8x128xf32>
    %565 = arith.truncf %557 : vector<8x128xf32> to vector<8x128xbf16>
    %cst_219 = arith.constant dense<0.000000e+00> : vector<8x128xf32>
    %566 = tpu.matmul %565, %8, %cst_219 {dimension_numbers = #tpu.dot_dimension_numbers<[1], [0], [0], [1], [0, 0, 1, 1], [], []>} : vector<8x128xbf16>, vector<128x128xbf16>, vector<8x128xf32> -> vector<8x128xf32>
    %567 = arith.addf %564, %566 : vector<8x128xf32>
    %568 = arith.negf %567 : vector<8x128xf32>
    %569 = math.exp %568 : vector<8x128xf32>
    %cst_220 = arith.constant 1.000000e+00 : f32
    %570 = vector.broadcast %cst_220 : f32 to vector<8x128xf32>
    %571 = arith.addf %570, %569 : vector<8x128xf32>
    %572 = arith.divf %570, %571 : vector<8x128xf32>
    %573 = math.tanh %567 : vector<8x128xf32>
    %c64_i32_221 = arith.constant 64 : i32
    %574 = tpu.dynamic_rotate %572 by %c64_i32_221 dim 1 : vector<8x128xf32>, i32 -> vector<8x128xf32>
    %c32_i32_222 = arith.constant 32 : i32
    %575 = tpu.dynamic_rotate %572 by %c32_i32_222 dim 1 : vector<8x128xf32>, i32 -> vector<8x128xf32>
    %c96_i32_223 = arith.constant 96 : i32
    %576 = tpu.dynamic_rotate %572 by %c96_i32_223 dim 1 : vector<8x128xf32>, i32 -> vector<8x128xf32>
    %577 = arith.mulf %575, %555 : vector<8x128xf32>
    %578 = arith.mulf %574, %573 : vector<8x128xf32>
    %579 = arith.addf %577, %578 : vector<8x128xf32>
    %580 = math.tanh %579 : vector<8x128xf32>
    %581 = arith.mulf %576, %580 : vector<8x128xf32>
    %582 = arith.index_cast %c23_i32 : i32 to index
    %c0_224 = arith.constant 0 : index
    %c0_225 = arith.constant 0 : index
    %583 = vector.load %arg19[%582, %c0_224, %c0_225] : memref<32x8x128xf32, #tpu.memory_space<vmem>>, vector<1x8x128xf32>
    %584 = vector.shape_cast %583 : vector<1x8x128xf32> to vector<8x128xf32>
    %585 = vector.shape_cast %581 : vector<8x128xf32> to vector<1x8x128xf32>
    tpu.vector_store %arg19[%582, %c0_224, %c0_225], %585 {strides = array<i32>} : memref<32x8x128xf32, #tpu.memory_space<vmem>>, vector<1x8x128xf32>,
    %c24_i32 = arith.constant 24 : i32
    %586 = arith.index_cast %c24_i32 : i32 to index
    %c0_226 = arith.constant 0 : index
    %c0_227 = arith.constant 0 : index
    %587 = vector.load %arg18[%586, %c0_226, %c0_227] : memref<32x8x128xf32, #tpu.memory_space<vmem>>, vector<1x8x128xf32>
    %588 = vector.shape_cast %587 : vector<1x8x128xf32> to vector<8x128xf32>
    %589 = arith.truncf %581 : vector<8x128xf32> to vector<8x128xbf16>
    %cst_228 = arith.constant dense<0.000000e+00> : vector<8x128xf32>
    %590 = tpu.matmul %589, %8, %cst_228 {dimension_numbers = #tpu.dot_dimension_numbers<[1], [0], [0], [1], [0, 0, 1, 1], [], []>} : vector<8x128xbf16>, vector<128x128xbf16>, vector<8x128xf32> -> vector<8x128xf32>
    %591 = arith.addf %588, %590 : vector<8x128xf32>
    %592 = arith.negf %591 : vector<8x128xf32>
    %593 = math.exp %592 : vector<8x128xf32>
    %cst_229 = arith.constant 1.000000e+00 : f32
    %594 = vector.broadcast %cst_229 : f32 to vector<8x128xf32>
    %595 = arith.addf %594, %593 : vector<8x128xf32>
    %596 = arith.divf %594, %595 : vector<8x128xf32>
    %597 = math.tanh %591 : vector<8x128xf32>
    %c64_i32_230 = arith.constant 64 : i32
    %598 = tpu.dynamic_rotate %596 by %c64_i32_230 dim 1 : vector<8x128xf32>, i32 -> vector<8x128xf32>
    %c32_i32_231 = arith.constant 32 : i32
    %599 = tpu.dynamic_rotate %596 by %c32_i32_231 dim 1 : vector<8x128xf32>, i32 -> vector<8x128xf32>
    %c96_i32_232 = arith.constant 96 : i32
    %600 = tpu.dynamic_rotate %596 by %c96_i32_232 dim 1 : vector<8x128xf32>, i32 -> vector<8x128xf32>
    %601 = arith.mulf %599, %579 : vector<8x128xf32>
    %602 = arith.mulf %598, %597 : vector<8x128xf32>
    %603 = arith.addf %601, %602 : vector<8x128xf32>
    %604 = math.tanh %603 : vector<8x128xf32>
    %605 = arith.mulf %600, %604 : vector<8x128xf32>
    %606 = arith.index_cast %c24_i32 : i32 to index
    %c0_233 = arith.constant 0 : index
    %c0_234 = arith.constant 0 : index
    %607 = vector.load %arg19[%606, %c0_233, %c0_234] : memref<32x8x128xf32, #tpu.memory_space<vmem>>, vector<1x8x128xf32>
    %608 = vector.shape_cast %607 : vector<1x8x128xf32> to vector<8x128xf32>
    %609 = vector.shape_cast %605 : vector<8x128xf32> to vector<1x8x128xf32>
    tpu.vector_store %arg19[%606, %c0_233, %c0_234], %609 {strides = array<i32>} : memref<32x8x128xf32, #tpu.memory_space<vmem>>, vector<1x8x128xf32>,
    %c25_i32 = arith.constant 25 : i32
    %610 = arith.index_cast %c25_i32 : i32 to index
    %c0_235 = arith.constant 0 : index
    %c0_236 = arith.constant 0 : index
    %611 = vector.load %arg18[%610, %c0_235, %c0_236] : memref<32x8x128xf32, #tpu.memory_space<vmem>>, vector<1x8x128xf32>
    %612 = vector.shape_cast %611 : vector<1x8x128xf32> to vector<8x128xf32>
    %613 = arith.truncf %605 : vector<8x128xf32> to vector<8x128xbf16>
    %cst_237 = arith.constant dense<0.000000e+00> : vector<8x128xf32>
    %614 = tpu.matmul %613, %8, %cst_237 {dimension_numbers = #tpu.dot_dimension_numbers<[1], [0], [0], [1], [0, 0, 1, 1], [], []>} : vector<8x128xbf16>, vector<128x128xbf16>, vector<8x128xf32> -> vector<8x128xf32>
    %615 = arith.addf %612, %614 : vector<8x128xf32>
    %616 = arith.negf %615 : vector<8x128xf32>
    %617 = math.exp %616 : vector<8x128xf32>
    %cst_238 = arith.constant 1.000000e+00 : f32
    %618 = vector.broadcast %cst_238 : f32 to vector<8x128xf32>
    %619 = arith.addf %618, %617 : vector<8x128xf32>
    %620 = arith.divf %618, %619 : vector<8x128xf32>
    %621 = math.tanh %615 : vector<8x128xf32>
    %c64_i32_239 = arith.constant 64 : i32
    %622 = tpu.dynamic_rotate %620 by %c64_i32_239 dim 1 : vector<8x128xf32>, i32 -> vector<8x128xf32>
    %c32_i32_240 = arith.constant 32 : i32
    %623 = tpu.dynamic_rotate %620 by %c32_i32_240 dim 1 : vector<8x128xf32>, i32 -> vector<8x128xf32>
    %c96_i32_241 = arith.constant 96 : i32
    %624 = tpu.dynamic_rotate %620 by %c96_i32_241 dim 1 : vector<8x128xf32>, i32 -> vector<8x128xf32>
    %625 = arith.mulf %623, %603 : vector<8x128xf32>
    %626 = arith.mulf %622, %621 : vector<8x128xf32>
    %627 = arith.addf %625, %626 : vector<8x128xf32>
    %628 = math.tanh %627 : vector<8x128xf32>
    %629 = arith.mulf %624, %628 : vector<8x128xf32>
    %630 = arith.index_cast %c25_i32 : i32 to index
    %c0_242 = arith.constant 0 : index
    %c0_243 = arith.constant 0 : index
    %631 = vector.load %arg19[%630, %c0_242, %c0_243] : memref<32x8x128xf32, #tpu.memory_space<vmem>>, vector<1x8x128xf32>
    %632 = vector.shape_cast %631 : vector<1x8x128xf32> to vector<8x128xf32>
    %633 = vector.shape_cast %629 : vector<8x128xf32> to vector<1x8x128xf32>
    tpu.vector_store %arg19[%630, %c0_242, %c0_243], %633 {strides = array<i32>} : memref<32x8x128xf32, #tpu.memory_space<vmem>>, vector<1x8x128xf32>,
    %c26_i32 = arith.constant 26 : i32
    %634 = arith.index_cast %c26_i32 : i32 to index
    %c0_244 = arith.constant 0 : index
    %c0_245 = arith.constant 0 : index
    %635 = vector.load %arg18[%634, %c0_244, %c0_245] : memref<32x8x128xf32, #tpu.memory_space<vmem>>, vector<1x8x128xf32>
    %636 = vector.shape_cast %635 : vector<1x8x128xf32> to vector<8x128xf32>
    %637 = arith.truncf %629 : vector<8x128xf32> to vector<8x128xbf16>
    %cst_246 = arith.constant dense<0.000000e+00> : vector<8x128xf32>
    %638 = tpu.matmul %637, %8, %cst_246 {dimension_numbers = #tpu.dot_dimension_numbers<[1], [0], [0], [1], [0, 0, 1, 1], [], []>} : vector<8x128xbf16>, vector<128x128xbf16>, vector<8x128xf32> -> vector<8x128xf32>
    %639 = arith.addf %636, %638 : vector<8x128xf32>
    %640 = arith.negf %639 : vector<8x128xf32>
    %641 = math.exp %640 : vector<8x128xf32>
    %cst_247 = arith.constant 1.000000e+00 : f32
    %642 = vector.broadcast %cst_247 : f32 to vector<8x128xf32>
    %643 = arith.addf %642, %641 : vector<8x128xf32>
    %644 = arith.divf %642, %643 : vector<8x128xf32>
    %645 = math.tanh %639 : vector<8x128xf32>
    %c64_i32_248 = arith.constant 64 : i32
    %646 = tpu.dynamic_rotate %644 by %c64_i32_248 dim 1 : vector<8x128xf32>, i32 -> vector<8x128xf32>
    %c32_i32_249 = arith.constant 32 : i32
    %647 = tpu.dynamic_rotate %644 by %c32_i32_249 dim 1 : vector<8x128xf32>, i32 -> vector<8x128xf32>
    %c96_i32_250 = arith.constant 96 : i32
    %648 = tpu.dynamic_rotate %644 by %c96_i32_250 dim 1 : vector<8x128xf32>, i32 -> vector<8x128xf32>
    %649 = arith.mulf %647, %627 : vector<8x128xf32>
    %650 = arith.mulf %646, %645 : vector<8x128xf32>
    %651 = arith.addf %649, %650 : vector<8x128xf32>
    %652 = math.tanh %651 : vector<8x128xf32>
    %653 = arith.mulf %648, %652 : vector<8x128xf32>
    %654 = arith.index_cast %c26_i32 : i32 to index
    %c0_251 = arith.constant 0 : index
    %c0_252 = arith.constant 0 : index
    %655 = vector.load %arg19[%654, %c0_251, %c0_252] : memref<32x8x128xf32, #tpu.memory_space<vmem>>, vector<1x8x128xf32>
    %656 = vector.shape_cast %655 : vector<1x8x128xf32> to vector<8x128xf32>
    %657 = vector.shape_cast %653 : vector<8x128xf32> to vector<1x8x128xf32>
    tpu.vector_store %arg19[%654, %c0_251, %c0_252], %657 {strides = array<i32>} : memref<32x8x128xf32, #tpu.memory_space<vmem>>, vector<1x8x128xf32>,
    %c27_i32 = arith.constant 27 : i32
    %658 = arith.index_cast %c27_i32 : i32 to index
    %c0_253 = arith.constant 0 : index
    %c0_254 = arith.constant 0 : index
    %659 = vector.load %arg18[%658, %c0_253, %c0_254] : memref<32x8x128xf32, #tpu.memory_space<vmem>>, vector<1x8x128xf32>
    %660 = vector.shape_cast %659 : vector<1x8x128xf32> to vector<8x128xf32>
    %661 = arith.truncf %653 : vector<8x128xf32> to vector<8x128xbf16>
    %cst_255 = arith.constant dense<0.000000e+00> : vector<8x128xf32>
    %662 = tpu.matmul %661, %8, %cst_255 {dimension_numbers = #tpu.dot_dimension_numbers<[1], [0], [0], [1], [0, 0, 1, 1], [], []>} : vector<8x128xbf16>, vector<128x128xbf16>, vector<8x128xf32> -> vector<8x128xf32>
    %663 = arith.addf %660, %662 : vector<8x128xf32>
    %664 = arith.negf %663 : vector<8x128xf32>
    %665 = math.exp %664 : vector<8x128xf32>
    %cst_256 = arith.constant 1.000000e+00 : f32
    %666 = vector.broadcast %cst_256 : f32 to vector<8x128xf32>
    %667 = arith.addf %666, %665 : vector<8x128xf32>
    %668 = arith.divf %666, %667 : vector<8x128xf32>
    %669 = math.tanh %663 : vector<8x128xf32>
    %c64_i32_257 = arith.constant 64 : i32
    %670 = tpu.dynamic_rotate %668 by %c64_i32_257 dim 1 : vector<8x128xf32>, i32 -> vector<8x128xf32>
    %c32_i32_258 = arith.constant 32 : i32
    %671 = tpu.dynamic_rotate %668 by %c32_i32_258 dim 1 : vector<8x128xf32>, i32 -> vector<8x128xf32>
    %c96_i32_259 = arith.constant 96 : i32
    %672 = tpu.dynamic_rotate %668 by %c96_i32_259 dim 1 : vector<8x128xf32>, i32 -> vector<8x128xf32>
    %673 = arith.mulf %671, %651 : vector<8x128xf32>
    %674 = arith.mulf %670, %669 : vector<8x128xf32>
    %675 = arith.addf %673, %674 : vector<8x128xf32>
    %676 = math.tanh %675 : vector<8x128xf32>
    %677 = arith.mulf %672, %676 : vector<8x128xf32>
    %678 = arith.index_cast %c27_i32 : i32 to index
    %c0_260 = arith.constant 0 : index
    %c0_261 = arith.constant 0 : index
    %679 = vector.load %arg19[%678, %c0_260, %c0_261] : memref<32x8x128xf32, #tpu.memory_space<vmem>>, vector<1x8x128xf32>
    %680 = vector.shape_cast %679 : vector<1x8x128xf32> to vector<8x128xf32>
    %681 = vector.shape_cast %677 : vector<8x128xf32> to vector<1x8x128xf32>
    tpu.vector_store %arg19[%678, %c0_260, %c0_261], %681 {strides = array<i32>} : memref<32x8x128xf32, #tpu.memory_space<vmem>>, vector<1x8x128xf32>,
    %c28_i32 = arith.constant 28 : i32
    %682 = arith.index_cast %c28_i32 : i32 to index
    %c0_262 = arith.constant 0 : index
    %c0_263 = arith.constant 0 : index
    %683 = vector.load %arg18[%682, %c0_262, %c0_263] : memref<32x8x128xf32, #tpu.memory_space<vmem>>, vector<1x8x128xf32>
    %684 = vector.shape_cast %683 : vector<1x8x128xf32> to vector<8x128xf32>
    %685 = arith.truncf %677 : vector<8x128xf32> to vector<8x128xbf16>
    %cst_264 = arith.constant dense<0.000000e+00> : vector<8x128xf32>
    %686 = tpu.matmul %685, %8, %cst_264 {dimension_numbers = #tpu.dot_dimension_numbers<[1], [0], [0], [1], [0, 0, 1, 1], [], []>} : vector<8x128xbf16>, vector<128x128xbf16>, vector<8x128xf32> -> vector<8x128xf32>
    %687 = arith.addf %684, %686 : vector<8x128xf32>
    %688 = arith.negf %687 : vector<8x128xf32>
    %689 = math.exp %688 : vector<8x128xf32>
    %cst_265 = arith.constant 1.000000e+00 : f32
    %690 = vector.broadcast %cst_265 : f32 to vector<8x128xf32>
    %691 = arith.addf %690, %689 : vector<8x128xf32>
    %692 = arith.divf %690, %691 : vector<8x128xf32>
    %693 = math.tanh %687 : vector<8x128xf32>
    %c64_i32_266 = arith.constant 64 : i32
    %694 = tpu.dynamic_rotate %692 by %c64_i32_266 dim 1 : vector<8x128xf32>, i32 -> vector<8x128xf32>
    %c32_i32_267 = arith.constant 32 : i32
    %695 = tpu.dynamic_rotate %692 by %c32_i32_267 dim 1 : vector<8x128xf32>, i32 -> vector<8x128xf32>
    %c96_i32_268 = arith.constant 96 : i32
    %696 = tpu.dynamic_rotate %692 by %c96_i32_268 dim 1 : vector<8x128xf32>, i32 -> vector<8x128xf32>
    %697 = arith.mulf %695, %675 : vector<8x128xf32>
    %698 = arith.mulf %694, %693 : vector<8x128xf32>
    %699 = arith.addf %697, %698 : vector<8x128xf32>
    %700 = math.tanh %699 : vector<8x128xf32>
    %701 = arith.mulf %696, %700 : vector<8x128xf32>
    %702 = arith.index_cast %c28_i32 : i32 to index
    %c0_269 = arith.constant 0 : index
    %c0_270 = arith.constant 0 : index
    %703 = vector.load %arg19[%702, %c0_269, %c0_270] : memref<32x8x128xf32, #tpu.memory_space<vmem>>, vector<1x8x128xf32>
    %704 = vector.shape_cast %703 : vector<1x8x128xf32> to vector<8x128xf32>
    %705 = vector.shape_cast %701 : vector<8x128xf32> to vector<1x8x128xf32>
    tpu.vector_store %arg19[%702, %c0_269, %c0_270], %705 {strides = array<i32>} : memref<32x8x128xf32, #tpu.memory_space<vmem>>, vector<1x8x128xf32>,
    %c29_i32 = arith.constant 29 : i32
    %706 = arith.index_cast %c29_i32 : i32 to index
    %c0_271 = arith.constant 0 : index
    %c0_272 = arith.constant 0 : index
    %707 = vector.load %arg18[%706, %c0_271, %c0_272] : memref<32x8x128xf32, #tpu.memory_space<vmem>>, vector<1x8x128xf32>
    %708 = vector.shape_cast %707 : vector<1x8x128xf32> to vector<8x128xf32>
    %709 = arith.truncf %701 : vector<8x128xf32> to vector<8x128xbf16>
    %cst_273 = arith.constant dense<0.000000e+00> : vector<8x128xf32>
    %710 = tpu.matmul %709, %8, %cst_273 {dimension_numbers = #tpu.dot_dimension_numbers<[1], [0], [0], [1], [0, 0, 1, 1], [], []>} : vector<8x128xbf16>, vector<128x128xbf16>, vector<8x128xf32> -> vector<8x128xf32>
    %711 = arith.addf %708, %710 : vector<8x128xf32>
    %712 = arith.negf %711 : vector<8x128xf32>
    %713 = math.exp %712 : vector<8x128xf32>
    %cst_274 = arith.constant 1.000000e+00 : f32
    %714 = vector.broadcast %cst_274 : f32 to vector<8x128xf32>
    %715 = arith.addf %714, %713 : vector<8x128xf32>
    %716 = arith.divf %714, %715 : vector<8x128xf32>
    %717 = math.tanh %711 : vector<8x128xf32>
    %c64_i32_275 = arith.constant 64 : i32
    %718 = tpu.dynamic_rotate %716 by %c64_i32_275 dim 1 : vector<8x128xf32>, i32 -> vector<8x128xf32>
    %c32_i32_276 = arith.constant 32 : i32
    %719 = tpu.dynamic_rotate %716 by %c32_i32_276 dim 1 : vector<8x128xf32>, i32 -> vector<8x128xf32>
    %c96_i32_277 = arith.constant 96 : i32
    %720 = tpu.dynamic_rotate %716 by %c96_i32_277 dim 1 : vector<8x128xf32>, i32 -> vector<8x128xf32>
    %721 = arith.mulf %719, %699 : vector<8x128xf32>
    %722 = arith.mulf %718, %717 : vector<8x128xf32>
    %723 = arith.addf %721, %722 : vector<8x128xf32>
    %724 = math.tanh %723 : vector<8x128xf32>
    %725 = arith.mulf %720, %724 : vector<8x128xf32>
    %726 = arith.index_cast %c29_i32 : i32 to index
    %c0_278 = arith.constant 0 : index
    %c0_279 = arith.constant 0 : index
    %727 = vector.load %arg19[%726, %c0_278, %c0_279] : memref<32x8x128xf32, #tpu.memory_space<vmem>>, vector<1x8x128xf32>
    %728 = vector.shape_cast %727 : vector<1x8x128xf32> to vector<8x128xf32>
    %729 = vector.shape_cast %725 : vector<8x128xf32> to vector<1x8x128xf32>
    tpu.vector_store %arg19[%726, %c0_278, %c0_279], %729 {strides = array<i32>} : memref<32x8x128xf32, #tpu.memory_space<vmem>>, vector<1x8x128xf32>,
    %c30_i32 = arith.constant 30 : i32
    %730 = arith.index_cast %c30_i32 : i32 to index
    %c0_280 = arith.constant 0 : index
    %c0_281 = arith.constant 0 : index
    %731 = vector.load %arg18[%730, %c0_280, %c0_281] : memref<32x8x128xf32, #tpu.memory_space<vmem>>, vector<1x8x128xf32>
    %732 = vector.shape_cast %731 : vector<1x8x128xf32> to vector<8x128xf32>
    %733 = arith.truncf %725 : vector<8x128xf32> to vector<8x128xbf16>
    %cst_282 = arith.constant dense<0.000000e+00> : vector<8x128xf32>
    %734 = tpu.matmul %733, %8, %cst_282 {dimension_numbers = #tpu.dot_dimension_numbers<[1], [0], [0], [1], [0, 0, 1, 1], [], []>} : vector<8x128xbf16>, vector<128x128xbf16>, vector<8x128xf32> -> vector<8x128xf32>
    %735 = arith.addf %732, %734 : vector<8x128xf32>
    %736 = arith.negf %735 : vector<8x128xf32>
    %737 = math.exp %736 : vector<8x128xf32>
    %cst_283 = arith.constant 1.000000e+00 : f32
    %738 = vector.broadcast %cst_283 : f32 to vector<8x128xf32>
    %739 = arith.addf %738, %737 : vector<8x128xf32>
    %740 = arith.divf %738, %739 : vector<8x128xf32>
    %741 = math.tanh %735 : vector<8x128xf32>
    %c64_i32_284 = arith.constant 64 : i32
    %742 = tpu.dynamic_rotate %740 by %c64_i32_284 dim 1 : vector<8x128xf32>, i32 -> vector<8x128xf32>
    %c32_i32_285 = arith.constant 32 : i32
    %743 = tpu.dynamic_rotate %740 by %c32_i32_285 dim 1 : vector<8x128xf32>, i32 -> vector<8x128xf32>
    %c96_i32_286 = arith.constant 96 : i32
    %744 = tpu.dynamic_rotate %740 by %c96_i32_286 dim 1 : vector<8x128xf32>, i32 -> vector<8x128xf32>
    %745 = arith.mulf %743, %723 : vector<8x128xf32>
    %746 = arith.mulf %742, %741 : vector<8x128xf32>
    %747 = arith.addf %745, %746 : vector<8x128xf32>
    %748 = math.tanh %747 : vector<8x128xf32>
    %749 = arith.mulf %744, %748 : vector<8x128xf32>
    %750 = arith.index_cast %c30_i32 : i32 to index
    %c0_287 = arith.constant 0 : index
    %c0_288 = arith.constant 0 : index
    %751 = vector.load %arg19[%750, %c0_287, %c0_288] : memref<32x8x128xf32, #tpu.memory_space<vmem>>, vector<1x8x128xf32>
    %752 = vector.shape_cast %751 : vector<1x8x128xf32> to vector<8x128xf32>
    %753 = vector.shape_cast %749 : vector<8x128xf32> to vector<1x8x128xf32>
    tpu.vector_store %arg19[%750, %c0_287, %c0_288], %753 {strides = array<i32>} : memref<32x8x128xf32, #tpu.memory_space<vmem>>, vector<1x8x128xf32>,
    %c31_i32 = arith.constant 31 : i32
    %754 = arith.index_cast %c31_i32 : i32 to index
    %c0_289 = arith.constant 0 : index
    %c0_290 = arith.constant 0 : index
    %755 = vector.load %arg18[%754, %c0_289, %c0_290] : memref<32x8x128xf32, #tpu.memory_space<vmem>>, vector<1x8x128xf32>
    %756 = vector.shape_cast %755 : vector<1x8x128xf32> to vector<8x128xf32>
    %757 = arith.truncf %749 : vector<8x128xf32> to vector<8x128xbf16>
    %cst_291 = arith.constant dense<0.000000e+00> : vector<8x128xf32>
    %758 = tpu.matmul %757, %8, %cst_291 {dimension_numbers = #tpu.dot_dimension_numbers<[1], [0], [0], [1], [0, 0, 1, 1], [], []>} : vector<8x128xbf16>, vector<128x128xbf16>, vector<8x128xf32> -> vector<8x128xf32>
    %759 = arith.addf %756, %758 : vector<8x128xf32>
    %760 = arith.negf %759 : vector<8x128xf32>
    %761 = math.exp %760 : vector<8x128xf32>
    %cst_292 = arith.constant 1.000000e+00 : f32
    %762 = vector.broadcast %cst_292 : f32 to vector<8x128xf32>
    %763 = arith.addf %762, %761 : vector<8x128xf32>
    %764 = arith.divf %762, %763 : vector<8x128xf32>
    %765 = math.tanh %759 : vector<8x128xf32>
    %c64_i32_293 = arith.constant 64 : i32
    %766 = tpu.dynamic_rotate %764 by %c64_i32_293 dim 1 : vector<8x128xf32>, i32 -> vector<8x128xf32>
    %c32_i32_294 = arith.constant 32 : i32
    %767 = tpu.dynamic_rotate %764 by %c32_i32_294 dim 1 : vector<8x128xf32>, i32 -> vector<8x128xf32>
    %c96_i32_295 = arith.constant 96 : i32
    %768 = tpu.dynamic_rotate %764 by %c96_i32_295 dim 1 : vector<8x128xf32>, i32 -> vector<8x128xf32>
    %769 = arith.mulf %767, %747 : vector<8x128xf32>
    %770 = arith.mulf %766, %765 : vector<8x128xf32>
    %771 = arith.addf %769, %770 : vector<8x128xf32>
    %772 = math.tanh %771 : vector<8x128xf32>
    %773 = arith.mulf %768, %772 : vector<8x128xf32>
    %774 = arith.index_cast %c31_i32 : i32 to index
    %c0_296 = arith.constant 0 : index
    %c0_297 = arith.constant 0 : index
    %775 = vector.load %arg19[%774, %c0_296, %c0_297] : memref<32x8x128xf32, #tpu.memory_space<vmem>>, vector<1x8x128xf32>
    %776 = vector.shape_cast %775 : vector<1x8x128xf32> to vector<8x128xf32>
    %777 = vector.shape_cast %773 : vector<8x128xf32> to vector<1x8x128xf32>
    tpu.vector_store %arg19[%774, %c0_296, %c0_297], %777 {strides = array<i32>} : memref<32x8x128xf32, #tpu.memory_space<vmem>>, vector<1x8x128xf32>,
    %c32_i32_298 = arith.constant 32 : i32
    %778 = tpu.iota {dimensions = array<i32: 0>} : vector<32x8xi32>
    %c0_299 = arith.constant 0 : index
    %c0_300 = arith.constant 0 : index
    %779 = vector.load %arg1[%c0_299, %c0_300] : memref<1x8xi32, #tpu.memory_space<vmem>>, vector<1x8xi32>
    %c1_i32_301 = arith.constant 1 : i32
    %780 = vector.broadcast %c1_i32_301 : i32 to vector<1x8xi32>
    %781 = arith.subi %779, %780 : vector<1x8xi32>
    %782 = vector.broadcast %781 : vector<1x8xi32> to vector<32x8xi32>
    %783 = arith.cmpi eq, %778, %782 : vector<32x8xi32>
    %784 = arith.extui %783 : vector<32x8xi1> to vector<32x8xi32>
    %785 = arith.sitofp %784 : vector<32x8xi32> to vector<32x8xf32>
    %786 = vector.shape_cast %785 : vector<32x8xf32> to vector<32x8x1xf32>
    %c0_302 = arith.constant 0 : index
    %c0_303 = arith.constant 0 : index
    %c0_304 = arith.constant 0 : index
    %787 = vector.load %arg19[%c0_302, %c0_303, %c0_304] : memref<32x8x128xf32, #tpu.memory_space<vmem>>, vector<32x8x128xf32>
    %788 = vector.broadcast %786 : vector<32x8x1xf32> to vector<32x8x128xf32>
    %789 = arith.mulf %788, %787 : vector<32x8x128xf32>
    %cst_305 = arith.constant dense<0.000000e+00> : vector<8x128xf32>
    %790 = vector.multi_reduction <add>, %789, %cst_305 [0] : vector<32x8x128xf32> to vector<8x128xf32>
    %c0_306 = arith.constant 0 : index
    %c0_307 = arith.constant 0 : index
    %c0_308 = arith.constant 0 : index
    %791 = vector.load %arg5[%c0_306, %c0_307, %c0_308] : memref<8x8x32xbf16, #tpu.memory_space<vmem>>, vector<8x8x32xbf16>
    %c0_309 = arith.constant 0 : index
    %c0_310 = arith.constant 0 : index
    %792 = vector.load %arg6[%c0_309, %c0_310] : memref<3x32xf32, #tpu.memory_space<vmem>>, vector<3x32xf32>
    %793 = arith.truncf %0 : vector<32x8x8xf32> to vector<32x8x8xbf16>
    %cst_311 = arith.constant 0.000000e+00 : f32
    %794 = vector.broadcast %cst_311 : f32 to vector<25x8x32xf32>
    %795 = vector.extract_strided_slice %793 {offsets = [0, 0, 0], sizes = [25, 8, 8], strides = [1, 1, 1]} : vector<32x8x8xbf16> to vector<25x8x8xbf16>
    %796 = vector.extract_strided_slice %791 {offsets = [0, 0, 0], sizes = [1, 8, 32], strides = [1, 1, 1]} : vector<8x8x32xbf16> to vector<1x8x32xbf16>
    %797 = vector.shape_cast %796 : vector<1x8x32xbf16> to vector<8x32xbf16>
    "tpu.trace_start"() <{level = 10 : i32, message = "lbc,co->lbo"}> : () -> ()
    %cst_312 = arith.constant dense<0.000000e+00> : vector<25x8x32xf32>
    %798 = tpu.matmul %795, %797, %cst_312 {dimension_numbers = #tpu.dot_dimension_numbers<[2], [0], [0, 1], [1], [0, 0, 0, 1, 1, 1], [], []>} : vector<25x8x8xbf16>, vector<8x32xbf16>, vector<25x8x32xf32> -> vector<25x8x32xf32>
    "tpu.trace_stop"() : () -> ()
    %799 = arith.addf %794, %798 : vector<25x8x32xf32>
    %800 = vector.extract_strided_slice %793 {offsets = [1, 0, 0], sizes = [25, 8, 8], strides = [1, 1, 1]} : vector<32x8x8xbf16> to vector<25x8x8xbf16>
    %801 = vector.extract_strided_slice %791 {offsets = [1, 0, 0], sizes = [1, 8, 32], strides = [1, 1, 1]} : vector<8x8x32xbf16> to vector<1x8x32xbf16>
    %802 = vector.shape_cast %801 : vector<1x8x32xbf16> to vector<8x32xbf16>
    "tpu.trace_start"() <{level = 10 : i32, message = "lbc,co->lbo"}> : () -> ()
    %cst_313 = arith.constant dense<0.000000e+00> : vector<25x8x32xf32>
    %803 = tpu.matmul %800, %802, %cst_313 {dimension_numbers = #tpu.dot_dimension_numbers<[2], [0], [0, 1], [1], [0, 0, 0, 1, 1, 1], [], []>} : vector<25x8x8xbf16>, vector<8x32xbf16>, vector<25x8x32xf32> -> vector<25x8x32xf32>
    "tpu.trace_stop"() : () -> ()
    %804 = arith.addf %799, %803 : vector<25x8x32xf32>
    %805 = vector.extract_strided_slice %793 {offsets = [2, 0, 0], sizes = [25, 8, 8], strides = [1, 1, 1]} : vector<32x8x8xbf16> to vector<25x8x8xbf16>
    %806 = vector.extract_strided_slice %791 {offsets = [2, 0, 0], sizes = [1, 8, 32], strides = [1, 1, 1]} : vector<8x8x32xbf16> to vector<1x8x32xbf16>
    %807 = vector.shape_cast %806 : vector<1x8x32xbf16> to vector<8x32xbf16>
    "tpu.trace_start"() <{level = 10 : i32, message = "lbc,co->lbo"}> : () -> ()
    %cst_314 = arith.constant dense<0.000000e+00> : vector<25x8x32xf32>
    %808 = tpu.matmul %805, %807, %cst_314 {dimension_numbers = #tpu.dot_dimension_numbers<[2], [0], [0, 1], [1], [0, 0, 0, 1, 1, 1], [], []>} : vector<25x8x8xbf16>, vector<8x32xbf16>, vector<25x8x32xf32> -> vector<25x8x32xf32>
    "tpu.trace_stop"() : () -> ()
    %809 = arith.addf %804, %808 : vector<25x8x32xf32>
    %810 = vector.extract_strided_slice %793 {offsets = [3, 0, 0], sizes = [25, 8, 8], strides = [1, 1, 1]} : vector<32x8x8xbf16> to vector<25x8x8xbf16>
    %811 = vector.extract_strided_slice %791 {offsets = [3, 0, 0], sizes = [1, 8, 32], strides = [1, 1, 1]} : vector<8x8x32xbf16> to vector<1x8x32xbf16>
    %812 = vector.shape_cast %811 : vector<1x8x32xbf16> to vector<8x32xbf16>
    "tpu.trace_start"() <{level = 10 : i32, message = "lbc,co->lbo"}> : () -> ()
    %cst_315 = arith.constant dense<0.000000e+00> : vector<25x8x32xf32>
    %813 = tpu.matmul %810, %812, %cst_315 {dimension_numbers = #tpu.dot_dimension_numbers<[2], [0], [0, 1], [1], [0, 0, 0, 1, 1, 1], [], []>} : vector<25x8x8xbf16>, vector<8x32xbf16>, vector<25x8x32xf32> -> vector<25x8x32xf32>
    "tpu.trace_stop"() : () -> ()
    %814 = arith.addf %809, %813 : vector<25x8x32xf32>
    %815 = vector.extract_strided_slice %793 {offsets = [4, 0, 0], sizes = [25, 8, 8], strides = [1, 1, 1]} : vector<32x8x8xbf16> to vector<25x8x8xbf16>
    %816 = vector.extract_strided_slice %791 {offsets = [4, 0, 0], sizes = [1, 8, 32], strides = [1, 1, 1]} : vector<8x8x32xbf16> to vector<1x8x32xbf16>
    %817 = vector.shape_cast %816 : vector<1x8x32xbf16> to vector<8x32xbf16>
    "tpu.trace_start"() <{level = 10 : i32, message = "lbc,co->lbo"}> : () -> ()
    %cst_316 = arith.constant dense<0.000000e+00> : vector<25x8x32xf32>
    %818 = tpu.matmul %815, %817, %cst_316 {dimension_numbers = #tpu.dot_dimension_numbers<[2], [0], [0, 1], [1], [0, 0, 0, 1, 1, 1], [], []>} : vector<25x8x8xbf16>, vector<8x32xbf16>, vector<25x8x32xf32> -> vector<25x8x32xf32>
    "tpu.trace_stop"() : () -> ()
    %819 = arith.addf %814, %818 : vector<25x8x32xf32>
    %820 = vector.extract_strided_slice %793 {offsets = [5, 0, 0], sizes = [25, 8, 8], strides = [1, 1, 1]} : vector<32x8x8xbf16> to vector<25x8x8xbf16>
    %821 = vector.extract_strided_slice %791 {offsets = [5, 0, 0], sizes = [1, 8, 32], strides = [1, 1, 1]} : vector<8x8x32xbf16> to vector<1x8x32xbf16>
    %822 = vector.shape_cast %821 : vector<1x8x32xbf16> to vector<8x32xbf16>
    "tpu.trace_start"() <{level = 10 : i32, message = "lbc,co->lbo"}> : () -> ()
    %cst_317 = arith.constant dense<0.000000e+00> : vector<25x8x32xf32>
    %823 = tpu.matmul %820, %822, %cst_317 {dimension_numbers = #tpu.dot_dimension_numbers<[2], [0], [0, 1], [1], [0, 0, 0, 1, 1, 1], [], []>} : vector<25x8x8xbf16>, vector<8x32xbf16>, vector<25x8x32xf32> -> vector<25x8x32xf32>
    "tpu.trace_stop"() : () -> ()
    %824 = arith.addf %819, %823 : vector<25x8x32xf32>
    %825 = vector.extract_strided_slice %793 {offsets = [6, 0, 0], sizes = [25, 8, 8], strides = [1, 1, 1]} : vector<32x8x8xbf16> to vector<25x8x8xbf16>
    %826 = vector.extract_strided_slice %791 {offsets = [6, 0, 0], sizes = [1, 8, 32], strides = [1, 1, 1]} : vector<8x8x32xbf16> to vector<1x8x32xbf16>
    %827 = vector.shape_cast %826 : vector<1x8x32xbf16> to vector<8x32xbf16>
    "tpu.trace_start"() <{level = 10 : i32, message = "lbc,co->lbo"}> : () -> ()
    %cst_318 = arith.constant dense<0.000000e+00> : vector<25x8x32xf32>
    %828 = tpu.matmul %825, %827, %cst_318 {dimension_numbers = #tpu.dot_dimension_numbers<[2], [0], [0, 1], [1], [0, 0, 0, 1, 1, 1], [], []>} : vector<25x8x8xbf16>, vector<8x32xbf16>, vector<25x8x32xf32> -> vector<25x8x32xf32>
    "tpu.trace_stop"() : () -> ()
    %829 = arith.addf %824, %828 : vector<25x8x32xf32>
    %830 = vector.extract_strided_slice %793 {offsets = [7, 0, 0], sizes = [25, 8, 8], strides = [1, 1, 1]} : vector<32x8x8xbf16> to vector<25x8x8xbf16>
    %831 = vector.extract_strided_slice %791 {offsets = [7, 0, 0], sizes = [1, 8, 32], strides = [1, 1, 1]} : vector<8x8x32xbf16> to vector<1x8x32xbf16>
    %832 = vector.shape_cast %831 : vector<1x8x32xbf16> to vector<8x32xbf16>
    "tpu.trace_start"() <{level = 10 : i32, message = "lbc,co->lbo"}> : () -> ()
    %cst_319 = arith.constant dense<0.000000e+00> : vector<25x8x32xf32>
    %833 = tpu.matmul %830, %832, %cst_319 {dimension_numbers = #tpu.dot_dimension_numbers<[2], [0], [0, 1], [1], [0, 0, 0, 1, 1, 1], [], []>} : vector<25x8x8xbf16>, vector<8x32xbf16>, vector<25x8x32xf32> -> vector<25x8x32xf32>
    "tpu.trace_stop"() : () -> ()
    %834 = arith.addf %829, %833 : vector<25x8x32xf32>
    %835 = vector.extract_strided_slice %792 {offsets = [0, 0], sizes = [1, 32], strides = [1, 1]} : vector<3x32xf32> to vector<1x32xf32>
    %836 = vector.shape_cast %835 : vector<1x32xf32> to vector<1x1x32xf32>
    %837 = vector.broadcast %836 : vector<1x1x32xf32> to vector<25x8x32xf32>
    %838 = arith.addf %834, %837 : vector<25x8x32xf32>
    %cst_320 = arith.constant dense<0.000000e+00> : vector<32xf32>
    %839 = vector.multi_reduction <add>, %838, %cst_320 [0, 1] : vector<25x8x32xf32> to vector<32xf32>
    %840 = vector.shape_cast %839 : vector<32xf32> to vector<1x1x32xf32>
    %cst_321 = arith.constant 2.000000e+02 : f32
    %841 = vector.broadcast %cst_321 : f32 to vector<1x1x32xf32>
    %842 = arith.divf %840, %841 : vector<1x1x32xf32>
    %843 = vector.broadcast %842 : vector<1x1x32xf32> to vector<25x8x32xf32>
    %844 = arith.subf %838, %843 : vector<25x8x32xf32>
    %845 = arith.mulf %844, %844 : vector<25x8x32xf32>
    %cst_322 = arith.constant dense<0.000000e+00> : vector<32xf32>
    %846 = vector.multi_reduction <add>, %845, %cst_322 [0, 1] : vector<25x8x32xf32> to vector<32xf32>
    %847 = vector.shape_cast %846 : vector<32xf32> to vector<1x1x32xf32>
    %cst_323 = arith.constant 2.000000e+02 : f32
    %848 = vector.broadcast %cst_323 : f32 to vector<1x1x32xf32>
    %849 = arith.divf %847, %848 : vector<1x1x32xf32>
    %850 = vector.broadcast %842 : vector<1x1x32xf32> to vector<25x8x32xf32>
    %851 = arith.subf %838, %850 : vector<25x8x32xf32>
    %cst_324 = arith.constant 9.99999974E-6 : f32
    %852 = vector.broadcast %cst_324 : f32 to vector<1x1x32xf32>
    %853 = arith.addf %849, %852 : vector<1x1x32xf32>
    %854 = math.rsqrt %853 : vector<1x1x32xf32>
    %855 = vector.broadcast %854 : vector<1x1x32xf32> to vector<25x8x32xf32>
    %856 = arith.mulf %851, %855 : vector<25x8x32xf32>
    %857 = vector.extract_strided_slice %792 {offsets = [1, 0], sizes = [1, 32], strides = [1, 1]} : vector<3x32xf32> to vector<1x32xf32>
    %858 = vector.shape_cast %857 : vector<1x32xf32> to vector<1x1x32xf32>
    %859 = vector.broadcast %858 : vector<1x1x32xf32> to vector<25x8x32xf32>
    %860 = arith.mulf %856, %859 : vector<25x8x32xf32>
    %861 = vector.extract_strided_slice %792 {offsets = [2, 0], sizes = [1, 32], strides = [1, 1]} : vector<3x32xf32> to vector<1x32xf32>
    %862 = vector.shape_cast %861 : vector<1x32xf32> to vector<1x1x32xf32>
    %863 = vector.broadcast %862 : vector<1x1x32xf32> to vector<25x8x32xf32>
    %864 = arith.addf %860, %863 : vector<25x8x32xf32>
    %cst_325 = arith.constant 0.000000e+00 : f32
    %865 = vector.broadcast %cst_325 : f32 to vector<25x8x32xf32>
    %866 = arith.maximumf %864, %865 : vector<25x8x32xf32>
    %cst_326 = arith.constant dense<0.000000e+00> : vector<8x32xf32>
    %867 = vector.multi_reduction <add>, %866, %cst_326 [0] : vector<25x8x32xf32> to vector<8x32xf32>
    %cst_327 = arith.constant 2.500000e+01 : f32
    %868 = vector.broadcast %cst_327 : f32 to vector<8x32xf32>
    %869 = arith.divf %867, %868 : vector<8x32xf32>
    %870 = arith.truncf %869 : vector<8x32xf32> to vector<8x32xbf16>
    %c0_328 = arith.constant 0 : index
    %c0_329 = arith.constant 0 : index
    %871 = vector.load %arg7[%c0_328, %c0_329] : memref<32x2xbf16, #tpu.memory_space<vmem>>, vector<32x2xbf16>
    %cst_330 = arith.constant dense<0.000000e+00> : vector<8x2xf32>
    %872 = tpu.matmul %870, %871, %cst_330 {dimension_numbers = #tpu.dot_dimension_numbers<[1], [0], [0], [1], [0, 0, 1, 1], [], []>} : vector<8x32xbf16>, vector<32x2xbf16>, vector<8x2xf32> -> vector<8x2xf32>
    %cst_331 = arith.constant 0.000000e+00 : f32
    %873 = vector.broadcast %cst_331 : f32 to vector<8x2xf32>
    %874 = arith.maximumf %872, %873 : vector<8x2xf32>
    %875 = arith.truncf %874 : vector<8x2xf32> to vector<8x2xbf16>
    %c0_332 = arith.constant 0 : index
    %c0_333 = arith.constant 0 : index
    %876 = vector.load %arg8[%c0_332, %c0_333] : memref<2x32xbf16, #tpu.memory_space<vmem>>, vector<2x32xbf16>
    %cst_334 = arith.constant dense<0.000000e+00> : vector<8x32xf32>
    %877 = tpu.matmul %875, %876, %cst_334 {dimension_numbers = #tpu.dot_dimension_numbers<[1], [0], [0], [1], [0, 0, 1, 1], [], []>} : vector<8x2xbf16>, vector<2x32xbf16>, vector<8x32xf32> -> vector<8x32xf32>
    %878 = arith.negf %877 : vector<8x32xf32>
    %879 = math.exp %878 : vector<8x32xf32>
    %cst_335 = arith.constant 1.000000e+00 : f32
    %880 = vector.broadcast %cst_335 : f32 to vector<8x32xf32>
    %881 = arith.addf %880, %879 : vector<8x32xf32>
    %882 = arith.divf %880, %881 : vector<8x32xf32>
    %883 = vector.shape_cast %882 : vector<8x32xf32> to vector<1x8x32xf32>
    %884 = vector.broadcast %883 : vector<1x8x32xf32> to vector<25x8x32xf32>
    %885 = arith.mulf %866, %884 : vector<25x8x32xf32>
    %c0_336 = arith.constant 0 : index
    %c0_337 = arith.constant 0 : index
    %c0_338 = arith.constant 0 : index
    %886 = vector.load %arg9[%c0_336, %c0_337, %c0_338] : memref<5x32x64xbf16, #tpu.memory_space<vmem>>, vector<5x32x64xbf16>
    %c0_339 = arith.constant 0 : index
    %c0_340 = arith.constant 0 : index
    %887 = vector.load %arg10[%c0_339, %c0_340] : memref<3x64xf32, #tpu.memory_space<vmem>>, vector<3x64xf32>
    %888 = arith.truncf %885 : vector<25x8x32xf32> to vector<25x8x32xbf16>
    %cst_341 = arith.constant 0.000000e+00 : f32
    %889 = vector.broadcast %cst_341 : f32 to vector<21x8x64xf32>
    %890 = vector.extract_strided_slice %888 {offsets = [0, 0, 0], sizes = [21, 8, 32], strides = [1, 1, 1]} : vector<25x8x32xbf16> to vector<21x8x32xbf16>
    %891 = vector.extract_strided_slice %886 {offsets = [0, 0, 0], sizes = [1, 32, 64], strides = [1, 1, 1]} : vector<5x32x64xbf16> to vector<1x32x64xbf16>
    %892 = vector.shape_cast %891 : vector<1x32x64xbf16> to vector<32x64xbf16>
    "tpu.trace_start"() <{level = 10 : i32, message = "lbc,co->lbo"}> : () -> ()
    %cst_342 = arith.constant dense<0.000000e+00> : vector<21x8x64xf32>
    %893 = tpu.matmul %890, %892, %cst_342 {dimension_numbers = #tpu.dot_dimension_numbers<[2], [0], [0, 1], [1], [0, 0, 0, 1, 1, 1], [], []>} : vector<21x8x32xbf16>, vector<32x64xbf16>, vector<21x8x64xf32> -> vector<21x8x64xf32>
    "tpu.trace_stop"() : () -> ()
    %894 = arith.addf %889, %893 : vector<21x8x64xf32>
    %895 = vector.extract_strided_slice %888 {offsets = [1, 0, 0], sizes = [21, 8, 32], strides = [1, 1, 1]} : vector<25x8x32xbf16> to vector<21x8x32xbf16>
    %896 = vector.extract_strided_slice %886 {offsets = [1, 0, 0], sizes = [1, 32, 64], strides = [1, 1, 1]} : vector<5x32x64xbf16> to vector<1x32x64xbf16>
    %897 = vector.shape_cast %896 : vector<1x32x64xbf16> to vector<32x64xbf16>
    "tpu.trace_start"() <{level = 10 : i32, message = "lbc,co->lbo"}> : () -> ()
    %cst_343 = arith.constant dense<0.000000e+00> : vector<21x8x64xf32>
    %898 = tpu.matmul %895, %897, %cst_343 {dimension_numbers = #tpu.dot_dimension_numbers<[2], [0], [0, 1], [1], [0, 0, 0, 1, 1, 1], [], []>} : vector<21x8x32xbf16>, vector<32x64xbf16>, vector<21x8x64xf32> -> vector<21x8x64xf32>
    "tpu.trace_stop"() : () -> ()
    %899 = arith.addf %894, %898 : vector<21x8x64xf32>
    %900 = vector.extract_strided_slice %888 {offsets = [2, 0, 0], sizes = [21, 8, 32], strides = [1, 1, 1]} : vector<25x8x32xbf16> to vector<21x8x32xbf16>
    %901 = vector.extract_strided_slice %886 {offsets = [2, 0, 0], sizes = [1, 32, 64], strides = [1, 1, 1]} : vector<5x32x64xbf16> to vector<1x32x64xbf16>
    %902 = vector.shape_cast %901 : vector<1x32x64xbf16> to vector<32x64xbf16>
    "tpu.trace_start"() <{level = 10 : i32, message = "lbc,co->lbo"}> : () -> ()
    %cst_344 = arith.constant dense<0.000000e+00> : vector<21x8x64xf32>
    %903 = tpu.matmul %900, %902, %cst_344 {dimension_numbers = #tpu.dot_dimension_numbers<[2], [0], [0, 1], [1], [0, 0, 0, 1, 1, 1], [], []>} : vector<21x8x32xbf16>, vector<32x64xbf16>, vector<21x8x64xf32> -> vector<21x8x64xf32>
    "tpu.trace_stop"() : () -> ()
    %904 = arith.addf %899, %903 : vector<21x8x64xf32>
    %905 = vector.extract_strided_slice %888 {offsets = [3, 0, 0], sizes = [21, 8, 32], strides = [1, 1, 1]} : vector<25x8x32xbf16> to vector<21x8x32xbf16>
    %906 = vector.extract_strided_slice %886 {offsets = [3, 0, 0], sizes = [1, 32, 64], strides = [1, 1, 1]} : vector<5x32x64xbf16> to vector<1x32x64xbf16>
    %907 = vector.shape_cast %906 : vector<1x32x64xbf16> to vector<32x64xbf16>
    "tpu.trace_start"() <{level = 10 : i32, message = "lbc,co->lbo"}> : () -> ()
    %cst_345 = arith.constant dense<0.000000e+00> : vector<21x8x64xf32>
    %908 = tpu.matmul %905, %907, %cst_345 {dimension_numbers = #tpu.dot_dimension_numbers<[2], [0], [0, 1], [1], [0, 0, 0, 1, 1, 1], [], []>} : vector<21x8x32xbf16>, vector<32x64xbf16>, vector<21x8x64xf32> -> vector<21x8x64xf32>
    "tpu.trace_stop"() : () -> ()
    %909 = arith.addf %904, %908 : vector<21x8x64xf32>
    %910 = vector.extract_strided_slice %888 {offsets = [4, 0, 0], sizes = [21, 8, 32], strides = [1, 1, 1]} : vector<25x8x32xbf16> to vector<21x8x32xbf16>
    %911 = vector.extract_strided_slice %886 {offsets = [4, 0, 0], sizes = [1, 32, 64], strides = [1, 1, 1]} : vector<5x32x64xbf16> to vector<1x32x64xbf16>
    %912 = vector.shape_cast %911 : vector<1x32x64xbf16> to vector<32x64xbf16>
    "tpu.trace_start"() <{level = 10 : i32, message = "lbc,co->lbo"}> : () -> ()
    %cst_346 = arith.constant dense<0.000000e+00> : vector<21x8x64xf32>
    %913 = tpu.matmul %910, %912, %cst_346 {dimension_numbers = #tpu.dot_dimension_numbers<[2], [0], [0, 1], [1], [0, 0, 0, 1, 1, 1], [], []>} : vector<21x8x32xbf16>, vector<32x64xbf16>, vector<21x8x64xf32> -> vector<21x8x64xf32>
    "tpu.trace_stop"() : () -> ()
    %914 = arith.addf %909, %913 : vector<21x8x64xf32>
    %915 = vector.extract_strided_slice %887 {offsets = [0, 0], sizes = [1, 64], strides = [1, 1]} : vector<3x64xf32> to vector<1x64xf32>
    %916 = vector.shape_cast %915 : vector<1x64xf32> to vector<1x1x64xf32>
    %917 = vector.broadcast %916 : vector<1x1x64xf32> to vector<21x8x64xf32>
    %918 = arith.addf %914, %917 : vector<21x8x64xf32>
    %cst_347 = arith.constant dense<0.000000e+00> : vector<64xf32>
    %919 = vector.multi_reduction <add>, %918, %cst_347 [0, 1] : vector<21x8x64xf32> to vector<64xf32>
    %920 = vector.shape_cast %919 : vector<64xf32> to vector<1x1x64xf32>
    %cst_348 = arith.constant 1.680000e+02 : f32
    %921 = vector.broadcast %cst_348 : f32 to vector<1x1x64xf32>
    %922 = arith.divf %920, %921 : vector<1x1x64xf32>
    %923 = vector.broadcast %922 : vector<1x1x64xf32> to vector<21x8x64xf32>
    %924 = arith.subf %918, %923 : vector<21x8x64xf32>
    %925 = arith.mulf %924, %924 : vector<21x8x64xf32>
    %cst_349 = arith.constant dense<0.000000e+00> : vector<64xf32>
    %926 = vector.multi_reduction <add>, %925, %cst_349 [0, 1] : vector<21x8x64xf32> to vector<64xf32>
    %927 = vector.shape_cast %926 : vector<64xf32> to vector<1x1x64xf32>
    %cst_350 = arith.constant 1.680000e+02 : f32
    %928 = vector.broadcast %cst_350 : f32 to vector<1x1x64xf32>
    %929 = arith.divf %927, %928 : vector<1x1x64xf32>
    %930 = vector.broadcast %922 : vector<1x1x64xf32> to vector<21x8x64xf32>
    %931 = arith.subf %918, %930 : vector<21x8x64xf32>
    %cst_351 = arith.constant 9.99999974E-6 : f32
    %932 = vector.broadcast %cst_351 : f32 to vector<1x1x64xf32>
    %933 = arith.addf %929, %932 : vector<1x1x64xf32>
    %934 = math.rsqrt %933 : vector<1x1x64xf32>
    %935 = vector.broadcast %934 : vector<1x1x64xf32> to vector<21x8x64xf32>
    %936 = arith.mulf %931, %935 : vector<21x8x64xf32>
    %937 = vector.extract_strided_slice %887 {offsets = [1, 0], sizes = [1, 64], strides = [1, 1]} : vector<3x64xf32> to vector<1x64xf32>
    %938 = vector.shape_cast %937 : vector<1x64xf32> to vector<1x1x64xf32>
    %939 = vector.broadcast %938 : vector<1x1x64xf32> to vector<21x8x64xf32>
    %940 = arith.mulf %936, %939 : vector<21x8x64xf32>
    %941 = vector.extract_strided_slice %887 {offsets = [2, 0], sizes = [1, 64], strides = [1, 1]} : vector<3x64xf32> to vector<1x64xf32>
    %942 = vector.shape_cast %941 : vector<1x64xf32> to vector<1x1x64xf32>
    %943 = vector.broadcast %942 : vector<1x1x64xf32> to vector<21x8x64xf32>
    %944 = arith.addf %940, %943 : vector<21x8x64xf32>
    %cst_352 = arith.constant 0.000000e+00 : f32
    %945 = vector.broadcast %cst_352 : f32 to vector<21x8x64xf32>
    %946 = arith.maximumf %944, %945 : vector<21x8x64xf32>
    %cst_353 = arith.constant dense<0.000000e+00> : vector<8x64xf32>
    %947 = vector.multi_reduction <add>, %946, %cst_353 [0] : vector<21x8x64xf32> to vector<8x64xf32>
    %cst_354 = arith.constant 2.100000e+01 : f32
    %948 = vector.broadcast %cst_354 : f32 to vector<8x64xf32>
    %949 = arith.divf %947, %948 : vector<8x64xf32>
    %950 = arith.truncf %949 : vector<8x64xf32> to vector<8x64xbf16>
    %c0_355 = arith.constant 0 : index
    %c0_356 = arith.constant 0 : index
    %951 = vector.load %arg11[%c0_355, %c0_356] : memref<64x4xbf16, #tpu.memory_space<vmem>>, vector<64x4xbf16>
    %cst_357 = arith.constant dense<0.000000e+00> : vector<8x4xf32>
    %952 = tpu.matmul %950, %951, %cst_357 {dimension_numbers = #tpu.dot_dimension_numbers<[1], [0], [0], [1], [0, 0, 1, 1], [], []>} : vector<8x64xbf16>, vector<64x4xbf16>, vector<8x4xf32> -> vector<8x4xf32>
    %cst_358 = arith.constant 0.000000e+00 : f32
    %953 = vector.broadcast %cst_358 : f32 to vector<8x4xf32>
    %954 = arith.maximumf %952, %953 : vector<8x4xf32>
    %955 = arith.truncf %954 : vector<8x4xf32> to vector<8x4xbf16>
    %c0_359 = arith.constant 0 : index
    %c0_360 = arith.constant 0 : index
    %956 = vector.load %arg12[%c0_359, %c0_360] : memref<4x64xbf16, #tpu.memory_space<vmem>>, vector<4x64xbf16>
    %cst_361 = arith.constant dense<0.000000e+00> : vector<8x64xf32>
    %957 = tpu.matmul %955, %956, %cst_361 {dimension_numbers = #tpu.dot_dimension_numbers<[1], [0], [0], [1], [0, 0, 1, 1], [], []>} : vector<8x4xbf16>, vector<4x64xbf16>, vector<8x64xf32> -> vector<8x64xf32>
    %958 = arith.negf %957 : vector<8x64xf32>
    %959 = math.exp %958 : vector<8x64xf32>
    %cst_362 = arith.constant 1.000000e+00 : f32
    %960 = vector.broadcast %cst_362 : f32 to vector<8x64xf32>
    %961 = arith.addf %960, %959 : vector<8x64xf32>
    %962 = arith.divf %960, %961 : vector<8x64xf32>
    %963 = vector.shape_cast %962 : vector<8x64xf32> to vector<1x8x64xf32>
    %964 = vector.broadcast %963 : vector<1x8x64xf32> to vector<21x8x64xf32>
    %965 = arith.mulf %946, %964 : vector<21x8x64xf32>
    %c0_363 = arith.constant 0 : index
    %c0_364 = arith.constant 0 : index
    %c0_365 = arith.constant 0 : index
    %966 = vector.load %arg13[%c0_363, %c0_364, %c0_365] : memref<3x64x32xbf16, #tpu.memory_space<vmem>>, vector<3x64x32xbf16>
    %c0_366 = arith.constant 0 : index
    %c0_367 = arith.constant 0 : index
    %967 = vector.load %arg14[%c0_366, %c0_367] : memref<3x32xf32, #tpu.memory_space<vmem>>, vector<3x32xf32>
    %968 = arith.truncf %965 : vector<21x8x64xf32> to vector<21x8x64xbf16>
    %cst_368 = arith.constant 0.000000e+00 : f32
    %969 = vector.broadcast %cst_368 : f32 to vector<19x8x32xf32>
    %970 = vector.extract_strided_slice %968 {offsets = [0, 0, 0], sizes = [19, 8, 64], strides = [1, 1, 1]} : vector<21x8x64xbf16> to vector<19x8x64xbf16>
    %971 = vector.extract_strided_slice %966 {offsets = [0, 0, 0], sizes = [1, 64, 32], strides = [1, 1, 1]} : vector<3x64x32xbf16> to vector<1x64x32xbf16>
    %972 = vector.shape_cast %971 : vector<1x64x32xbf16> to vector<64x32xbf16>
    "tpu.trace_start"() <{level = 10 : i32, message = "lbc,co->lbo"}> : () -> ()
    %cst_369 = arith.constant dense<0.000000e+00> : vector<19x8x32xf32>
    %973 = tpu.matmul %970, %972, %cst_369 {dimension_numbers = #tpu.dot_dimension_numbers<[2], [0], [0, 1], [1], [0, 0, 0, 1, 1, 1], [], []>} : vector<19x8x64xbf16>, vector<64x32xbf16>, vector<19x8x32xf32> -> vector<19x8x32xf32>
    "tpu.trace_stop"() : () -> ()
    %974 = arith.addf %969, %973 : vector<19x8x32xf32>
    %975 = vector.extract_strided_slice %968 {offsets = [1, 0, 0], sizes = [19, 8, 64], strides = [1, 1, 1]} : vector<21x8x64xbf16> to vector<19x8x64xbf16>
    %976 = vector.extract_strided_slice %966 {offsets = [1, 0, 0], sizes = [1, 64, 32], strides = [1, 1, 1]} : vector<3x64x32xbf16> to vector<1x64x32xbf16>
    %977 = vector.shape_cast %976 : vector<1x64x32xbf16> to vector<64x32xbf16>
    "tpu.trace_start"() <{level = 10 : i32, message = "lbc,co->lbo"}> : () -> ()
    %cst_370 = arith.constant dense<0.000000e+00> : vector<19x8x32xf32>
    %978 = tpu.matmul %975, %977, %cst_370 {dimension_numbers = #tpu.dot_dimension_numbers<[2], [0], [0, 1], [1], [0, 0, 0, 1, 1, 1], [], []>} : vector<19x8x64xbf16>, vector<64x32xbf16>, vector<19x8x32xf32> -> vector<19x8x32xf32>
    "tpu.trace_stop"() : () -> ()
    %979 = arith.addf %974, %978 : vector<19x8x32xf32>
    %980 = vector.extract_strided_slice %968 {offsets = [2, 0, 0], sizes = [19, 8, 64], strides = [1, 1, 1]} : vector<21x8x64xbf16> to vector<19x8x64xbf16>
    %981 = vector.extract_strided_slice %966 {offsets = [2, 0, 0], sizes = [1, 64, 32], strides = [1, 1, 1]} : vector<3x64x32xbf16> to vector<1x64x32xbf16>
    %982 = vector.shape_cast %981 : vector<1x64x32xbf16> to vector<64x32xbf16>
    "tpu.trace_start"() <{level = 10 : i32, message = "lbc,co->lbo"}> : () -> ()
    %cst_371 = arith.constant dense<0.000000e+00> : vector<19x8x32xf32>
    %983 = tpu.matmul %980, %982, %cst_371 {dimension_numbers = #tpu.dot_dimension_numbers<[2], [0], [0, 1], [1], [0, 0, 0, 1, 1, 1], [], []>} : vector<19x8x64xbf16>, vector<64x32xbf16>, vector<19x8x32xf32> -> vector<19x8x32xf32>
    "tpu.trace_stop"() : () -> ()
    %984 = arith.addf %979, %983 : vector<19x8x32xf32>
    %985 = vector.extract_strided_slice %967 {offsets = [0, 0], sizes = [1, 32], strides = [1, 1]} : vector<3x32xf32> to vector<1x32xf32>
    %986 = vector.shape_cast %985 : vector<1x32xf32> to vector<1x1x32xf32>
    %987 = vector.broadcast %986 : vector<1x1x32xf32> to vector<19x8x32xf32>
    %988 = arith.addf %984, %987 : vector<19x8x32xf32>
    %cst_372 = arith.constant dense<0.000000e+00> : vector<32xf32>
    %989 = vector.multi_reduction <add>, %988, %cst_372 [0, 1] : vector<19x8x32xf32> to vector<32xf32>
    %990 = vector.shape_cast %989 : vector<32xf32> to vector<1x1x32xf32>
    %cst_373 = arith.constant 1.520000e+02 : f32
    %991 = vector.broadcast %cst_373 : f32 to vector<1x1x32xf32>
    %992 = arith.divf %990, %991 : vector<1x1x32xf32>
    %993 = vector.broadcast %992 : vector<1x1x32xf32> to vector<19x8x32xf32>
    %994 = arith.subf %988, %993 : vector<19x8x32xf32>
    %995 = arith.mulf %994, %994 : vector<19x8x32xf32>
    %cst_374 = arith.constant dense<0.000000e+00> : vector<32xf32>
    %996 = vector.multi_reduction <add>, %995, %cst_374 [0, 1] : vector<19x8x32xf32> to vector<32xf32>
    %997 = vector.shape_cast %996 : vector<32xf32> to vector<1x1x32xf32>
    %cst_375 = arith.constant 1.520000e+02 : f32
    %998 = vector.broadcast %cst_375 : f32 to vector<1x1x32xf32>
    %999 = arith.divf %997, %998 : vector<1x1x32xf32>
    %1000 = vector.broadcast %992 : vector<1x1x32xf32> to vector<19x8x32xf32>
    %1001 = arith.subf %988, %1000 : vector<19x8x32xf32>
    %cst_376 = arith.constant 9.99999974E-6 : f32
    %1002 = vector.broadcast %cst_376 : f32 to vector<1x1x32xf32>
    %1003 = arith.addf %999, %1002 : vector<1x1x32xf32>
    %1004 = math.rsqrt %1003 : vector<1x1x32xf32>
    %1005 = vector.broadcast %1004 : vector<1x1x32xf32> to vector<19x8x32xf32>
    %1006 = arith.mulf %1001, %1005 : vector<19x8x32xf32>
    %1007 = vector.extract_strided_slice %967 {offsets = [1, 0], sizes = [1, 32], strides = [1, 1]} : vector<3x32xf32> to vector<1x32xf32>
    %1008 = vector.shape_cast %1007 : vector<1x32xf32> to vector<1x1x32xf32>
    %1009 = vector.broadcast %1008 : vector<1x1x32xf32> to vector<19x8x32xf32>
    %1010 = arith.mulf %1006, %1009 : vector<19x8x32xf32>
    %1011 = vector.extract_strided_slice %967 {offsets = [2, 0], sizes = [1, 32], strides = [1, 1]} : vector<3x32xf32> to vector<1x32xf32>
    %1012 = vector.shape_cast %1011 : vector<1x32xf32> to vector<1x1x32xf32>
    %1013 = vector.broadcast %1012 : vector<1x1x32xf32> to vector<19x8x32xf32>
    %1014 = arith.addf %1010, %1013 : vector<19x8x32xf32>
    %cst_377 = arith.constant 0.000000e+00 : f32
    %1015 = vector.broadcast %cst_377 : f32 to vector<19x8x32xf32>
    %1016 = arith.maximumf %1014, %1015 : vector<19x8x32xf32>
    %cst_378 = arith.constant dense<0.000000e+00> : vector<8x32xf32>
    %1017 = vector.multi_reduction <add>, %1016, %cst_378 [0] : vector<19x8x32xf32> to vector<8x32xf32>
    %cst_379 = arith.constant 1.900000e+01 : f32
    %1018 = vector.broadcast %cst_379 : f32 to vector<8x32xf32>
    %1019 = arith.divf %1017, %1018 : vector<8x32xf32>
    %1020 = tpu.concatenate %790, %1019 in 1 : vector<8x128xf32>, vector<8x32xf32> -> vector<8x160xf32>
    %1021 = arith.truncf %1020 : vector<8x160xf32> to vector<8x160xbf16>
    %c0_380 = arith.constant 0 : index
    %c0_381 = arith.constant 0 : index
    %1022 = vector.load %arg15[%c0_380, %c0_381] : memref<160x5xbf16, #tpu.memory_space<vmem>>, vector<160x5xbf16>
    %cst_382 = arith.constant dense<0.000000e+00> : vector<8x5xf32>
    %1023 = tpu.matmul %1021, %1022, %cst_382 {dimension_numbers = #tpu.dot_dimension_numbers<[1], [0], [0], [1], [0, 0, 1, 1], [], []>} : vector<8x160xbf16>, vector<160x5xbf16>, vector<8x5xf32> -> vector<8x5xf32>
    %c0_383 = arith.constant 0 : index
    %c0_384 = arith.constant 0 : index
    %1024 = vector.load %arg16[%c0_383, %c0_384] : memref<1x5xf32, #tpu.memory_space<vmem>>, vector<1x5xf32>
    %1025 = vector.broadcast %1024 : vector<1x5xf32> to vector<8x5xf32>
    %1026 = arith.addf %1023, %1025 : vector<8x5xf32>
    %cst_385 = arith.constant dense<0xFF800000> : vector<8xf32>
    %1027 = vector.multi_reduction <maximumf>, %1026, %cst_385 [1] : vector<8x5xf32> to vector<8xf32>
    %1028 = vector.shape_cast %1027 : vector<8xf32> to vector<8x1xf32>
    %1029 = vector.broadcast %1028 : vector<8x1xf32> to vector<8x5xf32>
    %1030 = arith.subf %1026, %1029 : vector<8x5xf32>
    %1031 = math.exp %1030 : vector<8x5xf32>
    %cst_386 = arith.constant dense<0.000000e+00> : vector<8xf32>
    %1032 = vector.multi_reduction <add>, %1031, %cst_386 [1] : vector<8x5xf32> to vector<8xf32>
    %1033 = vector.shape_cast %1032 : vector<8xf32> to vector<8x1xf32>
    %1034 = math.log %1033 : vector<8x1xf32>
    %1035 = vector.broadcast %1034 : vector<8x1xf32> to vector<8x5xf32>
    %1036 = arith.subf %1030, %1035 : vector<8x5xf32>
    %c0_387 = arith.constant 0 : index
    %c0_388 = arith.constant 0 : index
    %1037 = vector.load %arg17[%c0_387, %c0_388] : memref<8x5xf32, #tpu.memory_space<vmem>>, vector<8x5xf32>
    tpu.vector_store %arg17[%c0_387, %c0_388], %1036 {strides = array<i32>} : memref<8x5xf32, #tpu.memory_space<vmem>>, vector<8x5xf32>,
    return
  }
}

</mosaic_0001>

<llo_original>
// kernel: mlstm_fcn_forward.1
$region0: #{mlstm_fcn_forward.1}
  #allocation0 [shape = 'u32[]', space=smem, size = 0x4, offset = 0x4, fixed_abs, tag = 'smem constant byte address 0x4 - core index']
  #allocation1 [shape = 'u32[144,128]{1,0:T(1,128)}', space=vmem, size = 0x12000, scoped, tag = 'internal scratch']
  #allocation2 [shape = 'f32[32,8,128]{2,1,0:T(8,128)}', space=vmem, size = 0x20000, scoped, tag = 'scratch operand']
  #allocation3 [shape = 'f32[32,8,128]{2,1,0:T(8,128)}', space=vmem, size = 0x20000, scoped, tag = 'scratch operand']
  %s0 = inlined_call_operand.vmem [shape: f32[32,8,8], index: 0, kind: input, shape index: {}]
  %s1 = inlined_call_operand.vmem [shape: s32[1,8], index: 1, kind: input, shape index: {}]
  %s2 = inlined_call_operand.vmem [shape: bf16[8,128], index: 2, kind: input, shape index: {}]
  %s3 = inlined_call_operand.vmem [shape: f32[1,1,128], index: 3, kind: input, shape index: {}]
  %s4 = inlined_call_operand.vmem [shape: bf16[128,128], index: 4, kind: input, shape index: {}]
  %s5 = inlined_call_operand.vmem [shape: bf16[8,8,32], index: 5, kind: input, shape index: {}]
  %s6 = inlined_call_operand.vmem [shape: f32[3,32], index: 6, kind: input, shape index: {}]
  %s7 = inlined_call_operand.vmem [shape: bf16[32,2], index: 7, kind: input, shape index: {}]
  %s8 = inlined_call_operand.vmem [shape: bf16[2,32], index: 8, kind: input, shape index: {}]
  %s9 = inlined_call_operand.vmem [shape: bf16[5,32,64], index: 9, kind: input, shape index: {}]
  %s10 = inlined_call_operand.vmem [shape: f32[3,64], index: 10, kind: input, shape index: {}]
  %s11 = inlined_call_operand.vmem [shape: bf16[64,4], index: 11, kind: input, shape index: {}]
  %s12 = inlined_call_operand.vmem [shape: bf16[4,64], index: 12, kind: input, shape index: {}]
  %s13 = inlined_call_operand.vmem [shape: bf16[3,64,32], index: 13, kind: input, shape index: {}]
  %s14 = inlined_call_operand.vmem [shape: f32[3,32], index: 14, kind: input, shape index: {}]
  %s15 = inlined_call_operand.vmem [shape: bf16[160,5], index: 15, kind: input, shape index: {}]
  %s16 = inlined_call_operand.vmem [shape: f32[1,5], index: 16, kind: input, shape index: {}]
  %s17 = inlined_call_operand.hbm [shape: f32[8,5], index: 17, kind: output, shape index: {}]
  %s18 = sld [smem:[#allocation0]]
  $region78: #{mlstm_fcn_forward.1} parent=0
    _
  %s20 = ssub.s32 1, %s18
  %s21 = scalar_select 0, %s20, %s18
  $region1: #{mlstm_fcn_forward.1} parent=0
    #allocation4 [shape = 'u8[4096]{0}', space=vmem, size = 0x1000, scoped, tag = 'output window, operand 0, single buffered']
    #allocation5 [shape = 's32[1]{0}', space=sflag, size = 0x4, scoped, tag = 'scoped memory for mlstm_fcn_forward.1']
    %22 = vsyncpa [#allocation5], 0
    // Predicated region
    $region2: #{mlstm_fcn_forward.1} parent=1 // pred_check
      _
    $region3: #{mlstm_fcn_forward.1} parent=1 // pred_check_branch
      %24 = sbr.rel (0) target = $region5
    $region4: #{mlstm_fcn_forward.1} parent=1 // pred_region
      _
    $region5: #{mlstm_fcn_forward.1} parent=1 // pred_fallthru
      _
    // Predicated region
    $region6: #{mlstm_fcn_forward.1} parent=1 // pred_check
      _
    $region7: #{mlstm_fcn_forward.1} parent=1 // pred_check_branch
      %26 = sbr.rel (0) target = $region9
    $region8: #{mlstm_fcn_forward.1} parent=1 // pred_region
      _
    $region9: #{mlstm_fcn_forward.1} parent=1 // pred_fallthru
      _
    // Predicated region
    $region10: #{mlstm_fcn_forward.1} parent=1 // pred_check
      _
    $region11: #{mlstm_fcn_forward.1} parent=1 // pred_check_branch
      %28 = sbr.rel (0) target = $region13
    $region12: #{mlstm_fcn_forward.1} parent=1 // pred_region
      _
    $region13: #{mlstm_fcn_forward.1} parent=1 // pred_fallthru
      _
    // Predicated region
    $region14: #{mlstm_fcn_forward.1} parent=1 // pred_check
      _
    $region15: #{mlstm_fcn_forward.1} parent=1 // pred_check_branch
      %30 = sbr.rel (0) target = $region17
    $region16: #{mlstm_fcn_forward.1} parent=1 // pred_region
      _
    $region17: #{mlstm_fcn_forward.1} parent=1 // pred_fallthru
      _
    // Predicated region
    $region18: #{mlstm_fcn_forward.1} parent=1 // pred_check
      _
    $region19: #{mlstm_fcn_forward.1} parent=1 // pred_check_branch
      %32 = sbr.rel (0) target = $region21
    $region20: #{mlstm_fcn_forward.1} parent=1 // pred_region
      _
    $region21: #{mlstm_fcn_forward.1} parent=1 // pred_fallthru
      _
    // Predicated region
    $region22: #{mlstm_fcn_forward.1} parent=1 // pred_check
      _
    $region23: #{mlstm_fcn_forward.1} parent=1 // pred_check_branch
      %34 = sbr.rel (0) target = $region25
    $region24: #{mlstm_fcn_forward.1} parent=1 // pred_region
      _
    $region25: #{mlstm_fcn_forward.1} parent=1 // pred_fallthru
      _
    // Predicated region
    $region26: #{mlstm_fcn_forward.1} parent=1 // pred_check
      _
    $region27: #{mlstm_fcn_forward.1} parent=1 // pred_check_branch
      %36 = sbr.rel (0) target = $region29
    $region28: #{mlstm_fcn_forward.1} parent=1 // pred_region
      _
    $region29: #{mlstm_fcn_forward.1} parent=1 // pred_fallthru
      _
    // Predicated region
    $region30: #{mlstm_fcn_forward.1} parent=1 // pred_check
      _
    $region31: #{mlstm_fcn_forward.1} parent=1 // pred_check_branch
      %38 = sbr.rel (0) target = $region33
    $region32: #{mlstm_fcn_forward.1} parent=1 // pred_region
      _
    $region33: #{mlstm_fcn_forward.1} parent=1 // pred_fallthru
      _
    // Predicated region
    $region34: #{mlstm_fcn_forward.1} parent=1 // pred_check
      _
    $region35: #{mlstm_fcn_forward.1} parent=1 // pred_check_branch
      %40 = sbr.rel (0) target = $region37
    $region36: #{mlstm_fcn_forward.1} parent=1 // pred_region
      _
    $region37: #{mlstm_fcn_forward.1} parent=1 // pred_fallthru
      _
    // Predicated region
    $region38: #{mlstm_fcn_forward.1} parent=1 // pred_check
      _
    $region39: #{mlstm_fcn_forward.1} parent=1 // pred_check_branch
      %42 = sbr.rel (0) target = $region41
    $region40: #{mlstm_fcn_forward.1} parent=1 // pred_region
      _
    $region41: #{mlstm_fcn_forward.1} parent=1 // pred_fallthru
      _
    // Predicated region
    $region42: #{mlstm_fcn_forward.1} parent=1 // pred_check
      _
    $region43: #{mlstm_fcn_forward.1} parent=1 // pred_check_branch
      %44 = sbr.rel (0) target = $region45
    $region44: #{mlstm_fcn_forward.1} parent=1 // pred_region
      _
    $region45: #{mlstm_fcn_forward.1} parent=1 // pred_fallthru
      _
    // Predicated region
    $region46: #{mlstm_fcn_forward.1} parent=1 // pred_check
      _
    $region47: #{mlstm_fcn_forward.1} parent=1 // pred_check_branch
      %46 = sbr.rel (0) target = $region49
    $region48: #{mlstm_fcn_forward.1} parent=1 // pred_region
      _
    $region49: #{mlstm_fcn_forward.1} parent=1 // pred_fallthru
      _
    // Predicated region
    $region50: #{mlstm_fcn_forward.1} parent=1 // pred_check
      _
    $region51: #{mlstm_fcn_forward.1} parent=1 // pred_check_branch
      %48 = sbr.rel (0) target = $region53
    $region52: #{mlstm_fcn_forward.1} parent=1 // pred_region
      _
    $region53: #{mlstm_fcn_forward.1} parent=1 // pred_fallthru
      _
    // Predicated region
    $region54: #{mlstm_fcn_forward.1} parent=1 // pred_check
      _
    $region55: #{mlstm_fcn_forward.1} parent=1 // pred_check_branch
      %50 = sbr.rel (0) target = $region57
    $region56: #{mlstm_fcn_forward.1} parent=1 // pred_region
      _
    $region57: #{mlstm_fcn_forward.1} parent=1 // pred_fallthru
      _
    // Predicated region
    $region58: #{mlstm_fcn_forward.1} parent=1 // pred_check
      _
    $region59: #{mlstm_fcn_forward.1} parent=1 // pred_check_branch
      %52 = sbr.rel (0) target = $region61
    $region60: #{mlstm_fcn_forward.1} parent=1 // pred_region
      _
    $region61: #{mlstm_fcn_forward.1} parent=1 // pred_fallthru
      _
    // Predicated region
    $region62: #{mlstm_fcn_forward.1} parent=1 // pred_check
      _
    $region63: #{mlstm_fcn_forward.1} parent=1 // pred_check_branch
      %54 = sbr.rel (0) target = $region65
    $region64: #{mlstm_fcn_forward.1} parent=1 // pred_region
      _
    $region65: #{mlstm_fcn_forward.1} parent=1 // pred_fallthru
      _
    // Predicated region
    $region66: #{mlstm_fcn_forward.1} parent=1 // pred_check
      _
    $region67: #{mlstm_fcn_forward.1} parent=1 // pred_check_branch
      %56 = sbr.rel (0) target = $region69
    $region68: #{mlstm_fcn_forward.1} parent=1 // pred_region
      _
    $region69: #{mlstm_fcn_forward.1} parent=1 // pred_fallthru
      _
    %v58 = vld [vmem:[%s0] sm:$0xff]
    %v59 = vld [vmem:[%s0 + $0x8] sm:$0xff]
    %v60 = vld [vmem:[%s0 + $0x10] sm:$0xff]
    %v61 = vld [vmem:[%s0 + $0x18] sm:$0xff]
    %v62 = vld [vmem:[%s0 + $0x20] sm:$0xff]
    %v63 = vld [vmem:[%s0 + $0x28] sm:$0xff]
    %v64 = vld [vmem:[%s0 + $0x30] sm:$0xff]
    %v65 = vld [vmem:[%s0 + $0x38] sm:$0xff]
    %v66 = vld [vmem:[%s0 + $0x40] sm:$0xff]
    %v67 = vld [vmem:[%s0 + $0x48] sm:$0xff]
    %v68 = vld [vmem:[%s0 + $0x50] sm:$0xff]
    %v69 = vld [vmem:[%s0 + $0x58] sm:$0xff]
    %v70 = vld [vmem:[%s0 + $0x60] sm:$0xff]
    %v71 = vld [vmem:[%s0 + $0x68] sm:$0xff]
    %v72 = vld [vmem:[%s0 + $0x70] sm:$0xff]
    %v73 = vld [vmem:[%s0 + $0x78] sm:$0xff]
    %v74 = vld [vmem:[%s0 + $0x80] sm:$0xff]
    %v75 = vld [vmem:[%s0 + $0x88] sm:$0xff]
    %v76 = vld [vmem:[%s0 + $0x90] sm:$0xff]
    %v77 = vld [vmem:[%s0 + $0x98] sm:$0xff]
    %v78 = vld [vmem:[%s0 + $0xa0] sm:$0xff]
    %v79 = vld [vmem:[%s0 + $0xa8] sm:$0xff]
    %v80 = vld [vmem:[%s0 + $0xb0] sm:$0xff]
    %v81 = vld [vmem:[%s0 + $0xb8] sm:$0xff]
    %v82 = vld [vmem:[%s0 + $0xc0] sm:$0xff]
    %v83 = vld [vmem:[%s0 + $0xc8] sm:$0xff]
    %v84 = vld [vmem:[%s0 + $0xd0] sm:$0xff]
    %v85 = vld [vmem:[%s0 + $0xd8] sm:$0xff]
    %v86 = vld [vmem:[%s0 + $0xe0] sm:$0xff]
    %v87 = vld [vmem:[%s0 + $0xe8] sm:$0xff]
    %v88 = vld [vmem:[%s0 + $0xf0] sm:$0xff]
    %v89 = vld [vmem:[%s0 + $0xf8] sm:$0xff]
    %v90 = vpack.c.bf16 %v58, %v58
    %v91 = vpack.c.bf16 %v59, %v59
    %v92 = vpack.c.bf16 %v60, %v60
    %v93 = vpack.c.bf16 %v61, %v61
    %v94 = vpack.c.bf16 %v62, %v62
    %v95 = vpack.c.bf16 %v63, %v63
    %v96 = vpack.c.bf16 %v64, %v64
    %v97 = vpack.c.bf16 %v65, %v65
    %v98 = vpack.c.bf16 %v66, %v66
    %v99 = vpack.c.bf16 %v67, %v67
    %v100 = vpack.c.bf16 %v68, %v68
    %v101 = vpack.c.bf16 %v69, %v69
    %v102 = vpack.c.bf16 %v70, %v70
    %v103 = vpack.c.bf16 %v71, %v71
    %v104 = vpack.c.bf16 %v72, %v72
    %v105 = vpack.c.bf16 %v73, %v73
    %v106 = vpack.c.bf16 %v74, %v74
    %v107 = vpack.c.bf16 %v75, %v75
    %v108 = vpack.c.bf16 %v76, %v76
    %v109 = vpack.c.bf16 %v77, %v77
    %v110 = vpack.c.bf16 %v78, %v78
    %v111 = vpack.c.bf16 %v79, %v79
    %v112 = vpack.c.bf16 %v80, %v80
    %v113 = vpack.c.bf16 %v81, %v81
    %v114 = vpack.c.bf16 %v82, %v82
    %v115 = vpack.c.bf16 %v83, %v83
    %v116 = vpack.c.bf16 %v84, %v84
    %v117 = vpack.c.bf16 %v85, %v85
    %v118 = vpack.c.bf16 %v86, %v86
    %v119 = vpack.c.bf16 %v87, %v87
    %v120 = vpack.c.bf16 %v88, %v88
    %v121 = vpack.c.bf16 %v89, %v89
    %v122 = vld [vmem:[%s2] sm:$0xf]
    %v123 = vld [vmem:[%s3] sm:$0x1]
    %v125 = vlaneseq
    %v126 = vshrl.u32 %v125, 7
    %v127 = vsub.s32 0, %v126
    %v128 = vrot.slane %v123, %v127
    %v162 = vunpack.c.l.b16 %v90
    %v163 = vunpack.c.l.b16 %v91
    %v164 = vunpack.c.l.b16 %v92
    %v165 = vunpack.c.l.b16 %v93
    %v166 = vunpack.c.l.b16 %v94
    %v167 = vunpack.c.l.b16 %v95
    %v168 = vunpack.c.l.b16 %v96
    %v169 = vunpack.c.l.b16 %v97
    %v170 = vunpack.c.l.b16 %v98
    %v171 = vunpack.c.l.b16 %v99
    %v172 = vunpack.c.l.b16 %v100
    %v173 = vunpack.c.l.b16 %v101
    %v174 = vunpack.c.l.b16 %v102
    %v175 = vunpack.c.l.b16 %v103
    %v176 = vunpack.c.l.b16 %v104
    %v177 = vunpack.c.l.b16 %v105
    %v178 = vunpack.c.l.b16 %v106
    %v179 = vunpack.c.l.b16 %v107
    %v180 = vunpack.c.l.b16 %v108
    %v181 = vunpack.c.l.b16 %v109
    %v182 = vunpack.c.l.b16 %v110
    %v183 = vunpack.c.l.b16 %v111
    %v184 = vunpack.c.l.b16 %v112
    %v185 = vunpack.c.l.b16 %v113
    %v186 = vunpack.c.l.b16 %v114
    %v187 = vunpack.c.l.b16 %v115
    %v188 = vunpack.c.l.b16 %v116
    %v189 = vunpack.c.l.b16 %v117
    %v190 = vunpack.c.l.b16 %v118
    %v191 = vunpack.c.l.b16 %v119
    %v192 = vunpack.c.l.b16 %v120
    %v193 = vunpack.c.l.b16 %v121
    %v194 = vpack.c.b16 %v163, %v162
    %v195 = vpack.c.b16 %v165, %v164
    %v196 = vpack.c.b16 %v167, %v166
    %v197 = vpack.c.b16 %v169, %v168
    %v198 = vpack.c.b16 %v171, %v170
    %v199 = vpack.c.b16 %v173, %v172
    %v200 = vpack.c.b16 %v175, %v174
    %v201 = vpack.c.b16 %v177, %v176
    %v202 = vpack.c.b16 %v179, %v178
    %v203 = vpack.c.b16 %v181, %v180
    %v204 = vpack.c.b16 %v183, %v182
    %v205 = vpack.c.b16 %v185, %v184
    %v206 = vpack.c.b16 %v187, %v186
    %v207 = vpack.c.b16 %v189, %v188
    %v208 = vpack.c.b16 %v191, %v190
    %v209 = vpack.c.b16 %v193, %v192
    %vm210 = vcmask 64512
    %v212 = vsel %vm210, %v194, 0
    %v215 = vsel %vm210, %v195, 0
    %v218 = vsel %vm210, %v196, 0
    %v221 = vsel %vm210, %v197, 0
    %v224 = vsel %vm210, %v198, 0
    %v227 = vsel %vm210, %v199, 0
    %v230 = vsel %vm210, %v200, 0
    %v233 = vsel %vm210, %v201, 0
    %v236 = vsel %vm210, %v202, 0
    %v239 = vsel %vm210, %v203, 0
    %v242 = vsel %vm210, %v204, 0
    %v245 = vsel %vm210, %v205, 0
    %v248 = vsel %vm210, %v206, 0
    %v251 = vsel %vm210, %v207, 0
    %v254 = vsel %vm210, %v208, 0
    %v257 = vsel %vm210, %v209, 0
    %vm259 = vcmask 1043456
    %v261 = vsel %vm259, %v122, 0
    %263 = vmatprep.subr.bf16.mxu0 0
    %264 = vmatpush1.bf16.msra.mxu0 %v261
    %265 = vmatprep.subr.bf16.mxu0 0
    %266 = vmatpush1.bf16.msra.mxu0 0
    %267 = vmatprep.subr.bf16.mxu0 0
    %268 = vmatpush1.bf16.msra.mxu0 0
    %269 = vmatprep.subr.bf16.mxu0 0
    %270 = vmatpush1.bf16.msra.mxu0 0
    %271 = vmatprep.subr.bf16.mxu0 0
    %272 = vmatpush1.bf16.msra.mxu0 0
    %273 = vmatprep.subr.bf16.mxu0 0
    %274 = vmatpush1.bf16.msra.mxu0 0
    %275 = vmatprep.subr.bf16.mxu0 0
    %276 = vmatpush1.bf16.msra.mxu0 0
    %277 = vmatprep.subr.bf16.mxu0 0
    %278 = vmatpush1.bf16.msra.mxu0 0
    %279 = vmatprep.subr.bf16.mxu0 0
    %280 = vmatpush1.bf16.msra.mxu0 0
    %281 = vmatprep.subr.bf16.mxu0 0
    %282 = vmatpush1.bf16.msra.mxu0 0
    %283 = vmatprep.subr.bf16.mxu0 0
    %284 = vmatpush1.bf16.msra.mxu0 0
    %285 = vmatprep.subr.bf16.mxu0 0
    %286 = vmatpush1.bf16.msra.mxu0 0
    %287 = vmatprep.subr.bf16.mxu0 0
    %288 = vmatpush1.bf16.msra.mxu0 0
    %289 = vmatprep.subr.bf16.mxu0 0
    %290 = vmatpush1.bf16.msra.mxu0 0
    %291 = vmatprep.subr.bf16.mxu0 0
    %292 = vmatpush1.bf16.msra.mxu0 0
    %293 = vmatprep.subr.bf16.mxu0 0
    %294 = vmatpush1.bf16.msra.mxu0 0
    %295 = vmatprep.mubr.bf16.mxu0 0
    %296 = vmatmul.mubr.bf16.gmra.mrb[0].mxu0 %v212
    %v297 = vpop.f32.mrb[0].mxu0
    %v298 = vadd.f32 %v128, %v297
    %v299 = vpop.f32.mrb[0].mxu0
    %v300 = vpop.f32.mrb[0].mxu0
    %v301 = vadd.f32 %v128, %v300
    %v302 = vpop.f32.mrb[0].mxu0
    %303 = vmatprep.mubr.bf16.mxu0 0
    %304 = vmatmul.mubr.bf16.gmra.mrb[0].mxu0 %v215
    %v305 = vpop.f32.mrb[0].mxu0
    %v306 = vadd.f32 %v128, %v305
    %v307 = vpop.f32.mrb[0].mxu0
    %v308 = vpop.f32.mrb[0].mxu0
    %v309 = vadd.f32 %v128, %v308
    %v310 = vpop.f32.mrb[0].mxu0
    %311 = vmatprep.mubr.bf16.mxu0 0
    %312 = vmatmul.mubr.bf16.gmra.mrb[0].mxu0 %v218
    %v313 = vpop.f32.mrb[0].mxu0
    %v314 = vadd.f32 %v128, %v313
    %v315 = vpop.f32.mrb[0].mxu0
    %v316 = vpop.f32.mrb[0].mxu0
    %v317 = vadd.f32 %v128, %v316
    %v318 = vpop.f32.mrb[0].mxu0
    %319 = vmatprep.mubr.bf16.mxu0 0
    %320 = vmatmul.mubr.bf16.gmra.mrb[0].mxu0 %v221
    %v321 = vpop.f32.mrb[0].mxu0
    %v322 = vadd.f32 %v128, %v321
    %v323 = vpop.f32.mrb[0].mxu0
    %v324 = vpop.f32.mrb[0].mxu0
    %v325 = vadd.f32 %v128, %v324
    %v326 = vpop.f32.mrb[0].mxu0
    %327 = vmatprep.mubr.bf16.mxu0 0
    %328 = vmatmul.mubr.bf16.gmra.mrb[0].mxu0 %v224
    %v329 = vpop.f32.mrb[0].mxu0
    %v330 = vadd.f32 %v128, %v329
    %v331 = vpop.f32.mrb[0].mxu0
    %v332 = vpop.f32.mrb[0].mxu0
    %v333 = vadd.f32 %v128, %v332
    %v334 = vpop.f32.mrb[0].mxu0
    %335 = vmatprep.mubr.bf16.mxu0 0
    %336 = vmatmul.mubr.bf16.gmra.mrb[0].mxu0 %v227
    %v337 = vpop.f32.mrb[0].mxu0
    %v338 = vadd.f32 %v128, %v337
    %v339 = vpop.f32.mrb[0].mxu0
    %v340 = vpop.f32.mrb[0].mxu0
    %v341 = vadd.f32 %v128, %v340
    %v342 = vpop.f32.mrb[0].mxu0
    %343 = vmatprep.mubr.bf16.mxu0 0
    %344 = vmatmul.mubr.bf16.gmra.mrb[0].mxu0 %v230
    %v345 = vpop.f32.mrb[0].mxu0
    %v346 = vadd.f32 %v128, %v345
    %v347 = vpop.f32.mrb[0].mxu0
    %v348 = vpop.f32.mrb[0].mxu0
    %v349 = vadd.f32 %v128, %v348
    %v350 = vpop.f32.mrb[0].mxu0
    %351 = vmatprep.mubr.bf16.mxu0 0
    %352 = vmatmul.mubr.bf16.gmra.mrb[0].mxu0 %v233
    %v353 = vpop.f32.mrb[0].mxu0
    %v354 = vadd.f32 %v128, %v353
    %v355 = vpop.f32.mrb[0].mxu0
    %v356 = vpop.f32.mrb[0].mxu0
    %v357 = vadd.f32 %v128, %v356
    %v358 = vpop.f32.mrb[0].mxu0
    %359 = vmatprep.mubr.bf16.mxu0 0
    %360 = vmatmul.mubr.bf16.gmra.mrb[0].mxu0 %v236
    %v361 = vpop.f32.mrb[0].mxu0
    %v362 = vadd.f32 %v128, %v361
    %v363 = vpop.f32.mrb[0].mxu0
    %v364 = vpop.f32.mrb[0].mxu0
    %v365 = vadd.f32 %v128, %v364
    %v366 = vpop.f32.mrb[0].mxu0
    %367 = vmatprep.mubr.bf16.mxu0 0
    %368 = vmatmul.mubr.bf16.gmra.mrb[0].mxu0 %v239
    %v369 = vpop.f32.mrb[0].mxu0
    %v370 = vadd.f32 %v128, %v369
    %v371 = vpop.f32.mrb[0].mxu0
    %v372 = vpop.f32.mrb[0].mxu0
    %v373 = vadd.f32 %v128, %v372
    %v374 = vpop.f32.mrb[0].mxu0
    %375 = vmatprep.mubr.bf16.mxu0 0
    %376 = vmatmul.mubr.bf16.gmra.mrb[0].mxu0 %v242
    %v377 = vpop.f32.mrb[0].mxu0
    %v378 = vadd.f32 %v128, %v377
    %v379 = vpop.f32.mrb[0].mxu0
    %v380 = vpop.f32.mrb[0].mxu0
    %v381 = vadd.f32 %v128, %v380
    %v382 = vpop.f32.mrb[0].mxu0
    %383 = vmatprep.mubr.bf16.mxu0 0
    %384 = vmatmul.mubr.bf16.gmra.mrb[0].mxu0 %v245
    %v385 = vpop.f32.mrb[0].mxu0
    %v386 = vadd.f32 %v128, %v385
    %v387 = vpop.f32.mrb[0].mxu0
    %v388 = vpop.f32.mrb[0].mxu0
    %v389 = vadd.f32 %v128, %v388
    %v390 = vpop.f32.mrb[0].mxu0
    %391 = vmatprep.mubr.bf16.mxu0 0
    %392 = vmatmul.mubr.bf16.gmra.mrb[0].mxu0 %v248
    %v393 = vpop.f32.mrb[0].mxu0
    %v394 = vadd.f32 %v128, %v393
    %v395 = vpop.f32.mrb[0].mxu0
    %v396 = vpop.f32.mrb[0].mxu0
    %v397 = vadd.f32 %v128, %v396
    %v398 = vpop.f32.mrb[0].mxu0
    %399 = vmatprep.mubr.bf16.mxu0 0
    %400 = vmatmul.mubr.bf16.gmra.mrb[0].mxu0 %v251
    %v401 = vpop.f32.mrb[0].mxu0
    %v402 = vadd.f32 %v128, %v401
    %v403 = vpop.f32.mrb[0].mxu0
    %v404 = vpop.f32.mrb[0].mxu0
    %v405 = vadd.f32 %v128, %v404
    %v406 = vpop.f32.mrb[0].mxu0
    %407 = vmatprep.mubr.bf16.mxu0 0
    %408 = vmatmul.mubr.bf16.gmra.mrb[0].mxu0 %v254
    %v409 = vpop.f32.mrb[0].mxu0
    %v410 = vadd.f32 %v128, %v409
    %v411 = vpop.f32.mrb[0].mxu0
    %v412 = vpop.f32.mrb[0].mxu0
    %v413 = vadd.f32 %v128, %v412
    %v414 = vpop.f32.mrb[0].mxu0
    %415 = vmatprep.mubr.bf16.mxu0 0
    %416 = vmatmul.mubr.bf16.gmra.mrb[0].mxu0 %v257
    %v417 = vpop.f32.mrb[0].mxu0
    %v418 = vadd.f32 %v128, %v417
    %v419 = vpop.f32.mrb[0].mxu0
    %v420 = vpop.f32.mrb[0].mxu0
    %v421 = vadd.f32 %v128, %v420
    %v422 = vpop.f32.mrb[0].mxu0
    %423 = vdwg.mxu0
    %424 = vst [vmem:[#allocation2] sm:$0xff] %v298
    %425 = vst [vmem:[#allocation2 + $0x8] sm:$0xff] %v301
    %426 = vst [vmem:[#allocation2 + $0x10] sm:$0xff] %v306
    %427 = vst [vmem:[#allocation2 + $0x18] sm:$0xff] %v309
    %428 = vst [vmem:[#allocation2 + $0x20] sm:$0xff] %v314
    %429 = vst [vmem:[#allocation2 + $0x28] sm:$0xff] %v317
    %430 = vst [vmem:[#allocation2 + $0x30] sm:$0xff] %v322
    %431 = vst [vmem:[#allocation2 + $0x38] sm:$0xff] %v325
    %432 = vst [vmem:[#allocation2 + $0x40] sm:$0xff] %v330
    %433 = vst [vmem:[#allocation2 + $0x48] sm:$0xff] %v333
    %434 = vst [vmem:[#allocation2 + $0x50] sm:$0xff] %v338
    %435 = vst [vmem:[#allocation2 + $0x58] sm:$0xff] %v341
    %436 = vst [vmem:[#allocation2 + $0x60] sm:$0xff] %v346
    %437 = vst [vmem:[#allocation2 + $0x68] sm:$0xff] %v349
    %438 = vst [vmem:[#allocation2 + $0x70] sm:$0xff] %v354
    %439 = vst [vmem:[#allocation2 + $0x78] sm:$0xff] %v357
    %440 = vst [vmem:[#allocation2 + $0x80] sm:$0xff] %v362
    %441 = vst [vmem:[#allocation2 + $0x88] sm:$0xff] %v365
    %442 = vst [vmem:[#allocation2 + $0x90] sm:$0xff] %v370
    %443 = vst [vmem:[#allocation2 + $0x98] sm:$0xff] %v373
    %444 = vst [vmem:[#allocation2 + $0xa0] sm:$0xff] %v378
    %445 = vst [vmem:[#allocation2 + $0xa8] sm:$0xff] %v381
    %446 = vst [vmem:[#allocation2 + $0xb0] sm:$0xff] %v386
    %447 = vst [vmem:[#allocation2 + $0xb8] sm:$0xff] %v389
    %448 = vst [vmem:[#allocation2 + $0xc0] sm:$0xff] %v394
    %449 = vst [vmem:[#allocation2 + $0xc8] sm:$0xff] %v397
    %450 = vst [vmem:[#allocation2 + $0xd0] sm:$0xff] %v402
    %451 = vst [vmem:[#allocation2 + $0xd8] sm:$0xff] %v405
    %452 = vst [vmem:[#allocation2 + $0xe0] sm:$0xff] %v410
    %453 = vst [vmem:[#allocation2 + $0xe8] sm:$0xff] %v413
    %454 = vst [vmem:[#allocation2 + $0xf0] sm:$0xff] %v418
    %455 = vst [vmem:[#allocation2 + $0xf8] sm:$0xff] %v421
    %v456 = vld [vmem:[%s4] sm:$0xf]
    %v457 = vld [vmem:[%s4 + $0x4] sm:$0xf]
    %v458 = vld [vmem:[%s4 + $0x8] sm:$0xf]
    %v459 = vld [vmem:[%s4 + $0xc] sm:$0xf]
    %v460 = vld [vmem:[%s4 + $0x10] sm:$0xf]
    %v461 = vld [vmem:[%s4 + $0x14] sm:$0xf]
    %v462 = vld [vmem:[%s4 + $0x18] sm:$0xf]
    %v463 = vld [vmem:[%s4 + $0x1c] sm:$0xf]
    %v464 = vld [vmem:[%s4 + $0x20] sm:$0xf]
    %v465 = vld [vmem:[%s4 + $0x24] sm:$0xf]
    %v466 = vld [vmem:[%s4 + $0x28] sm:$0xf]
    %v467 = vld [vmem:[%s4 + $0x2c] sm:$0xf]
    %v468 = vld [vmem:[%s4 + $0x30] sm:$0xf]
    %v469 = vld [vmem:[%s4 + $0x34] sm:$0xf]
    %v470 = vld [vmem:[%s4 + $0x38] sm:$0xf]
    %v471 = vld [vmem:[%s4 + $0x3c] sm:$0xf]
    %v472 = vld [vmem:[#allocation2] sm:$0xff]
    %v489 = vunpack.c.l.b16 %v456
    %v490 = vunpack.c.l.b16 %v457
    %v491 = vunpack.c.l.b16 %v458
    %v492 = vunpack.c.l.b16 %v459
    %v493 = vunpack.c.l.b16 %v460
    %v494 = vunpack.c.l.b16 %v461
    %v495 = vunpack.c.l.b16 %v462
    %v496 = vunpack.c.l.b16 %v463
    %v497 = vunpack.c.l.b16 %v464
    %v498 = vunpack.c.l.b16 %v465
    %v499 = vunpack.c.l.b16 %v466
    %v500 = vunpack.c.l.b16 %v467
    %v501 = vunpack.c.l.b16 %v468
    %v502 = vunpack.c.l.b16 %v469
    %v503 = vunpack.c.l.b16 %v470
    %v504 = vunpack.c.l.b16 %v471
    %v505 = vpack.c.b16 %v490, %v489
    %v506 = vpack.c.b16 %v492, %v491
    %v507 = vpack.c.b16 %v494, %v493
    %v508 = vpack.c.b16 %v496, %v495
    %v509 = vpack.c.b16 %v498, %v497
    %v510 = vpack.c.b16 %v500, %v499
    %v511 = vpack.c.b16 %v502, %v501
    %v512 = vpack.c.b16 %v504, %v503
    %521 = vmatprep.subr.bf16.mxu0 0
    %522 = vmatpush1.bf16.msra.mxu0 %v505
    %523 = vmatprep.subr.bf16.mxu0 0
    %524 = vmatpush1.bf16.msra.mxu0 %v506
    %525 = vmatprep.subr.bf16.mxu0 0
    %526 = vmatpush1.bf16.msra.mxu0 %v507
    %527 = vmatprep.subr.bf16.mxu0 0
    %528 = vmatpush1.bf16.msra.mxu0 %v508
    %529 = vmatprep.subr.bf16.mxu0 0
    %530 = vmatpush1.bf16.msra.mxu0 %v509
    %531 = vmatprep.subr.bf16.mxu0 0
    %532 = vmatpush1.bf16.msra.mxu0 %v510
    %533 = vmatprep.subr.bf16.mxu0 0
    %534 = vmatpush1.bf16.msra.mxu0 %v511
    %535 = vmatprep.subr.bf16.mxu0 0
    %536 = vmatpush1.bf16.msra.mxu0 %v512
    %537 = vmatprep.subr.bf16.mxu0 0
    %538 = vmatpush1.bf16.msra.mxu0 0
    %539 = vmatprep.subr.bf16.mxu0 0
    %540 = vmatpush1.bf16.msra.mxu0 0
    %541 = vmatprep.subr.bf16.mxu0 0
    %542 = vmatpush1.bf16.msra.mxu0 0
    %543 = vmatprep.subr.bf16.mxu0 0
    %544 = vmatpush1.bf16.msra.mxu0 0
    %545 = vmatprep.subr.bf16.mxu0 0
    %546 = vmatpush1.bf16.msra.mxu0 0
    %547 = vmatprep.subr.bf16.mxu0 0
    %548 = vmatpush1.bf16.msra.mxu0 0
    %549 = vmatprep.subr.bf16.mxu0 0
    %550 = vmatpush1.bf16.msra.mxu0 0
    %551 = vmatprep.subr.bf16.mxu0 0
    %552 = vmatpush1.bf16.msra.mxu0 0
    %553 = vmatprep.mubr.bf16.mxu0 0
    %554 = vmatmul.mubr.bf16.gmra.mrb[0].mxu0 0
    %v555 = vpop.f32.mrb[0].mxu0
    %v556 = vadd.f32 0.0, %v555
    %v557 = vpop.f32.mrb[0].mxu0
    %v558 = vpop.f32.mrb[0].mxu0
    %v559 = vpop.f32.mrb[0].mxu0
    %560 = vdwg.mxu0
    %v561 = vadd.f32 %v472, %v556
    %v562 = vxor.u32 %v561, 2147483648
    %v563 = vmul.f32 %v562, 1.442695
    %v564 = vpow.pop %v563
    %v565 = vadd.f32 %v564, 1.0
    %v566 = vrcp.pop %v565
    %v567 = vmul.f32 1.0, %v566
    %v568 = vtanh.pop %v561
    %569 = vrot.lane.b32.xlu0 %v567, 64
    %v570 = vpop.permute.xlu0 %569
    %571 = vrot.lane.b32.xlu0 %v567, 32
    %v572 = vpop.permute.xlu0 %571
    %573 = vrot.lane.b32.xlu0 %v567, 96
    %v574 = vpop.permute.xlu0 %573
    %v575 = vmul.f32 %v572, 0.0
    %v576 = vmul.f32 %v570, %v568
    %v577 = vadd.f32 %v575, %v576
    %v578 = vtanh.pop %v577
    %v579 = vmul.f32 %v574, %v578
    %580 = vst [vmem:[#allocation3] sm:$0xff] %v579
    %s581 = scalar_lea.vmem [#allocation2], 8
    %v582 = vld [vmem:[%s581] sm:$0xff]
    %v583 = vpack.c.bf16 %v579, %v579
    %584 = vmatprep.subr.bf16.mxu0 0
    %585 = vmatpush1.bf16.msra.mxu0 %v505
    %586 = vmatprep.subr.bf16.mxu0 0
    %587 = vmatpush1.bf16.msra.mxu0 %v506
    %588 = vmatprep.subr.bf16.mxu0 0
    %589 = vmatpush1.bf16.msra.mxu0 %v507
    %590 = vmatprep.subr.bf16.mxu0 0
    %591 = vmatpush1.bf16.msra.mxu0 %v508
    %592 = vmatprep.subr.bf16.mxu0 0
    %593 = vmatpush1.bf16.msra.mxu0 %v509
    %594 = vmatprep.subr.bf16.mxu0 0
    %595 = vmatpush1.bf16.msra.mxu0 %v510
    %596 = vmatprep.subr.bf16.mxu0 0
    %597 = vmatpush1.bf16.msra.mxu0 %v511
    %598 = vmatprep.subr.bf16.mxu0 0
    %599 = vmatpush1.bf16.msra.mxu0 %v512
    %600 = vmatprep.subr.bf16.mxu0 0
    %601 = vmatpush1.bf16.msra.mxu0 0
    %602 = vmatprep.subr.bf16.mxu0 0
    %603 = vmatpush1.bf16.msra.mxu0 0
    %604 = vmatprep.subr.bf16.mxu0 0
    %605 = vmatpush1.bf16.msra.mxu0 0
    %606 = vmatprep.subr.bf16.mxu0 0
    %607 = vmatpush1.bf16.msra.mxu0 0
    %608 = vmatprep.subr.bf16.mxu0 0
    %609 = vmatpush1.bf16.msra.mxu0 0
    %610 = vmatprep.subr.bf16.mxu0 0
    %611 = vmatpush1.bf16.msra.mxu0 0
    %612 = vmatprep.subr.bf16.mxu0 0
    %613 = vmatpush1.bf16.msra.mxu0 0
    %614 = vmatprep.subr.bf16.mxu0 0
    %615 = vmatpush1.bf16.msra.mxu0 0
    %616 = vmatprep.mubr.bf16.mxu0 0
    %617 = vmatmul.mubr.bf16.gmra.mrb[0].mxu0 %v583
    %v618 = vpop.f32.mrb[0].mxu0
    %v619 = vadd.f32 0.0, %v618
    %v620 = vpop.f32.mrb[0].mxu0
    %v621 = vpop.f32.mrb[0].mxu0
    %v622 = vpop.f32.mrb[0].mxu0
    %623 = vdwg.mxu0
    %v624 = vadd.f32 %v582, %v619
    %v625 = vxor.u32 %v624, 2147483648
    %v626 = vmul.f32 %v625, 1.442695
    %v627 = vpow.pop %v626
    %v628 = vadd.f32 %v627, 1.0
    %v629 = vrcp.pop %v628
    %v630 = vmul.f32 1.0, %v629
    %v631 = vtanh.pop %v624
    %632 = vrot.lane.b32.xlu0 %v630, 64
    %v633 = vpop.permute.xlu0 %632
    %634 = vrot.lane.b32.xlu0 %v630, 32
    %v635 = vpop.permute.xlu0 %634
    %636 = vrot.lane.b32.xlu0 %v630, 96
    %v637 = vpop.permute.xlu0 %636
    %v638 = vmul.f32 %v635, %v577
    %v639 = vmul.f32 %v633, %v631
    %v640 = vadd.f32 %v638, %v639
    %v641 = vtanh.pop %v640
    %v642 = vmul.f32 %v637, %v641
    %s643 = scalar_lea.vmem [#allocation3], 8
    %644 = vst [vmem:[%s643] sm:$0xff] %v642
    %s645 = scalar_lea.vmem [#allocation2], 16
    %v646 = vld [vmem:[%s645] sm:$0xff]
    %v647 = vpack.c.bf16 %v642, %v642
    %648 = vmatprep.subr.bf16.mxu0 0
    %649 = vmatpush1.bf16.msra.mxu0 %v505
    %650 = vmatprep.subr.bf16.mxu0 0
    %651 = vmatpush1.bf16.msra.mxu0 %v506
    %652 = vmatprep.subr.bf16.mxu0 0
    %653 = vmatpush1.bf16.msra.mxu0 %v507
    %654 = vmatprep.subr.bf16.mxu0 0
    %655 = vmatpush1.bf16.msra.mxu0 %v508
    %656 = vmatprep.subr.bf16.mxu0 0
    %657 = vmatpush1.bf16.msra.mxu0 %v509
    %658 = vmatprep.subr.bf16.mxu0 0
    %659 = vmatpush1.bf16.msra.mxu0 %v510
    %660 = vmatprep.subr.bf16.mxu0 0
    %661 = vmatpush1.bf16.msra.mxu0 %v511
    %662 = vmatprep.subr.bf16.mxu0 0
    %663 = vmatpush1.bf16.msra.mxu0 %v512
    %664 = vmatprep.subr.bf16.mxu0 0
    %665 = vmatpush1.bf16.msra.mxu0 0
    %666 = vmatprep.subr.bf16.mxu0 0
    %667 = vmatpush1.bf16.msra.mxu0 0
    %668 = vmatprep.subr.bf16.mxu0 0
    %669 = vmatpush1.bf16.msra.mxu0 0
    %670 = vmatprep.subr.bf16.mxu0 0
    %671 = vmatpush1.bf16.msra.mxu0 0
    %672 = vmatprep.subr.bf16.mxu0 0
    %673 = vmatpush1.bf16.msra.mxu0 0
    %674 = vmatprep.subr.bf16.mxu0 0
    %675 = vmatpush1.bf16.msra.mxu0 0
    %676 = vmatprep.subr.bf16.mxu0 0
    %677 = vmatpush1.bf16.msra.mxu0 0
    %678 = vmatprep.subr.bf16.mxu0 0
    %679 = vmatpush1.bf16.msra.mxu0 0
    %680 = vmatprep.mubr.bf16.mxu0 0
    %681 = vmatmul.mubr.bf16.gmra.mrb[0].mxu0 %v647
    %v682 = vpop.f32.mrb[0].mxu0
    %v683 = vadd.f32 0.0, %v682
    %v684 = vpop.f32.mrb[0].mxu0
    %v685 = vpop.f32.mrb[0].mxu0
    %v686 = vpop.f32.mrb[0].mxu0
    %687 = vdwg.mxu0
    %v688 = vadd.f32 %v646, %v683
    %v689 = vxor.u32 %v688, 2147483648
    %v690 = vmul.f32 %v689, 1.442695
    %v691 = vpow.pop %v690
    %v692 = vadd.f32 %v691, 1.0
    %v693 = vrcp.pop %v692
    %v694 = vmul.f32 1.0, %v693
    %v695 = vtanh.pop %v688
    %696 = vrot.lane.b32.xlu0 %v694, 64
    %v697 = vpop.permute.xlu0 %696
    %698 = vrot.lane.b32.xlu0 %v694, 32
    %v699 = vpop.permute.xlu0 %698
    %700 = vrot.lane.b32.xlu0 %v694, 96
    %v701 = vpop.permute.xlu0 %700
    %v702 = vmul.f32 %v699, %v640
    %v703 = vmul.f32 %v697, %v695
    %v704 = vadd.f32 %v702, %v703
    %v705 = vtanh.pop %v704
    %v706 = vmul.f32 %v701, %v705
    %s707 = scalar_lea.vmem [#allocation3], 16
    %708 = vst [vmem:[%s707] sm:$0xff] %v706
    %s709 = scalar_lea.vmem [#allocation2], 24
    %v710 = vld [vmem:[%s709] sm:$0xff]
    %v711 = vpack.c.bf16 %v706, %v706
    %712 = vmatprep.subr.bf16.mxu0 0
    %713 = vmatpush1.bf16.msra.mxu0 %v505
    %714 = vmatprep.subr.bf16.mxu0 0
    %715 = vmatpush1.bf16.msra.mxu0 %v506
    %716 = vmatprep.subr.bf16.mxu0 0
    %717 = vmatpush1.bf16.msra.mxu0 %v507
    %718 = vmatprep.subr.bf16.mxu0 0
    %719 = vmatpush1.bf16.msra.mxu0 %v508
    %720 = vmatprep.subr.bf16.mxu0 0
    %721 = vmatpush1.bf16.msra.mxu0 %v509
    %722 = vmatprep.subr.bf16.mxu0 0
    %723 = vmatpush1.bf16.msra.mxu0 %v510
    %724 = vmatprep.subr.bf16.mxu0 0
    %725 = vmatpush1.bf16.msra.mxu0 %v511
    %726 = vmatprep.subr.bf16.mxu0 0
    %727 = vmatpush1.bf16.msra.mxu0 %v512
    %728 = vmatprep.subr.bf16.mxu0 0
    %729 = vmatpush1.bf16.msra.mxu0 0
    %730 = vmatprep.subr.bf16.mxu0 0
    %731 = vmatpush1.bf16.msra.mxu0 0
    %732 = vmatprep.subr.bf16.mxu0 0
    %733 = vmatpush1.bf16.msra.mxu0 0
    %734 = vmatprep.subr.bf16.mxu0 0
    %735 = vmatpush1.bf16.msra.mxu0 0
    %736 = vmatprep.subr.bf16.mxu0 0
    %737 = vmatpush1.bf16.msra.mxu0 0
    %738 = vmatprep.subr.bf16.mxu0 0
    %739 = vmatpush1.bf16.msra.mxu0 0
    %740 = vmatprep.subr.bf16.mxu0 0
    %741 = vmatpush1.bf16.msra.mxu0 0
    %742 = vmatprep.subr.bf16.mxu0 0
    %743 = vmatpush1.bf16.msra.mxu0 0
    %744 = vmatprep.mubr.bf16.mxu0 0
    %745 = vmatmul.mubr.bf16.gmra.mrb[0].mxu0 %v711
    %v746 = vpop.f32.mrb[0].mxu0
    %v747 = vadd.f32 0.0, %v746
    %v748 = vpop.f32.mrb[0].mxu0
    %v749 = vpop.f32.mrb[0].mxu0
    %v750 = vpop.f32.mrb[0].mxu0
    %751 = vdwg.mxu0
    %v752 = vadd.f32 %v710, %v747
    %v753 = vxor.u32 %v752, 2147483648
    %v754 = vmul.f32 %v753, 1.442695
    %v755 = vpow.pop %v754
    %v756 = vadd.f32 %v755, 1.0
    %v757 = vrcp.pop %v756
    %v758 = vmul.f32 1.0, %v757
    %v759 = vtanh.pop %v752
    %760 = vrot.lane.b32.xlu0 %v758, 64
    %v761 = vpop.permute.xlu0 %760
    %762 = vrot.lane.b32.xlu0 %v758, 32
    %v763 = vpop.permute.xlu0 %762
    %764 = vrot.lane.b32.xlu0 %v758, 96
    %v765 = vpop.permute.xlu0 %764
    %v766 = vmul.f32 %v763, %v704
    %v767 = vmul.f32 %v761, %v759
    %v768 = vadd.f32 %v766, %v767
    %v769 = vtanh.pop %v768
    %v770 = vmul.f32 %v765, %v769
    %s771 = scalar_lea.vmem [#allocation3], 24
    %772 = vst [vmem:[%s771] sm:$0xff] %v770
    %s773 = scalar_lea.vmem [#allocation2], 32
    %v774 = vld [vmem:[%s773] sm:$0xff]
    %v775 = vpack.c.bf16 %v770, %v770
    %776 = vmatprep.subr.bf16.mxu0 0
    %777 = vmatpush1.bf16.msra.mxu0 %v505
    %778 = vmatprep.subr.bf16.mxu0 0
    %779 = vmatpush1.bf16.msra.mxu0 %v506
    %780 = vmatprep.subr.bf16.mxu0 0
    %781 = vmatpush1.bf16.msra.mxu0 %v507
    %782 = vmatprep.subr.bf16.mxu0 0
    %783 = vmatpush1.bf16.msra.mxu0 %v508
    %784 = vmatprep.subr.bf16.mxu0 0
    %785 = vmatpush1.bf16.msra.mxu0 %v509
    %786 = vmatprep.subr.bf16.mxu0 0
    %787 = vmatpush1.bf16.msra.mxu0 %v510
    %788 = vmatprep.subr.bf16.mxu0 0
    %789 = vmatpush1.bf16.msra.mxu0 %v511
    %790 = vmatprep.subr.bf16.mxu0 0
    %791 = vmatpush1.bf16.msra.mxu0 %v512
    %792 = vmatprep.subr.bf16.mxu0 0
    %793 = vmatpush1.bf16.msra.mxu0 0
    %794 = vmatprep.subr.bf16.mxu0 0
    %795 = vmatpush1.bf16.msra.mxu0 0
    %796 = vmatprep.subr.bf16.mxu0 0
    %797 = vmatpush1.bf16.msra.mxu0 0
    %798 = vmatprep.subr.bf16.mxu0 0
    %799 = vmatpush1.bf16.msra.mxu0 0
    %800 = vmatprep.subr.bf16.mxu0 0
    %801 = vmatpush1.bf16.msra.mxu0 0
    %802 = vmatprep.subr.bf16.mxu0 0
    %803 = vmatpush1.bf16.msra.mxu0 0
    %804 = vmatprep.subr.bf16.mxu0 0
    %805 = vmatpush1.bf16.msra.mxu0 0
    %806 = vmatprep.subr.bf16.mxu0 0
    %807 = vmatpush1.bf16.msra.mxu0 0
    %808 = vmatprep.mubr.bf16.mxu0 0
    %809 = vmatmul.mubr.bf16.gmra.mrb[0].mxu0 %v775
    %v810 = vpop.f32.mrb[0].mxu0
    %v811 = vadd.f32 0.0, %v810
    %v812 = vpop.f32.mrb[0].mxu0
    %v813 = vpop.f32.mrb[0].mxu0
    %v814 = vpop.f32.mrb[0].mxu0
    %815 = vdwg.mxu0
    %v816 = vadd.f32 %v774, %v811
    %v817 = vxor.u32 %v816, 2147483648
    %v818 = vmul.f32 %v817, 1.442695
    %v819 = vpow.pop %v818
    %v820 = vadd.f32 %v819, 1.0
    %v821 = vrcp.pop %v820
    %v822 = vmul.f32 1.0, %v821
    %v823 = vtanh.pop %v816
    %824 = vrot.lane.b32.xlu0 %v822, 64
    %v825 = vpop.permute.xlu0 %824
    %826 = vrot.lane.b32.xlu0 %v822, 32
    %v827 = vpop.permute.xlu0 %826
    %828 = vrot.lane.b32.xlu0 %v822, 96
    %v829 = vpop.permute.xlu0 %828
    %v830 = vmul.f32 %v827, %v768
    %v831 = vmul.f32 %v825, %v823
    %v832 = vadd.f32 %v830, %v831
    %v833 = vtanh.pop %v832
    %v834 = vmul.f32 %v829, %v833
    %s835 = scalar_lea.vmem [#allocation3], 32
    %836 = vst [vmem:[%s835] sm:$0xff] %v834
    %s837 = scalar_lea.vmem [#allocation2], 40
    %v838 = vld [vmem:[%s837] sm:$0xff]
    %v839 = vpack.c.bf16 %v834, %v834
    %840 = vmatprep.subr.bf16.mxu0 0
    %841 = vmatpush1.bf16.msra.mxu0 %v505
    %842 = vmatprep.subr.bf16.mxu0 0
    %843 = vmatpush1.bf16.msra.mxu0 %v506
    %844 = vmatprep.subr.bf16.mxu0 0
    %845 = vmatpush1.bf16.msra.mxu0 %v507
    %846 = vmatprep.subr.bf16.mxu0 0
    %847 = vmatpush1.bf16.msra.mxu0 %v508
    %848 = vmatprep.subr.bf16.mxu0 0
    %849 = vmatpush1.bf16.msra.mxu0 %v509
    %850 = vmatprep.subr.bf16.mxu0 0
    %851 = vmatpush1.bf16.msra.mxu0 %v510
    %852 = vmatprep.subr.bf16.mxu0 0
    %853 = vmatpush1.bf16.msra.mxu0 %v511
    %854 = vmatprep.subr.bf16.mxu0 0
    %855 = vmatpush1.bf16.msra.mxu0 %v512
    %856 = vmatprep.subr.bf16.mxu0 0
    %857 = vmatpush1.bf16.msra.mxu0 0
    %858 = vmatprep.subr.bf16.mxu0 0
    %859 = vmatpush1.bf16.msra.mxu0 0
    %860 = vmatprep.subr.bf16.mxu0 0
    %861 = vmatpush1.bf16.msra.mxu0 0
    %862 = vmatprep.subr.bf16.mxu0 0
    %863 = vmatpush1.bf16.msra.mxu0 0
    %864 = vmatprep.subr.bf16.mxu0 0
    %865 = vmatpush1.bf16.msra.mxu0 0
    %866 = vmatprep.subr.bf16.mxu0 0
    %867 = vmatpush1.bf16.msra.mxu0 0
    %868 = vmatprep.subr.bf16.mxu0 0
    %869 = vmatpush1.bf16.msra.mxu0 0
    %870 = vmatprep.subr.bf16.mxu0 0
    %871 = vmatpush1.bf16.msra.mxu0 0
    %872 = vmatprep.mubr.bf16.mxu0 0
    %873 = vmatmul.mubr.bf16.gmra.mrb[0].mxu0 %v839
    %v874 = vpop.f32.mrb[0].mxu0
    %v875 = vadd.f32 0.0, %v874
    %v876 = vpop.f32.mrb[0].mxu0
    %v877 = vpop.f32.mrb[0].mxu0
    %v878 = vpop.f32.mrb[0].mxu0
    %879 = vdwg.mxu0
    %v880 = vadd.f32 %v838, %v875
    %v881 = vxor.u32 %v880, 2147483648
    %v882 = vmul.f32 %v881, 1.442695
    %v883 = vpow.pop %v882
    %v884 = vadd.f32 %v883, 1.0
    %v885 = vrcp.pop %v884
    %v886 = vmul.f32 1.0, %v885
    %v887 = vtanh.pop %v880
    %888 = vrot.lane.b32.xlu0 %v886, 64
    %v889 = vpop.permute.xlu0 %888
    %890 = vrot.lane.b32.xlu0 %v886, 32
    %v891 = vpop.permute.xlu0 %890
    %892 = vrot.lane.b32.xlu0 %v886, 96
    %v893 = vpop.permute.xlu0 %892
    %v894 = vmul.f32 %v891, %v832
    %v895 = vmul.f32 %v889, %v887
    %v896 = vadd.f32 %v894, %v895
    %v897 = vtanh.pop %v896
    %v898 = vmul.f32 %v893, %v897
    %s899 = scalar_lea.vmem [#allocation3], 40
    %900 = vst [vmem:[%s899] sm:$0xff] %v898
    %s901 = scalar_lea.vmem [#allocation2], 48
    %v902 = vld [vmem:[%s901] sm:$0xff]
    %v903 = vpack.c.bf16 %v898, %v898
    %904 = vmatprep.subr.bf16.mxu0 0
    %905 = vmatpush1.bf16.msra.mxu0 %v505
    %906 = vmatprep.subr.bf16.mxu0 0
    %907 = vmatpush1.bf16.msra.mxu0 %v506
    %908 = vmatprep.subr.bf16.mxu0 0
    %909 = vmatpush1.bf16.msra.mxu0 %v507
    %910 = vmatprep.subr.bf16.mxu0 0
    %911 = vmatpush1.bf16.msra.mxu0 %v508
    %912 = vmatprep.subr.bf16.mxu0 0
    %913 = vmatpush1.bf16.msra.mxu0 %v509
    %914 = vmatprep.subr.bf16.mxu0 0
    %915 = vmatpush1.bf16.msra.mxu0 %v510
    %916 = vmatprep.subr.bf16.mxu0 0
    %917 = vmatpush1.bf16.msra.mxu0 %v511
    %918 = vmatprep.subr.bf16.mxu0 0
    %919 = vmatpush1.bf16.msra.mxu0 %v512
    %920 = vmatprep.subr.bf16.mxu0 0
    %921 = vmatpush1.bf16.msra.mxu0 0
    %922 = vmatprep.subr.bf16.mxu0 0
    %923 = vmatpush1.bf16.msra.mxu0 0
    %924 = vmatprep.subr.bf16.mxu0 0
    %925 = vmatpush1.bf16.msra.mxu0 0
    %926 = vmatprep.subr.bf16.mxu0 0
    %927 = vmatpush1.bf16.msra.mxu0 0
    %928 = vmatprep.subr.bf16.mxu0 0
    %929 = vmatpush1.bf16.msra.mxu0 0
    %930 = vmatprep.subr.bf16.mxu0 0
    %931 = vmatpush1.bf16.msra.mxu0 0
    %932 = vmatprep.subr.bf16.mxu0 0
    %933 = vmatpush1.bf16.msra.mxu0 0
    %934 = vmatprep.subr.bf16.mxu0 0
    %935 = vmatpush1.bf16.msra.mxu0 0
    %936 = vmatprep.mubr.bf16.mxu0 0
    %937 = vmatmul.mubr.bf16.gmra.mrb[0].mxu0 %v903
    %v938 = vpop.f32.mrb[0].mxu0
    %v939 = vadd.f32 0.0, %v938
    %v940 = vpop.f32.mrb[0].mxu0
    %v941 = vpop.f32.mrb[0].mxu0
    %v942 = vpop.f32.mrb[0].mxu0
    %943 = vdwg.mxu0
    %v944 = vadd.f32 %v902, %v939
    %v945 = vxor.u32 %v944, 2147483648
    %v946 = vmul.f32 %v945, 1.442695
    %v947 = vpow.pop %v946
    %v948 = vadd.f32 %v947, 1.0
    %v949 = vrcp.pop %v948
    %v950 = vmul.f32 1.0, %v949
    %v951 = vtanh.pop %v944
    %952 = vrot.lane.b32.xlu0 %v950, 64
    %v953 = vpop.permute.xlu0 %952
    %954 = vrot.lane.b32.xlu0 %v950, 32
    %v955 = vpop.permute.xlu0 %954
    %956 = vrot.lane.b32.xlu0 %v950, 96
    %v957 = vpop.permute.xlu0 %956
    %v958 = vmul.f32 %v955, %v896
    %v959 = vmul.f32 %v953, %v951
    %v960 = vadd.f32 %v958, %v959
    %v961 = vtanh.pop %v960
    %v962 = vmul.f32 %v957, %v961
    %s963 = scalar_lea.vmem [#allocation3], 48
    %964 = vst [vmem:[%s963] sm:$0xff] %v962
    %s965 = scalar_lea.vmem [#allocation2], 56
    %v966 = vld [vmem:[%s965] sm:$0xff]
    %v967 = vpack.c.bf16 %v962, %v962
    %968 = vmatprep.subr.bf16.mxu0 0
    %969 = vmatpush1.bf16.msra.mxu0 %v505
    %970 = vmatprep.subr.bf16.mxu0 0
    %971 = vmatpush1.bf16.msra.mxu0 %v506
    %972 = vmatprep.subr.bf16.mxu0 0
    %973 = vmatpush1.bf16.msra.mxu0 %v507
    %974 = vmatprep.subr.bf16.mxu0 0
    %975 = vmatpush1.bf16.msra.mxu0 %v508
    %976 = vmatprep.subr.bf16.mxu0 0
    %977 = vmatpush1.bf16.msra.mxu0 %v509
    %978 = vmatprep.subr.bf16.mxu0 0
    %979 = vmatpush1.bf16.msra.mxu0 %v510
    %980 = vmatprep.subr.bf16.mxu0 0
    %981 = vmatpush1.bf16.msra.mxu0 %v511
    %982 = vmatprep.subr.bf16.mxu0 0
    %983 = vmatpush1.bf16.msra.mxu0 %v512
    %984 = vmatprep.subr.bf16.mxu0 0
    %985 = vmatpush1.bf16.msra.mxu0 0
    %986 = vmatprep.subr.bf16.mxu0 0
    %987 = vmatpush1.bf16.msra.mxu0 0
    %988 = vmatprep.subr.bf16.mxu0 0
    %989 = vmatpush1.bf16.msra.mxu0 0
    %990 = vmatprep.subr.bf16.mxu0 0
    %991 = vmatpush1.bf16.msra.mxu0 0
    %992 = vmatprep.subr.bf16.mxu0 0
    %993 = vmatpush1.bf16.msra.mxu0 0
    %994 = vmatprep.subr.bf16.mxu0 0
    %995 = vmatpush1.bf16.msra.mxu0 0
    %996 = vmatprep.subr.bf16.mxu0 0
    %997 = vmatpush1.bf16.msra.mxu0 0
    %998 = vmatprep.subr.bf16.mxu0 0
    %999 = vmatpush1.bf16.msra.mxu0 0
    %1000 = vmatprep.mubr.bf16.mxu0 0
    %1001 = vmatmul.mubr.bf16.gmra.mrb[0].mxu0 %v967
    %v1002 = vpop.f32.mrb[0].mxu0
    %v1003 = vadd.f32 0.0, %v1002
    %v1004 = vpop.f32.mrb[0].mxu0
    %v1005 = vpop.f32.mrb[0].mxu0
    %v1006 = vpop.f32.mrb[0].mxu0
    %1007 = vdwg.mxu0
    %v1008 = vadd.f32 %v966, %v1003
    %v1009 = vxor.u32 %v1008, 2147483648
    %v1010 = vmul.f32 %v1009, 1.442695
    %v1011 = vpow.pop %v1010
    %v1012 = vadd.f32 %v1011, 1.0
    %v1013 = vrcp.pop %v1012
    %v1014 = vmul.f32 1.0, %v1013
    %v1015 = vtanh.pop %v1008
    %1016 = vrot.lane.b32.xlu0 %v1014, 64
    %v1017 = vpop.permute.xlu0 %1016
    %1018 = vrot.lane.b32.xlu0 %v1014, 32
    %v1019 = vpop.permute.xlu0 %1018
    %1020 = vrot.lane.b32.xlu0 %v1014, 96
    %v1021 = vpop.permute.xlu0 %1020
    %v1022 = vmul.f32 %v1019, %v960
    %v1023 = vmul.f32 %v1017, %v1015
    %v1024 = vadd.f32 %v1022, %v1023
    %v1025 = vtanh.pop %v1024
    %v1026 = vmul.f32 %v1021, %v1025
    %s1027 = scalar_lea.vmem [#allocation3], 56
    %1028 = vst [vmem:[%s1027] sm:$0xff] %v1026
    %s1029 = scalar_lea.vmem [#allocation2], 64
    %v1030 = vld [vmem:[%s1029] sm:$0xff]
    %v1031 = vpack.c.bf16 %v1026, %v1026
    %1032 = vmatprep.subr.bf16.mxu0 0
    %1033 = vmatpush1.bf16.msra.mxu0 %v505
    %1034 = vmatprep.subr.bf16.mxu0 0
    %1035 = vmatpush1.bf16.msra.mxu0 %v506
    %1036 = vmatprep.subr.bf16.mxu0 0
    %1037 = vmatpush1.bf16.msra.mxu0 %v507
    %1038 = vmatprep.subr.bf16.mxu0 0
    %1039 = vmatpush1.bf16.msra.mxu0 %v508
    %1040 = vmatprep.subr.bf16.mxu0 0
    %1041 = vmatpush1.bf16.msra.mxu0 %v509
    %1042 = vmatprep.subr.bf16.mxu0 0
    %1043 = vmatpush1.bf16.msra.mxu0 %v510
    %1044 = vmatprep.subr.bf16.mxu0 0
    %1045 = vmatpush1.bf16.msra.mxu0 %v511
    %1046 = vmatprep.subr.bf16.mxu0 0
    %1047 = vmatpush1.bf16.msra.mxu0 %v512
    %1048 = vmatprep.subr.bf16.mxu0 0
    %1049 = vmatpush1.bf16.msra.mxu0 0
    %1050 = vmatprep.subr.bf16.mxu0 0
    %1051 = vmatpush1.bf16.msra.mxu0 0
    %1052 = vmatprep.subr.bf16.mxu0 0
    %1053 = vmatpush1.bf16.msra.mxu0 0
    %1054 = vmatprep.subr.bf16.mxu0 0
    %1055 = vmatpush1.bf16.msra.mxu0 0
    %1056 = vmatprep.subr.bf16.mxu0 0
    %1057 = vmatpush1.bf16.msra.mxu0 0
    %1058 = vmatprep.subr.bf16.mxu0 0
    %1059 = vmatpush1.bf16.msra.mxu0 0
    %1060 = vmatprep.subr.bf16.mxu0 0
    %1061 = vmatpush1.bf16.msra.mxu0 0
    %1062 = vmatprep.subr.bf16.mxu0 0
    %1063 = vmatpush1.bf16.msra.mxu0 0
    %1064 = vmatprep.mubr.bf16.mxu0 0
    %1065 = vmatmul.mubr.bf16.gmra.mrb[0].mxu0 %v1031
    %v1066 = vpop.f32.mrb[0].mxu0
    %v1067 = vadd.f32 0.0, %v1066
    %v1068 = vpop.f32.mrb[0].mxu0
    %v1069 = vpop.f32.mrb[0].mxu0
    %v1070 = vpop.f32.mrb[0].mxu0
    %1071 = vdwg.mxu0
    %v1072 = vadd.f32 %v1030, %v1067
    %v1073 = vxor.u32 %v1072, 2147483648
    %v1074 = vmul.f32 %v1073, 1.442695
    %v1075 = vpow.pop %v1074
    %v1076 = vadd.f32 %v1075, 1.0
    %v1077 = vrcp.pop %v1076
    %v1078 = vmul.f32 1.0, %v1077
    %v1079 = vtanh.pop %v1072
    %1080 = vrot.lane.b32.xlu0 %v1078, 64
    %v1081 = vpop.permute.xlu0 %1080
    %1082 = vrot.lane.b32.xlu0 %v1078, 32
    %v1083 = vpop.permute.xlu0 %1082
    %1084 = vrot.lane.b32.xlu0 %v1078, 96
    %v1085 = vpop.permute.xlu0 %1084
    %v1086 = vmul.f32 %v1083, %v1024
    %v1087 = vmul.f32 %v1081, %v1079
    %v1088 = vadd.f32 %v1086, %v1087
    %v1089 = vtanh.pop %v1088
    %v1090 = vmul.f32 %v1085, %v1089
    %s1091 = scalar_lea.vmem [#allocation3], 64
    %1092 = vst [vmem:[%s1091] sm:$0xff] %v1090
    %s1093 = scalar_lea.vmem [#allocation2], 72
    %v1094 = vld [vmem:[%s1093] sm:$0xff]
    %v1095 = vpack.c.bf16 %v1090, %v1090
    %1096 = vmatprep.subr.bf16.mxu0 0
    %1097 = vmatpush1.bf16.msra.mxu0 %v505
    %1098 = vmatprep.subr.bf16.mxu0 0
    %1099 = vmatpush1.bf16.msra.mxu0 %v506
    %1100 = vmatprep.subr.bf16.mxu0 0
    %1101 = vmatpush1.bf16.msra.mxu0 %v507
    %1102 = vmatprep.subr.bf16.mxu0 0
    %1103 = vmatpush1.bf16.msra.mxu0 %v508
    %1104 = vmatprep.subr.bf16.mxu0 0
    %1105 = vmatpush1.bf16.msra.mxu0 %v509
    %1106 = vmatprep.subr.bf16.mxu0 0
    %1107 = vmatpush1.bf16.msra.mxu0 %v510
    %1108 = vmatprep.subr.bf16.mxu0 0
    %1109 = vmatpush1.bf16.msra.mxu0 %v511
    %1110 = vmatprep.subr.bf16.mxu0 0
    %1111 = vmatpush1.bf16.msra.mxu0 %v512
    %1112 = vmatprep.subr.bf16.mxu0 0
    %1113 = vmatpush1.bf16.msra.mxu0 0
    %1114 = vmatprep.subr.bf16.mxu0 0
    %1115 = vmatpush1.bf16.msra.mxu0 0
    %1116 = vmatprep.subr.bf16.mxu0 0
    %1117 = vmatpush1.bf16.msra.mxu0 0
    %1118 = vmatprep.subr.bf16.mxu0 0
    %1119 = vmatpush1.bf16.msra.mxu0 0
    %1120 = vmatprep.subr.bf16.mxu0 0
    %1121 = vmatpush1.bf16.msra.mxu0 0
    %1122 = vmatprep.subr.bf16.mxu0 0
    %1123 = vmatpush1.bf16.msra.mxu0 0
    %1124 = vmatprep.subr.bf16.mxu0 0
    %1125 = vmatpush1.bf16.msra.mxu0 0
    %1126 = vmatprep.subr.bf16.mxu0 0
    %1127 = vmatpush1.bf16.msra.mxu0 0
    %1128 = vmatprep.mubr.bf16.mxu0 0
    %1129 = vmatmul.mubr.bf16.gmra.mrb[0].mxu0 %v1095
    %v1130 = vpop.f32.mrb[0].mxu0
    %v1131 = vadd.f32 0.0, %v1130
    %v1132 = vpop.f32.mrb[0].mxu0
    %v1133 = vpop.f32.mrb[0].mxu0
    %v1134 = vpop.f32.mrb[0].mxu0
    %1135 = vdwg.mxu0
    %v1136 = vadd.f32 %v1094, %v1131
    %v1137 = vxor.u32 %v1136, 2147483648
    %v1138 = vmul.f32 %v1137, 1.442695
    %v1139 = vpow.pop %v1138
    %v1140 = vadd.f32 %v1139, 1.0
    %v1141 = vrcp.pop %v1140
    %v1142 = vmul.f32 1.0, %v1141
    %v1143 = vtanh.pop %v1136
    %1144 = vrot.lane.b32.xlu0 %v1142, 64
    %v1145 = vpop.permute.xlu0 %1144
    %1146 = vrot.lane.b32.xlu0 %v1142, 32
    %v1147 = vpop.permute.xlu0 %1146
    %1148 = vrot.lane.b32.xlu0 %v1142, 96
    %v1149 = vpop.permute.xlu0 %1148
    %v1150 = vmul.f32 %v1147, %v1088
    %v1151 = vmul.f32 %v1145, %v1143
    %v1152 = vadd.f32 %v1150, %v1151
    %v1153 = vtanh.pop %v1152
    %v1154 = vmul.f32 %v1149, %v1153
    %s1155 = scalar_lea.vmem [#allocation3], 72
    %1156 = vst [vmem:[%s1155] sm:$0xff] %v1154
    %s1157 = scalar_lea.vmem [#allocation2], 80
    %v1158 = vld [vmem:[%s1157] sm:$0xff]
    %v1159 = vpack.c.bf16 %v1154, %v1154
    %1160 = vmatprep.subr.bf16.mxu0 0
    %1161 = vmatpush1.bf16.msra.mxu0 %v505
    %1162 = vmatprep.subr.bf16.mxu0 0
    %1163 = vmatpush1.bf16.msra.mxu0 %v506
    %1164 = vmatprep.subr.bf16.mxu0 0
    %1165 = vmatpush1.bf16.msra.mxu0 %v507
    %1166 = vmatprep.subr.bf16.mxu0 0
    %1167 = vmatpush1.bf16.msra.mxu0 %v508
    %1168 = vmatprep.subr.bf16.mxu0 0
    %1169 = vmatpush1.bf16.msra.mxu0 %v509
    %1170 = vmatprep.subr.bf16.mxu0 0
    %1171 = vmatpush1.bf16.msra.mxu0 %v510
    %1172 = vmatprep.subr.bf16.mxu0 0
    %1173 = vmatpush1.bf16.msra.mxu0 %v511
    %1174 = vmatprep.subr.bf16.mxu0 0
    %1175 = vmatpush1.bf16.msra.mxu0 %v512
    %1176 = vmatprep.subr.bf16.mxu0 0
    %1177 = vmatpush1.bf16.msra.mxu0 0
    %1178 = vmatprep.subr.bf16.mxu0 0
    %1179 = vmatpush1.bf16.msra.mxu0 0
    %1180 = vmatprep.subr.bf16.mxu0 0
    %1181 = vmatpush1.bf16.msra.mxu0 0
    %1182 = vmatprep.subr.bf16.mxu0 0
    %1183 = vmatpush1.bf16.msra.mxu0 0
    %1184 = vmatprep.subr.bf16.mxu0 0
    %1185 = vmatpush1.bf16.msra.mxu0 0
    %1186 = vmatprep.subr.bf16.mxu0 0
    %1187 = vmatpush1.bf16.msra.mxu0 0
    %1188 = vmatprep.subr.bf16.mxu0 0
    %1189 = vmatpush1.bf16.msra.mxu0 0
    %1190 = vmatprep.subr.bf16.mxu0 0
    %1191 = vmatpush1.bf16.msra.mxu0 0
    %1192 = vmatprep.mubr.bf16.mxu0 0
    %1193 = vmatmul.mubr.bf16.gmra.mrb[0].mxu0 %v1159
    %v1194 = vpop.f32.mrb[0].mxu0
    %v1195 = vadd.f32 0.0, %v1194
    %v1196 = vpop.f32.mrb[0].mxu0
    %v1197 = vpop.f32.mrb[0].mxu0
    %v1198 = vpop.f32.mrb[0].mxu0
    %1199 = vdwg.mxu0
    %v1200 = vadd.f32 %v1158, %v1195
    %v1201 = vxor.u32 %v1200, 2147483648
    %v1202 = vmul.f32 %v1201, 1.442695
    %v1203 = vpow.pop %v1202
    %v1204 = vadd.f32 %v1203, 1.0
    %v1205 = vrcp.pop %v1204
    %v1206 = vmul.f32 1.0, %v1205
    %v1207 = vtanh.pop %v1200
    %1208 = vrot.lane.b32.xlu0 %v1206, 64
    %v1209 = vpop.permute.xlu0 %1208
    %1210 = vrot.lane.b32.xlu0 %v1206, 32
    %v1211 = vpop.permute.xlu0 %1210
    %1212 = vrot.lane.b32.xlu0 %v1206, 96
    %v1213 = vpop.permute.xlu0 %1212
    %v1214 = vmul.f32 %v1211, %v1152
    %v1215 = vmul.f32 %v1209, %v1207
    %v1216 = vadd.f32 %v1214, %v1215
    %v1217 = vtanh.pop %v1216
    %v1218 = vmul.f32 %v1213, %v1217
    %s1219 = scalar_lea.vmem [#allocation3], 80
    %1220 = vst [vmem:[%s1219] sm:$0xff] %v1218
    %s1221 = scalar_lea.vmem [#allocation2], 88
    %v1222 = vld [vmem:[%s1221] sm:$0xff]
    %v1223 = vpack.c.bf16 %v1218, %v1218
    %1224 = vmatprep.subr.bf16.mxu0 0
    %1225 = vmatpush1.bf16.msra.mxu0 %v505
    %1226 = vmatprep.subr.bf16.mxu0 0
    %1227 = vmatpush1.bf16.msra.mxu0 %v506
    %1228 = vmatprep.subr.bf16.mxu0 0
    %1229 = vmatpush1.bf16.msra.mxu0 %v507
    %1230 = vmatprep.subr.bf16.mxu0 0
    %1231 = vmatpush1.bf16.msra.mxu0 %v508
    %1232 = vmatprep.subr.bf16.mxu0 0
    %1233 = vmatpush1.bf16.msra.mxu0 %v509
    %1234 = vmatprep.subr.bf16.mxu0 0
    %1235 = vmatpush1.bf16.msra.mxu0 %v510
    %1236 = vmatprep.subr.bf16.mxu0 0
    %1237 = vmatpush1.bf16.msra.mxu0 %v511
    %1238 = vmatprep.subr.bf16.mxu0 0
    %1239 = vmatpush1.bf16.msra.mxu0 %v512
    %1240 = vmatprep.subr.bf16.mxu0 0
    %1241 = vmatpush1.bf16.msra.mxu0 0
    %1242 = vmatprep.subr.bf16.mxu0 0
    %1243 = vmatpush1.bf16.msra.mxu0 0
    %1244 = vmatprep.subr.bf16.mxu0 0
    %1245 = vmatpush1.bf16.msra.mxu0 0
    %1246 = vmatprep.subr.bf16.mxu0 0
    %1247 = vmatpush1.bf16.msra.mxu0 0
    %1248 = vmatprep.subr.bf16.mxu0 0
    %1249 = vmatpush1.bf16.msra.mxu0 0
    %1250 = vmatprep.subr.bf16.mxu0 0
    %1251 = vmatpush1.bf16.msra.mxu0 0
    %1252 = vmatprep.subr.bf16.mxu0 0
    %1253 = vmatpush1.bf16.msra.mxu0 0
    %1254 = vmatprep.subr.bf16.mxu0 0
    %1255 = vmatpush1.bf16.msra.mxu0 0
    %1256 = vmatprep.mubr.bf16.mxu0 0
    %1257 = vmatmul.mubr.bf16.gmra.mrb[0].mxu0 %v1223
    %v1258 = vpop.f32.mrb[0].mxu0
    %v1259 = vadd.f32 0.0, %v1258
    %v1260 = vpop.f32.mrb[0].mxu0
    %v1261 = vpop.f32.mrb[0].mxu0
    %v1262 = vpop.f32.mrb[0].mxu0
    %1263 = vdwg.mxu0
    %v1264 = vadd.f32 %v1222, %v1259
    %v1265 = vxor.u32 %v1264, 2147483648
    %v1266 = vmul.f32 %v1265, 1.442695
    %v1267 = vpow.pop %v1266
    %v1268 = vadd.f32 %v1267, 1.0
    %v1269 = vrcp.pop %v1268
    %v1270 = vmul.f32 1.0, %v1269
    %v1271 = vtanh.pop %v1264
    %1272 = vrot.lane.b32.xlu0 %v1270, 64
    %v1273 = vpop.permute.xlu0 %1272
    %1274 = vrot.lane.b32.xlu0 %v1270, 32
    %v1275 = vpop.permute.xlu0 %1274
    %1276 = vrot.lane.b32.xlu0 %v1270, 96
    %v1277 = vpop.permute.xlu0 %1276
    %v1278 = vmul.f32 %v1275, %v1216
    %v1279 = vmul.f32 %v1273, %v1271
    %v1280 = vadd.f32 %v1278, %v1279
    %v1281 = vtanh.pop %v1280
    %v1282 = vmul.f32 %v1277, %v1281
    %s1283 = scalar_lea.vmem [#allocation3], 88
    %1284 = vst [vmem:[%s1283] sm:$0xff] %v1282
    %s1285 = scalar_lea.vmem [#allocation2], 96
    %v1286 = vld [vmem:[%s1285] sm:$0xff]
    %v1287 = vpack.c.bf16 %v1282, %v1282
    %1288 = vmatprep.subr.bf16.mxu0 0
    %1289 = vmatpush1.bf16.msra.mxu0 %v505
    %1290 = vmatprep.subr.bf16.mxu0 0
    %1291 = vmatpush1.bf16.msra.mxu0 %v506
    %1292 = vmatprep.subr.bf16.mxu0 0
    %1293 = vmatpush1.bf16.msra.mxu0 %v507
    %1294 = vmatprep.subr.bf16.mxu0 0
    %1295 = vmatpush1.bf16.msra.mxu0 %v508
    %1296 = vmatprep.subr.bf16.mxu0 0
    %1297 = vmatpush1.bf16.msra.mxu0 %v509
    %1298 = vmatprep.subr.bf16.mxu0 0
    %1299 = vmatpush1.bf16.msra.mxu0 %v510
    %1300 = vmatprep.subr.bf16.mxu0 0
    %1301 = vmatpush1.bf16.msra.mxu0 %v511
    %1302 = vmatprep.subr.bf16.mxu0 0
    %1303 = vmatpush1.bf16.msra.mxu0 %v512
    %1304 = vmatprep.subr.bf16.mxu0 0
    %1305 = vmatpush1.bf16.msra.mxu0 0
    %1306 = vmatprep.subr.bf16.mxu0 0
    %1307 = vmatpush1.bf16.msra.mxu0 0
    %1308 = vmatprep.subr.bf16.mxu0 0
    %1309 = vmatpush1.bf16.msra.mxu0 0
    %1310 = vmatprep.subr.bf16.mxu0 0
    %1311 = vmatpush1.bf16.msra.mxu0 0
    %1312 = vmatprep.subr.bf16.mxu0 0
    %1313 = vmatpush1.bf16.msra.mxu0 0
    %1314 = vmatprep.subr.bf16.mxu0 0
    %1315 = vmatpush1.bf16.msra.mxu0 0
    %1316 = vmatprep.subr.bf16.mxu0 0
    %1317 = vmatpush1.bf16.msra.mxu0 0
    %1318 = vmatprep.subr.bf16.mxu0 0
    %1319 = vmatpush1.bf16.msra.mxu0 0
    %1320 = vmatprep.mubr.bf16.mxu0 0
    %1321 = vmatmul.mubr.bf16.gmra.mrb[0].mxu0 %v1287
    %v1322 = vpop.f32.mrb[0].mxu0
    %v1323 = vadd.f32 0.0, %v1322
    %v1324 = vpop.f32.mrb[0].mxu0
    %v1325 = vpop.f32.mrb[0].mxu0
    %v1326 = vpop.f32.mrb[0].mxu0
    %1327 = vdwg.mxu0
    %v1328 = vadd.f32 %v1286, %v1323
    %v1329 = vxor.u32 %v1328, 2147483648
    %v1330 = vmul.f32 %v1329, 1.442695
    %v1331 = vpow.pop %v1330
    %v1332 = vadd.f32 %v1331, 1.0
    %v1333 = vrcp.pop %v1332
    %v1334 = vmul.f32 1.0, %v1333
    %v1335 = vtanh.pop %v1328
    %1336 = vrot.lane.b32.xlu0 %v1334, 64
    %v1337 = vpop.permute.xlu0 %1336
    %1338 = vrot.lane.b32.xlu0 %v1334, 32
    %v1339 = vpop.permute.xlu0 %1338
    %1340 = vrot.lane.b32.xlu0 %v1334, 96
    %v1341 = vpop.permute.xlu0 %1340
    %v1342 = vmul.f32 %v1339, %v1280
    %v1343 = vmul.f32 %v1337, %v1335
    %v1344 = vadd.f32 %v1342, %v1343
    %v1345 = vtanh.pop %v1344
    %v1346 = vmul.f32 %v1341, %v1345
    %s1347 = scalar_lea.vmem [#allocation3], 96
    %1348 = vst [vmem:[%s1347] sm:$0xff] %v1346
    %s1349 = scalar_lea.vmem [#allocation2], 104
    %v1350 = vld [vmem:[%s1349] sm:$0xff]
    %v1351 = vpack.c.bf16 %v1346, %v1346
    %1352 = vmatprep.subr.bf16.mxu0 0
    %1353 = vmatpush1.bf16.msra.mxu0 %v505
    %1354 = vmatprep.subr.bf16.mxu0 0
    %1355 = vmatpush1.bf16.msra.mxu0 %v506
    %1356 = vmatprep.subr.bf16.mxu0 0
    %1357 = vmatpush1.bf16.msra.mxu0 %v507
    %1358 = vmatprep.subr.bf16.mxu0 0
    %1359 = vmatpush1.bf16.msra.mxu0 %v508
    %1360 = vmatprep.subr.bf16.mxu0 0
    %1361 = vmatpush1.bf16.msra.mxu0 %v509
    %1362 = vmatprep.subr.bf16.mxu0 0
    %1363 = vmatpush1.bf16.msra.mxu0 %v510
    %1364 = vmatprep.subr.bf16.mxu0 0
    %1365 = vmatpush1.bf16.msra.mxu0 %v511
    %1366 = vmatprep.subr.bf16.mxu0 0
    %1367 = vmatpush1.bf16.msra.mxu0 %v512
    %1368 = vmatprep.subr.bf16.mxu0 0
    %1369 = vmatpush1.bf16.msra.mxu0 0
    %1370 = vmatprep.subr.bf16.mxu0 0
    %1371 = vmatpush1.bf16.msra.mxu0 0
    %1372 = vmatprep.subr.bf16.mxu0 0
    %1373 = vmatpush1.bf16.msra.mxu0 0
    %1374 = vmatprep.subr.bf16.mxu0 0
    %1375 = vmatpush1.bf16.msra.mxu0 0
    %1376 = vmatprep.subr.bf16.mxu0 0
    %1377 = vmatpush1.bf16.msra.mxu0 0
    %1378 = vmatprep.subr.bf16.mxu0 0
    %1379 = vmatpush1.bf16.msra.mxu0 0
    %1380 = vmatprep.subr.bf16.mxu0 0
    %1381 = vmatpush1.bf16.msra.mxu0 0
    %1382 = vmatprep.subr.bf16.mxu0 0
    %1383 = vmatpush1.bf16.msra.mxu0 0
    %1384 = vmatprep.mubr.bf16.mxu0 0
    %1385 = vmatmul.mubr.bf16.gmra.mrb[0].mxu0 %v1351
    %v1386 = vpop.f32.mrb[0].mxu0
    %v1387 = vadd.f32 0.0, %v1386
    %v1388 = vpop.f32.mrb[0].mxu0
    %v1389 = vpop.f32.mrb[0].mxu0
    %v1390 = vpop.f32.mrb[0].mxu0
    %1391 = vdwg.mxu0
    %v1392 = vadd.f32 %v1350, %v1387
    %v1393 = vxor.u32 %v1392, 2147483648
    %v1394 = vmul.f32 %v1393, 1.442695
    %v1395 = vpow.pop %v1394
    %v1396 = vadd.f32 %v1395, 1.0
    %v1397 = vrcp.pop %v1396
    %v1398 = vmul.f32 1.0, %v1397
    %v1399 = vtanh.pop %v1392
    %1400 = vrot.lane.b32.xlu0 %v1398, 64
    %v1401 = vpop.permute.xlu0 %1400
    %1402 = vrot.lane.b32.xlu0 %v1398, 32
    %v1403 = vpop.permute.xlu0 %1402
    %1404 = vrot.lane.b32.xlu0 %v1398, 96
    %v1405 = vpop.permute.xlu0 %1404
    %v1406 = vmul.f32 %v1403, %v1344
    %v1407 = vmul.f32 %v1401, %v1399
    %v1408 = vadd.f32 %v1406, %v1407
    %v1409 = vtanh.pop %v1408
    %v1410 = vmul.f32 %v1405, %v1409
    %s1411 = scalar_lea.vmem [#allocation3], 104
    %1412 = vst [vmem:[%s1411] sm:$0xff] %v1410
    %s1413 = scalar_lea.vmem [#allocation2], 112
    %v1414 = vld [vmem:[%s1413] sm:$0xff]
    %v1415 = vpack.c.bf16 %v1410, %v1410
    %1416 = vmatprep.subr.bf16.mxu0 0
    %1417 = vmatpush1.bf16.msra.mxu0 %v505
    %1418 = vmatprep.subr.bf16.mxu0 0
    %1419 = vmatpush1.bf16.msra.mxu0 %v506
    %1420 = vmatprep.subr.bf16.mxu0 0
    %1421 = vmatpush1.bf16.msra.mxu0 %v507
    %1422 = vmatprep.subr.bf16.mxu0 0
    %1423 = vmatpush1.bf16.msra.mxu0 %v508
    %1424 = vmatprep.subr.bf16.mxu0 0
    %1425 = vmatpush1.bf16.msra.mxu0 %v509
    %1426 = vmatprep.subr.bf16.mxu0 0
    %1427 = vmatpush1.bf16.msra.mxu0 %v510
    %1428 = vmatprep.subr.bf16.mxu0 0
    %1429 = vmatpush1.bf16.msra.mxu0 %v511
    %1430 = vmatprep.subr.bf16.mxu0 0
    %1431 = vmatpush1.bf16.msra.mxu0 %v512
    %1432 = vmatprep.subr.bf16.mxu0 0
    %1433 = vmatpush1.bf16.msra.mxu0 0
    %1434 = vmatprep.subr.bf16.mxu0 0
    %1435 = vmatpush1.bf16.msra.mxu0 0
    %1436 = vmatprep.subr.bf16.mxu0 0
    %1437 = vmatpush1.bf16.msra.mxu0 0
    %1438 = vmatprep.subr.bf16.mxu0 0
    %1439 = vmatpush1.bf16.msra.mxu0 0
    %1440 = vmatprep.subr.bf16.mxu0 0
    %1441 = vmatpush1.bf16.msra.mxu0 0
    %1442 = vmatprep.subr.bf16.mxu0 0
    %1443 = vmatpush1.bf16.msra.mxu0 0
    %1444 = vmatprep.subr.bf16.mxu0 0
    %1445 = vmatpush1.bf16.msra.mxu0 0
    %1446 = vmatprep.subr.bf16.mxu0 0
    %1447 = vmatpush1.bf16.msra.mxu0 0
    %1448 = vmatprep.mubr.bf16.mxu0 0
    %1449 = vmatmul.mubr.bf16.gmra.mrb[0].mxu0 %v1415
    %v1450 = vpop.f32.mrb[0].mxu0
    %v1451 = vadd.f32 0.0, %v1450
    %v1452 = vpop.f32.mrb[0].mxu0
    %v1453 = vpop.f32.mrb[0].mxu0
    %v1454 = vpop.f32.mrb[0].mxu0
    %1455 = vdwg.mxu0
    %v1456 = vadd.f32 %v1414, %v1451
    %v1457 = vxor.u32 %v1456, 2147483648
    %v1458 = vmul.f32 %v1457, 1.442695
    %v1459 = vpow.pop %v1458
    %v1460 = vadd.f32 %v1459, 1.0
    %v1461 = vrcp.pop %v1460
    %v1462 = vmul.f32 1.0, %v1461
    %v1463 = vtanh.pop %v1456
    %1464 = vrot.lane.b32.xlu0 %v1462, 64
    %v1465 = vpop.permute.xlu0 %1464
    %1466 = vrot.lane.b32.xlu0 %v1462, 32
    %v1467 = vpop.permute.xlu0 %1466
    %1468 = vrot.lane.b32.xlu0 %v1462, 96
    %v1469 = vpop.permute.xlu0 %1468
    %v1470 = vmul.f32 %v1467, %v1408
    %v1471 = vmul.f32 %v1465, %v1463
    %v1472 = vadd.f32 %v1470, %v1471
    %v1473 = vtanh.pop %v1472
    %v1474 = vmul.f32 %v1469, %v1473
    %s1475 = scalar_lea.vmem [#allocation3], 112
    %1476 = vst [vmem:[%s1475] sm:$0xff] %v1474
    %s1477 = scalar_lea.vmem [#allocation2], 120
    %v1478 = vld [vmem:[%s1477] sm:$0xff]
    %v1479 = vpack.c.bf16 %v1474, %v1474
    %1480 = vmatprep.subr.bf16.mxu0 0
    %1481 = vmatpush1.bf16.msra.mxu0 %v505
    %1482 = vmatprep.subr.bf16.mxu0 0
    %1483 = vmatpush1.bf16.msra.mxu0 %v506
    %1484 = vmatprep.subr.bf16.mxu0 0
    %1485 = vmatpush1.bf16.msra.mxu0 %v507
    %1486 = vmatprep.subr.bf16.mxu0 0
    %1487 = vmatpush1.bf16.msra.mxu0 %v508
    %1488 = vmatprep.subr.bf16.mxu0 0
    %1489 = vmatpush1.bf16.msra.mxu0 %v509
    %1490 = vmatprep.subr.bf16.mxu0 0
    %1491 = vmatpush1.bf16.msra.mxu0 %v510
    %1492 = vmatprep.subr.bf16.mxu0 0
    %1493 = vmatpush1.bf16.msra.mxu0 %v511
    %1494 = vmatprep.subr.bf16.mxu0 0
    %1495 = vmatpush1.bf16.msra.mxu0 %v512
    %1496 = vmatprep.subr.bf16.mxu0 0
    %1497 = vmatpush1.bf16.msra.mxu0 0
    %1498 = vmatprep.subr.bf16.mxu0 0
    %1499 = vmatpush1.bf16.msra.mxu0 0
    %1500 = vmatprep.subr.bf16.mxu0 0
    %1501 = vmatpush1.bf16.msra.mxu0 0
    %1502 = vmatprep.subr.bf16.mxu0 0
    %1503 = vmatpush1.bf16.msra.mxu0 0
    %1504 = vmatprep.subr.bf16.mxu0 0
    %1505 = vmatpush1.bf16.msra.mxu0 0
    %1506 = vmatprep.subr.bf16.mxu0 0
    %1507 = vmatpush1.bf16.msra.mxu0 0
    %1508 = vmatprep.subr.bf16.mxu0 0
    %1509 = vmatpush1.bf16.msra.mxu0 0
    %1510 = vmatprep.subr.bf16.mxu0 0
    %1511 = vmatpush1.bf16.msra.mxu0 0
    %1512 = vmatprep.mubr.bf16.mxu0 0
    %1513 = vmatmul.mubr.bf16.gmra.mrb[0].mxu0 %v1479
    %v1514 = vpop.f32.mrb[0].mxu0
    %v1515 = vadd.f32 0.0, %v1514
    %v1516 = vpop.f32.mrb[0].mxu0
    %v1517 = vpop.f32.mrb[0].mxu0
    %v1518 = vpop.f32.mrb[0].mxu0
    %1519 = vdwg.mxu0
    %v1520 = vadd.f32 %v1478, %v1515
    %v1521 = vxor.u32 %v1520, 2147483648
    %v1522 = vmul.f32 %v1521, 1.442695
    %v1523 = vpow.pop %v1522
    %v1524 = vadd.f32 %v1523, 1.0
    %v1525 = vrcp.pop %v1524
    %v1526 = vmul.f32 1.0, %v1525
    %v1527 = vtanh.pop %v1520
    %1528 = vrot.lane.b32.xlu0 %v1526, 64
    %v1529 = vpop.permute.xlu0 %1528
    %1530 = vrot.lane.b32.xlu0 %v1526, 32
    %v1531 = vpop.permute.xlu0 %1530
    %1532 = vrot.lane.b32.xlu0 %v1526, 96
    %v1533 = vpop.permute.xlu0 %1532
    %v1534 = vmul.f32 %v1531, %v1472
    %v1535 = vmul.f32 %v1529, %v1527
    %v1536 = vadd.f32 %v1534, %v1535
    %v1537 = vtanh.pop %v1536
    %v1538 = vmul.f32 %v1533, %v1537
    %s1539 = scalar_lea.vmem [#allocation3], 120
    %1540 = vst [vmem:[%s1539] sm:$0xff] %v1538
    %s1541 = scalar_lea.vmem [#allocation2], 128
    %v1542 = vld [vmem:[%s1541] sm:$0xff]
    %v1543 = vpack.c.bf16 %v1538, %v1538
    %1544 = vmatprep.subr.bf16.mxu0 0
    %1545 = vmatpush1.bf16.msra.mxu0 %v505
    %1546 = vmatprep.subr.bf16.mxu0 0
    %1547 = vmatpush1.bf16.msra.mxu0 %v506
    %1548 = vmatprep.subr.bf16.mxu0 0
    %1549 = vmatpush1.bf16.msra.mxu0 %v507
    %1550 = vmatprep.subr.bf16.mxu0 0
    %1551 = vmatpush1.bf16.msra.mxu0 %v508
    %1552 = vmatprep.subr.bf16.mxu0 0
    %1553 = vmatpush1.bf16.msra.mxu0 %v509
    %1554 = vmatprep.subr.bf16.mxu0 0
    %1555 = vmatpush1.bf16.msra.mxu0 %v510
    %1556 = vmatprep.subr.bf16.mxu0 0
    %1557 = vmatpush1.bf16.msra.mxu0 %v511
    %1558 = vmatprep.subr.bf16.mxu0 0
    %1559 = vmatpush1.bf16.msra.mxu0 %v512
    %1560 = vmatprep.subr.bf16.mxu0 0
    %1561 = vmatpush1.bf16.msra.mxu0 0
    %1562 = vmatprep.subr.bf16.mxu0 0
    %1563 = vmatpush1.bf16.msra.mxu0 0
    %1564 = vmatprep.subr.bf16.mxu0 0
    %1565 = vmatpush1.bf16.msra.mxu0 0
    %1566 = vmatprep.subr.bf16.mxu0 0
    %1567 = vmatpush1.bf16.msra.mxu0 0
    %1568 = vmatprep.subr.bf16.mxu0 0
    %1569 = vmatpush1.bf16.msra.mxu0 0
    %1570 = vmatprep.subr.bf16.mxu0 0
    %1571 = vmatpush1.bf16.msra.mxu0 0
    %1572 = vmatprep.subr.bf16.mxu0 0
    %1573 = vmatpush1.bf16.msra.mxu0 0
    %1574 = vmatprep.subr.bf16.mxu0 0
    %1575 = vmatpush1.bf16.msra.mxu0 0
    %1576 = vmatprep.mubr.bf16.mxu0 0
    %1577 = vmatmul.mubr.bf16.gmra.mrb[0].mxu0 %v1543
    %v1578 = vpop.f32.mrb[0].mxu0
    %v1579 = vadd.f32 0.0, %v1578
    %v1580 = vpop.f32.mrb[0].mxu0
    %v1581 = vpop.f32.mrb[0].mxu0
    %v1582 = vpop.f32.mrb[0].mxu0
    %1583 = vdwg.mxu0
    %v1584 = vadd.f32 %v1542, %v1579
    %v1585 = vxor.u32 %v1584, 2147483648
    %v1586 = vmul.f32 %v1585, 1.442695
    %v1587 = vpow.pop %v1586
    %v1588 = vadd.f32 %v1587, 1.0
    %v1589 = vrcp.pop %v1588
    %v1590 = vmul.f32 1.0, %v1589
    %v1591 = vtanh.pop %v1584
    %1592 = vrot.lane.b32.xlu0 %v1590, 64
    %v1593 = vpop.permute.xlu0 %1592
    %1594 = vrot.lane.b32.xlu0 %v1590, 32
    %v1595 = vpop.permute.xlu0 %1594
    %1596 = vrot.lane.b32.xlu0 %v1590, 96
    %v1597 = vpop.permute.xlu0 %1596
    %v1598 = vmul.f32 %v1595, %v1536
    %v1599 = vmul.f32 %v1593, %v1591
    %v1600 = vadd.f32 %v1598, %v1599
    %v1601 = vtanh.pop %v1600
    %v1602 = vmul.f32 %v1597, %v1601
    %s1603 = scalar_lea.vmem [#allocation3], 128
    %1604 = vst [vmem:[%s1603] sm:$0xff] %v1602
    %s1605 = scalar_lea.vmem [#allocation2], 136
    %v1606 = vld [vmem:[%s1605] sm:$0xff]
    %v1607 = vpack.c.bf16 %v1602, %v1602
    %1608 = vmatprep.subr.bf16.mxu0 0
    %1609 = vmatpush1.bf16.msra.mxu0 %v505
    %1610 = vmatprep.subr.bf16.mxu0 0
    %1611 = vmatpush1.bf16.msra.mxu0 %v506
    %1612 = vmatprep.subr.bf16.mxu0 0
    %1613 = vmatpush1.bf16.msra.mxu0 %v507
    %1614 = vmatprep.subr.bf16.mxu0 0
    %1615 = vmatpush1.bf16.msra.mxu0 %v508
    %1616 = vmatprep.subr.bf16.mxu0 0
    %1617 = vmatpush1.bf16.msra.mxu0 %v509
    %1618 = vmatprep.subr.bf16.mxu0 0
    %1619 = vmatpush1.bf16.msra.mxu0 %v510
    %1620 = vmatprep.subr.bf16.mxu0 0
    %1621 = vmatpush1.bf16.msra.mxu0 %v511
    %1622 = vmatprep.subr.bf16.mxu0 0
    %1623 = vmatpush1.bf16.msra.mxu0 %v512
    %1624 = vmatprep.subr.bf16.mxu0 0
    %1625 = vmatpush1.bf16.msra.mxu0 0
    %1626 = vmatprep.subr.bf16.mxu0 0
    %1627 = vmatpush1.bf16.msra.mxu0 0
    %1628 = vmatprep.subr.bf16.mxu0 0
    %1629 = vmatpush1.bf16.msra.mxu0 0
    %1630 = vmatprep.subr.bf16.mxu0 0
    %1631 = vmatpush1.bf16.msra.mxu0 0
    %1632 = vmatprep.subr.bf16.mxu0 0
    %1633 = vmatpush1.bf16.msra.mxu0 0
    %1634 = vmatprep.subr.bf16.mxu0 0
    %1635 = vmatpush1.bf16.msra.mxu0 0
    %1636 = vmatprep.subr.bf16.mxu0 0
    %1637 = vmatpush1.bf16.msra.mxu0 0
    %1638 = vmatprep.subr.bf16.mxu0 0
    %1639 = vmatpush1.bf16.msra.mxu0 0
    %1640 = vmatprep.mubr.bf16.mxu0 0
    %1641 = vmatmul.mubr.bf16.gmra.mrb[0].mxu0 %v1607
    %v1642 = vpop.f32.mrb[0].mxu0
    %v1643 = vadd.f32 0.0, %v1642
    %v1644 = vpop.f32.mrb[0].mxu0
    %v1645 = vpop.f32.mrb[0].mxu0
    %v1646 = vpop.f32.mrb[0].mxu0
    %1647 = vdwg.mxu0
    %v1648 = vadd.f32 %v1606, %v1643
    %v1649 = vxor.u32 %v1648, 2147483648
    %v1650 = vmul.f32 %v1649, 1.442695
    %v1651 = vpow.pop %v1650
    %v1652 = vadd.f32 %v1651, 1.0
    %v1653 = vrcp.pop %v1652
    %v1654 = vmul.f32 1.0, %v1653
    %v1655 = vtanh.pop %v1648
    %1656 = vrot.lane.b32.xlu0 %v1654, 64
    %v1657 = vpop.permute.xlu0 %1656
    %1658 = vrot.lane.b32.xlu0 %v1654, 32
    %v1659 = vpop.permute.xlu0 %1658
    %1660 = vrot.lane.b32.xlu0 %v1654, 96
    %v1661 = vpop.permute.xlu0 %1660
    %v1662 = vmul.f32 %v1659, %v1600
    %v1663 = vmul.f32 %v1657, %v1655
    %v1664 = vadd.f32 %v1662, %v1663
    %v1665 = vtanh.pop %v1664
    %v1666 = vmul.f32 %v1661, %v1665
    %s1667 = scalar_lea.vmem [#allocation3], 136
    %1668 = vst [vmem:[%s1667] sm:$0xff] %v1666
    %s1669 = scalar_lea.vmem [#allocation2], 144
    %v1670 = vld [vmem:[%s1669] sm:$0xff]
    %v1671 = vpack.c.bf16 %v1666, %v1666
    %1672 = vmatprep.subr.bf16.mxu0 0
    %1673 = vmatpush1.bf16.msra.mxu0 %v505
    %1674 = vmatprep.subr.bf16.mxu0 0
    %1675 = vmatpush1.bf16.msra.mxu0 %v506
    %1676 = vmatprep.subr.bf16.mxu0 0
    %1677 = vmatpush1.bf16.msra.mxu0 %v507
    %1678 = vmatprep.subr.bf16.mxu0 0
    %1679 = vmatpush1.bf16.msra.mxu0 %v508
    %1680 = vmatprep.subr.bf16.mxu0 0
    %1681 = vmatpush1.bf16.msra.mxu0 %v509
    %1682 = vmatprep.subr.bf16.mxu0 0
    %1683 = vmatpush1.bf16.msra.mxu0 %v510
    %1684 = vmatprep.subr.bf16.mxu0 0
    %1685 = vmatpush1.bf16.msra.mxu0 %v511
    %1686 = vmatprep.subr.bf16.mxu0 0
    %1687 = vmatpush1.bf16.msra.mxu0 %v512
    %1688 = vmatprep.subr.bf16.mxu0 0
    %1689 = vmatpush1.bf16.msra.mxu0 0
    %1690 = vmatprep.subr.bf16.mxu0 0
    %1691 = vmatpush1.bf16.msra.mxu0 0
    %1692 = vmatprep.subr.bf16.mxu0 0
    %1693 = vmatpush1.bf16.msra.mxu0 0
    %1694 = vmatprep.subr.bf16.mxu0 0
    %1695 = vmatpush1.bf16.msra.mxu0 0
    %1696 = vmatprep.subr.bf16.mxu0 0
    %1697 = vmatpush1.bf16.msra.mxu0 0
    %1698 = vmatprep.subr.bf16.mxu0 0
    %1699 = vmatpush1.bf16.msra.mxu0 0
    %1700 = vmatprep.subr.bf16.mxu0 0
    %1701 = vmatpush1.bf16.msra.mxu0 0
    %1702 = vmatprep.subr.bf16.mxu0 0
    %1703 = vmatpush1.bf16.msra.mxu0 0
    %1704 = vmatprep.mubr.bf16.mxu0 0
    %1705 = vmatmul.mubr.bf16.gmra.mrb[0].mxu0 %v1671
    %v1706 = vpop.f32.mrb[0].mxu0
    %v1707 = vadd.f32 0.0, %v1706
    %v1708 = vpop.f32.mrb[0].mxu0
    %v1709 = vpop.f32.mrb[0].mxu0
    %v1710 = vpop.f32.mrb[0].mxu0
    %1711 = vdwg.mxu0
    %v1712 = vadd.f32 %v1670, %v1707
    %v1713 = vxor.u32 %v1712, 2147483648
    %v1714 = vmul.f32 %v1713, 1.442695
    %v1715 = vpow.pop %v1714
    %v1716 = vadd.f32 %v1715, 1.0
    %v1717 = vrcp.pop %v1716
    %v1718 = vmul.f32 1.0, %v1717
    %v1719 = vtanh.pop %v1712
    %1720 = vrot.lane.b32.xlu0 %v1718, 64
    %v1721 = vpop.permute.xlu0 %1720
    %1722 = vrot.lane.b32.xlu0 %v1718, 32
    %v1723 = vpop.permute.xlu0 %1722
    %1724 = vrot.lane.b32.xlu0 %v1718, 96
    %v1725 = vpop.permute.xlu0 %1724
    %v1726 = vmul.f32 %v1723, %v1664
    %v1727 = vmul.f32 %v1721, %v1719
    %v1728 = vadd.f32 %v1726, %v1727
    %v1729 = vtanh.pop %v1728
    %v1730 = vmul.f32 %v1725, %v1729
    %s1731 = scalar_lea.vmem [#allocation3], 144
    %1732 = vst [vmem:[%s1731] sm:$0xff] %v1730
    %s1733 = scalar_lea.vmem [#allocation2], 152
    %v1734 = vld [vmem:[%s1733] sm:$0xff]
    %v1735 = vpack.c.bf16 %v1730, %v1730
    %1736 = vmatprep.subr.bf16.mxu0 0
    %1737 = vmatpush1.bf16.msra.mxu0 %v505
    %1738 = vmatprep.subr.bf16.mxu0 0
    %1739 = vmatpush1.bf16.msra.mxu0 %v506
    %1740 = vmatprep.subr.bf16.mxu0 0
    %1741 = vmatpush1.bf16.msra.mxu0 %v507
    %1742 = vmatprep.subr.bf16.mxu0 0
    %1743 = vmatpush1.bf16.msra.mxu0 %v508
    %1744 = vmatprep.subr.bf16.mxu0 0
    %1745 = vmatpush1.bf16.msra.mxu0 %v509
    %1746 = vmatprep.subr.bf16.mxu0 0
    %1747 = vmatpush1.bf16.msra.mxu0 %v510
    %1748 = vmatprep.subr.bf16.mxu0 0
    %1749 = vmatpush1.bf16.msra.mxu0 %v511
    %1750 = vmatprep.subr.bf16.mxu0 0
    %1751 = vmatpush1.bf16.msra.mxu0 %v512
    %1752 = vmatprep.subr.bf16.mxu0 0
    %1753 = vmatpush1.bf16.msra.mxu0 0
    %1754 = vmatprep.subr.bf16.mxu0 0
    %1755 = vmatpush1.bf16.msra.mxu0 0
    %1756 = vmatprep.subr.bf16.mxu0 0
    %1757 = vmatpush1.bf16.msra.mxu0 0
    %1758 = vmatprep.subr.bf16.mxu0 0
    %1759 = vmatpush1.bf16.msra.mxu0 0
    %1760 = vmatprep.subr.bf16.mxu0 0
    %1761 = vmatpush1.bf16.msra.mxu0 0
    %1762 = vmatprep.subr.bf16.mxu0 0
    %1763 = vmatpush1.bf16.msra.mxu0 0
    %1764 = vmatprep.subr.bf16.mxu0 0
    %1765 = vmatpush1.bf16.msra.mxu0 0
    %1766 = vmatprep.subr.bf16.mxu0 0
    %1767 = vmatpush1.bf16.msra.mxu0 0
    %1768 = vmatprep.mubr.bf16.mxu0 0
    %1769 = vmatmul.mubr.bf16.gmra.mrb[0].mxu0 %v1735
    %v1770 = vpop.f32.mrb[0].mxu0
    %v1771 = vadd.f32 0.0, %v1770
    %v1772 = vpop.f32.mrb[0].mxu0
    %v1773 = vpop.f32.mrb[0].mxu0
    %v1774 = vpop.f32.mrb[0].mxu0
    %1775 = vdwg.mxu0
    %v1776 = vadd.f32 %v1734, %v1771
    %v1777 = vxor.u32 %v1776, 2147483648
    %v1778 = vmul.f32 %v1777, 1.442695
    %v1779 = vpow.pop %v1778
    %v1780 = vadd.f32 %v1779, 1.0
    %v1781 = vrcp.pop %v1780
    %v1782 = vmul.f32 1.0, %v1781
    %v1783 = vtanh.pop %v1776
    %1784 = vrot.lane.b32.xlu0 %v1782, 64
    %v1785 = vpop.permute.xlu0 %1784
    %1786 = vrot.lane.b32.xlu0 %v1782, 32
    %v1787 = vpop.permute.xlu0 %1786
    %1788 = vrot.lane.b32.xlu0 %v1782, 96
    %v1789 = vpop.permute.xlu0 %1788
    %v1790 = vmul.f32 %v1787, %v1728
    %v1791 = vmul.f32 %v1785, %v1783
    %v1792 = vadd.f32 %v1790, %v1791
    %v1793 = vtanh.pop %v1792
    %v1794 = vmul.f32 %v1789, %v1793
    %s1795 = scalar_lea.vmem [#allocation3], 152
    %1796 = vst [vmem:[%s1795] sm:$0xff] %v1794
    %s1797 = scalar_lea.vmem [#allocation2], 160
    %v1798 = vld [vmem:[%s1797] sm:$0xff]
    %v1799 = vpack.c.bf16 %v1794, %v1794
    %1800 = vmatprep.subr.bf16.mxu0 0
    %1801 = vmatpush1.bf16.msra.mxu0 %v505
    %1802 = vmatprep.subr.bf16.mxu0 0
    %1803 = vmatpush1.bf16.msra.mxu0 %v506
    %1804 = vmatprep.subr.bf16.mxu0 0
    %1805 = vmatpush1.bf16.msra.mxu0 %v507
    %1806 = vmatprep.subr.bf16.mxu0 0
    %1807 = vmatpush1.bf16.msra.mxu0 %v508
    %1808 = vmatprep.subr.bf16.mxu0 0
    %1809 = vmatpush1.bf16.msra.mxu0 %v509
    %1810 = vmatprep.subr.bf16.mxu0 0
    %1811 = vmatpush1.bf16.msra.mxu0 %v510
    %1812 = vmatprep.subr.bf16.mxu0 0
    %1813 = vmatpush1.bf16.msra.mxu0 %v511
    %1814 = vmatprep.subr.bf16.mxu0 0
    %1815 = vmatpush1.bf16.msra.mxu0 %v512
    %1816 = vmatprep.subr.bf16.mxu0 0
    %1817 = vmatpush1.bf16.msra.mxu0 0
    %1818 = vmatprep.subr.bf16.mxu0 0
    %1819 = vmatpush1.bf16.msra.mxu0 0
    %1820 = vmatprep.subr.bf16.mxu0 0
    %1821 = vmatpush1.bf16.msra.mxu0 0
    %1822 = vmatprep.subr.bf16.mxu0 0
    %1823 = vmatpush1.bf16.msra.mxu0 0
    %1824 = vmatprep.subr.bf16.mxu0 0
    %1825 = vmatpush1.bf16.msra.mxu0 0
    %1826 = vmatprep.subr.bf16.mxu0 0
    %1827 = vmatpush1.bf16.msra.mxu0 0
    %1828 = vmatprep.subr.bf16.mxu0 0
    %1829 = vmatpush1.bf16.msra.mxu0 0
    %1830 = vmatprep.subr.bf16.mxu0 0
    %1831 = vmatpush1.bf16.msra.mxu0 0
    %1832 = vmatprep.mubr.bf16.mxu0 0
    %1833 = vmatmul.mubr.bf16.gmra.mrb[0].mxu0 %v1799
    %v1834 = vpop.f32.mrb[0].mxu0
    %v1835 = vadd.f32 0.0, %v1834
    %v1836 = vpop.f32.mrb[0].mxu0
    %v1837 = vpop.f32.mrb[0].mxu0
    %v1838 = vpop.f32.mrb[0].mxu0
    %1839 = vdwg.mxu0
    %v1840 = vadd.f32 %v1798, %v1835
    %v1841 = vxor.u32 %v1840, 2147483648
    %v1842 = vmul.f32 %v1841, 1.442695
    %v1843 = vpow.pop %v1842
    %v1844 = vadd.f32 %v1843, 1.0
    %v1845 = vrcp.pop %v1844
    %v1846 = vmul.f32 1.0, %v1845
    %v1847 = vtanh.pop %v1840
    %1848 = vrot.lane.b32.xlu0 %v1846, 64
    %v1849 = vpop.permute.xlu0 %1848
    %1850 = vrot.lane.b32.xlu0 %v1846, 32
    %v1851 = vpop.permute.xlu0 %1850
    %1852 = vrot.lane.b32.xlu0 %v1846, 96
    %v1853 = vpop.permute.xlu0 %1852
    %v1854 = vmul.f32 %v1851, %v1792
    %v1855 = vmul.f32 %v1849, %v1847
    %v1856 = vadd.f32 %v1854, %v1855
    %v1857 = vtanh.pop %v1856
    %v1858 = vmul.f32 %v1853, %v1857
    %s1859 = scalar_lea.vmem [#allocation3], 160
    %1860 = vst [vmem:[%s1859] sm:$0xff] %v1858
    %s1861 = scalar_lea.vmem [#allocation2], 168
    %v1862 = vld [vmem:[%s1861] sm:$0xff]
    %v1863 = vpack.c.bf16 %v1858, %v1858
    %1864 = vmatprep.subr.bf16.mxu0 0
    %1865 = vmatpush1.bf16.msra.mxu0 %v505
    %1866 = vmatprep.subr.bf16.mxu0 0
    %1867 = vmatpush1.bf16.msra.mxu0 %v506
    %1868 = vmatprep.subr.bf16.mxu0 0
    %1869 = vmatpush1.bf16.msra.mxu0 %v507
    %1870 = vmatprep.subr.bf16.mxu0 0
    %1871 = vmatpush1.bf16.msra.mxu0 %v508
    %1872 = vmatprep.subr.bf16.mxu0 0
    %1873 = vmatpush1.bf16.msra.mxu0 %v509
    %1874 = vmatprep.subr.bf16.mxu0 0
    %1875 = vmatpush1.bf16.msra.mxu0 %v510
    %1876 = vmatprep.subr.bf16.mxu0 0
    %1877 = vmatpush1.bf16.msra.mxu0 %v511
    %1878 = vmatprep.subr.bf16.mxu0 0
    %1879 = vmatpush1.bf16.msra.mxu0 %v512
    %1880 = vmatprep.subr.bf16.mxu0 0
    %1881 = vmatpush1.bf16.msra.mxu0 0
    %1882 = vmatprep.subr.bf16.mxu0 0
    %1883 = vmatpush1.bf16.msra.mxu0 0
    %1884 = vmatprep.subr.bf16.mxu0 0
    %1885 = vmatpush1.bf16.msra.mxu0 0
    %1886 = vmatprep.subr.bf16.mxu0 0
    %1887 = vmatpush1.bf16.msra.mxu0 0
    %1888 = vmatprep.subr.bf16.mxu0 0
    %1889 = vmatpush1.bf16.msra.mxu0 0
    %1890 = vmatprep.subr.bf16.mxu0 0
    %1891 = vmatpush1.bf16.msra.mxu0 0
    %1892 = vmatprep.subr.bf16.mxu0 0
    %1893 = vmatpush1.bf16.msra.mxu0 0
    %1894 = vmatprep.subr.bf16.mxu0 0
    %1895 = vmatpush1.bf16.msra.mxu0 0
    %1896 = vmatprep.mubr.bf16.mxu0 0
    %1897 = vmatmul.mubr.bf16.gmra.mrb[0].mxu0 %v1863
    %v1898 = vpop.f32.mrb[0].mxu0
    %v1899 = vadd.f32 0.0, %v1898
    %v1900 = vpop.f32.mrb[0].mxu0
    %v1901 = vpop.f32.mrb[0].mxu0
    %v1902 = vpop.f32.mrb[0].mxu0
    %1903 = vdwg.mxu0
    %v1904 = vadd.f32 %v1862, %v1899
    %v1905 = vxor.u32 %v1904, 2147483648
    %v1906 = vmul.f32 %v1905, 1.442695
    %v1907 = vpow.pop %v1906
    %v1908 = vadd.f32 %v1907, 1.0
    %v1909 = vrcp.pop %v1908
    %v1910 = vmul.f32 1.0, %v1909
    %v1911 = vtanh.pop %v1904
    %1912 = vrot.lane.b32.xlu0 %v1910, 64
    %v1913 = vpop.permute.xlu0 %1912
    %1914 = vrot.lane.b32.xlu0 %v1910, 32
    %v1915 = vpop.permute.xlu0 %1914
    %1916 = vrot.lane.b32.xlu0 %v1910, 96
    %v1917 = vpop.permute.xlu0 %1916
    %v1918 = vmul.f32 %v1915, %v1856
    %v1919 = vmul.f32 %v1913, %v1911
    %v1920 = vadd.f32 %v1918, %v1919
    %v1921 = vtanh.pop %v1920
    %v1922 = vmul.f32 %v1917, %v1921
    %s1923 = scalar_lea.vmem [#allocation3], 168
    %1924 = vst [vmem:[%s1923] sm:$0xff] %v1922
    %s1925 = scalar_lea.vmem [#allocation2], 176
    %v1926 = vld [vmem:[%s1925] sm:$0xff]
    %v1927 = vpack.c.bf16 %v1922, %v1922
    %1928 = vmatprep.subr.bf16.mxu0 0
    %1929 = vmatpush1.bf16.msra.mxu0 %v505
    %1930 = vmatprep.subr.bf16.mxu0 0
    %1931 = vmatpush1.bf16.msra.mxu0 %v506
    %1932 = vmatprep.subr.bf16.mxu0 0
    %1933 = vmatpush1.bf16.msra.mxu0 %v507
    %1934 = vmatprep.subr.bf16.mxu0 0
    %1935 = vmatpush1.bf16.msra.mxu0 %v508
    %1936 = vmatprep.subr.bf16.mxu0 0
    %1937 = vmatpush1.bf16.msra.mxu0 %v509
    %1938 = vmatprep.subr.bf16.mxu0 0
    %1939 = vmatpush1.bf16.msra.mxu0 %v510
    %1940 = vmatprep.subr.bf16.mxu0 0
    %1941 = vmatpush1.bf16.msra.mxu0 %v511
    %1942 = vmatprep.subr.bf16.mxu0 0
    %1943 = vmatpush1.bf16.msra.mxu0 %v512
    %1944 = vmatprep.subr.bf16.mxu0 0
    %1945 = vmatpush1.bf16.msra.mxu0 0
    %1946 = vmatprep.subr.bf16.mxu0 0
    %1947 = vmatpush1.bf16.msra.mxu0 0
    %1948 = vmatprep.subr.bf16.mxu0 0
    %1949 = vmatpush1.bf16.msra.mxu0 0
    %1950 = vmatprep.subr.bf16.mxu0 0
    %1951 = vmatpush1.bf16.msra.mxu0 0
    %1952 = vmatprep.subr.bf16.mxu0 0
    %1953 = vmatpush1.bf16.msra.mxu0 0
    %1954 = vmatprep.subr.bf16.mxu0 0
    %1955 = vmatpush1.bf16.msra.mxu0 0
    %1956 = vmatprep.subr.bf16.mxu0 0
    %1957 = vmatpush1.bf16.msra.mxu0 0
    %1958 = vmatprep.subr.bf16.mxu0 0
    %1959 = vmatpush1.bf16.msra.mxu0 0
    %1960 = vmatprep.mubr.bf16.mxu0 0
    %1961 = vmatmul.mubr.bf16.gmra.mrb[0].mxu0 %v1927
    %v1962 = vpop.f32.mrb[0].mxu0
    %v1963 = vadd.f32 0.0, %v1962
    %v1964 = vpop.f32.mrb[0].mxu0
    %v1965 = vpop.f32.mrb[0].mxu0
    %v1966 = vpop.f32.mrb[0].mxu0
    %1967 = vdwg.mxu0
    %v1968 = vadd.f32 %v1926, %v1963
    %v1969 = vxor.u32 %v1968, 2147483648
    %v1970 = vmul.f32 %v1969, 1.442695
    %v1971 = vpow.pop %v1970
    %v1972 = vadd.f32 %v1971, 1.0
    %v1973 = vrcp.pop %v1972
    %v1974 = vmul.f32 1.0, %v1973
    %v1975 = vtanh.pop %v1968
    %1976 = vrot.lane.b32.xlu0 %v1974, 64
    %v1977 = vpop.permute.xlu0 %1976
    %1978 = vrot.lane.b32.xlu0 %v1974, 32
    %v1979 = vpop.permute.xlu0 %1978
    %1980 = vrot.lane.b32.xlu0 %v1974, 96
    %v1981 = vpop.permute.xlu0 %1980
    %v1982 = vmul.f32 %v1979, %v1920
    %v1983 = vmul.f32 %v1977, %v1975
    %v1984 = vadd.f32 %v1982, %v1983
    %v1985 = vtanh.pop %v1984
    %v1986 = vmul.f32 %v1981, %v1985
    %s1987 = scalar_lea.vmem [#allocation3], 176
    %1988 = vst [vmem:[%s1987] sm:$0xff] %v1986
    %s1989 = scalar_lea.vmem [#allocation2], 184
    %v1990 = vld [vmem:[%s1989] sm:$0xff]
    %v1991 = vpack.c.bf16 %v1986, %v1986
    %1992 = vmatprep.subr.bf16.mxu0 0
    %1993 = vmatpush1.bf16.msra.mxu0 %v505
    %1994 = vmatprep.subr.bf16.mxu0 0
    %1995 = vmatpush1.bf16.msra.mxu0 %v506
    %1996 = vmatprep.subr.bf16.mxu0 0
    %1997 = vmatpush1.bf16.msra.mxu0 %v507
    %1998 = vmatprep.subr.bf16.mxu0 0
    %1999 = vmatpush1.bf16.msra.mxu0 %v508
    %2000 = vmatprep.subr.bf16.mxu0 0
    %2001 = vmatpush1.bf16.msra.mxu0 %v509
    %2002 = vmatprep.subr.bf16.mxu0 0
    %2003 = vmatpush1.bf16.msra.mxu0 %v510
    %2004 = vmatprep.subr.bf16.mxu0 0
    %2005 = vmatpush1.bf16.msra.mxu0 %v511
    %2006 = vmatprep.subr.bf16.mxu0 0
    %2007 = vmatpush1.bf16.msra.mxu0 %v512
    %2008 = vmatprep.subr.bf16.mxu0 0
    %2009 = vmatpush1.bf16.msra.mxu0 0
    %2010 = vmatprep.subr.bf16.mxu0 0
    %2011 = vmatpush1.bf16.msra.mxu0 0
    %2012 = vmatprep.subr.bf16.mxu0 0
    %2013 = vmatpush1.bf16.msra.mxu0 0
    %2014 = vmatprep.subr.bf16.mxu0 0
    %2015 = vmatpush1.bf16.msra.mxu0 0
    %2016 = vmatprep.subr.bf16.mxu0 0
    %2017 = vmatpush1.bf16.msra.mxu0 0
    %2018 = vmatprep.subr.bf16.mxu0 0
    %2019 = vmatpush1.bf16.msra.mxu0 0
    %2020 = vmatprep.subr.bf16.mxu0 0
    %2021 = vmatpush1.bf16.msra.mxu0 0
    %2022 = vmatprep.subr.bf16.mxu0 0
    %2023 = vmatpush1.bf16.msra.mxu0 0
    %2024 = vmatprep.mubr.bf16.mxu0 0
    %2025 = vmatmul.mubr.bf16.gmra.mrb[0].mxu0 %v1991
    %v2026 = vpop.f32.mrb[0].mxu0
    %v2027 = vadd.f32 0.0, %v2026
    %v2028 = vpop.f32.mrb[0].mxu0
    %v2029 = vpop.f32.mrb[0].mxu0
    %v2030 = vpop.f32.mrb[0].mxu0
    %2031 = vdwg.mxu0
    %v2032 = vadd.f32 %v1990, %v2027
    %v2033 = vxor.u32 %v2032, 2147483648
    %v2034 = vmul.f32 %v2033, 1.442695
    %v2035 = vpow.pop %v2034
    %v2036 = vadd.f32 %v2035, 1.0
    %v2037 = vrcp.pop %v2036
    %v2038 = vmul.f32 1.0, %v2037
    %v2039 = vtanh.pop %v2032
    %2040 = vrot.lane.b32.xlu0 %v2038, 64
    %v2041 = vpop.permute.xlu0 %2040
    %2042 = vrot.lane.b32.xlu0 %v2038, 32
    %v2043 = vpop.permute.xlu0 %2042
    %2044 = vrot.lane.b32.xlu0 %v2038, 96
    %v2045 = vpop.permute.xlu0 %2044
    %v2046 = vmul.f32 %v2043, %v1984
    %v2047 = vmul.f32 %v2041, %v2039
    %v2048 = vadd.f32 %v2046, %v2047
    %v2049 = vtanh.pop %v2048
    %v2050 = vmul.f32 %v2045, %v2049
    %s2051 = scalar_lea.vmem [#allocation3], 184
    %2052 = vst [vmem:[%s2051] sm:$0xff] %v2050
    %s2053 = scalar_lea.vmem [#allocation2], 192
    %v2054 = vld [vmem:[%s2053] sm:$0xff]
    %v2055 = vpack.c.bf16 %v2050, %v2050
    %2056 = vmatprep.subr.bf16.mxu0 0
    %2057 = vmatpush1.bf16.msra.mxu0 %v505
    %2058 = vmatprep.subr.bf16.mxu0 0
    %2059 = vmatpush1.bf16.msra.mxu0 %v506
    %2060 = vmatprep.subr.bf16.mxu0 0
    %2061 = vmatpush1.bf16.msra.mxu0 %v507
    %2062 = vmatprep.subr.bf16.mxu0 0
    %2063 = vmatpush1.bf16.msra.mxu0 %v508
    %2064 = vmatprep.subr.bf16.mxu0 0
    %2065 = vmatpush1.bf16.msra.mxu0 %v509
    %2066 = vmatprep.subr.bf16.mxu0 0
    %2067 = vmatpush1.bf16.msra.mxu0 %v510
    %2068 = vmatprep.subr.bf16.mxu0 0
    %2069 = vmatpush1.bf16.msra.mxu0 %v511
    %2070 = vmatprep.subr.bf16.mxu0 0
    %2071 = vmatpush1.bf16.msra.mxu0 %v512
    %2072 = vmatprep.subr.bf16.mxu0 0
    %2073 = vmatpush1.bf16.msra.mxu0 0
    %2074 = vmatprep.subr.bf16.mxu0 0
    %2075 = vmatpush1.bf16.msra.mxu0 0
    %2076 = vmatprep.subr.bf16.mxu0 0
    %2077 = vmatpush1.bf16.msra.mxu0 0
    %2078 = vmatprep.subr.bf16.mxu0 0
    %2079 = vmatpush1.bf16.msra.mxu0 0
    %2080 = vmatprep.subr.bf16.mxu0 0
    %2081 = vmatpush1.bf16.msra.mxu0 0
    %2082 = vmatprep.subr.bf16.mxu0 0
    %2083 = vmatpush1.bf16.msra.mxu0 0
    %2084 = vmatprep.subr.bf16.mxu0 0
    %2085 = vmatpush1.bf16.msra.mxu0 0
    %2086 = vmatprep.subr.bf16.mxu0 0
    %2087 = vmatpush1.bf16.msra.mxu0 0
    %2088 = vmatprep.mubr.bf16.mxu0 0
    %2089 = vmatmul.mubr.bf16.gmra.mrb[0].mxu0 %v2055
    %v2090 = vpop.f32.mrb[0].mxu0
    %v2091 = vadd.f32 0.0, %v2090
    %v2092 = vpop.f32.mrb[0].mxu0
    %v2093 = vpop.f32.mrb[0].mxu0
    %v2094 = vpop.f32.mrb[0].mxu0
    %2095 = vdwg.mxu0
    %v2096 = vadd.f32 %v2054, %v2091
    %v2097 = vxor.u32 %v2096, 2147483648
    %v2098 = vmul.f32 %v2097, 1.442695
    %v2099 = vpow.pop %v2098
    %v2100 = vadd.f32 %v2099, 1.0
    %v2101 = vrcp.pop %v2100
    %v2102 = vmul.f32 1.0, %v2101
    %v2103 = vtanh.pop %v2096
    %2104 = vrot.lane.b32.xlu0 %v2102, 64
    %v2105 = vpop.permute.xlu0 %2104
    %2106 = vrot.lane.b32.xlu0 %v2102, 32
    %v2107 = vpop.permute.xlu0 %2106
    %2108 = vrot.lane.b32.xlu0 %v2102, 96
    %v2109 = vpop.permute.xlu0 %2108
    %v2110 = vmul.f32 %v2107, %v2048
    %v2111 = vmul.f32 %v2105, %v2103
    %v2112 = vadd.f32 %v2110, %v2111
    %v2113 = vtanh.pop %v2112
    %v2114 = vmul.f32 %v2109, %v2113
    %s2115 = scalar_lea.vmem [#allocation3], 192
    %2116 = vst [vmem:[%s2115] sm:$0xff] %v2114
    %s2117 = scalar_lea.vmem [#allocation2], 200
    %v2118 = vld [vmem:[%s2117] sm:$0xff]
    %v2119 = vpack.c.bf16 %v2114, %v2114
    %2120 = vmatprep.subr.bf16.mxu0 0
    %2121 = vmatpush1.bf16.msra.mxu0 %v505
    %2122 = vmatprep.subr.bf16.mxu0 0
    %2123 = vmatpush1.bf16.msra.mxu0 %v506
    %2124 = vmatprep.subr.bf16.mxu0 0
    %2125 = vmatpush1.bf16.msra.mxu0 %v507
    %2126 = vmatprep.subr.bf16.mxu0 0
    %2127 = vmatpush1.bf16.msra.mxu0 %v508
    %2128 = vmatprep.subr.bf16.mxu0 0
    %2129 = vmatpush1.bf16.msra.mxu0 %v509
    %2130 = vmatprep.subr.bf16.mxu0 0
    %2131 = vmatpush1.bf16.msra.mxu0 %v510
    %2132 = vmatprep.subr.bf16.mxu0 0
    %2133 = vmatpush1.bf16.msra.mxu0 %v511
    %2134 = vmatprep.subr.bf16.mxu0 0
    %2135 = vmatpush1.bf16.msra.mxu0 %v512
    %2136 = vmatprep.subr.bf16.mxu0 0
    %2137 = vmatpush1.bf16.msra.mxu0 0
    %2138 = vmatprep.subr.bf16.mxu0 0
    %2139 = vmatpush1.bf16.msra.mxu0 0
    %2140 = vmatprep.subr.bf16.mxu0 0
    %2141 = vmatpush1.bf16.msra.mxu0 0
    %2142 = vmatprep.subr.bf16.mxu0 0
    %2143 = vmatpush1.bf16.msra.mxu0 0
    %2144 = vmatprep.subr.bf16.mxu0 0
    %2145 = vmatpush1.bf16.msra.mxu0 0
    %2146 = vmatprep.subr.bf16.mxu0 0
    %2147 = vmatpush1.bf16.msra.mxu0 0
    %2148 = vmatprep.subr.bf16.mxu0 0
    %2149 = vmatpush1.bf16.msra.mxu0 0
    %2150 = vmatprep.subr.bf16.mxu0 0
    %2151 = vmatpush1.bf16.msra.mxu0 0
    %2152 = vmatprep.mubr.bf16.mxu0 0
    %2153 = vmatmul.mubr.bf16.gmra.mrb[0].mxu0 %v2119
    %v2154 = vpop.f32.mrb[0].mxu0
    %v2155 = vadd.f32 0.0, %v2154
    %v2156 = vpop.f32.mrb[0].mxu0
    %v2157 = vpop.f32.mrb[0].mxu0
    %v2158 = vpop.f32.mrb[0].mxu0
    %2159 = vdwg.mxu0
    %v2160 = vadd.f32 %v2118, %v2155
    %v2161 = vxor.u32 %v2160, 2147483648
    %v2162 = vmul.f32 %v2161, 1.442695
    %v2163 = vpow.pop %v2162
    %v2164 = vadd.f32 %v2163, 1.0
    %v2165 = vrcp.pop %v2164
    %v2166 = vmul.f32 1.0, %v2165
    %v2167 = vtanh.pop %v2160
    %2168 = vrot.lane.b32.xlu0 %v2166, 64
    %v2169 = vpop.permute.xlu0 %2168
    %2170 = vrot.lane.b32.xlu0 %v2166, 32
    %v2171 = vpop.permute.xlu0 %2170
    %2172 = vrot.lane.b32.xlu0 %v2166, 96
    %v2173 = vpop.permute.xlu0 %2172
    %v2174 = vmul.f32 %v2171, %v2112
    %v2175 = vmul.f32 %v2169, %v2167
    %v2176 = vadd.f32 %v2174, %v2175
    %v2177 = vtanh.pop %v2176
    %v2178 = vmul.f32 %v2173, %v2177
    %s2179 = scalar_lea.vmem [#allocation3], 200
    %2180 = vst [vmem:[%s2179] sm:$0xff] %v2178
    %s2181 = scalar_lea.vmem [#allocation2], 208
    %v2182 = vld [vmem:[%s2181] sm:$0xff]
    %v2183 = vpack.c.bf16 %v2178, %v2178
    %2184 = vmatprep.subr.bf16.mxu0 0
    %2185 = vmatpush1.bf16.msra.mxu0 %v505
    %2186 = vmatprep.subr.bf16.mxu0 0
    %2187 = vmatpush1.bf16.msra.mxu0 %v506
    %2188 = vmatprep.subr.bf16.mxu0 0
    %2189 = vmatpush1.bf16.msra.mxu0 %v507
    %2190 = vmatprep.subr.bf16.mxu0 0
    %2191 = vmatpush1.bf16.msra.mxu0 %v508
    %2192 = vmatprep.subr.bf16.mxu0 0
    %2193 = vmatpush1.bf16.msra.mxu0 %v509
    %2194 = vmatprep.subr.bf16.mxu0 0
    %2195 = vmatpush1.bf16.msra.mxu0 %v510
    %2196 = vmatprep.subr.bf16.mxu0 0
    %2197 = vmatpush1.bf16.msra.mxu0 %v511
    %2198 = vmatprep.subr.bf16.mxu0 0
    %2199 = vmatpush1.bf16.msra.mxu0 %v512
    %2200 = vmatprep.subr.bf16.mxu0 0
    %2201 = vmatpush1.bf16.msra.mxu0 0
    %2202 = vmatprep.subr.bf16.mxu0 0
    %2203 = vmatpush1.bf16.msra.mxu0 0
    %2204 = vmatprep.subr.bf16.mxu0 0
    %2205 = vmatpush1.bf16.msra.mxu0 0
    %2206 = vmatprep.subr.bf16.mxu0 0
    %2207 = vmatpush1.bf16.msra.mxu0 0
    %2208 = vmatprep.subr.bf16.mxu0 0
    %2209 = vmatpush1.bf16.msra.mxu0 0
    %2210 = vmatprep.subr.bf16.mxu0 0
    %2211 = vmatpush1.bf16.msra.mxu0 0
    %2212 = vmatprep.subr.bf16.mxu0 0
    %2213 = vmatpush1.bf16.msra.mxu0 0
    %2214 = vmatprep.subr.bf16.mxu0 0
    %2215 = vmatpush1.bf16.msra.mxu0 0
    %2216 = vmatprep.mubr.bf16.mxu0 0
    %2217 = vmatmul.mubr.bf16.gmra.mrb[0].mxu0 %v2183
    %v2218 = vpop.f32.mrb[0].mxu0
    %v2219 = vadd.f32 0.0, %v2218
    %v2220 = vpop.f32.mrb[0].mxu0
    %v2221 = vpop.f32.mrb[0].mxu0
    %v2222 = vpop.f32.mrb[0].mxu0
    %2223 = vdwg.mxu0
    %v2224 = vadd.f32 %v2182, %v2219
    %v2225 = vxor.u32 %v2224, 2147483648
    %v2226 = vmul.f32 %v2225, 1.442695
    %v2227 = vpow.pop %v2226
    %v2228 = vadd.f32 %v2227, 1.0
    %v2229 = vrcp.pop %v2228
    %v2230 = vmul.f32 1.0, %v2229
    %v2231 = vtanh.pop %v2224
    %2232 = vrot.lane.b32.xlu0 %v2230, 64
    %v2233 = vpop.permute.xlu0 %2232
    %2234 = vrot.lane.b32.xlu0 %v2230, 32
    %v2235 = vpop.permute.xlu0 %2234
    %2236 = vrot.lane.b32.xlu0 %v2230, 96
    %v2237 = vpop.permute.xlu0 %2236
    %v2238 = vmul.f32 %v2235, %v2176
    %v2239 = vmul.f32 %v2233, %v2231
    %v2240 = vadd.f32 %v2238, %v2239
    %v2241 = vtanh.pop %v2240
    %v2242 = vmul.f32 %v2237, %v2241
    %s2243 = scalar_lea.vmem [#allocation3], 208
    %2244 = vst [vmem:[%s2243] sm:$0xff] %v2242
    %s2245 = scalar_lea.vmem [#allocation2], 216
    %v2246 = vld [vmem:[%s2245] sm:$0xff]
    %v2247 = vpack.c.bf16 %v2242, %v2242
    %2248 = vmatprep.subr.bf16.mxu0 0
    %2249 = vmatpush1.bf16.msra.mxu0 %v505
    %2250 = vmatprep.subr.bf16.mxu0 0
    %2251 = vmatpush1.bf16.msra.mxu0 %v506
    %2252 = vmatprep.subr.bf16.mxu0 0
    %2253 = vmatpush1.bf16.msra.mxu0 %v507
    %2254 = vmatprep.subr.bf16.mxu0 0
    %2255 = vmatpush1.bf16.msra.mxu0 %v508
    %2256 = vmatprep.subr.bf16.mxu0 0
    %2257 = vmatpush1.bf16.msra.mxu0 %v509
    %2258 = vmatprep.subr.bf16.mxu0 0
    %2259 = vmatpush1.bf16.msra.mxu0 %v510
    %2260 = vmatprep.subr.bf16.mxu0 0
    %2261 = vmatpush1.bf16.msra.mxu0 %v511
    %2262 = vmatprep.subr.bf16.mxu0 0
    %2263 = vmatpush1.bf16.msra.mxu0 %v512
    %2264 = vmatprep.subr.bf16.mxu0 0
    %2265 = vmatpush1.bf16.msra.mxu0 0
    %2266 = vmatprep.subr.bf16.mxu0 0
    %2267 = vmatpush1.bf16.msra.mxu0 0
    %2268 = vmatprep.subr.bf16.mxu0 0
    %2269 = vmatpush1.bf16.msra.mxu0 0
    %2270 = vmatprep.subr.bf16.mxu0 0
    %2271 = vmatpush1.bf16.msra.mxu0 0
    %2272 = vmatprep.subr.bf16.mxu0 0
    %2273 = vmatpush1.bf16.msra.mxu0 0
    %2274 = vmatprep.subr.bf16.mxu0 0
    %2275 = vmatpush1.bf16.msra.mxu0 0
    %2276 = vmatprep.subr.bf16.mxu0 0
    %2277 = vmatpush1.bf16.msra.mxu0 0
    %2278 = vmatprep.subr.bf16.mxu0 0
    %2279 = vmatpush1.bf16.msra.mxu0 0
    %2280 = vmatprep.mubr.bf16.mxu0 0
    %2281 = vmatmul.mubr.bf16.gmra.mrb[0].mxu0 %v2247
    %v2282 = vpop.f32.mrb[0].mxu0
    %v2283 = vadd.f32 0.0, %v2282
    %v2284 = vpop.f32.mrb[0].mxu0
    %v2285 = vpop.f32.mrb[0].mxu0
    %v2286 = vpop.f32.mrb[0].mxu0
    %2287 = vdwg.mxu0
    %v2288 = vadd.f32 %v2246, %v2283
    %v2289 = vxor.u32 %v2288, 2147483648
    %v2290 = vmul.f32 %v2289, 1.442695
    %v2291 = vpow.pop %v2290
    %v2292 = vadd.f32 %v2291, 1.0
    %v2293 = vrcp.pop %v2292
    %v2294 = vmul.f32 1.0, %v2293
    %v2295 = vtanh.pop %v2288
    %2296 = vrot.lane.b32.xlu0 %v2294, 64
    %v2297 = vpop.permute.xlu0 %2296
    %2298 = vrot.lane.b32.xlu0 %v2294, 32
    %v2299 = vpop.permute.xlu0 %2298
    %2300 = vrot.lane.b32.xlu0 %v2294, 96
    %v2301 = vpop.permute.xlu0 %2300
    %v2302 = vmul.f32 %v2299, %v2240
    %v2303 = vmul.f32 %v2297, %v2295
    %v2304 = vadd.f32 %v2302, %v2303
    %v2305 = vtanh.pop %v2304
    %v2306 = vmul.f32 %v2301, %v2305
    %s2307 = scalar_lea.vmem [#allocation3], 216
    %2308 = vst [vmem:[%s2307] sm:$0xff] %v2306
    %s2309 = scalar_lea.vmem [#allocation2], 224
    %v2310 = vld [vmem:[%s2309] sm:$0xff]
    %v2311 = vpack.c.bf16 %v2306, %v2306
    %2312 = vmatprep.subr.bf16.mxu0 0
    %2313 = vmatpush1.bf16.msra.mxu0 %v505
    %2314 = vmatprep.subr.bf16.mxu0 0
    %2315 = vmatpush1.bf16.msra.mxu0 %v506
    %2316 = vmatprep.subr.bf16.mxu0 0
    %2317 = vmatpush1.bf16.msra.mxu0 %v507
    %2318 = vmatprep.subr.bf16.mxu0 0
    %2319 = vmatpush1.bf16.msra.mxu0 %v508
    %2320 = vmatprep.subr.bf16.mxu0 0
    %2321 = vmatpush1.bf16.msra.mxu0 %v509
    %2322 = vmatprep.subr.bf16.mxu0 0
    %2323 = vmatpush1.bf16.msra.mxu0 %v510
    %2324 = vmatprep.subr.bf16.mxu0 0
    %2325 = vmatpush1.bf16.msra.mxu0 %v511
    %2326 = vmatprep.subr.bf16.mxu0 0
    %2327 = vmatpush1.bf16.msra.mxu0 %v512
    %2328 = vmatprep.subr.bf16.mxu0 0
    %2329 = vmatpush1.bf16.msra.mxu0 0
    %2330 = vmatprep.subr.bf16.mxu0 0
    %2331 = vmatpush1.bf16.msra.mxu0 0
    %2332 = vmatprep.subr.bf16.mxu0 0
    %2333 = vmatpush1.bf16.msra.mxu0 0
    %2334 = vmatprep.subr.bf16.mxu0 0
    %2335 = vmatpush1.bf16.msra.mxu0 0
    %2336 = vmatprep.subr.bf16.mxu0 0
    %2337 = vmatpush1.bf16.msra.mxu0 0
    %2338 = vmatprep.subr.bf16.mxu0 0
    %2339 = vmatpush1.bf16.msra.mxu0 0
    %2340 = vmatprep.subr.bf16.mxu0 0
    %2341 = vmatpush1.bf16.msra.mxu0 0
    %2342 = vmatprep.subr.bf16.mxu0 0
    %2343 = vmatpush1.bf16.msra.mxu0 0
    %2344 = vmatprep.mubr.bf16.mxu0 0
    %2345 = vmatmul.mubr.bf16.gmra.mrb[0].mxu0 %v2311
    %v2346 = vpop.f32.mrb[0].mxu0
    %v2347 = vadd.f32 0.0, %v2346
    %v2348 = vpop.f32.mrb[0].mxu0
    %v2349 = vpop.f32.mrb[0].mxu0
    %v2350 = vpop.f32.mrb[0].mxu0
    %2351 = vdwg.mxu0
    %v2352 = vadd.f32 %v2310, %v2347
    %v2353 = vxor.u32 %v2352, 2147483648
    %v2354 = vmul.f32 %v2353, 1.442695
    %v2355 = vpow.pop %v2354
    %v2356 = vadd.f32 %v2355, 1.0
    %v2357 = vrcp.pop %v2356
    %v2358 = vmul.f32 1.0, %v2357
    %v2359 = vtanh.pop %v2352
    %2360 = vrot.lane.b32.xlu0 %v2358, 64
    %v2361 = vpop.permute.xlu0 %2360
    %2362 = vrot.lane.b32.xlu0 %v2358, 32
    %v2363 = vpop.permute.xlu0 %2362
    %2364 = vrot.lane.b32.xlu0 %v2358, 96
    %v2365 = vpop.permute.xlu0 %2364
    %v2366 = vmul.f32 %v2363, %v2304
    %v2367 = vmul.f32 %v2361, %v2359
    %v2368 = vadd.f32 %v2366, %v2367
    %v2369 = vtanh.pop %v2368
    %v2370 = vmul.f32 %v2365, %v2369
    %s2371 = scalar_lea.vmem [#allocation3], 224
    %2372 = vst [vmem:[%s2371] sm:$0xff] %v2370
    %s2373 = scalar_lea.vmem [#allocation2], 232
    %v2374 = vld [vmem:[%s2373] sm:$0xff]
    %v2375 = vpack.c.bf16 %v2370, %v2370
    %2376 = vmatprep.subr.bf16.mxu0 0
    %2377 = vmatpush1.bf16.msra.mxu0 %v505
    %2378 = vmatprep.subr.bf16.mxu0 0
    %2379 = vmatpush1.bf16.msra.mxu0 %v506
    %2380 = vmatprep.subr.bf16.mxu0 0
    %2381 = vmatpush1.bf16.msra.mxu0 %v507
    %2382 = vmatprep.subr.bf16.mxu0 0
    %2383 = vmatpush1.bf16.msra.mxu0 %v508
    %2384 = vmatprep.subr.bf16.mxu0 0
    %2385 = vmatpush1.bf16.msra.mxu0 %v509
    %2386 = vmatprep.subr.bf16.mxu0 0
    %2387 = vmatpush1.bf16.msra.mxu0 %v510
    %2388 = vmatprep.subr.bf16.mxu0 0
    %2389 = vmatpush1.bf16.msra.mxu0 %v511
    %2390 = vmatprep.subr.bf16.mxu0 0
    %2391 = vmatpush1.bf16.msra.mxu0 %v512
    %2392 = vmatprep.subr.bf16.mxu0 0
    %2393 = vmatpush1.bf16.msra.mxu0 0
    %2394 = vmatprep.subr.bf16.mxu0 0
    %2395 = vmatpush1.bf16.msra.mxu0 0
    %2396 = vmatprep.subr.bf16.mxu0 0
    %2397 = vmatpush1.bf16.msra.mxu0 0
    %2398 = vmatprep.subr.bf16.mxu0 0
    %2399 = vmatpush1.bf16.msra.mxu0 0
    %2400 = vmatprep.subr.bf16.mxu0 0
    %2401 = vmatpush1.bf16.msra.mxu0 0
    %2402 = vmatprep.subr.bf16.mxu0 0
    %2403 = vmatpush1.bf16.msra.mxu0 0
    %2404 = vmatprep.subr.bf16.mxu0 0
    %2405 = vmatpush1.bf16.msra.mxu0 0
    %2406 = vmatprep.subr.bf16.mxu0 0
    %2407 = vmatpush1.bf16.msra.mxu0 0
    %2408 = vmatprep.mubr.bf16.mxu0 0
    %2409 = vmatmul.mubr.bf16.gmra.mrb[0].mxu0 %v2375
    %v2410 = vpop.f32.mrb[0].mxu0
    %v2411 = vadd.f32 0.0, %v2410
    %v2412 = vpop.f32.mrb[0].mxu0
    %v2413 = vpop.f32.mrb[0].mxu0
    %v2414 = vpop.f32.mrb[0].mxu0
    %2415 = vdwg.mxu0
    %v2416 = vadd.f32 %v2374, %v2411
    %v2417 = vxor.u32 %v2416, 2147483648
    %v2418 = vmul.f32 %v2417, 1.442695
    %v2419 = vpow.pop %v2418
    %v2420 = vadd.f32 %v2419, 1.0
    %v2421 = vrcp.pop %v2420
    %v2422 = vmul.f32 1.0, %v2421
    %v2423 = vtanh.pop %v2416
    %2424 = vrot.lane.b32.xlu0 %v2422, 64
    %v2425 = vpop.permute.xlu0 %2424
    %2426 = vrot.lane.b32.xlu0 %v2422, 32
    %v2427 = vpop.permute.xlu0 %2426
    %2428 = vrot.lane.b32.xlu0 %v2422, 96
    %v2429 = vpop.permute.xlu0 %2428
    %v2430 = vmul.f32 %v2427, %v2368
    %v2431 = vmul.f32 %v2425, %v2423
    %v2432 = vadd.f32 %v2430, %v2431
    %v2433 = vtanh.pop %v2432
    %v2434 = vmul.f32 %v2429, %v2433
    %s2435 = scalar_lea.vmem [#allocation3], 232
    %2436 = vst [vmem:[%s2435] sm:$0xff] %v2434
    %s2437 = scalar_lea.vmem [#allocation2], 240
    %v2438 = vld [vmem:[%s2437] sm:$0xff]
    %v2439 = vpack.c.bf16 %v2434, %v2434
    %2440 = vmatprep.subr.bf16.mxu0 0
    %2441 = vmatpush1.bf16.msra.mxu0 %v505
    %2442 = vmatprep.subr.bf16.mxu0 0
    %2443 = vmatpush1.bf16.msra.mxu0 %v506
    %2444 = vmatprep.subr.bf16.mxu0 0
    %2445 = vmatpush1.bf16.msra.mxu0 %v507
    %2446 = vmatprep.subr.bf16.mxu0 0
    %2447 = vmatpush1.bf16.msra.mxu0 %v508
    %2448 = vmatprep.subr.bf16.mxu0 0
    %2449 = vmatpush1.bf16.msra.mxu0 %v509
    %2450 = vmatprep.subr.bf16.mxu0 0
    %2451 = vmatpush1.bf16.msra.mxu0 %v510
    %2452 = vmatprep.subr.bf16.mxu0 0
    %2453 = vmatpush1.bf16.msra.mxu0 %v511
    %2454 = vmatprep.subr.bf16.mxu0 0
    %2455 = vmatpush1.bf16.msra.mxu0 %v512
    %2456 = vmatprep.subr.bf16.mxu0 0
    %2457 = vmatpush1.bf16.msra.mxu0 0
    %2458 = vmatprep.subr.bf16.mxu0 0
    %2459 = vmatpush1.bf16.msra.mxu0 0
    %2460 = vmatprep.subr.bf16.mxu0 0
    %2461 = vmatpush1.bf16.msra.mxu0 0
    %2462 = vmatprep.subr.bf16.mxu0 0
    %2463 = vmatpush1.bf16.msra.mxu0 0
    %2464 = vmatprep.subr.bf16.mxu0 0
    %2465 = vmatpush1.bf16.msra.mxu0 0
    %2466 = vmatprep.subr.bf16.mxu0 0
    %2467 = vmatpush1.bf16.msra.mxu0 0
    %2468 = vmatprep.subr.bf16.mxu0 0
    %2469 = vmatpush1.bf16.msra.mxu0 0
    %2470 = vmatprep.subr.bf16.mxu0 0
    %2471 = vmatpush1.bf16.msra.mxu0 0
    %2472 = vmatprep.mubr.bf16.mxu0 0
    %2473 = vmatmul.mubr.bf16.gmra.mrb[0].mxu0 %v2439
    %v2474 = vpop.f32.mrb[0].mxu0
    %v2475 = vadd.f32 0.0, %v2474
    %v2476 = vpop.f32.mrb[0].mxu0
    %v2477 = vpop.f32.mrb[0].mxu0
    %v2478 = vpop.f32.mrb[0].mxu0
    %2479 = vdwg.mxu0
    %v2480 = vadd.f32 %v2438, %v2475
    %v2481 = vxor.u32 %v2480, 2147483648
    %v2482 = vmul.f32 %v2481, 1.442695
    %v2483 = vpow.pop %v2482
    %v2484 = vadd.f32 %v2483, 1.0
    %v2485 = vrcp.pop %v2484
    %v2486 = vmul.f32 1.0, %v2485
    %v2487 = vtanh.pop %v2480
    %2488 = vrot.lane.b32.xlu0 %v2486, 64
    %v2489 = vpop.permute.xlu0 %2488
    %2490 = vrot.lane.b32.xlu0 %v2486, 32
    %v2491 = vpop.permute.xlu0 %2490
    %2492 = vrot.lane.b32.xlu0 %v2486, 96
    %v2493 = vpop.permute.xlu0 %2492
    %v2494 = vmul.f32 %v2491, %v2432
    %v2495 = vmul.f32 %v2489, %v2487
    %v2496 = vadd.f32 %v2494, %v2495
    %v2497 = vtanh.pop %v2496
    %v2498 = vmul.f32 %v2493, %v2497
    %s2499 = scalar_lea.vmem [#allocation3], 240
    %2500 = vst [vmem:[%s2499] sm:$0xff] %v2498
    %s2501 = scalar_lea.vmem [#allocation2], 248
    %v2502 = vld [vmem:[%s2501] sm:$0xff]
    %v2503 = vpack.c.bf16 %v2498, %v2498
    %2504 = vmatprep.subr.bf16.mxu0 0
    %2505 = vmatpush1.bf16.msra.mxu0 %v505
    %2506 = vmatprep.subr.bf16.mxu0 0
    %2507 = vmatpush1.bf16.msra.mxu0 %v506
    %2508 = vmatprep.subr.bf16.mxu0 0
    %2509 = vmatpush1.bf16.msra.mxu0 %v507
    %2510 = vmatprep.subr.bf16.mxu0 0
    %2511 = vmatpush1.bf16.msra.mxu0 %v508
    %2512 = vmatprep.subr.bf16.mxu0 0
    %2513 = vmatpush1.bf16.msra.mxu0 %v509
    %2514 = vmatprep.subr.bf16.mxu0 0
    %2515 = vmatpush1.bf16.msra.mxu0 %v510
    %2516 = vmatprep.subr.bf16.mxu0 0
    %2517 = vmatpush1.bf16.msra.mxu0 %v511
    %2518 = vmatprep.subr.bf16.mxu0 0
    %2519 = vmatpush1.bf16.msra.mxu0 %v512
    %2520 = vmatprep.subr.bf16.mxu0 0
    %2521 = vmatpush1.bf16.msra.mxu0 0
    %2522 = vmatprep.subr.bf16.mxu0 0
    %2523 = vmatpush1.bf16.msra.mxu0 0
    %2524 = vmatprep.subr.bf16.mxu0 0
    %2525 = vmatpush1.bf16.msra.mxu0 0
    %2526 = vmatprep.subr.bf16.mxu0 0
    %2527 = vmatpush1.bf16.msra.mxu0 0
    %2528 = vmatprep.subr.bf16.mxu0 0
    %2529 = vmatpush1.bf16.msra.mxu0 0
    %2530 = vmatprep.subr.bf16.mxu0 0
    %2531 = vmatpush1.bf16.msra.mxu0 0
    %2532 = vmatprep.subr.bf16.mxu0 0
    %2533 = vmatpush1.bf16.msra.mxu0 0
    %2534 = vmatprep.subr.bf16.mxu0 0
    %2535 = vmatpush1.bf16.msra.mxu0 0
    %2536 = vmatprep.mubr.bf16.mxu0 0
    %2537 = vmatmul.mubr.bf16.gmra.mrb[0].mxu0 %v2503
    %v2538 = vpop.f32.mrb[0].mxu0
    %v2539 = vadd.f32 0.0, %v2538
    %v2540 = vpop.f32.mrb[0].mxu0
    %v2541 = vpop.f32.mrb[0].mxu0
    %v2542 = vpop.f32.mrb[0].mxu0
    %2543 = vdwg.mxu0
    %v2544 = vadd.f32 %v2502, %v2539
    %v2545 = vxor.u32 %v2544, 2147483648
    %v2546 = vmul.f32 %v2545, 1.442695
    %v2547 = vpow.pop %v2546
    %v2548 = vadd.f32 %v2547, 1.0
    %v2549 = vrcp.pop %v2548
    %v2550 = vmul.f32 1.0, %v2549
    %v2551 = vtanh.pop %v2544
    %2552 = vrot.lane.b32.xlu0 %v2550, 64
    %v2553 = vpop.permute.xlu0 %2552
    %2554 = vrot.lane.b32.xlu0 %v2550, 32
    %v2555 = vpop.permute.xlu0 %2554
    %2556 = vrot.lane.b32.xlu0 %v2550, 96
    %v2557 = vpop.permute.xlu0 %2556
    %v2558 = vmul.f32 %v2555, %v2496
    %v2559 = vmul.f32 %v2553, %v2551
    %v2560 = vadd.f32 %v2558, %v2559
    %v2561 = vtanh.pop %v2560
    %v2562 = vmul.f32 %v2557, %v2561
    %s2563 = scalar_lea.vmem [#allocation3], 248
    %2564 = vst [vmem:[%s2563] sm:$0xff] %v2562
    %v2565 = vlaneseq
    %v2566 = vshrl.u32 %v2565, 7
    %v2567 = vadd.s32 %v2566, 8
    %v2568 = vadd.s32 %v2566, 16
    %v2569 = vadd.s32 %v2566, 24
    %v2570 = vld [vmem:[%s1] sm:$0x1]
    %v2571 = vsub.s32 %v2570, 1
    %v2572 = vlaneseq
    %v2573 = vshrl.u32 %v2572, 7
    %v2574 = vsub.s32 0, %v2573
    %v2575 = vrot.slane %v2571, %v2574
    %vm2576 = vcmp.eq.s32.totalorder %v2566, %v2575
    %vm2577 = vcmp.eq.s32.totalorder %v2567, %v2575
    %vm2578 = vcmp.eq.s32.totalorder %v2568, %v2575
    %vm2579 = vcmp.eq.s32.totalorder %v2569, %v2575
    %v2580 = vsel %vm2576, 1, 0
    %v2581 = vsel %vm2577, 1, 0
    %v2582 = vsel %vm2578, 1, 0
    %v2583 = vsel %vm2579, 1, 0
    %v2584 = vcvt.s32.f32 %v2580
    %v2585 = vcvt.s32.f32 %v2581
    %v2586 = vcvt.s32.f32 %v2582
    %v2587 = vcvt.s32.f32 %v2583
    %v2588 = vlaneseq
    %v2589 = vshrl.u32 %v2588, 7
    %v2590 = vsub.s32 0, %v2589
    %v2591 = vrot.slane %v2584, %v2590
    %2593 = vbcast.lane.b32.xlu0 %v2591, 256
    %v2594 = vpop.permute.xlu0 %2593
    %v2595 = vlaneseq
    %v2596 = vshrl.u32 %v2595, 7
    %v2597 = vsub.s32 1, %v2596
    %v2598 = vrot.slane %v2584, %v2597
    %2600 = vbcast.lane.b32.xlu0 %v2598, 256
    %v2601 = vpop.permute.xlu0 %2600
    %v2602 = vlaneseq
    %v2603 = vshrl.u32 %v2602, 7
    %v2604 = vsub.s32 2, %v2603
    %v2605 = vrot.slane %v2584, %v2604
    %2607 = vbcast.lane.b32.xlu0 %v2605, 256
    %v2608 = vpop.permute.xlu0 %2607
    %v2609 = vlaneseq
    %v2610 = vshrl.u32 %v2609, 7
    %v2611 = vsub.s32 3, %v2610
    %v2612 = vrot.slane %v2584, %v2611
    %2614 = vbcast.lane.b32.xlu0 %v2612, 256
    %v2615 = vpop.permute.xlu0 %2614
    %v2616 = vlaneseq
    %v2617 = vshrl.u32 %v2616, 7
    %v2618 = vsub.s32 4, %v2617
    %v2619 = vrot.slane %v2584, %v2618
    %2621 = vbcast.lane.b32.xlu0 %v2619, 256
    %v2622 = vpop.permute.xlu0 %2621
    %v2623 = vlaneseq
    %v2624 = vshrl.u32 %v2623, 7
    %v2625 = vsub.s32 5, %v2624
    %v2626 = vrot.slane %v2584, %v2625
    %2628 = vbcast.lane.b32.xlu0 %v2626, 256
    %v2629 = vpop.permute.xlu0 %2628
    %v2630 = vlaneseq
    %v2631 = vshrl.u32 %v2630, 7
    %v2632 = vsub.s32 6, %v2631
    %v2633 = vrot.slane %v2584, %v2632
    %2635 = vbcast.lane.b32.xlu0 %v2633, 256
    %v2636 = vpop.permute.xlu0 %2635
    %v2637 = vlaneseq
    %v2638 = vshrl.u32 %v2637, 7
    %v2639 = vsub.s32 7, %v2638
    %v2640 = vrot.slane %v2584, %v2639
    %2642 = vbcast.lane.b32.xlu0 %v2640, 256
    %v2643 = vpop.permute.xlu0 %2642
    %v2644 = vlaneseq
    %v2645 = vshrl.u32 %v2644, 7
    %v2646 = vsub.s32 0, %v2645
    %v2647 = vrot.slane %v2585, %v2646
    %2649 = vbcast.lane.b32.xlu0 %v2647, 256
    %v2650 = vpop.permute.xlu0 %2649
    %v2651 = vlaneseq
    %v2652 = vshrl.u32 %v2651, 7
    %v2653 = vsub.s32 1, %v2652
    %v2654 = vrot.slane %v2585, %v2653
    %2656 = vbcast.lane.b32.xlu0 %v2654, 256
    %v2657 = vpop.permute.xlu0 %2656
    %v2658 = vlaneseq
    %v2659 = vshrl.u32 %v2658, 7
    %v2660 = vsub.s32 2, %v2659
    %v2661 = vrot.slane %v2585, %v2660
    %2663 = vbcast.lane.b32.xlu0 %v2661, 256
    %v2664 = vpop.permute.xlu0 %2663
    %v2665 = vlaneseq
    %v2666 = vshrl.u32 %v2665, 7
    %v2667 = vsub.s32 3, %v2666
    %v2668 = vrot.slane %v2585, %v2667
    %2670 = vbcast.lane.b32.xlu0 %v2668, 256
    %v2671 = vpop.permute.xlu0 %2670
    %v2672 = vlaneseq
    %v2673 = vshrl.u32 %v2672, 7
    %v2674 = vsub.s32 4, %v2673
    %v2675 = vrot.slane %v2585, %v2674
    %2677 = vbcast.lane.b32.xlu0 %v2675, 256
    %v2678 = vpop.permute.xlu0 %2677
    %v2679 = vlaneseq
    %v2680 = vshrl.u32 %v2679, 7
    %v2681 = vsub.s32 5, %v2680
    %v2682 = vrot.slane %v2585, %v2681
    %2684 = vbcast.lane.b32.xlu0 %v2682, 256
    %v2685 = vpop.permute.xlu0 %2684
    %v2686 = vlaneseq
    %v2687 = vshrl.u32 %v2686, 7
    %v2688 = vsub.s32 6, %v2687
    %v2689 = vrot.slane %v2585, %v2688
    %2691 = vbcast.lane.b32.xlu0 %v2689, 256
    %v2692 = vpop.permute.xlu0 %2691
    %v2693 = vlaneseq
    %v2694 = vshrl.u32 %v2693, 7
    %v2695 = vsub.s32 7, %v2694
    %v2696 = vrot.slane %v2585, %v2695
    %2698 = vbcast.lane.b32.xlu0 %v2696, 256
    %v2699 = vpop.permute.xlu0 %2698
    %v2700 = vlaneseq
    %v2701 = vshrl.u32 %v2700, 7
    %v2702 = vsub.s32 0, %v2701
    %v2703 = vrot.slane %v2586, %v2702
    %2705 = vbcast.lane.b32.xlu0 %v2703, 256
    %v2706 = vpop.permute.xlu0 %2705
    %v2707 = vlaneseq
    %v2708 = vshrl.u32 %v2707, 7
    %v2709 = vsub.s32 1, %v2708
    %v2710 = vrot.slane %v2586, %v2709
    %2712 = vbcast.lane.b32.xlu0 %v2710, 256
    %v2713 = vpop.permute.xlu0 %2712
    %v2714 = vlaneseq
    %v2715 = vshrl.u32 %v2714, 7
    %v2716 = vsub.s32 2, %v2715
    %v2717 = vrot.slane %v2586, %v2716
    %2719 = vbcast.lane.b32.xlu0 %v2717, 256
    %v2720 = vpop.permute.xlu0 %2719
    %v2721 = vlaneseq
    %v2722 = vshrl.u32 %v2721, 7
    %v2723 = vsub.s32 3, %v2722
    %v2724 = vrot.slane %v2586, %v2723
    %2726 = vbcast.lane.b32.xlu0 %v2724, 256
    %v2727 = vpop.permute.xlu0 %2726
    %v2728 = vlaneseq
    %v2729 = vshrl.u32 %v2728, 7
    %v2730 = vsub.s32 4, %v2729
    %v2731 = vrot.slane %v2586, %v2730
    %2733 = vbcast.lane.b32.xlu0 %v2731, 256
    %v2734 = vpop.permute.xlu0 %2733
    %v2735 = vlaneseq
    %v2736 = vshrl.u32 %v2735, 7
    %v2737 = vsub.s32 5, %v2736
    %v2738 = vrot.slane %v2586, %v2737
    %2740 = vbcast.lane.b32.xlu0 %v2738, 256
    %v2741 = vpop.permute.xlu0 %2740
    %v2742 = vlaneseq
    %v2743 = vshrl.u32 %v2742, 7
    %v2744 = vsub.s32 6, %v2743
    %v2745 = vrot.slane %v2586, %v2744
    %2747 = vbcast.lane.b32.xlu0 %v2745, 256
    %v2748 = vpop.permute.xlu0 %2747
    %v2749 = vlaneseq
    %v2750 = vshrl.u32 %v2749, 7
    %v2751 = vsub.s32 7, %v2750
    %v2752 = vrot.slane %v2586, %v2751
    %2754 = vbcast.lane.b32.xlu0 %v2752, 256
    %v2755 = vpop.permute.xlu0 %2754
    %v2756 = vlaneseq
    %v2757 = vshrl.u32 %v2756, 7
    %v2758 = vsub.s32 0, %v2757
    %v2759 = vrot.slane %v2587, %v2758
    %2761 = vbcast.lane.b32.xlu0 %v2759, 256
    %v2762 = vpop.permute.xlu0 %2761
    %v2763 = vlaneseq
    %v2764 = vshrl.u32 %v2763, 7
    %v2765 = vsub.s32 1, %v2764
    %v2766 = vrot.slane %v2587, %v2765
    %2768 = vbcast.lane.b32.xlu0 %v2766, 256
    %v2769 = vpop.permute.xlu0 %2768
    %v2770 = vlaneseq
    %v2771 = vshrl.u32 %v2770, 7
    %v2772 = vsub.s32 2, %v2771
    %v2773 = vrot.slane %v2587, %v2772
    %2775 = vbcast.lane.b32.xlu0 %v2773, 256
    %v2776 = vpop.permute.xlu0 %2775
    %v2777 = vlaneseq
    %v2778 = vshrl.u32 %v2777, 7
    %v2779 = vsub.s32 3, %v2778
    %v2780 = vrot.slane %v2587, %v2779
    %2782 = vbcast.lane.b32.xlu0 %v2780, 256
    %v2783 = vpop.permute.xlu0 %2782
    %v2784 = vlaneseq
    %v2785 = vshrl.u32 %v2784, 7
    %v2786 = vsub.s32 4, %v2785
    %v2787 = vrot.slane %v2587, %v2786
    %2789 = vbcast.lane.b32.xlu0 %v2787, 256
    %v2790 = vpop.permute.xlu0 %2789
    %v2791 = vlaneseq
    %v2792 = vshrl.u32 %v2791, 7
    %v2793 = vsub.s32 5, %v2792
    %v2794 = vrot.slane %v2587, %v2793
    %2796 = vbcast.lane.b32.xlu0 %v2794, 256
    %v2797 = vpop.permute.xlu0 %2796
    %v2798 = vlaneseq
    %v2799 = vshrl.u32 %v2798, 7
    %v2800 = vsub.s32 6, %v2799
    %v2801 = vrot.slane %v2587, %v2800
    %2803 = vbcast.lane.b32.xlu0 %v2801, 256
    %v2804 = vpop.permute.xlu0 %2803
    %v2805 = vlaneseq
    %v2806 = vshrl.u32 %v2805, 7
    %v2807 = vsub.s32 7, %v2806
    %v2808 = vrot.slane %v2587, %v2807
    %2810 = vbcast.lane.b32.xlu0 %v2808, 256
    %v2811 = vpop.permute.xlu0 %2810
    %v2812 = vld [vmem:[#allocation3] sm:$0xff]
    %v2813 = vld [vmem:[#allocation3 + $0x8] sm:$0xff]
    %v2814 = vld [vmem:[#allocation3 + $0x10] sm:$0xff]
    %v2815 = vld [vmem:[#allocation3 + $0x18] sm:$0xff]
    %v2816 = vld [vmem:[#allocation3 + $0x20] sm:$0xff]
    %v2817 = vld [vmem:[#allocation3 + $0x28] sm:$0xff]
    %v2818 = vld [vmem:[#allocation3 + $0x30] sm:$0xff]
    %v2819 = vld [vmem:[#allocation3 + $0x38] sm:$0xff]
    %v2820 = vld [vmem:[#allocation3 + $0x40] sm:$0xff]
    %v2821 = vld [vmem:[#allocation3 + $0x48] sm:$0xff]
    %v2822 = vld [vmem:[#allocation3 + $0x50] sm:$0xff]
    %v2823 = vld [vmem:[#allocation3 + $0x58] sm:$0xff]
    %v2824 = vld [vmem:[#allocation3 + $0x60] sm:$0xff]
    %v2825 = vld [vmem:[#allocation3 + $0x68] sm:$0xff]
    %v2826 = vld [vmem:[#allocation3 + $0x70] sm:$0xff]
    %v2827 = vld [vmem:[#allocation3 + $0x78] sm:$0xff]
    %v2828 = vld [vmem:[#allocation3 + $0x80] sm:$0xff]
    %v2829 = vld [vmem:[#allocation3 + $0x88] sm:$0xff]
    %v2830 = vld [vmem:[#allocation3 + $0x90] sm:$0xff]
    %v2831 = vld [vmem:[#allocation3 + $0x98] sm:$0xff]
    %v2832 = vld [vmem:[#allocation3 + $0xa0] sm:$0xff]
    %v2833 = vld [vmem:[#allocation3 + $0xa8] sm:$0xff]
    %v2834 = vld [vmem:[#allocation3 + $0xb0] sm:$0xff]
    %v2835 = vld [vmem:[#allocation3 + $0xb8] sm:$0xff]
    %v2836 = vld [vmem:[#allocation3 + $0xc0] sm:$0xff]
    %v2837 = vld [vmem:[#allocation3 + $0xc8] sm:$0xff]
    %v2838 = vld [vmem:[#allocation3 + $0xd0] sm:$0xff]
    %v2839 = vld [vmem:[#allocation3 + $0xd8] sm:$0xff]
    %v2840 = vld [vmem:[#allocation3 + $0xe0] sm:$0xff]
    %v2841 = vld [vmem:[#allocation3 + $0xe8] sm:$0xff]
    %v2842 = vld [vmem:[#allocation3 + $0xf0] sm:$0xff]
    %v2843 = vld [vmem:[#allocation3 + $0xf8] sm:$0xff]
    %v2844 = vmul.f32 %v2594, %v2812
    %v2845 = vmul.f32 %v2601, %v2813
    %v2846 = vmul.f32 %v2608, %v2814
    %v2847 = vmul.f32 %v2615, %v2815
    %v2848 = vmul.f32 %v2622, %v2816
    %v2849 = vmul.f32 %v2629, %v2817
    %v2850 = vmul.f32 %v2636, %v2818
    %v2851 = vmul.f32 %v2643, %v2819
    %v2852 = vmul.f32 %v2650, %v2820
    %v2853 = vmul.f32 %v2657, %v2821
    %v2854 = vmul.f32 %v2664, %v2822
    %v2855 = vmul.f32 %v2671, %v2823
    %v2856 = vmul.f32 %v2678, %v2824
    %v2857 = vmul.f32 %v2685, %v2825
    %v2858 = vmul.f32 %v2692, %v2826
    %v2859 = vmul.f32 %v2699, %v2827
    %v2860 = vmul.f32 %v2706, %v2828
    %v2861 = vmul.f32 %v2713, %v2829
    %v2862 = vmul.f32 %v2720, %v2830
    %v2863 = vmul.f32 %v2727, %v2831
    %v2864 = vmul.f32 %v2734, %v2832
    %v2865 = vmul.f32 %v2741, %v2833
    %v2866 = vmul.f32 %v2748, %v2834
    %v2867 = vmul.f32 %v2755, %v2835
    %v2868 = vmul.f32 %v2762, %v2836
    %v2869 = vmul.f32 %v2769, %v2837
    %v2870 = vmul.f32 %v2776, %v2838
    %v2871 = vmul.f32 %v2783, %v2839
    %v2872 = vmul.f32 %v2790, %v2840
    %v2873 = vmul.f32 %v2797, %v2841
    %v2874 = vmul.f32 %v2804, %v2842
    %v2875 = vmul.f32 %v2811, %v2843
    %v2876 = vadd.f32 %v2844, %v2845
    %v2877 = vadd.f32 %v2876, %v2846
    %v2878 = vadd.f32 %v2877, %v2847
    %v2879 = vadd.f32 %v2878, %v2848
    %v2880 = vadd.f32 %v2879, %v2849
    %v2881 = vadd.f32 %v2880, %v2850
    %v2882 = vadd.f32 %v2881, %v2851
    %v2883 = vadd.f32 %v2882, %v2852
    %v2884 = vadd.f32 %v2883, %v2853
    %v2885 = vadd.f32 %v2884, %v2854
    %v2886 = vadd.f32 %v2885, %v2855
    %v2887 = vadd.f32 %v2886, %v2856
    %v2888 = vadd.f32 %v2887, %v2857
    %v2889 = vadd.f32 %v2888, %v2858
    %v2890 = vadd.f32 %v2889, %v2859
    %v2891 = vadd.f32 %v2890, %v2860
    %v2892 = vadd.f32 %v2891, %v2861
    %v2893 = vadd.f32 %v2892, %v2862
    %v2894 = vadd.f32 %v2893, %v2863
    %v2895 = vadd.f32 %v2894, %v2864
    %v2896 = vadd.f32 %v2895, %v2865
    %v2897 = vadd.f32 %v2896, %v2866
    %v2898 = vadd.f32 %v2897, %v2867
    %v2899 = vadd.f32 %v2898, %v2868
    %v2900 = vadd.f32 %v2899, %v2869
    %v2901 = vadd.f32 %v2900, %v2870
    %v2902 = vadd.f32 %v2901, %v2871
    %v2903 = vadd.f32 %v2902, %v2872
    %v2904 = vadd.f32 %v2903, %v2873
    %v2905 = vadd.f32 %v2904, %v2874
    %v2906 = vadd.f32 %v2905, %v2875
    %v2907 = vld [vmem:[%s5] sm:$0xf]
    %v2908 = vld [vmem:[%s5 + $0x4] sm:$0xf]
    %v2909 = vld [vmem:[%s5 + $0x8] sm:$0xf]
    %v2910 = vld [vmem:[%s5 + $0xc] sm:$0xf]
    %v2911 = vld [vmem:[%s5 + $0x10] sm:$0xf]
    %v2912 = vld [vmem:[%s5 + $0x14] sm:$0xf]
    %v2913 = vld [vmem:[%s5 + $0x18] sm:$0xf]
    %v2914 = vld [vmem:[%s5 + $0x1c] sm:$0xf]
    %v2915 = vld [vmem:[%s6] sm:$0x7]
    %v2916 = vpack.c.b16 %v164, %v163
    %v2917 = vpack.c.b16 %v166, %v165
    %v2918 = vpack.c.b16 %v168, %v167
    %v2919 = vpack.c.b16 %v170, %v169
    %v2920 = vpack.c.b16 %v172, %v171
    %v2921 = vpack.c.b16 %v174, %v173
    %v2922 = vpack.c.b16 %v176, %v175
    %v2923 = vpack.c.b16 %v178, %v177
    %v2924 = vpack.c.b16 %v180, %v179
    %v2925 = vpack.c.b16 %v182, %v181
    %v2926 = vpack.c.b16 %v184, %v183
    %v2927 = vpack.c.b16 %v186, %v185
    %v2928 = vpack.c.b16 %v187, %v187
    %v2930 = vsel %vm210, %v2916, 0
    %v2933 = vsel %vm210, %v2917, 0
    %v2936 = vsel %vm210, %v2918, 0
    %v2939 = vsel %vm210, %v2919, 0
    %v2942 = vsel %vm210, %v2920, 0
    %v2945 = vsel %vm210, %v2921, 0
    %v2948 = vsel %vm210, %v2922, 0
    %v2951 = vsel %vm210, %v2923, 0
    %v2954 = vsel %vm210, %v2924, 0
    %v2957 = vsel %vm210, %v2925, 0
    %v2960 = vsel %vm210, %v2926, 0
    %v2963 = vsel %vm210, %v2927, 0
    %v2966 = vsel %vm210, %v2928, 0
    %v2969 = vsel %vm259, %v2908, 0
    %2971 = vmatprep.subr.bf16.mxu0 0
    %2972 = vmatpush1.bf16.msra.mxu0 %v2969
    %2973 = vmatprep.subr.bf16.mxu0 0
    %2974 = vmatpush1.bf16.msra.mxu0 0
    %2975 = vmatprep.subr.bf16.mxu0 0
    %2976 = vmatpush1.bf16.msra.mxu0 0
    %2977 = vmatprep.subr.bf16.mxu0 0
    %2978 = vmatpush1.bf16.msra.mxu0 0
    %2979 = vmatprep.subr.bf16.mxu0 0
    %2980 = vmatpush1.bf16.msra.mxu0 0
    %2981 = vmatprep.subr.bf16.mxu0 0
    %2982 = vmatpush1.bf16.msra.mxu0 0
    %2983 = vmatprep.subr.bf16.mxu0 0
    %2984 = vmatpush1.bf16.msra.mxu0 0
    %2985 = vmatprep.subr.bf16.mxu0 0
    %2986 = vmatpush1.bf16.msra.mxu0 0
    %2987 = vmatprep.subr.bf16.mxu0 0
    %2988 = vmatpush1.bf16.msra.mxu0 0
    %2989 = vmatprep.subr.bf16.mxu0 0
    %2990 = vmatpush1.bf16.msra.mxu0 0
    %2991 = vmatprep.subr.bf16.mxu0 0
    %2992 = vmatpush1.bf16.msra.mxu0 0
    %2993 = vmatprep.subr.bf16.mxu0 0
    %2994 = vmatpush1.bf16.msra.mxu0 0
    %2995 = vmatprep.subr.bf16.mxu0 0
    %2996 = vmatpush1.bf16.msra.mxu0 0
    %2997 = vmatprep.subr.bf16.mxu0 0
    %2998 = vmatpush1.bf16.msra.mxu0 0
    %2999 = vmatprep.subr.bf16.mxu0 0
    %3000 = vmatpush1.bf16.msra.mxu0 0
    %3001 = vmatprep.subr.bf16.mxu0 0
    %3002 = vmatpush1.bf16.msra.mxu0 0
    %3003 = vmatprep.mubr.bf16.mxu0 0
    %3004 = vmatmul.mubr.bf16.gmra.mrb[0].mxu0 %v2930
    %v3005 = vpop.f32.mrb[0].mxu0
    %v3006 = vadd.f32 0.0, %v3005
    %v3007 = vpop.f32.mrb[0].mxu0
    %v3008 = vpop.f32.mrb[0].mxu0
    %v3009 = vadd.f32 0.0, %v3008
    %v3010 = vpop.f32.mrb[0].mxu0
    %3011 = vmatprep.mubr.bf16.mxu0 0
    %3012 = vmatmul.mubr.bf16.gmra.mrb[0].mxu0 %v2933
    %v3013 = vpop.f32.mrb[0].mxu0
    %v3014 = vadd.f32 0.0, %v3013
    %v3015 = vpop.f32.mrb[0].mxu0
    %v3016 = vpop.f32.mrb[0].mxu0
    %v3017 = vadd.f32 0.0, %v3016
    %v3018 = vpop.f32.mrb[0].mxu0
    %3019 = vmatprep.mubr.bf16.mxu0 0
    %3020 = vmatmul.mubr.bf16.gmra.mrb[0].mxu0 %v2936
    %v3021 = vpop.f32.mrb[0].mxu0
    %v3022 = vadd.f32 0.0, %v3021
    %v3023 = vpop.f32.mrb[0].mxu0
    %v3024 = vpop.f32.mrb[0].mxu0
    %v3025 = vadd.f32 0.0, %v3024
    %v3026 = vpop.f32.mrb[0].mxu0
    %3027 = vmatprep.mubr.bf16.mxu0 0
    %3028 = vmatmul.mubr.bf16.gmra.mrb[0].mxu0 %v2939
    %v3029 = vpop.f32.mrb[0].mxu0
    %v3030 = vadd.f32 0.0, %v3029
    %v3031 = vpop.f32.mrb[0].mxu0
    %v3032 = vpop.f32.mrb[0].mxu0
    %v3033 = vadd.f32 0.0, %v3032
    %v3034 = vpop.f32.mrb[0].mxu0
    %3035 = vmatprep.mubr.bf16.mxu0 0
    %3036 = vmatmul.mubr.bf16.gmra.mrb[0].mxu0 %v2942
    %v3037 = vpop.f32.mrb[0].mxu0
    %v3038 = vadd.f32 0.0, %v3037
    %v3039 = vpop.f32.mrb[0].mxu0
    %v3040 = vpop.f32.mrb[0].mxu0
    %v3041 = vadd.f32 0.0, %v3040
    %v3042 = vpop.f32.mrb[0].mxu0
    %3043 = vmatprep.mubr.bf16.mxu0 0
    %3044 = vmatmul.mubr.bf16.gmra.mrb[0].mxu0 %v2945
    %v3045 = vpop.f32.mrb[0].mxu0
    %v3046 = vadd.f32 0.0, %v3045
    %v3047 = vpop.f32.mrb[0].mxu0
    %v3048 = vpop.f32.mrb[0].mxu0
    %v3049 = vadd.f32 0.0, %v3048
    %v3050 = vpop.f32.mrb[0].mxu0
    %3051 = vmatprep.mubr.bf16.mxu0 0
    %3052 = vmatmul.mubr.bf16.gmra.mrb[0].mxu0 %v2948
    %v3053 = vpop.f32.mrb[0].mxu0
    %v3054 = vadd.f32 0.0, %v3053
    %v3055 = vpop.f32.mrb[0].mxu0
    %v3056 = vpop.f32.mrb[0].mxu0
    %v3057 = vadd.f32 0.0, %v3056
    %v3058 = vpop.f32.mrb[0].mxu0
    %3059 = vmatprep.mubr.bf16.mxu0 0
    %3060 = vmatmul.mubr.bf16.gmra.mrb[0].mxu0 %v2951
    %v3061 = vpop.f32.mrb[0].mxu0
    %v3062 = vadd.f32 0.0, %v3061
    %v3063 = vpop.f32.mrb[0].mxu0
    %v3064 = vpop.f32.mrb[0].mxu0
    %v3065 = vadd.f32 0.0, %v3064
    %v3066 = vpop.f32.mrb[0].mxu0
    %3067 = vmatprep.mubr.bf16.mxu0 0
    %3068 = vmatmul.mubr.bf16.gmra.mrb[0].mxu0 %v2954
    %v3069 = vpop.f32.mrb[0].mxu0
    %v3070 = vadd.f32 0.0, %v3069
    %v3071 = vpop.f32.mrb[0].mxu0
    %v3072 = vpop.f32.mrb[0].mxu0
    %v3073 = vadd.f32 0.0, %v3072
    %v3074 = vpop.f32.mrb[0].mxu0
    %3075 = vmatprep.mubr.bf16.mxu0 0
    %3076 = vmatmul.mubr.bf16.gmra.mrb[0].mxu0 %v2957
    %v3077 = vpop.f32.mrb[0].mxu0
    %v3078 = vadd.f32 0.0, %v3077
    %v3079 = vpop.f32.mrb[0].mxu0
    %v3080 = vpop.f32.mrb[0].mxu0
    %v3081 = vadd.f32 0.0, %v3080
    %v3082 = vpop.f32.mrb[0].mxu0
    %3083 = vmatprep.mubr.bf16.mxu0 0
    %3084 = vmatmul.mubr.bf16.gmra.mrb[0].mxu0 %v2960
    %v3085 = vpop.f32.mrb[0].mxu0
    %v3086 = vadd.f32 0.0, %v3085
    %v3087 = vpop.f32.mrb[0].mxu0
    %v3088 = vpop.f32.mrb[0].mxu0
    %v3089 = vadd.f32 0.0, %v3088
    %v3090 = vpop.f32.mrb[0].mxu0
    %3091 = vmatprep.mubr.bf16.mxu0 0
    %3092 = vmatmul.mubr.bf16.gmra.mrb[0].mxu0 %v2963
    %v3093 = vpop.f32.mrb[0].mxu0
    %v3094 = vadd.f32 0.0, %v3093
    %v3095 = vpop.f32.mrb[0].mxu0
    %v3096 = vpop.f32.mrb[0].mxu0
    %v3097 = vadd.f32 0.0, %v3096
    %v3098 = vpop.f32.mrb[0].mxu0
    %3099 = vmatprep.mubr.bf16.mxu0 0
    %3100 = vmatmul.mubr.bf16.gmra.mrb[0].mxu0 %v2966
    %v3101 = vpop.f32.mrb[0].mxu0
    %v3102 = vadd.f32 0.0, %v3101
    %v3103 = vpop.f32.mrb[0].mxu0
    %v3104 = vpop.f32.mrb[0].mxu0
    %v3105 = vpop.f32.mrb[0].mxu0
    %3106 = vdwg.mxu0
    %v3107 = vpack.c.b16 %v186, %v186
    %v3109 = vsel %vm210, %v3107, 0
    %v3112 = vsel %vm259, %v2907, 0
    %3114 = vmatprep.subr.bf16.mxu0 0
    %3115 = vmatpush1.bf16.msra.mxu0 %v3112
    %3116 = vmatprep.subr.bf16.mxu0 0
    %3117 = vmatpush1.bf16.msra.mxu0 0
    %3118 = vmatprep.subr.bf16.mxu0 0
    %3119 = vmatpush1.bf16.msra.mxu0 0
    %3120 = vmatprep.subr.bf16.mxu0 0
    %3121 = vmatpush1.bf16.msra.mxu0 0
    %3122 = vmatprep.subr.bf16.mxu0 0
    %3123 = vmatpush1.bf16.msra.mxu0 0
    %3124 = vmatprep.subr.bf16.mxu0 0
    %3125 = vmatpush1.bf16.msra.mxu0 0
    %3126 = vmatprep.subr.bf16.mxu0 0
    %3127 = vmatpush1.bf16.msra.mxu0 0
    %3128 = vmatprep.subr.bf16.mxu0 0
    %3129 = vmatpush1.bf16.msra.mxu0 0
    %3130 = vmatprep.subr.bf16.mxu0 0
    %3131 = vmatpush1.bf16.msra.mxu0 0
    %3132 = vmatprep.subr.bf16.mxu0 0
    %3133 = vmatpush1.bf16.msra.mxu0 0
    %3134 = vmatprep.subr.bf16.mxu0 0
    %3135 = vmatpush1.bf16.msra.mxu0 0
    %3136 = vmatprep.subr.bf16.mxu0 0
    %3137 = vmatpush1.bf16.msra.mxu0 0
    %3138 = vmatprep.subr.bf16.mxu0 0
    %3139 = vmatpush1.bf16.msra.mxu0 0
    %3140 = vmatprep.subr.bf16.mxu0 0
    %3141 = vmatpush1.bf16.msra.mxu0 0
    %3142 = vmatprep.subr.bf16.mxu0 0
    %3143 = vmatpush1.bf16.msra.mxu0 0
    %3144 = vmatprep.subr.bf16.mxu0 0
    %3145 = vmatpush1.bf16.msra.mxu0 0
    %3146 = vmatprep.mubr.bf16.mxu0 0
    %3147 = vmatmul.mubr.bf16.gmra.mrb[0].mxu0 %v212
    %v3148 = vpop.f32.mrb[0].mxu0
    %v3149 = vadd.f32 %v3006, %v3148
    %v3150 = vpop.f32.mrb[0].mxu0
    %v3151 = vpop.f32.mrb[0].mxu0
    %v3152 = vadd.f32 %v3009, %v3151
    %v3153 = vpop.f32.mrb[0].mxu0
    %3154 = vmatprep.mubr.bf16.mxu0 0
    %3155 = vmatmul.mubr.bf16.gmra.mrb[0].mxu0 %v215
    %v3156 = vpop.f32.mrb[0].mxu0
    %v3157 = vadd.f32 %v3014, %v3156
    %v3158 = vpop.f32.mrb[0].mxu0
    %v3159 = vpop.f32.mrb[0].mxu0
    %v3160 = vadd.f32 %v3017, %v3159
    %v3161 = vpop.f32.mrb[0].mxu0
    %3162 = vmatprep.mubr.bf16.mxu0 0
    %3163 = vmatmul.mubr.bf16.gmra.mrb[0].mxu0 %v218
    %v3164 = vpop.f32.mrb[0].mxu0
    %v3165 = vadd.f32 %v3022, %v3164
    %v3166 = vpop.f32.mrb[0].mxu0
    %v3167 = vpop.f32.mrb[0].mxu0
    %v3168 = vadd.f32 %v3025, %v3167
    %v3169 = vpop.f32.mrb[0].mxu0
    %3170 = vmatprep.mubr.bf16.mxu0 0
    %3171 = vmatmul.mubr.bf16.gmra.mrb[0].mxu0 %v221
    %v3172 = vpop.f32.mrb[0].mxu0
    %v3173 = vadd.f32 %v3030, %v3172
    %v3174 = vpop.f32.mrb[0].mxu0
    %v3175 = vpop.f32.mrb[0].mxu0
    %v3176 = vadd.f32 %v3033, %v3175
    %v3177 = vpop.f32.mrb[0].mxu0
    %3178 = vmatprep.mubr.bf16.mxu0 0
    %3179 = vmatmul.mubr.bf16.gmra.mrb[0].mxu0 %v224
    %v3180 = vpop.f32.mrb[0].mxu0
    %v3181 = vadd.f32 %v3038, %v3180
    %v3182 = vpop.f32.mrb[0].mxu0
    %v3183 = vpop.f32.mrb[0].mxu0
    %v3184 = vadd.f32 %v3041, %v3183
    %v3185 = vpop.f32.mrb[0].mxu0
    %3186 = vmatprep.mubr.bf16.mxu0 0
    %3187 = vmatmul.mubr.bf16.gmra.mrb[0].mxu0 %v227
    %v3188 = vpop.f32.mrb[0].mxu0
    %v3189 = vadd.f32 %v3046, %v3188
    %v3190 = vpop.f32.mrb[0].mxu0
    %v3191 = vpop.f32.mrb[0].mxu0
    %v3192 = vadd.f32 %v3049, %v3191
    %v3193 = vpop.f32.mrb[0].mxu0
    %3194 = vmatprep.mubr.bf16.mxu0 0
    %3195 = vmatmul.mubr.bf16.gmra.mrb[0].mxu0 %v230
    %v3196 = vpop.f32.mrb[0].mxu0
    %v3197 = vadd.f32 %v3054, %v3196
    %v3198 = vpop.f32.mrb[0].mxu0
    %v3199 = vpop.f32.mrb[0].mxu0
    %v3200 = vadd.f32 %v3057, %v3199
    %v3201 = vpop.f32.mrb[0].mxu0
    %3202 = vmatprep.mubr.bf16.mxu0 0
    %3203 = vmatmul.mubr.bf16.gmra.mrb[0].mxu0 %v233
    %v3204 = vpop.f32.mrb[0].mxu0
    %v3205 = vadd.f32 %v3062, %v3204
    %v3206 = vpop.f32.mrb[0].mxu0
    %v3207 = vpop.f32.mrb[0].mxu0
    %v3208 = vadd.f32 %v3065, %v3207
    %v3209 = vpop.f32.mrb[0].mxu0
    %3210 = vmatprep.mubr.bf16.mxu0 0
    %3211 = vmatmul.mubr.bf16.gmra.mrb[0].mxu0 %v236
    %v3212 = vpop.f32.mrb[0].mxu0
    %v3213 = vadd.f32 %v3070, %v3212
    %v3214 = vpop.f32.mrb[0].mxu0
    %v3215 = vpop.f32.mrb[0].mxu0
    %v3216 = vadd.f32 %v3073, %v3215
    %v3217 = vpop.f32.mrb[0].mxu0
    %3218 = vmatprep.mubr.bf16.mxu0 0
    %3219 = vmatmul.mubr.bf16.gmra.mrb[0].mxu0 %v239
    %v3220 = vpop.f32.mrb[0].mxu0
    %v3221 = vadd.f32 %v3078, %v3220
    %v3222 = vpop.f32.mrb[0].mxu0
    %v3223 = vpop.f32.mrb[0].mxu0
    %v3224 = vadd.f32 %v3081, %v3223
    %v3225 = vpop.f32.mrb[0].mxu0
    %3226 = vmatprep.mubr.bf16.mxu0 0
    %3227 = vmatmul.mubr.bf16.gmra.mrb[0].mxu0 %v242
    %v3228 = vpop.f32.mrb[0].mxu0
    %v3229 = vadd.f32 %v3086, %v3228
    %v3230 = vpop.f32.mrb[0].mxu0
    %v3231 = vpop.f32.mrb[0].mxu0
    %v3232 = vadd.f32 %v3089, %v3231
    %v3233 = vpop.f32.mrb[0].mxu0
    %3234 = vmatprep.mubr.bf16.mxu0 0
    %3235 = vmatmul.mubr.bf16.gmra.mrb[0].mxu0 %v245
    %v3236 = vpop.f32.mrb[0].mxu0
    %v3237 = vadd.f32 %v3094, %v3236
    %v3238 = vpop.f32.mrb[0].mxu0
    %v3239 = vpop.f32.mrb[0].mxu0
    %v3240 = vadd.f32 %v3097, %v3239
    %v3241 = vpop.f32.mrb[0].mxu0
    %3242 = vmatprep.mubr.bf16.mxu0 0
    %3243 = vmatmul.mubr.bf16.gmra.mrb[0].mxu0 %v3109
    %v3244 = vpop.f32.mrb[0].mxu0
    %v3245 = vadd.f32 %v3102, %v3244
    %v3246 = vpop.f32.mrb[0].mxu0
    %v3247 = vpop.f32.mrb[0].mxu0
    %v3248 = vpop.f32.mrb[0].mxu0
    %3249 = vdwg.mxu0
    %v3250 = vpack.c.b16 %v188, %v188
    %v3252 = vsel %vm210, %v3250, 0
    %v3255 = vsel %vm259, %v2909, 0
    %3257 = vmatprep.subr.bf16.mxu0 0
    %3258 = vmatpush1.bf16.msra.mxu0 %v3255
    %3259 = vmatprep.subr.bf16.mxu0 0
    %3260 = vmatpush1.bf16.msra.mxu0 0
    %3261 = vmatprep.subr.bf16.mxu0 0
    %3262 = vmatpush1.bf16.msra.mxu0 0
    %3263 = vmatprep.subr.bf16.mxu0 0
    %3264 = vmatpush1.bf16.msra.mxu0 0
    %3265 = vmatprep.subr.bf16.mxu0 0
    %3266 = vmatpush1.bf16.msra.mxu0 0
    %3267 = vmatprep.subr.bf16.mxu0 0
    %3268 = vmatpush1.bf16.msra.mxu0 0
    %3269 = vmatprep.subr.bf16.mxu0 0
    %3270 = vmatpush1.bf16.msra.mxu0 0
    %3271 = vmatprep.subr.bf16.mxu0 0
    %3272 = vmatpush1.bf16.msra.mxu0 0
    %3273 = vmatprep.subr.bf16.mxu0 0
    %3274 = vmatpush1.bf16.msra.mxu0 0
    %3275 = vmatprep.subr.bf16.mxu0 0
    %3276 = vmatpush1.bf16.msra.mxu0 0
    %3277 = vmatprep.subr.bf16.mxu0 0
    %3278 = vmatpush1.bf16.msra.mxu0 0
    %3279 = vmatprep.subr.bf16.mxu0 0
    %3280 = vmatpush1.bf16.msra.mxu0 0
    %3281 = vmatprep.subr.bf16.mxu0 0
    %3282 = vmatpush1.bf16.msra.mxu0 0
    %3283 = vmatprep.subr.bf16.mxu0 0
    %3284 = vmatpush1.bf16.msra.mxu0 0
    %3285 = vmatprep.subr.bf16.mxu0 0
    %3286 = vmatpush1.bf16.msra.mxu0 0
    %3287 = vmatprep.subr.bf16.mxu0 0
    %3288 = vmatpush1.bf16.msra.mxu0 0
    %3289 = vmatprep.mubr.bf16.mxu0 0
    %3290 = vmatmul.mubr.bf16.gmra.mrb[0].mxu0 %v215
    %v3291 = vpop.f32.mrb[0].mxu0
    %v3292 = vadd.f32 0.0, %v3291
    %v3293 = vpop.f32.mrb[0].mxu0
    %v3294 = vpop.f32.mrb[0].mxu0
    %v3295 = vadd.f32 0.0, %v3294
    %v3296 = vpop.f32.mrb[0].mxu0
    %3297 = vmatprep.mubr.bf16.mxu0 0
    %3298 = vmatmul.mubr.bf16.gmra.mrb[0].mxu0 %v218
    %v3299 = vpop.f32.mrb[0].mxu0
    %v3300 = vadd.f32 0.0, %v3299
    %v3301 = vpop.f32.mrb[0].mxu0
    %v3302 = vpop.f32.mrb[0].mxu0
    %v3303 = vadd.f32 0.0, %v3302
    %v3304 = vpop.f32.mrb[0].mxu0
    %3305 = vmatprep.mubr.bf16.mxu0 0
    %3306 = vmatmul.mubr.bf16.gmra.mrb[0].mxu0 %v221
    %v3307 = vpop.f32.mrb[0].mxu0
    %v3308 = vadd.f32 0.0, %v3307
    %v3309 = vpop.f32.mrb[0].mxu0
    %v3310 = vpop.f32.mrb[0].mxu0
    %v3311 = vadd.f32 0.0, %v3310
    %v3312 = vpop.f32.mrb[0].mxu0
    %3313 = vmatprep.mubr.bf16.mxu0 0
    %3314 = vmatmul.mubr.bf16.gmra.mrb[0].mxu0 %v224
    %v3315 = vpop.f32.mrb[0].mxu0
    %v3316 = vadd.f32 0.0, %v3315
    %v3317 = vpop.f32.mrb[0].mxu0
    %v3318 = vpop.f32.mrb[0].mxu0
    %v3319 = vadd.f32 0.0, %v3318
    %v3320 = vpop.f32.mrb[0].mxu0
    %3321 = vmatprep.mubr.bf16.mxu0 0
    %3322 = vmatmul.mubr.bf16.gmra.mrb[0].mxu0 %v227
    %v3323 = vpop.f32.mrb[0].mxu0
    %v3324 = vadd.f32 0.0, %v3323
    %v3325 = vpop.f32.mrb[0].mxu0
    %v3326 = vpop.f32.mrb[0].mxu0
    %v3327 = vadd.f32 0.0, %v3326
    %v3328 = vpop.f32.mrb[0].mxu0
    %3329 = vmatprep.mubr.bf16.mxu0 0
    %3330 = vmatmul.mubr.bf16.gmra.mrb[0].mxu0 %v230
    %v3331 = vpop.f32.mrb[0].mxu0
    %v3332 = vadd.f32 0.0, %v3331
    %v3333 = vpop.f32.mrb[0].mxu0
    %v3334 = vpop.f32.mrb[0].mxu0
    %v3335 = vadd.f32 0.0, %v3334
    %v3336 = vpop.f32.mrb[0].mxu0
    %3337 = vmatprep.mubr.bf16.mxu0 0
    %3338 = vmatmul.mubr.bf16.gmra.mrb[0].mxu0 %v233
    %v3339 = vpop.f32.mrb[0].mxu0
    %v3340 = vadd.f32 0.0, %v3339
    %v3341 = vpop.f32.mrb[0].mxu0
    %v3342 = vpop.f32.mrb[0].mxu0
    %v3343 = vadd.f32 0.0, %v3342
    %v3344 = vpop.f32.mrb[0].mxu0
    %3345 = vmatprep.mubr.bf16.mxu0 0
    %3346 = vmatmul.mubr.bf16.gmra.mrb[0].mxu0 %v236
    %v3347 = vpop.f32.mrb[0].mxu0
    %v3348 = vadd.f32 0.0, %v3347
    %v3349 = vpop.f32.mrb[0].mxu0
    %v3350 = vpop.f32.mrb[0].mxu0
    %v3351 = vadd.f32 0.0, %v3350
    %v3352 = vpop.f32.mrb[0].mxu0
    %3353 = vmatprep.mubr.bf16.mxu0 0
    %3354 = vmatmul.mubr.bf16.gmra.mrb[0].mxu0 %v239
    %v3355 = vpop.f32.mrb[0].mxu0
    %v3356 = vadd.f32 0.0, %v3355
    %v3357 = vpop.f32.mrb[0].mxu0
    %v3358 = vpop.f32.mrb[0].mxu0
    %v3359 = vadd.f32 0.0, %v3358
    %v3360 = vpop.f32.mrb[0].mxu0
    %3361 = vmatprep.mubr.bf16.mxu0 0
    %3362 = vmatmul.mubr.bf16.gmra.mrb[0].mxu0 %v242
    %v3363 = vpop.f32.mrb[0].mxu0
    %v3364 = vadd.f32 0.0, %v3363
    %v3365 = vpop.f32.mrb[0].mxu0
    %v3366 = vpop.f32.mrb[0].mxu0
    %v3367 = vadd.f32 0.0, %v3366
    %v3368 = vpop.f32.mrb[0].mxu0
    %3369 = vmatprep.mubr.bf16.mxu0 0
    %3370 = vmatmul.mubr.bf16.gmra.mrb[0].mxu0 %v245
    %v3371 = vpop.f32.mrb[0].mxu0
    %v3372 = vadd.f32 0.0, %v3371
    %v3373 = vpop.f32.mrb[0].mxu0
    %v3374 = vpop.f32.mrb[0].mxu0
    %v3375 = vadd.f32 0.0, %v3374
    %v3376 = vpop.f32.mrb[0].mxu0
    %3377 = vmatprep.mubr.bf16.mxu0 0
    %3378 = vmatmul.mubr.bf16.gmra.mrb[0].mxu0 %v248
    %v3379 = vpop.f32.mrb[0].mxu0
    %v3380 = vadd.f32 0.0, %v3379
    %v3381 = vpop.f32.mrb[0].mxu0
    %v3382 = vpop.f32.mrb[0].mxu0
    %v3383 = vadd.f32 0.0, %v3382
    %v3384 = vpop.f32.mrb[0].mxu0
    %3385 = vmatprep.mubr.bf16.mxu0 0
    %3386 = vmatmul.mubr.bf16.gmra.mrb[0].mxu0 %v3252
    %v3387 = vpop.f32.mrb[0].mxu0
    %v3388 = vadd.f32 0.0, %v3387
    %v3389 = vpop.f32.mrb[0].mxu0
    %v3390 = vpop.f32.mrb[0].mxu0
    %v3391 = vpop.f32.mrb[0].mxu0
    %3392 = vdwg.mxu0
    %v3393 = vadd.f32 %v3149, %v3292
    %v3394 = vadd.f32 %v3152, %v3295
    %v3395 = vadd.f32 %v3157, %v3300
    %v3396 = vadd.f32 %v3160, %v3303
    %v3397 = vadd.f32 %v3165, %v3308
    %v3398 = vadd.f32 %v3168, %v3311
    %v3399 = vadd.f32 %v3173, %v3316
    %v3400 = vadd.f32 %v3176, %v3319
    %v3401 = vadd.f32 %v3181, %v3324
    %v3402 = vadd.f32 %v3184, %v3327
    %v3403 = vadd.f32 %v3189, %v3332
    %v3404 = vadd.f32 %v3192, %v3335
    %v3405 = vadd.f32 %v3197, %v3340
    %v3406 = vadd.f32 %v3200, %v3343
    %v3407 = vadd.f32 %v3205, %v3348
    %v3408 = vadd.f32 %v3208, %v3351
    %v3409 = vadd.f32 %v3213, %v3356
    %v3410 = vadd.f32 %v3216, %v3359
    %v3411 = vadd.f32 %v3221, %v3364
    %v3412 = vadd.f32 %v3224, %v3367
    %v3413 = vadd.f32 %v3229, %v3372
    %v3414 = vadd.f32 %v3232, %v3375
    %v3415 = vadd.f32 %v3237, %v3380
    %v3416 = vadd.f32 %v3240, %v3383
    %v3417 = vadd.f32 %v3245, %v3388
    %v3418 = vpack.c.b16 %v188, %v187
    %v3419 = vpack.c.b16 %v189, %v189
    %v3421 = vsel %vm210, %v3418, 0
    %v3424 = vsel %vm210, %v3419, 0
    %v3427 = vsel %vm259, %v2910, 0
    %3429 = vmatprep.subr.bf16.mxu0 0
    %3430 = vmatpush1.bf16.msra.mxu0 %v3427
    %3431 = vmatprep.subr.bf16.mxu0 0
    %3432 = vmatpush1.bf16.msra.mxu0 0
    %3433 = vmatprep.subr.bf16.mxu0 0
    %3434 = vmatpush1.bf16.msra.mxu0 0
    %3435 = vmatprep.subr.bf16.mxu0 0
    %3436 = vmatpush1.bf16.msra.mxu0 0
    %3437 = vmatprep.subr.bf16.mxu0 0
    %3438 = vmatpush1.bf16.msra.mxu0 0
    %3439 = vmatprep.subr.bf16.mxu0 0
    %3440 = vmatpush1.bf16.msra.mxu0 0
    %3441 = vmatprep.subr.bf16.mxu0 0
    %3442 = vmatpush1.bf16.msra.mxu0 0
    %3443 = vmatprep.subr.bf16.mxu0 0
    %3444 = vmatpush1.bf16.msra.mxu0 0
    %3445 = vmatprep.subr.bf16.mxu0 0
    %3446 = vmatpush1.bf16.msra.mxu0 0
    %3447 = vmatprep.subr.bf16.mxu0 0
    %3448 = vmatpush1.bf16.msra.mxu0 0
    %3449 = vmatprep.subr.bf16.mxu0 0
    %3450 = vmatpush1.bf16.msra.mxu0 0
    %3451 = vmatprep.subr.bf16.mxu0 0
    %3452 = vmatpush1.bf16.msra.mxu0 0
    %3453 = vmatprep.subr.bf16.mxu0 0
    %3454 = vmatpush1.bf16.msra.mxu0 0
    %3455 = vmatprep.subr.bf16.mxu0 0
    %3456 = vmatpush1.bf16.msra.mxu0 0
    %3457 = vmatprep.subr.bf16.mxu0 0
    %3458 = vmatpush1.bf16.msra.mxu0 0
    %3459 = vmatprep.subr.bf16.mxu0 0
    %3460 = vmatpush1.bf16.msra.mxu0 0
    %3461 = vmatprep.mubr.bf16.mxu0 0
    %3462 = vmatmul.mubr.bf16.gmra.mrb[0].mxu0 %v2933
    %v3463 = vpop.f32.mrb[0].mxu0
    %v3464 = vadd.f32 0.0, %v3463
    %v3465 = vpop.f32.mrb[0].mxu0
    %v3466 = vpop.f32.mrb[0].mxu0
    %v3467 = vadd.f32 0.0, %v3466
    %v3468 = vpop.f32.mrb[0].mxu0
    %3469 = vmatprep.mubr.bf16.mxu0 0
    %3470 = vmatmul.mubr.bf16.gmra.mrb[0].mxu0 %v2936
    %v3471 = vpop.f32.mrb[0].mxu0
    %v3472 = vadd.f32 0.0, %v3471
    %v3473 = vpop.f32.mrb[0].mxu0
    %v3474 = vpop.f32.mrb[0].mxu0
    %v3475 = vadd.f32 0.0, %v3474
    %v3476 = vpop.f32.mrb[0].mxu0
    %3477 = vmatprep.mubr.bf16.mxu0 0
    %3478 = vmatmul.mubr.bf16.gmra.mrb[0].mxu0 %v2939
    %v3479 = vpop.f32.mrb[0].mxu0
    %v3480 = vadd.f32 0.0, %v3479
    %v3481 = vpop.f32.mrb[0].mxu0
    %v3482 = vpop.f32.mrb[0].mxu0
    %v3483 = vadd.f32 0.0, %v3482
    %v3484 = vpop.f32.mrb[0].mxu0
    %3485 = vmatprep.mubr.bf16.mxu0 0
    %3486 = vmatmul.mubr.bf16.gmra.mrb[0].mxu0 %v2942
    %v3487 = vpop.f32.mrb[0].mxu0
    %v3488 = vadd.f32 0.0, %v3487
    %v3489 = vpop.f32.mrb[0].mxu0
    %v3490 = vpop.f32.mrb[0].mxu0
    %v3491 = vadd.f32 0.0, %v3490
    %v3492 = vpop.f32.mrb[0].mxu0
    %3493 = vmatprep.mubr.bf16.mxu0 0
    %3494 = vmatmul.mubr.bf16.gmra.mrb[0].mxu0 %v2945
    %v3495 = vpop.f32.mrb[0].mxu0
    %v3496 = vadd.f32 0.0, %v3495
    %v3497 = vpop.f32.mrb[0].mxu0
    %v3498 = vpop.f32.mrb[0].mxu0
    %v3499 = vadd.f32 0.0, %v3498
    %v3500 = vpop.f32.mrb[0].mxu0
    %3501 = vmatprep.mubr.bf16.mxu0 0
    %3502 = vmatmul.mubr.bf16.gmra.mrb[0].mxu0 %v2948
    %v3503 = vpop.f32.mrb[0].mxu0
    %v3504 = vadd.f32 0.0, %v3503
    %v3505 = vpop.f32.mrb[0].mxu0
    %v3506 = vpop.f32.mrb[0].mxu0
    %v3507 = vadd.f32 0.0, %v3506
    %v3508 = vpop.f32.mrb[0].mxu0
    %3509 = vmatprep.mubr.bf16.mxu0 0
    %3510 = vmatmul.mubr.bf16.gmra.mrb[0].mxu0 %v2951
    %v3511 = vpop.f32.mrb[0].mxu0
    %v3512 = vadd.f32 0.0, %v3511
    %v3513 = vpop.f32.mrb[0].mxu0
    %v3514 = vpop.f32.mrb[0].mxu0
    %v3515 = vadd.f32 0.0, %v3514
    %v3516 = vpop.f32.mrb[0].mxu0
    %3517 = vmatprep.mubr.bf16.mxu0 0
    %3518 = vmatmul.mubr.bf16.gmra.mrb[0].mxu0 %v2954
    %v3519 = vpop.f32.mrb[0].mxu0
    %v3520 = vadd.f32 0.0, %v3519
    %v3521 = vpop.f32.mrb[0].mxu0
    %v3522 = vpop.f32.mrb[0].mxu0
    %v3523 = vadd.f32 0.0, %v3522
    %v3524 = vpop.f32.mrb[0].mxu0
    %3525 = vmatprep.mubr.bf16.mxu0 0
    %3526 = vmatmul.mubr.bf16.gmra.mrb[0].mxu0 %v2957
    %v3527 = vpop.f32.mrb[0].mxu0
    %v3528 = vadd.f32 0.0, %v3527
    %v3529 = vpop.f32.mrb[0].mxu0
    %v3530 = vpop.f32.mrb[0].mxu0
    %v3531 = vadd.f32 0.0, %v3530
    %v3532 = vpop.f32.mrb[0].mxu0
    %3533 = vmatprep.mubr.bf16.mxu0 0
    %3534 = vmatmul.mubr.bf16.gmra.mrb[0].mxu0 %v2960
    %v3535 = vpop.f32.mrb[0].mxu0
    %v3536 = vadd.f32 0.0, %v3535
    %v3537 = vpop.f32.mrb[0].mxu0
    %v3538 = vpop.f32.mrb[0].mxu0
    %v3539 = vadd.f32 0.0, %v3538
    %v3540 = vpop.f32.mrb[0].mxu0
    %3541 = vmatprep.mubr.bf16.mxu0 0
    %3542 = vmatmul.mubr.bf16.gmra.mrb[0].mxu0 %v2963
    %v3543 = vpop.f32.mrb[0].mxu0
    %v3544 = vadd.f32 0.0, %v3543
    %v3545 = vpop.f32.mrb[0].mxu0
    %v3546 = vpop.f32.mrb[0].mxu0
    %v3547 = vadd.f32 0.0, %v3546
    %v3548 = vpop.f32.mrb[0].mxu0
    %3549 = vmatprep.mubr.bf16.mxu0 0
    %3550 = vmatmul.mubr.bf16.gmra.mrb[0].mxu0 %v3421
    %v3551 = vpop.f32.mrb[0].mxu0
    %v3552 = vadd.f32 0.0, %v3551
    %v3553 = vpop.f32.mrb[0].mxu0
    %v3554 = vpop.f32.mrb[0].mxu0
    %v3555 = vadd.f32 0.0, %v3554
    %v3556 = vpop.f32.mrb[0].mxu0
    %3557 = vmatprep.mubr.bf16.mxu0 0
    %3558 = vmatmul.mubr.bf16.gmra.mrb[0].mxu0 %v3424
    %v3559 = vpop.f32.mrb[0].mxu0
    %v3560 = vadd.f32 0.0, %v3559
    %v3561 = vpop.f32.mrb[0].mxu0
    %v3562 = vpop.f32.mrb[0].mxu0
    %v3563 = vpop.f32.mrb[0].mxu0
    %3564 = vdwg.mxu0
    %v3565 = vadd.f32 %v3393, %v3464
    %v3566 = vadd.f32 %v3394, %v3467
    %v3567 = vadd.f32 %v3395, %v3472
    %v3568 = vadd.f32 %v3396, %v3475
    %v3569 = vadd.f32 %v3397, %v3480
    %v3570 = vadd.f32 %v3398, %v3483
    %v3571 = vadd.f32 %v3399, %v3488
    %v3572 = vadd.f32 %v3400, %v3491
    %v3573 = vadd.f32 %v3401, %v3496
    %v3574 = vadd.f32 %v3402, %v3499
    %v3575 = vadd.f32 %v3403, %v3504
    %v3576 = vadd.f32 %v3404, %v3507
    %v3577 = vadd.f32 %v3405, %v3512
    %v3578 = vadd.f32 %v3406, %v3515
    %v3579 = vadd.f32 %v3407, %v3520
    %v3580 = vadd.f32 %v3408, %v3523
    %v3581 = vadd.f32 %v3409, %v3528
    %v3582 = vadd.f32 %v3410, %v3531
    %v3583 = vadd.f32 %v3411, %v3536
    %v3584 = vadd.f32 %v3412, %v3539
    %v3585 = vadd.f32 %v3413, %v3544
    %v3586 = vadd.f32 %v3414, %v3547
    %v3587 = vadd.f32 %v3415, %v3552
    %v3588 = vadd.f32 %v3416, %v3555
    %v3589 = vadd.f32 %v3417, %v3560
    %v3590 = vpack.c.b16 %v190, %v190
    %v3592 = vsel %vm210, %v3590, 0
    %v3595 = vsel %vm259, %v2911, 0
    %3597 = vmatprep.subr.bf16.mxu0 0
    %3598 = vmatpush1.bf16.msra.mxu0 %v3595
    %3599 = vmatprep.subr.bf16.mxu0 0
    %3600 = vmatpush1.bf16.msra.mxu0 0
    %3601 = vmatprep.subr.bf16.mxu0 0
    %3602 = vmatpush1.bf16.msra.mxu0 0
    %3603 = vmatprep.subr.bf16.mxu0 0
    %3604 = vmatpush1.bf16.msra.mxu0 0
    %3605 = vmatprep.subr.bf16.mxu0 0
    %3606 = vmatpush1.bf16.msra.mxu0 0
    %3607 = vmatprep.subr.bf16.mxu0 0
    %3608 = vmatpush1.bf16.msra.mxu0 0
    %3609 = vmatprep.subr.bf16.mxu0 0
    %3610 = vmatpush1.bf16.msra.mxu0 0
    %3611 = vmatprep.subr.bf16.mxu0 0
    %3612 = vmatpush1.bf16.msra.mxu0 0
    %3613 = vmatprep.subr.bf16.mxu0 0
    %3614 = vmatpush1.bf16.msra.mxu0 0
    %3615 = vmatprep.subr.bf16.mxu0 0
    %3616 = vmatpush1.bf16.msra.mxu0 0
    %3617 = vmatprep.subr.bf16.mxu0 0
    %3618 = vmatpush1.bf16.msra.mxu0 0
    %3619 = vmatprep.subr.bf16.mxu0 0
    %3620 = vmatpush1.bf16.msra.mxu0 0
    %3621 = vmatprep.subr.bf16.mxu0 0
    %3622 = vmatpush1.bf16.msra.mxu0 0
    %3623 = vmatprep.subr.bf16.mxu0 0
    %3624 = vmatpush1.bf16.msra.mxu0 0
    %3625 = vmatprep.subr.bf16.mxu0 0
    %3626 = vmatpush1.bf16.msra.mxu0 0
    %3627 = vmatprep.subr.bf16.mxu0 0
    %3628 = vmatpush1.bf16.msra.mxu0 0
    %3629 = vmatprep.mubr.bf16.mxu0 0
    %3630 = vmatmul.mubr.bf16.gmra.mrb[0].mxu0 %v218
    %v3631 = vpop.f32.mrb[0].mxu0
    %v3632 = vadd.f32 0.0, %v3631
    %v3633 = vpop.f32.mrb[0].mxu0
    %v3634 = vpop.f32.mrb[0].mxu0
    %v3635 = vadd.f32 0.0, %v3634
    %v3636 = vpop.f32.mrb[0].mxu0
    %3637 = vmatprep.mubr.bf16.mxu0 0
    %3638 = vmatmul.mubr.bf16.gmra.mrb[0].mxu0 %v221
    %v3639 = vpop.f32.mrb[0].mxu0
    %v3640 = vadd.f32 0.0, %v3639
    %v3641 = vpop.f32.mrb[0].mxu0
    %v3642 = vpop.f32.mrb[0].mxu0
    %v3643 = vadd.f32 0.0, %v3642
    %v3644 = vpop.f32.mrb[0].mxu0
    %3645 = vmatprep.mubr.bf16.mxu0 0
    %3646 = vmatmul.mubr.bf16.gmra.mrb[0].mxu0 %v224
    %v3647 = vpop.f32.mrb[0].mxu0
    %v3648 = vadd.f32 0.0, %v3647
    %v3649 = vpop.f32.mrb[0].mxu0
    %v3650 = vpop.f32.mrb[0].mxu0
    %v3651 = vadd.f32 0.0, %v3650
    %v3652 = vpop.f32.mrb[0].mxu0
    %3653 = vmatprep.mubr.bf16.mxu0 0
    %3654 = vmatmul.mubr.bf16.gmra.mrb[0].mxu0 %v227
    %v3655 = vpop.f32.mrb[0].mxu0
    %v3656 = vadd.f32 0.0, %v3655
    %v3657 = vpop.f32.mrb[0].mxu0
    %v3658 = vpop.f32.mrb[0].mxu0
    %v3659 = vadd.f32 0.0, %v3658
    %v3660 = vpop.f32.mrb[0].mxu0
    %3661 = vmatprep.mubr.bf16.mxu0 0
    %3662 = vmatmul.mubr.bf16.gmra.mrb[0].mxu0 %v230
    %v3663 = vpop.f32.mrb[0].mxu0
    %v3664 = vadd.f32 0.0, %v3663
    %v3665 = vpop.f32.mrb[0].mxu0
    %v3666 = vpop.f32.mrb[0].mxu0
    %v3667 = vadd.f32 0.0, %v3666
    %v3668 = vpop.f32.mrb[0].mxu0
    %3669 = vmatprep.mubr.bf16.mxu0 0
    %3670 = vmatmul.mubr.bf16.gmra.mrb[0].mxu0 %v233
    %v3671 = vpop.f32.mrb[0].mxu0
    %v3672 = vadd.f32 0.0, %v3671
    %v3673 = vpop.f32.mrb[0].mxu0
    %v3674 = vpop.f32.mrb[0].mxu0
    %v3675 = vadd.f32 0.0, %v3674
    %v3676 = vpop.f32.mrb[0].mxu0
    %3677 = vmatprep.mubr.bf16.mxu0 0
    %3678 = vmatmul.mubr.bf16.gmra.mrb[0].mxu0 %v236
    %v3679 = vpop.f32.mrb[0].mxu0
    %v3680 = vadd.f32 0.0, %v3679
    %v3681 = vpop.f32.mrb[0].mxu0
    %v3682 = vpop.f32.mrb[0].mxu0
    %v3683 = vadd.f32 0.0, %v3682
    %v3684 = vpop.f32.mrb[0].mxu0
    %3685 = vmatprep.mubr.bf16.mxu0 0
    %3686 = vmatmul.mubr.bf16.gmra.mrb[0].mxu0 %v239
    %v3687 = vpop.f32.mrb[0].mxu0
    %v3688 = vadd.f32 0.0, %v3687
    %v3689 = vpop.f32.mrb[0].mxu0
    %v3690 = vpop.f32.mrb[0].mxu0
    %v3691 = vadd.f32 0.0, %v3690
    %v3692 = vpop.f32.mrb[0].mxu0
    %3693 = vmatprep.mubr.bf16.mxu0 0
    %3694 = vmatmul.mubr.bf16.gmra.mrb[0].mxu0 %v242
    %v3695 = vpop.f32.mrb[0].mxu0
    %v3696 = vadd.f32 0.0, %v3695
    %v3697 = vpop.f32.mrb[0].mxu0
    %v3698 = vpop.f32.mrb[0].mxu0
    %v3699 = vadd.f32 0.0, %v3698
    %v3700 = vpop.f32.mrb[0].mxu0
    %3701 = vmatprep.mubr.bf16.mxu0 0
    %3702 = vmatmul.mubr.bf16.gmra.mrb[0].mxu0 %v245
    %v3703 = vpop.f32.mrb[0].mxu0
    %v3704 = vadd.f32 0.0, %v3703
    %v3705 = vpop.f32.mrb[0].mxu0
    %v3706 = vpop.f32.mrb[0].mxu0
    %v3707 = vadd.f32 0.0, %v3706
    %v3708 = vpop.f32.mrb[0].mxu0
    %3709 = vmatprep.mubr.bf16.mxu0 0
    %3710 = vmatmul.mubr.bf16.gmra.mrb[0].mxu0 %v248
    %v3711 = vpop.f32.mrb[0].mxu0
    %v3712 = vadd.f32 0.0, %v3711
    %v3713 = vpop.f32.mrb[0].mxu0
    %v3714 = vpop.f32.mrb[0].mxu0
    %v3715 = vadd.f32 0.0, %v3714
    %v3716 = vpop.f32.mrb[0].mxu0
    %3717 = vmatprep.mubr.bf16.mxu0 0
    %3718 = vmatmul.mubr.bf16.gmra.mrb[0].mxu0 %v251
    %v3719 = vpop.f32.mrb[0].mxu0
    %v3720 = vadd.f32 0.0, %v3719
    %v3721 = vpop.f32.mrb[0].mxu0
    %v3722 = vpop.f32.mrb[0].mxu0
    %v3723 = vadd.f32 0.0, %v3722
    %v3724 = vpop.f32.mrb[0].mxu0
    %3725 = vmatprep.mubr.bf16.mxu0 0
    %3726 = vmatmul.mubr.bf16.gmra.mrb[0].mxu0 %v3592
    %v3727 = vpop.f32.mrb[0].mxu0
    %v3728 = vadd.f32 0.0, %v3727
    %v3729 = vpop.f32.mrb[0].mxu0
    %v3730 = vpop.f32.mrb[0].mxu0
    %v3731 = vpop.f32.mrb[0].mxu0
    %3732 = vdwg.mxu0
    %v3733 = vadd.f32 %v3565, %v3632
    %v3734 = vadd.f32 %v3566, %v3635
    %v3735 = vadd.f32 %v3567, %v3640
    %v3736 = vadd.f32 %v3568, %v3643
    %v3737 = vadd.f32 %v3569, %v3648
    %v3738 = vadd.f32 %v3570, %v3651
    %v3739 = vadd.f32 %v3571, %v3656
    %v3740 = vadd.f32 %v3572, %v3659
    %v3741 = vadd.f32 %v3573, %v3664
    %v3742 = vadd.f32 %v3574, %v3667
    %v3743 = vadd.f32 %v3575, %v3672
    %v3744 = vadd.f32 %v3576, %v3675
    %v3745 = vadd.f32 %v3577, %v3680
    %v3746 = vadd.f32 %v3578, %v3683
    %v3747 = vadd.f32 %v3579, %v3688
    %v3748 = vadd.f32 %v3580, %v3691
    %v3749 = vadd.f32 %v3581, %v3696
    %v3750 = vadd.f32 %v3582, %v3699
    %v3751 = vadd.f32 %v3583, %v3704
    %v3752 = vadd.f32 %v3584, %v3707
    %v3753 = vadd.f32 %v3585, %v3712
    %v3754 = vadd.f32 %v3586, %v3715
    %v3755 = vadd.f32 %v3587, %v3720
    %v3756 = vadd.f32 %v3588, %v3723
    %v3757 = vadd.f32 %v3589, %v3728
    %v3758 = vpack.c.b16 %v190, %v189
    %v3759 = vpack.c.b16 %v191, %v191
    %v3761 = vsel %vm210, %v3758, 0
    %v3764 = vsel %vm210, %v3759, 0
    %v3767 = vsel %vm259, %v2912, 0
    %3769 = vmatprep.subr.bf16.mxu0 0
    %3770 = vmatpush1.bf16.msra.mxu0 %v3767
    %3771 = vmatprep.subr.bf16.mxu0 0
    %3772 = vmatpush1.bf16.msra.mxu0 0
    %3773 = vmatprep.subr.bf16.mxu0 0
    %3774 = vmatpush1.bf16.msra.mxu0 0
    %3775 = vmatprep.subr.bf16.mxu0 0
    %3776 = vmatpush1.bf16.msra.mxu0 0
    %3777 = vmatprep.subr.bf16.mxu0 0
    %3778 = vmatpush1.bf16.msra.mxu0 0
    %3779 = vmatprep.subr.bf16.mxu0 0
    %3780 = vmatpush1.bf16.msra.mxu0 0
    %3781 = vmatprep.subr.bf16.mxu0 0
    %3782 = vmatpush1.bf16.msra.mxu0 0
    %3783 = vmatprep.subr.bf16.mxu0 0
    %3784 = vmatpush1.bf16.msra.mxu0 0
    %3785 = vmatprep.subr.bf16.mxu0 0
    %3786 = vmatpush1.bf16.msra.mxu0 0
    %3787 = vmatprep.subr.bf16.mxu0 0
    %3788 = vmatpush1.bf16.msra.mxu0 0
    %3789 = vmatprep.subr.bf16.mxu0 0
    %3790 = vmatpush1.bf16.msra.mxu0 0
    %3791 = vmatprep.subr.bf16.mxu0 0
    %3792 = vmatpush1.bf16.msra.mxu0 0
    %3793 = vmatprep.subr.bf16.mxu0 0
    %3794 = vmatpush1.bf16.msra.mxu0 0
    %3795 = vmatprep.subr.bf16.mxu0 0
    %3796 = vmatpush1.bf16.msra.mxu0 0
    %3797 = vmatprep.subr.bf16.mxu0 0
    %3798 = vmatpush1.bf16.msra.mxu0 0
    %3799 = vmatprep.subr.bf16.mxu0 0
    %3800 = vmatpush1.bf16.msra.mxu0 0
    %3801 = vmatprep.mubr.bf16.mxu0 0
    %3802 = vmatmul.mubr.bf16.gmra.mrb[0].mxu0 %v2936
    %v3803 = vpop.f32.mrb[0].mxu0
    %v3804 = vadd.f32 0.0, %v3803
    %v3805 = vpop.f32.mrb[0].mxu0
    %v3806 = vpop.f32.mrb[0].mxu0
    %v3807 = vadd.f32 0.0, %v3806
    %v3808 = vpop.f32.mrb[0].mxu0
    %3809 = vmatprep.mubr.bf16.mxu0 0
    %3810 = vmatmul.mubr.bf16.gmra.mrb[0].mxu0 %v2939
    %v3811 = vpop.f32.mrb[0].mxu0
    %v3812 = vadd.f32 0.0, %v3811
    %v3813 = vpop.f32.mrb[0].mxu0
    %v3814 = vpop.f32.mrb[0].mxu0
    %v3815 = vadd.f32 0.0, %v3814
    %v3816 = vpop.f32.mrb[0].mxu0
    %3817 = vmatprep.mubr.bf16.mxu0 0
    %3818 = vmatmul.mubr.bf16.gmra.mrb[0].mxu0 %v2942
    %v3819 = vpop.f32.mrb[0].mxu0
    %v3820 = vadd.f32 0.0, %v3819
    %v3821 = vpop.f32.mrb[0].mxu0
    %v3822 = vpop.f32.mrb[0].mxu0
    %v3823 = vadd.f32 0.0, %v3822
    %v3824 = vpop.f32.mrb[0].mxu0
    %3825 = vmatprep.mubr.bf16.mxu0 0
    %3826 = vmatmul.mubr.bf16.gmra.mrb[0].mxu0 %v2945
    %v3827 = vpop.f32.mrb[0].mxu0
    %v3828 = vadd.f32 0.0, %v3827
    %v3829 = vpop.f32.mrb[0].mxu0
    %v3830 = vpop.f32.mrb[0].mxu0
    %v3831 = vadd.f32 0.0, %v3830
    %v3832 = vpop.f32.mrb[0].mxu0
    %3833 = vmatprep.mubr.bf16.mxu0 0
    %3834 = vmatmul.mubr.bf16.gmra.mrb[0].mxu0 %v2948
    %v3835 = vpop.f32.mrb[0].mxu0
    %v3836 = vadd.f32 0.0, %v3835
    %v3837 = vpop.f32.mrb[0].mxu0
    %v3838 = vpop.f32.mrb[0].mxu0
    %v3839 = vadd.f32 0.0, %v3838
    %v3840 = vpop.f32.mrb[0].mxu0
    %3841 = vmatprep.mubr.bf16.mxu0 0
    %3842 = vmatmul.mubr.bf16.gmra.mrb[0].mxu0 %v2951
    %v3843 = vpop.f32.mrb[0].mxu0
    %v3844 = vadd.f32 0.0, %v3843
    %v3845 = vpop.f32.mrb[0].mxu0
    %v3846 = vpop.f32.mrb[0].mxu0
    %v3847 = vadd.f32 0.0, %v3846
    %v3848 = vpop.f32.mrb[0].mxu0
    %3849 = vmatprep.mubr.bf16.mxu0 0
    %3850 = vmatmul.mubr.bf16.gmra.mrb[0].mxu0 %v2954
    %v3851 = vpop.f32.mrb[0].mxu0
    %v3852 = vadd.f32 0.0, %v3851
    %v3853 = vpop.f32.mrb[0].mxu0
    %v3854 = vpop.f32.mrb[0].mxu0
    %v3855 = vadd.f32 0.0, %v3854
    %v3856 = vpop.f32.mrb[0].mxu0
    %3857 = vmatprep.mubr.bf16.mxu0 0
    %3858 = vmatmul.mubr.bf16.gmra.mrb[0].mxu0 %v2957
    %v3859 = vpop.f32.mrb[0].mxu0
    %v3860 = vadd.f32 0.0, %v3859
    %v3861 = vpop.f32.mrb[0].mxu0
    %v3862 = vpop.f32.mrb[0].mxu0
    %v3863 = vadd.f32 0.0, %v3862
    %v3864 = vpop.f32.mrb[0].mxu0
    %3865 = vmatprep.mubr.bf16.mxu0 0
    %3866 = vmatmul.mubr.bf16.gmra.mrb[0].mxu0 %v2960
    %v3867 = vpop.f32.mrb[0].mxu0
    %v3868 = vadd.f32 0.0, %v3867
    %v3869 = vpop.f32.mrb[0].mxu0
    %v3870 = vpop.f32.mrb[0].mxu0
    %v3871 = vadd.f32 0.0, %v3870
    %v3872 = vpop.f32.mrb[0].mxu0
    %3873 = vmatprep.mubr.bf16.mxu0 0
    %3874 = vmatmul.mubr.bf16.gmra.mrb[0].mxu0 %v2963
    %v3875 = vpop.f32.mrb[0].mxu0
    %v3876 = vadd.f32 0.0, %v3875
    %v3877 = vpop.f32.mrb[0].mxu0
    %v3878 = vpop.f32.mrb[0].mxu0
    %v3879 = vadd.f32 0.0, %v3878
    %v3880 = vpop.f32.mrb[0].mxu0
    %3881 = vmatprep.mubr.bf16.mxu0 0
    %3882 = vmatmul.mubr.bf16.gmra.mrb[0].mxu0 %v3421
    %v3883 = vpop.f32.mrb[0].mxu0
    %v3884 = vadd.f32 0.0, %v3883
    %v3885 = vpop.f32.mrb[0].mxu0
    %v3886 = vpop.f32.mrb[0].mxu0
    %v3887 = vadd.f32 0.0, %v3886
    %v3888 = vpop.f32.mrb[0].mxu0
    %3889 = vmatprep.mubr.bf16.mxu0 0
    %3890 = vmatmul.mubr.bf16.gmra.mrb[0].mxu0 %v3761
    %v3891 = vpop.f32.mrb[0].mxu0
    %v3892 = vadd.f32 0.0, %v3891
    %v3893 = vpop.f32.mrb[0].mxu0
    %v3894 = vpop.f32.mrb[0].mxu0
    %v3895 = vadd.f32 0.0, %v3894
    %v3896 = vpop.f32.mrb[0].mxu0
    %3897 = vmatprep.mubr.bf16.mxu0 0
    %3898 = vmatmul.mubr.bf16.gmra.mrb[0].mxu0 %v3764
    %v3899 = vpop.f32.mrb[0].mxu0
    %v3900 = vadd.f32 0.0, %v3899
    %v3901 = vpop.f32.mrb[0].mxu0
    %v3902 = vpop.f32.mrb[0].mxu0
    %v3903 = vpop.f32.mrb[0].mxu0
    %3904 = vdwg.mxu0
    %v3905 = vadd.f32 %v3733, %v3804
    %v3906 = vadd.f32 %v3734, %v3807
    %v3907 = vadd.f32 %v3735, %v3812
    %v3908 = vadd.f32 %v3736, %v3815
    %v3909 = vadd.f32 %v3737, %v3820
    %v3910 = vadd.f32 %v3738, %v3823
    %v3911 = vadd.f32 %v3739, %v3828
    %v3912 = vadd.f32 %v3740, %v3831
    %v3913 = vadd.f32 %v3741, %v3836
    %v3914 = vadd.f32 %v3742, %v3839
    %v3915 = vadd.f32 %v3743, %v3844
    %v3916 = vadd.f32 %v3744, %v3847
    %v3917 = vadd.f32 %v3745, %v3852
    %v3918 = vadd.f32 %v3746, %v3855
    %v3919 = vadd.f32 %v3747, %v3860
    %v3920 = vadd.f32 %v3748, %v3863
    %v3921 = vadd.f32 %v3749, %v3868
    %v3922 = vadd.f32 %v3750, %v3871
    %v3923 = vadd.f32 %v3751, %v3876
    %v3924 = vadd.f32 %v3752, %v3879
    %v3925 = vadd.f32 %v3753, %v3884
    %v3926 = vadd.f32 %v3754, %v3887
    %v3927 = vadd.f32 %v3755, %v3892
    %v3928 = vadd.f32 %v3756, %v3895
    %v3929 = vadd.f32 %v3757, %v3900
    %v3930 = vpack.c.b16 %v192, %v192
    %v3932 = vsel %vm210, %v3930, 0
    %v3935 = vsel %vm259, %v2913, 0
    %3937 = vmatprep.subr.bf16.mxu0 0
    %3938 = vmatpush1.bf16.msra.mxu0 %v3935
    %3939 = vmatprep.subr.bf16.mxu0 0
    %3940 = vmatpush1.bf16.msra.mxu0 0
    %3941 = vmatprep.subr.bf16.mxu0 0
    %3942 = vmatpush1.bf16.msra.mxu0 0
    %3943 = vmatprep.subr.bf16.mxu0 0
    %3944 = vmatpush1.bf16.msra.mxu0 0
    %3945 = vmatprep.subr.bf16.mxu0 0
    %3946 = vmatpush1.bf16.msra.mxu0 0
    %3947 = vmatprep.subr.bf16.mxu0 0
    %3948 = vmatpush1.bf16.msra.mxu0 0
    %3949 = vmatprep.subr.bf16.mxu0 0
    %3950 = vmatpush1.bf16.msra.mxu0 0
    %3951 = vmatprep.subr.bf16.mxu0 0
    %3952 = vmatpush1.bf16.msra.mxu0 0
    %3953 = vmatprep.subr.bf16.mxu0 0
    %3954 = vmatpush1.bf16.msra.mxu0 0
    %3955 = vmatprep.subr.bf16.mxu0 0
    %3956 = vmatpush1.bf16.msra.mxu0 0
    %3957 = vmatprep.subr.bf16.mxu0 0
    %3958 = vmatpush1.bf16.msra.mxu0 0
    %3959 = vmatprep.subr.bf16.mxu0 0
    %3960 = vmatpush1.bf16.msra.mxu0 0
    %3961 = vmatprep.subr.bf16.mxu0 0
    %3962 = vmatpush1.bf16.msra.mxu0 0
    %3963 = vmatprep.subr.bf16.mxu0 0
    %3964 = vmatpush1.bf16.msra.mxu0 0
    %3965 = vmatprep.subr.bf16.mxu0 0
    %3966 = vmatpush1.bf16.msra.mxu0 0
    %3967 = vmatprep.subr.bf16.mxu0 0
    %3968 = vmatpush1.bf16.msra.mxu0 0
    %3969 = vmatprep.mubr.bf16.mxu0 0
    %3970 = vmatmul.mubr.bf16.gmra.mrb[0].mxu0 %v221
    %v3971 = vpop.f32.mrb[0].mxu0
    %v3972 = vadd.f32 0.0, %v3971
    %v3973 = vpop.f32.mrb[0].mxu0
    %v3974 = vpop.f32.mrb[0].mxu0
    %v3975 = vadd.f32 0.0, %v3974
    %v3976 = vpop.f32.mrb[0].mxu0
    %3977 = vmatprep.mubr.bf16.mxu0 0
    %3978 = vmatmul.mubr.bf16.gmra.mrb[0].mxu0 %v224
    %v3979 = vpop.f32.mrb[0].mxu0
    %v3980 = vadd.f32 0.0, %v3979
    %v3981 = vpop.f32.mrb[0].mxu0
    %v3982 = vpop.f32.mrb[0].mxu0
    %v3983 = vadd.f32 0.0, %v3982
    %v3984 = vpop.f32.mrb[0].mxu0
    %3985 = vmatprep.mubr.bf16.mxu0 0
    %3986 = vmatmul.mubr.bf16.gmra.mrb[0].mxu0 %v227
    %v3987 = vpop.f32.mrb[0].mxu0
    %v3988 = vadd.f32 0.0, %v3987
    %v3989 = vpop.f32.mrb[0].mxu0
    %v3990 = vpop.f32.mrb[0].mxu0
    %v3991 = vadd.f32 0.0, %v3990
    %v3992 = vpop.f32.mrb[0].mxu0
    %3993 = vmatprep.mubr.bf16.mxu0 0
    %3994 = vmatmul.mubr.bf16.gmra.mrb[0].mxu0 %v230
    %v3995 = vpop.f32.mrb[0].mxu0
    %v3996 = vadd.f32 0.0, %v3995
    %v3997 = vpop.f32.mrb[0].mxu0
    %v3998 = vpop.f32.mrb[0].mxu0
    %v3999 = vadd.f32 0.0, %v3998
    %v4000 = vpop.f32.mrb[0].mxu0
    %4001 = vmatprep.mubr.bf16.mxu0 0
    %4002 = vmatmul.mubr.bf16.gmra.mrb[0].mxu0 %v233
    %v4003 = vpop.f32.mrb[0].mxu0
    %v4004 = vadd.f32 0.0, %v4003
    %v4005 = vpop.f32.mrb[0].mxu0
    %v4006 = vpop.f32.mrb[0].mxu0
    %v4007 = vadd.f32 0.0, %v4006
    %v4008 = vpop.f32.mrb[0].mxu0
    %4009 = vmatprep.mubr.bf16.mxu0 0
    %4010 = vmatmul.mubr.bf16.gmra.mrb[0].mxu0 %v236
    %v4011 = vpop.f32.mrb[0].mxu0
    %v4012 = vadd.f32 0.0, %v4011
    %v4013 = vpop.f32.mrb[0].mxu0
    %v4014 = vpop.f32.mrb[0].mxu0
    %v4015 = vadd.f32 0.0, %v4014
    %v4016 = vpop.f32.mrb[0].mxu0
    %4017 = vmatprep.mubr.bf16.mxu0 0
    %4018 = vmatmul.mubr.bf16.gmra.mrb[0].mxu0 %v239
    %v4019 = vpop.f32.mrb[0].mxu0
    %v4020 = vadd.f32 0.0, %v4019
    %v4021 = vpop.f32.mrb[0].mxu0
    %v4022 = vpop.f32.mrb[0].mxu0
    %v4023 = vadd.f32 0.0, %v4022
    %v4024 = vpop.f32.mrb[0].mxu0
    %4025 = vmatprep.mubr.bf16.mxu0 0
    %4026 = vmatmul.mubr.bf16.gmra.mrb[0].mxu0 %v242
    %v4027 = vpop.f32.mrb[0].mxu0
    %v4028 = vadd.f32 0.0, %v4027
    %v4029 = vpop.f32.mrb[0].mxu0
    %v4030 = vpop.f32.mrb[0].mxu0
    %v4031 = vadd.f32 0.0, %v4030
    %v4032 = vpop.f32.mrb[0].mxu0
    %4033 = vmatprep.mubr.bf16.mxu0 0
    %4034 = vmatmul.mubr.bf16.gmra.mrb[0].mxu0 %v245
    %v4035 = vpop.f32.mrb[0].mxu0
    %v4036 = vadd.f32 0.0, %v4035
    %v4037 = vpop.f32.mrb[0].mxu0
    %v4038 = vpop.f32.mrb[0].mxu0
    %v4039 = vadd.f32 0.0, %v4038
    %v4040 = vpop.f32.mrb[0].mxu0
    %4041 = vmatprep.mubr.bf16.mxu0 0
    %4042 = vmatmul.mubr.bf16.gmra.mrb[0].mxu0 %v248
    %v4043 = vpop.f32.mrb[0].mxu0
    %v4044 = vadd.f32 0.0, %v4043
    %v4045 = vpop.f32.mrb[0].mxu0
    %v4046 = vpop.f32.mrb[0].mxu0
    %v4047 = vadd.f32 0.0, %v4046
    %v4048 = vpop.f32.mrb[0].mxu0
    %4049 = vmatprep.mubr.bf16.mxu0 0
    %4050 = vmatmul.mubr.bf16.gmra.mrb[0].mxu0 %v251
    %v4051 = vpop.f32.mrb[0].mxu0
    %v4052 = vadd.f32 0.0, %v4051
    %v4053 = vpop.f32.mrb[0].mxu0
    %v4054 = vpop.f32.mrb[0].mxu0
    %v4055 = vadd.f32 0.0, %v4054
    %v4056 = vpop.f32.mrb[0].mxu0
    %4057 = vmatprep.mubr.bf16.mxu0 0
    %4058 = vmatmul.mubr.bf16.gmra.mrb[0].mxu0 %v254
    %v4059 = vpop.f32.mrb[0].mxu0
    %v4060 = vadd.f32 0.0, %v4059
    %v4061 = vpop.f32.mrb[0].mxu0
    %v4062 = vpop.f32.mrb[0].mxu0
    %v4063 = vadd.f32 0.0, %v4062
    %v4064 = vpop.f32.mrb[0].mxu0
    %4065 = vmatprep.mubr.bf16.mxu0 0
    %4066 = vmatmul.mubr.bf16.gmra.mrb[0].mxu0 %v3932
    %v4067 = vpop.f32.mrb[0].mxu0
    %v4068 = vadd.f32 0.0, %v4067
    %v4069 = vpop.f32.mrb[0].mxu0
    %v4070 = vpop.f32.mrb[0].mxu0
    %v4071 = vpop.f32.mrb[0].mxu0
    %4072 = vdwg.mxu0
    %v4073 = vadd.f32 %v3905, %v3972
    %v4074 = vadd.f32 %v3906, %v3975
    %v4075 = vadd.f32 %v3907, %v3980
    %v4076 = vadd.f32 %v3908, %v3983
    %v4077 = vadd.f32 %v3909, %v3988
    %v4078 = vadd.f32 %v3910, %v3991
    %v4079 = vadd.f32 %v3911, %v3996
    %v4080 = vadd.f32 %v3912, %v3999
    %v4081 = vadd.f32 %v3913, %v4004
    %v4082 = vadd.f32 %v3914, %v4007
    %v4083 = vadd.f32 %v3915, %v4012
    %v4084 = vadd.f32 %v3916, %v4015
    %v4085 = vadd.f32 %v3917, %v4020
    %v4086 = vadd.f32 %v3918, %v4023
    %v4087 = vadd.f32 %v3919, %v4028
    %v4088 = vadd.f32 %v3920, %v4031
    %v4089 = vadd.f32 %v3921, %v4036
    %v4090 = vadd.f32 %v3922, %v4039
    %v4091 = vadd.f32 %v3923, %v4044
    %v4092 = vadd.f32 %v3924, %v4047
    %v4093 = vadd.f32 %v3925, %v4052
    %v4094 = vadd.f32 %v3926, %v4055
    %v4095 = vadd.f32 %v3927, %v4060
    %v4096 = vadd.f32 %v3928, %v4063
    %v4097 = vadd.f32 %v3929, %v4068
    %v4098 = vpack.c.b16 %v192, %v191
    %v4099 = vpack.c.b16 %v193, %v193
    %v4101 = vsel %vm210, %v4098, 0
    %v4104 = vsel %vm210, %v4099, 0
    %v4107 = vsel %vm259, %v2914, 0
    %4109 = vmatprep.subr.bf16.mxu0 0
    %4110 = vmatpush1.bf16.msra.mxu0 %v4107
    %4111 = vmatprep.subr.bf16.mxu0 0
    %4112 = vmatpush1.bf16.msra.mxu0 0
    %4113 = vmatprep.subr.bf16.mxu0 0
    %4114 = vmatpush1.bf16.msra.mxu0 0
    %4115 = vmatprep.subr.bf16.mxu0 0
    %4116 = vmatpush1.bf16.msra.mxu0 0
    %4117 = vmatprep.subr.bf16.mxu0 0
    %4118 = vmatpush1.bf16.msra.mxu0 0
    %4119 = vmatprep.subr.bf16.mxu0 0
    %4120 = vmatpush1.bf16.msra.mxu0 0
    %4121 = vmatprep.subr.bf16.mxu0 0
    %4122 = vmatpush1.bf16.msra.mxu0 0
    %4123 = vmatprep.subr.bf16.mxu0 0
    %4124 = vmatpush1.bf16.msra.mxu0 0
    %4125 = vmatprep.subr.bf16.mxu0 0
    %4126 = vmatpush1.bf16.msra.mxu0 0
    %4127 = vmatprep.subr.bf16.mxu0 0
    %4128 = vmatpush1.bf16.msra.mxu0 0
    %4129 = vmatprep.subr.bf16.mxu0 0
    %4130 = vmatpush1.bf16.msra.mxu0 0
    %4131 = vmatprep.subr.bf16.mxu0 0
    %4132 = vmatpush1.bf16.msra.mxu0 0
    %4133 = vmatprep.subr.bf16.mxu0 0
    %4134 = vmatpush1.bf16.msra.mxu0 0
    %4135 = vmatprep.subr.bf16.mxu0 0
    %4136 = vmatpush1.bf16.msra.mxu0 0
    %4137 = vmatprep.subr.bf16.mxu0 0
    %4138 = vmatpush1.bf16.msra.mxu0 0
    %4139 = vmatprep.subr.bf16.mxu0 0
    %4140 = vmatpush1.bf16.msra.mxu0 0
    %4141 = vmatprep.mubr.bf16.mxu0 0
    %4142 = vmatmul.mubr.bf16.gmra.mrb[0].mxu0 %v2939
    %v4143 = vpop.f32.mrb[0].mxu0
    %v4144 = vadd.f32 0.0, %v4143
    %v4145 = vpop.f32.mrb[0].mxu0
    %v4146 = vpop.f32.mrb[0].mxu0
    %v4147 = vadd.f32 0.0, %v4146
    %v4148 = vpop.f32.mrb[0].mxu0
    %4149 = vmatprep.mubr.bf16.mxu0 0
    %4150 = vmatmul.mubr.bf16.gmra.mrb[0].mxu0 %v2942
    %v4151 = vpop.f32.mrb[0].mxu0
    %v4152 = vadd.f32 0.0, %v4151
    %v4153 = vpop.f32.mrb[0].mxu0
    %v4154 = vpop.f32.mrb[0].mxu0
    %v4155 = vadd.f32 0.0, %v4154
    %v4156 = vpop.f32.mrb[0].mxu0
    %4157 = vmatprep.mubr.bf16.mxu0 0
    %4158 = vmatmul.mubr.bf16.gmra.mrb[0].mxu0 %v2945
    %v4159 = vpop.f32.mrb[0].mxu0
    %v4160 = vadd.f32 0.0, %v4159
    %v4161 = vpop.f32.mrb[0].mxu0
    %v4162 = vpop.f32.mrb[0].mxu0
    %v4163 = vadd.f32 0.0, %v4162
    %v4164 = vpop.f32.mrb[0].mxu0
    %4165 = vmatprep.mubr.bf16.mxu0 0
    %4166 = vmatmul.mubr.bf16.gmra.mrb[0].mxu0 %v2948
    %v4167 = vpop.f32.mrb[0].mxu0
    %v4168 = vadd.f32 0.0, %v4167
    %v4169 = vpop.f32.mrb[0].mxu0
    %v4170 = vpop.f32.mrb[0].mxu0
    %v4171 = vadd.f32 0.0, %v4170
    %v4172 = vpop.f32.mrb[0].mxu0
    %4173 = vmatprep.mubr.bf16.mxu0 0
    %4174 = vmatmul.mubr.bf16.gmra.mrb[0].mxu0 %v2951
    %v4175 = vpop.f32.mrb[0].mxu0
    %v4176 = vadd.f32 0.0, %v4175
    %v4177 = vpop.f32.mrb[0].mxu0
    %v4178 = vpop.f32.mrb[0].mxu0
    %v4179 = vadd.f32 0.0, %v4178
    %v4180 = vpop.f32.mrb[0].mxu0
    %4181 = vmatprep.mubr.bf16.mxu0 0
    %4182 = vmatmul.mubr.bf16.gmra.mrb[0].mxu0 %v2954
    %v4183 = vpop.f32.mrb[0].mxu0
    %v4184 = vadd.f32 0.0, %v4183
    %v4185 = vpop.f32.mrb[0].mxu0
    %v4186 = vpop.f32.mrb[0].mxu0
    %v4187 = vadd.f32 0.0, %v4186
    %v4188 = vpop.f32.mrb[0].mxu0
    %4189 = vmatprep.mubr.bf16.mxu0 0
    %4190 = vmatmul.mubr.bf16.gmra.mrb[0].mxu0 %v2957
    %v4191 = vpop.f32.mrb[0].mxu0
    %v4192 = vadd.f32 0.0, %v4191
    %v4193 = vpop.f32.mrb[0].mxu0
    %v4194 = vpop.f32.mrb[0].mxu0
    %v4195 = vadd.f32 0.0, %v4194
    %v4196 = vpop.f32.mrb[0].mxu0
    %4197 = vmatprep.mubr.bf16.mxu0 0
    %4198 = vmatmul.mubr.bf16.gmra.mrb[0].mxu0 %v2960
    %v4199 = vpop.f32.mrb[0].mxu0
    %v4200 = vadd.f32 0.0, %v4199
    %v4201 = vpop.f32.mrb[0].mxu0
    %v4202 = vpop.f32.mrb[0].mxu0
    %v4203 = vadd.f32 0.0, %v4202
    %v4204 = vpop.f32.mrb[0].mxu0
    %4205 = vmatprep.mubr.bf16.mxu0 0
    %4206 = vmatmul.mubr.bf16.gmra.mrb[0].mxu0 %v2963
    %v4207 = vpop.f32.mrb[0].mxu0
    %v4208 = vadd.f32 0.0, %v4207
    %v4209 = vpop.f32.mrb[0].mxu0
    %v4210 = vpop.f32.mrb[0].mxu0
    %v4211 = vadd.f32 0.0, %v4210
    %v4212 = vpop.f32.mrb[0].mxu0
    %4213 = vmatprep.mubr.bf16.mxu0 0
    %4214 = vmatmul.mubr.bf16.gmra.mrb[0].mxu0 %v3421
    %v4215 = vpop.f32.mrb[0].mxu0
    %v4216 = vadd.f32 0.0, %v4215
    %v4217 = vpop.f32.mrb[0].mxu0
    %v4218 = vpop.f32.mrb[0].mxu0
    %v4219 = vadd.f32 0.0, %v4218
    %v4220 = vpop.f32.mrb[0].mxu0
    %4221 = vmatprep.mubr.bf16.mxu0 0
    %4222 = vmatmul.mubr.bf16.gmra.mrb[0].mxu0 %v3761
    %v4223 = vpop.f32.mrb[0].mxu0
    %v4224 = vadd.f32 0.0, %v4223
    %v4225 = vpop.f32.mrb[0].mxu0
    %v4226 = vpop.f32.mrb[0].mxu0
    %v4227 = vadd.f32 0.0, %v4226
    %v4228 = vpop.f32.mrb[0].mxu0
    %4229 = vmatprep.mubr.bf16.mxu0 0
    %4230 = vmatmul.mubr.bf16.gmra.mrb[0].mxu0 %v4101
    %v4231 = vpop.f32.mrb[0].mxu0
    %v4232 = vadd.f32 0.0, %v4231
    %v4233 = vpop.f32.mrb[0].mxu0
    %v4234 = vpop.f32.mrb[0].mxu0
    %v4235 = vadd.f32 0.0, %v4234
    %v4236 = vpop.f32.mrb[0].mxu0
    %4237 = vmatprep.mubr.bf16.mxu0 0
    %4238 = vmatmul.mubr.bf16.gmra.mrb[0].mxu0 %v4104
    %v4239 = vpop.f32.mrb[0].mxu0
    %v4240 = vadd.f32 0.0, %v4239
    %v4241 = vpop.f32.mrb[0].mxu0
    %v4242 = vpop.f32.mrb[0].mxu0
    %v4243 = vpop.f32.mrb[0].mxu0
    %4244 = vdwg.mxu0
    %v4245 = vadd.f32 %v4073, %v4144
    %v4246 = vadd.f32 %v4074, %v4147
    %v4247 = vadd.f32 %v4075, %v4152
    %v4248 = vadd.f32 %v4076, %v4155
    %v4249 = vadd.f32 %v4077, %v4160
    %v4250 = vadd.f32 %v4078, %v4163
    %v4251 = vadd.f32 %v4079, %v4168
    %v4252 = vadd.f32 %v4080, %v4171
    %v4253 = vadd.f32 %v4081, %v4176
    %v4254 = vadd.f32 %v4082, %v4179
    %v4255 = vadd.f32 %v4083, %v4184
    %v4256 = vadd.f32 %v4084, %v4187
    %v4257 = vadd.f32 %v4085, %v4192
    %v4258 = vadd.f32 %v4086, %v4195
    %v4259 = vadd.f32 %v4087, %v4200
    %v4260 = vadd.f32 %v4088, %v4203
    %v4261 = vadd.f32 %v4089, %v4208
    %v4262 = vadd.f32 %v4090, %v4211
    %v4263 = vadd.f32 %v4091, %v4216
    %v4264 = vadd.f32 %v4092, %v4219
    %v4265 = vadd.f32 %v4093, %v4224
    %v4266 = vadd.f32 %v4094, %v4227
    %v4267 = vadd.f32 %v4095, %v4232
    %v4268 = vadd.f32 %v4096, %v4235
    %v4269 = vadd.f32 %v4097, %v4240
    %v4270 = vlaneseq
    %v4271 = vshrl.u32 %v4270, 7
    %v4272 = vsub.s32 0, %v4271
    %v4273 = vrot.slane %v2915, %v4272
    %v4274 = vadd.f32 %v4245, %v4273
    %v4275 = vadd.f32 %v4246, %v4273
    %v4276 = vadd.f32 %v4247, %v4273
    %v4277 = vadd.f32 %v4248, %v4273
    %v4278 = vadd.f32 %v4249, %v4273
    %v4279 = vadd.f32 %v4250, %v4273
    %v4280 = vadd.f32 %v4251, %v4273
    %v4281 = vadd.f32 %v4252, %v4273
    %v4282 = vadd.f32 %v4253, %v4273
    %v4283 = vadd.f32 %v4254, %v4273
    %v4284 = vadd.f32 %v4255, %v4273
    %v4285 = vadd.f32 %v4256, %v4273
    %v4286 = vadd.f32 %v4257, %v4273
    %v4287 = vadd.f32 %v4258, %v4273
    %v4288 = vadd.f32 %v4259, %v4273
    %v4289 = vadd.f32 %v4260, %v4273
    %v4290 = vadd.f32 %v4261, %v4273
    %v4291 = vadd.f32 %v4262, %v4273
    %v4292 = vadd.f32 %v4263, %v4273
    %v4293 = vadd.f32 %v4264, %v4273
    %v4294 = vadd.f32 %v4265, %v4273
    %v4295 = vadd.f32 %v4266, %v4273
    %v4296 = vadd.f32 %v4267, %v4273
    %v4297 = vadd.f32 %v4268, %v4273
    %v4298 = vadd.f32 %v4269, %v4273
    %vm4299 = vcmask 261120
    %v4300 = vsel %vm4299, %v4274, 0.0
    %v4301 = vsel %vm4299, %v4275, 0.0
    %v4302 = vadd.f32 %v4300, %v4301
    %v4303 = vsel %vm4299, %v4276, 0.0
    %v4304 = vadd.f32 %v4302, %v4303
    %v4305 = vsel %vm4299, %v4277, 0.0
    %v4306 = vadd.f32 %v4304, %v4305
    %v4307 = vsel %vm4299, %v4278, 0.0
    %v4308 = vadd.f32 %v4306, %v4307
    %v4309 = vsel %vm4299, %v4279, 0.0
    %v4310 = vadd.f32 %v4308, %v4309
    %v4311 = vsel %vm4299, %v4280, 0.0
    %v4312 = vadd.f32 %v4310, %v4311
    %v4313 = vsel %vm4299, %v4281, 0.0
    %v4314 = vadd.f32 %v4312, %v4313
    %v4315 = vsel %vm4299, %v4282, 0.0
    %v4316 = vadd.f32 %v4314, %v4315
    %v4317 = vsel %vm4299, %v4283, 0.0
    %v4318 = vadd.f32 %v4316, %v4317
    %v4319 = vsel %vm4299, %v4284, 0.0
    %v4320 = vadd.f32 %v4318, %v4319
    %v4321 = vsel %vm4299, %v4285, 0.0
    %v4322 = vadd.f32 %v4320, %v4321
    %v4323 = vsel %vm4299, %v4286, 0.0
    %v4324 = vadd.f32 %v4322, %v4323
    %v4325 = vsel %vm4299, %v4287, 0.0
    %v4326 = vadd.f32 %v4324, %v4325
    %v4327 = vsel %vm4299, %v4288, 0.0
    %v4328 = vadd.f32 %v4326, %v4327
    %v4329 = vsel %vm4299, %v4289, 0.0
    %v4330 = vadd.f32 %v4328, %v4329
    %v4331 = vsel %vm4299, %v4290, 0.0
    %v4332 = vadd.f32 %v4330, %v4331
    %v4333 = vsel %vm4299, %v4291, 0.0
    %v4334 = vadd.f32 %v4332, %v4333
    %v4335 = vsel %vm4299, %v4292, 0.0
    %v4336 = vadd.f32 %v4334, %v4335
    %v4337 = vsel %vm4299, %v4293, 0.0
    %v4338 = vadd.f32 %v4336, %v4337
    %v4339 = vsel %vm4299, %v4294, 0.0
    %v4340 = vadd.f32 %v4338, %v4339
    %v4341 = vsel %vm4299, %v4295, 0.0
    %v4342 = vadd.f32 %v4340, %v4341
    %v4343 = vsel %vm4299, %v4296, 0.0
    %v4344 = vadd.f32 %v4342, %v4343
    %v4345 = vsel %vm4299, %v4297, 0.0
    %v4346 = vadd.f32 %v4344, %v4345
    %v4347 = vsel %vm4299, %v4298, 0.0
    %v4348 = vadd.f32 %v4346, %v4347
    %v4349 = vrot.slane %v4348, 4
    %v4350 = vadd.f32 %v4348, %v4349
    %v4351 = vrot.slane %v4350, 2
    %v4352 = vadd.f32 %v4350, %v4351
    %v4353 = vrot.slane %v4352, 1
    %v4354 = vadd.f32 %v4352, %v4353
    %v4355 = vrcp.pop 200.0
    %v4356 = vmul.f32 %v4354, %v4355
    %v4357 = vsub.f32 %v4274, %v4356
    %v4358 = vsub.f32 %v4275, %v4356
    %v4359 = vsub.f32 %v4276, %v4356
    %v4360 = vsub.f32 %v4277, %v4356
    %v4361 = vsub.f32 %v4278, %v4356
    %v4362 = vsub.f32 %v4279, %v4356
    %v4363 = vsub.f32 %v4280, %v4356
    %v4364 = vsub.f32 %v4281, %v4356
    %v4365 = vsub.f32 %v4282, %v4356
    %v4366 = vsub.f32 %v4283, %v4356
    %v4367 = vsub.f32 %v4284, %v4356
    %v4368 = vsub.f32 %v4285, %v4356
    %v4369 = vsub.f32 %v4286, %v4356
    %v4370 = vsub.f32 %v4287, %v4356
    %v4371 = vsub.f32 %v4288, %v4356
    %v4372 = vsub.f32 %v4289, %v4356
    %v4373 = vsub.f32 %v4290, %v4356
    %v4374 = vsub.f32 %v4291, %v4356
    %v4375 = vsub.f32 %v4292, %v4356
    %v4376 = vsub.f32 %v4293, %v4356
    %v4377 = vsub.f32 %v4294, %v4356
    %v4378 = vsub.f32 %v4295, %v4356
    %v4379 = vsub.f32 %v4296, %v4356
    %v4380 = vsub.f32 %v4297, %v4356
    %v4381 = vsub.f32 %v4298, %v4356
    %v4382 = vmul.f32 %v4357, %v4357
    %v4383 = vmul.f32 %v4358, %v4358
    %v4384 = vmul.f32 %v4359, %v4359
    %v4385 = vmul.f32 %v4360, %v4360
    %v4386 = vmul.f32 %v4361, %v4361
    %v4387 = vmul.f32 %v4362, %v4362
    %v4388 = vmul.f32 %v4363, %v4363
    %v4389 = vmul.f32 %v4364, %v4364
    %v4390 = vmul.f32 %v4365, %v4365
    %v4391 = vmul.f32 %v4366, %v4366
    %v4392 = vmul.f32 %v4367, %v4367
    %v4393 = vmul.f32 %v4368, %v4368
    %v4394 = vmul.f32 %v4369, %v4369
    %v4395 = vmul.f32 %v4370, %v4370
    %v4396 = vmul.f32 %v4371, %v4371
    %v4397 = vmul.f32 %v4372, %v4372
    %v4398 = vmul.f32 %v4373, %v4373
    %v4399 = vmul.f32 %v4374, %v4374
    %v4400 = vmul.f32 %v4375, %v4375
    %v4401 = vmul.f32 %v4376, %v4376
    %v4402 = vmul.f32 %v4377, %v4377
    %v4403 = vmul.f32 %v4378, %v4378
    %v4404 = vmul.f32 %v4379, %v4379
    %v4405 = vmul.f32 %v4380, %v4380
    %v4406 = vmul.f32 %v4381, %v4381
    %v4407 = vsel %vm4299, %v4382, 0.0
    %v4408 = vsel %vm4299, %v4383, 0.0
    %v4409 = vadd.f32 %v4407, %v4408
    %v4410 = vsel %vm4299, %v4384, 0.0
    %v4411 = vadd.f32 %v4409, %v4410
    %v4412 = vsel %vm4299, %v4385, 0.0
    %v4413 = vadd.f32 %v4411, %v4412
    %v4414 = vsel %vm4299, %v4386, 0.0
    %v4415 = vadd.f32 %v4413, %v4414
    %v4416 = vsel %vm4299, %v4387, 0.0
    %v4417 = vadd.f32 %v4415, %v4416
    %v4418 = vsel %vm4299, %v4388, 0.0
    %v4419 = vadd.f32 %v4417, %v4418
    %v4420 = vsel %vm4299, %v4389, 0.0
    %v4421 = vadd.f32 %v4419, %v4420
    %v4422 = vsel %vm4299, %v4390, 0.0
    %v4423 = vadd.f32 %v4421, %v4422
    %v4424 = vsel %vm4299, %v4391, 0.0
    %v4425 = vadd.f32 %v4423, %v4424
    %v4426 = vsel %vm4299, %v4392, 0.0
    %v4427 = vadd.f32 %v4425, %v4426
    %v4428 = vsel %vm4299, %v4393, 0.0
    %v4429 = vadd.f32 %v4427, %v4428
    %v4430 = vsel %vm4299, %v4394, 0.0
    %v4431 = vadd.f32 %v4429, %v4430
    %v4432 = vsel %vm4299, %v4395, 0.0
    %v4433 = vadd.f32 %v4431, %v4432
    %v4434 = vsel %vm4299, %v4396, 0.0
    %v4435 = vadd.f32 %v4433, %v4434
    %v4436 = vsel %vm4299, %v4397, 0.0
    %v4437 = vadd.f32 %v4435, %v4436
    %v4438 = vsel %vm4299, %v4398, 0.0
    %v4439 = vadd.f32 %v4437, %v4438
    %v4440 = vsel %vm4299, %v4399, 0.0
    %v4441 = vadd.f32 %v4439, %v4440
    %v4442 = vsel %vm4299, %v4400, 0.0
    %v4443 = vadd.f32 %v4441, %v4442
    %v4444 = vsel %vm4299, %v4401, 0.0
    %v4445 = vadd.f32 %v4443, %v4444
    %v4446 = vsel %vm4299, %v4402, 0.0
    %v4447 = vadd.f32 %v4445, %v4446
    %v4448 = vsel %vm4299, %v4403, 0.0
    %v4449 = vadd.f32 %v4447, %v4448
    %v4450 = vsel %vm4299, %v4404, 0.0
    %v4451 = vadd.f32 %v4449, %v4450
    %v4452 = vsel %vm4299, %v4405, 0.0
    %v4453 = vadd.f32 %v4451, %v4452
    %v4454 = vsel %vm4299, %v4406, 0.0
    %v4455 = vadd.f32 %v4453, %v4454
    %v4456 = vrot.slane %v4455, 4
    %v4457 = vadd.f32 %v4455, %v4456
    %v4458 = vrot.slane %v4457, 2
    %v4459 = vadd.f32 %v4457, %v4458
    %v4460 = vrot.slane %v4459, 1
    %v4461 = vadd.f32 %v4459, %v4460
    %v4462 = vmul.f32 %v4461, %v4355
    %v4463 = vadd.f32 %v4462, 1e-05
    %v4464 = vrsqrt.pop %v4463
    %v4465 = vmul.f32 %v4357, %v4464
    %v4466 = vmul.f32 %v4358, %v4464
    %v4467 = vmul.f32 %v4359, %v4464
    %v4468 = vmul.f32 %v4360, %v4464
    %v4469 = vmul.f32 %v4361, %v4464
    %v4470 = vmul.f32 %v4362, %v4464
    %v4471 = vmul.f32 %v4363, %v4464
    %v4472 = vmul.f32 %v4364, %v4464
    %v4473 = vmul.f32 %v4365, %v4464
    %v4474 = vmul.f32 %v4366, %v4464
    %v4475 = vmul.f32 %v4367, %v4464
    %v4476 = vmul.f32 %v4368, %v4464
    %v4477 = vmul.f32 %v4369, %v4464
    %v4478 = vmul.f32 %v4370, %v4464
    %v4479 = vmul.f32 %v4371, %v4464
    %v4480 = vmul.f32 %v4372, %v4464
    %v4481 = vmul.f32 %v4373, %v4464
    %v4482 = vmul.f32 %v4374, %v4464
    %v4483 = vmul.f32 %v4375, %v4464
    %v4484 = vmul.f32 %v4376, %v4464
    %v4485 = vmul.f32 %v4377, %v4464
    %v4486 = vmul.f32 %v4378, %v4464
    %v4487 = vmul.f32 %v4379, %v4464
    %v4488 = vmul.f32 %v4380, %v4464
    %v4489 = vmul.f32 %v4381, %v4464
    %v4490 = vlaneseq
    %v4491 = vshrl.u32 %v4490, 7
    %v4492 = vsub.s32 1, %v4491
    %v4493 = vrot.slane %v2915, %v4492
    %v4494 = vmul.f32 %v4465, %v4493
    %v4495 = vmul.f32 %v4466, %v4493
    %v4496 = vmul.f32 %v4467, %v4493
    %v4497 = vmul.f32 %v4468, %v4493
    %v4498 = vmul.f32 %v4469, %v4493
    %v4499 = vmul.f32 %v4470, %v4493
    %v4500 = vmul.f32 %v4471, %v4493
    %v4501 = vmul.f32 %v4472, %v4493
    %v4502 = vmul.f32 %v4473, %v4493
    %v4503 = vmul.f32 %v4474, %v4493
    %v4504 = vmul.f32 %v4475, %v4493
    %v4505 = vmul.f32 %v4476, %v4493
    %v4506 = vmul.f32 %v4477, %v4493
    %v4507 = vmul.f32 %v4478, %v4493
    %v4508 = vmul.f32 %v4479, %v4493
    %v4509 = vmul.f32 %v4480, %v4493
    %v4510 = vmul.f32 %v4481, %v4493
    %v4511 = vmul.f32 %v4482, %v4493
    %v4512 = vmul.f32 %v4483, %v4493
    %v4513 = vmul.f32 %v4484, %v4493
    %v4514 = vmul.f32 %v4485, %v4493
    %v4515 = vmul.f32 %v4486, %v4493
    %v4516 = vmul.f32 %v4487, %v4493
    %v4517 = vmul.f32 %v4488, %v4493
    %v4518 = vmul.f32 %v4489, %v4493
    %v4519 = vlaneseq
    %v4520 = vshrl.u32 %v4519, 7
    %v4521 = vsub.s32 2, %v4520
    %v4522 = vrot.slane %v2915, %v4521
    %v4523 = vadd.f32 %v4494, %v4522
    %v4524 = vadd.f32 %v4495, %v4522
    %v4525 = vadd.f32 %v4496, %v4522
    %v4526 = vadd.f32 %v4497, %v4522
    %v4527 = vadd.f32 %v4498, %v4522
    %v4528 = vadd.f32 %v4499, %v4522
    %v4529 = vadd.f32 %v4500, %v4522
    %v4530 = vadd.f32 %v4501, %v4522
    %v4531 = vadd.f32 %v4502, %v4522
    %v4532 = vadd.f32 %v4503, %v4522
    %v4533 = vadd.f32 %v4504, %v4522
    %v4534 = vadd.f32 %v4505, %v4522
    %v4535 = vadd.f32 %v4506, %v4522
    %v4536 = vadd.f32 %v4507, %v4522
    %v4537 = vadd.f32 %v4508, %v4522
    %v4538 = vadd.f32 %v4509, %v4522
    %v4539 = vadd.f32 %v4510, %v4522
    %v4540 = vadd.f32 %v4511, %v4522
    %v4541 = vadd.f32 %v4512, %v4522
    %v4542 = vadd.f32 %v4513, %v4522
    %v4543 = vadd.f32 %v4514, %v4522
    %v4544 = vadd.f32 %v4515, %v4522
    %v4545 = vadd.f32 %v4516, %v4522
    %v4546 = vadd.f32 %v4517, %v4522
    %v4547 = vadd.f32 %v4518, %v4522
    %v4548 = vmax.f32 %v4523, 0.0
    %v4549 = vmax.f32 %v4524, 0.0
    %v4550 = vmax.f32 %v4525, 0.0
    %v4551 = vmax.f32 %v4526, 0.0
    %v4552 = vmax.f32 %v4527, 0.0
    %v4553 = vmax.f32 %v4528, 0.0
    %v4554 = vmax.f32 %v4529, 0.0
    %v4555 = vmax.f32 %v4530, 0.0
    %v4556 = vmax.f32 %v4531, 0.0
    %v4557 = vmax.f32 %v4532, 0.0
    %v4558 = vmax.f32 %v4533, 0.0
    %v4559 = vmax.f32 %v4534, 0.0
    %v4560 = vmax.f32 %v4535, 0.0
    %v4561 = vmax.f32 %v4536, 0.0
    %v4562 = vmax.f32 %v4537, 0.0
    %v4563 = vmax.f32 %v4538, 0.0
    %v4564 = vmax.f32 %v4539, 0.0
    %v4565 = vmax.f32 %v4540, 0.0
    %v4566 = vmax.f32 %v4541, 0.0
    %v4567 = vmax.f32 %v4542, 0.0
    %v4568 = vmax.f32 %v4543, 0.0
    %v4569 = vmax.f32 %v4544, 0.0
    %v4570 = vmax.f32 %v4545, 0.0
    %v4571 = vmax.f32 %v4546, 0.0
    %v4572 = vmax.f32 %v4547, 0.0
    %v4573 = vsel %vm4299, %v4548, 0.0
    %v4574 = vsel %vm4299, %v4549, 0.0
    %v4575 = vadd.f32 %v4573, %v4574
    %v4576 = vsel %vm4299, %v4550, 0.0
    %v4577 = vadd.f32 %v4575, %v4576
    %v4578 = vsel %vm4299, %v4551, 0.0
    %v4579 = vadd.f32 %v4577, %v4578
    %v4580 = vsel %vm4299, %v4552, 0.0
    %v4581 = vadd.f32 %v4579, %v4580
    %v4582 = vsel %vm4299, %v4553, 0.0
    %v4583 = vadd.f32 %v4581, %v4582
    %v4584 = vsel %vm4299, %v4554, 0.0
    %v4585 = vadd.f32 %v4583, %v4584
    %v4586 = vsel %vm4299, %v4555, 0.0
    %v4587 = vadd.f32 %v4585, %v4586
    %v4588 = vsel %vm4299, %v4556, 0.0
    %v4589 = vadd.f32 %v4587, %v4588
    %v4590 = vsel %vm4299, %v4557, 0.0
    %v4591 = vadd.f32 %v4589, %v4590
    %v4592 = vsel %vm4299, %v4558, 0.0
    %v4593 = vadd.f32 %v4591, %v4592
    %v4594 = vsel %vm4299, %v4559, 0.0
    %v4595 = vadd.f32 %v4593, %v4594
    %v4596 = vsel %vm4299, %v4560, 0.0
    %v4597 = vadd.f32 %v4595, %v4596
    %v4598 = vsel %vm4299, %v4561, 0.0
    %v4599 = vadd.f32 %v4597, %v4598
    %v4600 = vsel %vm4299, %v4562, 0.0
    %v4601 = vadd.f32 %v4599, %v4600
    %v4602 = vsel %vm4299, %v4563, 0.0
    %v4603 = vadd.f32 %v4601, %v4602
    %v4604 = vsel %vm4299, %v4564, 0.0
    %v4605 = vadd.f32 %v4603, %v4604
    %v4606 = vsel %vm4299, %v4565, 0.0
    %v4607 = vadd.f32 %v4605, %v4606
    %v4608 = vsel %vm4299, %v4566, 0.0
    %v4609 = vadd.f32 %v4607, %v4608
    %v4610 = vsel %vm4299, %v4567, 0.0
    %v4611 = vadd.f32 %v4609, %v4610
    %v4612 = vsel %vm4299, %v4568, 0.0
    %v4613 = vadd.f32 %v4611, %v4612
    %v4614 = vsel %vm4299, %v4569, 0.0
    %v4615 = vadd.f32 %v4613, %v4614
    %v4616 = vsel %vm4299, %v4570, 0.0
    %v4617 = vadd.f32 %v4615, %v4616
    %v4618 = vsel %vm4299, %v4571, 0.0
    %v4619 = vadd.f32 %v4617, %v4618
    %v4620 = vsel %vm4299, %v4572, 0.0
    %v4621 = vadd.f32 %v4619, %v4620
    %v4622 = vrcp.pop 25.0
    %v4623 = vmul.f32 %v4621, %v4622
    %v4624 = vpack.c.bf16 %v4623, %v4623
    %v4625 = vld [vmem:[%s7] sm:$0xf]
    %v4626 = vld [vmem:[%s7 + $0x4] sm:$0xf]
    %v4627 = vld [vmem:[%s7 + $0x8] sm:$0xf]
    %v4628 = vld [vmem:[%s7 + $0xc] sm:$0xf]
    %v4633 = vunpack.c.l.b16 %v4625
    %v4634 = vunpack.c.l.b16 %v4626
    %v4635 = vunpack.c.l.b16 %v4627
    %v4636 = vunpack.c.l.b16 %v4628
    %v4637 = vpack.c.b16 %v4634, %v4633
    %v4638 = vpack.c.b16 %v4636, %v4635
    %v4642 = vsel %vm4299, %v4624, 0
    %4644 = vmatprep.subr.bf16.mxu0 0
    %4645 = vmatpush1.bf16.msra.mxu0 %v4637
    %4646 = vmatprep.subr.bf16.mxu0 0
    %4647 = vmatpush1.bf16.msra.mxu0 %v4638
    %4648 = vmatprep.subr.bf16.mxu0 0
    %4649 = vmatpush1.bf16.msra.mxu0 0
    %4650 = vmatprep.subr.bf16.mxu0 0
    %4651 = vmatpush1.bf16.msra.mxu0 0
    %4652 = vmatprep.subr.bf16.mxu0 0
    %4653 = vmatpush1.bf16.msra.mxu0 0
    %4654 = vmatprep.subr.bf16.mxu0 0
    %4655 = vmatpush1.bf16.msra.mxu0 0
    %4656 = vmatprep.subr.bf16.mxu0 0
    %4657 = vmatpush1.bf16.msra.mxu0 0
    %4658 = vmatprep.subr.bf16.mxu0 0
    %4659 = vmatpush1.bf16.msra.mxu0 0
    %4660 = vmatprep.subr.bf16.mxu0 0
    %4661 = vmatpush1.bf16.msra.mxu0 0
    %4662 = vmatprep.subr.bf16.mxu0 0
    %4663 = vmatpush1.bf16.msra.mxu0 0
    %4664 = vmatprep.subr.bf16.mxu0 0
    %4665 = vmatpush1.bf16.msra.mxu0 0
    %4666 = vmatprep.subr.bf16.mxu0 0
    %4667 = vmatpush1.bf16.msra.mxu0 0
    %4668 = vmatprep.subr.bf16.mxu0 0
    %4669 = vmatpush1.bf16.msra.mxu0 0
    %4670 = vmatprep.subr.bf16.mxu0 0
    %4671 = vmatpush1.bf16.msra.mxu0 0
    %4672 = vmatprep.subr.bf16.mxu0 0
    %4673 = vmatpush1.bf16.msra.mxu0 0
    %4674 = vmatprep.subr.bf16.mxu0 0
    %4675 = vmatpush1.bf16.msra.mxu0 0
    %4676 = vmatprep.mubr.bf16.mxu0 0
    %4677 = vmatmul.mubr.bf16.gmra.mrb[0].mxu0 %v4642
    %v4678 = vpop.f32.mrb[0].mxu0
    %v4679 = vadd.f32 0.0, %v4678
    %v4680 = vpop.f32.mrb[0].mxu0
    %v4681 = vpop.f32.mrb[0].mxu0
    %v4682 = vpop.f32.mrb[0].mxu0
    %4683 = vdwg.mxu0
    %v4684 = vmax.f32 %v4679, 0.0
    %v4685 = vpack.c.bf16 %v4684, %v4684
    %v4686 = vld [vmem:[%s8] sm:$0x1]
    %vm4687 = vcmask 15360
    %v4689 = vsel %vm4687, %v4685, 0
    %vm4691 = vcmask 1040384
    %v4693 = vsel %vm4691, %v4686, 0
    %4695 = vmatprep.subr.bf16.mxu0 0
    %4696 = vmatpush1.bf16.msra.mxu0 %v4693
    %4697 = vmatprep.subr.bf16.mxu0 0
    %4698 = vmatpush1.bf16.msra.mxu0 0
    %4699 = vmatprep.subr.bf16.mxu0 0
    %4700 = vmatpush1.bf16.msra.mxu0 0
    %4701 = vmatprep.subr.bf16.mxu0 0
    %4702 = vmatpush1.bf16.msra.mxu0 0
    %4703 = vmatprep.subr.bf16.mxu0 0
    %4704 = vmatpush1.bf16.msra.mxu0 0
    %4705 = vmatprep.subr.bf16.mxu0 0
    %4706 = vmatpush1.bf16.msra.mxu0 0
    %4707 = vmatprep.subr.bf16.mxu0 0
    %4708 = vmatpush1.bf16.msra.mxu0 0
    %4709 = vmatprep.subr.bf16.mxu0 0
    %4710 = vmatpush1.bf16.msra.mxu0 0
    %4711 = vmatprep.subr.bf16.mxu0 0
    %4712 = vmatpush1.bf16.msra.mxu0 0
    %4713 = vmatprep.subr.bf16.mxu0 0
    %4714 = vmatpush1.bf16.msra.mxu0 0
    %4715 = vmatprep.subr.bf16.mxu0 0
    %4716 = vmatpush1.bf16.msra.mxu0 0
    %4717 = vmatprep.subr.bf16.mxu0 0
    %4718 = vmatpush1.bf16.msra.mxu0 0
    %4719 = vmatprep.subr.bf16.mxu0 0
    %4720 = vmatpush1.bf16.msra.mxu0 0
    %4721 = vmatprep.subr.bf16.mxu0 0
    %4722 = vmatpush1.bf16.msra.mxu0 0
    %4723 = vmatprep.subr.bf16.mxu0 0
    %4724 = vmatpush1.bf16.msra.mxu0 0
    %4725 = vmatprep.subr.bf16.mxu0 0
    %4726 = vmatpush1.bf16.msra.mxu0 0
    %4727 = vmatprep.mubr.bf16.mxu0 0
    %4728 = vmatmul.mubr.bf16.gmra.mrb[0].mxu0 %v4689
    %v4729 = vpop.f32.mrb[0].mxu0
    %v4730 = vadd.f32 0.0, %v4729
    %v4731 = vpop.f32.mrb[0].mxu0
    %v4732 = vpop.f32.mrb[0].mxu0
    %v4733 = vpop.f32.mrb[0].mxu0
    %4734 = vdwg.mxu0
    %v4735 = vxor.u32 %v4730, 2147483648
    %v4736 = vmul.f32 %v4735, 1.442695
    %v4737 = vpow.pop %v4736
    %v4738 = vadd.f32 %v4737, 1.0
    %v4739 = vrcp.pop %v4738
    %v4740 = vmul.f32 1.0, %v4739
    %v4741 = vmul.f32 %v4548, %v4740
    %v4742 = vmul.f32 %v4549, %v4740
    %v4743 = vmul.f32 %v4550, %v4740
    %v4744 = vmul.f32 %v4551, %v4740
    %v4745 = vmul.f32 %v4552, %v4740
    %v4746 = vmul.f32 %v4553, %v4740
    %v4747 = vmul.f32 %v4554, %v4740
    %v4748 = vmul.f32 %v4555, %v4740
    %v4749 = vmul.f32 %v4556, %v4740
    %v4750 = vmul.f32 %v4557, %v4740
    %v4751 = vmul.f32 %v4558, %v4740
    %v4752 = vmul.f32 %v4559, %v4740
    %v4753 = vmul.f32 %v4560, %v4740
    %v4754 = vmul.f32 %v4561, %v4740
    %v4755 = vmul.f32 %v4562, %v4740
    %v4756 = vmul.f32 %v4563, %v4740
    %v4757 = vmul.f32 %v4564, %v4740
    %v4758 = vmul.f32 %v4565, %v4740
    %v4759 = vmul.f32 %v4566, %v4740
    %v4760 = vmul.f32 %v4567, %v4740
    %v4761 = vmul.f32 %v4568, %v4740
    %v4762 = vmul.f32 %v4569, %v4740
    %v4763 = vmul.f32 %v4570, %v4740
    %v4764 = vmul.f32 %v4571, %v4740
    %v4765 = vmul.f32 %v4572, %v4740
    %v4766 = vld [vmem:[%s9] sm:$0xf]
    %v4767 = vld [vmem:[%s9 + $0x4] sm:$0xf]
    %v4768 = vld [vmem:[%s9 + $0x8] sm:$0xf]
    %v4769 = vld [vmem:[%s9 + $0xc] sm:$0xf]
    %v4770 = vld [vmem:[%s9 + $0x10] sm:$0xf]
    %v4771 = vld [vmem:[%s9 + $0x14] sm:$0xf]
    %v4772 = vld [vmem:[%s9 + $0x18] sm:$0xf]
    %v4773 = vld [vmem:[%s9 + $0x1c] sm:$0xf]
    %v4774 = vld [vmem:[%s9 + $0x20] sm:$0xf]
    %v4775 = vld [vmem:[%s9 + $0x24] sm:$0xf]
    %v4776 = vld [vmem:[%s9 + $0x28] sm:$0xf]
    %v4777 = vld [vmem:[%s9 + $0x2c] sm:$0xf]
    %v4778 = vld [vmem:[%s9 + $0x30] sm:$0xf]
    %v4779 = vld [vmem:[%s9 + $0x34] sm:$0xf]
    %v4780 = vld [vmem:[%s9 + $0x38] sm:$0xf]
    %v4781 = vld [vmem:[%s9 + $0x3c] sm:$0xf]
    %v4782 = vld [vmem:[%s9 + $0x40] sm:$0xf]
    %v4783 = vld [vmem:[%s9 + $0x44] sm:$0xf]
    %v4784 = vld [vmem:[%s9 + $0x48] sm:$0xf]
    %v4785 = vld [vmem:[%s9 + $0x4c] sm:$0xf]
    %v4786 = vld [vmem:[%s10] sm:$0x7]
    %v4787 = vpack.c.bf16 %v4741, %v4741
    %v4788 = vpack.c.bf16 %v4742, %v4742
    %v4789 = vpack.c.bf16 %v4743, %v4743
    %v4790 = vpack.c.bf16 %v4744, %v4744
    %v4791 = vpack.c.bf16 %v4745, %v4745
    %v4792 = vpack.c.bf16 %v4746, %v4746
    %v4793 = vpack.c.bf16 %v4747, %v4747
    %v4794 = vpack.c.bf16 %v4748, %v4748
    %v4795 = vpack.c.bf16 %v4749, %v4749
    %v4796 = vpack.c.bf16 %v4750, %v4750
    %v4797 = vpack.c.bf16 %v4751, %v4751
    %v4798 = vpack.c.bf16 %v4752, %v4752
    %v4799 = vpack.c.bf16 %v4753, %v4753
    %v4800 = vpack.c.bf16 %v4754, %v4754
    %v4801 = vpack.c.bf16 %v4755, %v4755
    %v4802 = vpack.c.bf16 %v4756, %v4756
    %v4803 = vpack.c.bf16 %v4757, %v4757
    %v4804 = vpack.c.bf16 %v4758, %v4758
    %v4805 = vpack.c.bf16 %v4759, %v4759
    %v4806 = vpack.c.bf16 %v4760, %v4760
    %v4807 = vpack.c.bf16 %v4761, %v4761
    %v4808 = vpack.c.bf16 %v4762, %v4762
    %v4809 = vpack.c.bf16 %v4763, %v4763
    %v4810 = vpack.c.bf16 %v4764, %v4764
    %v4811 = vpack.c.bf16 %v4765, %v4765
    %v4833 = vunpack.c.l.b16 %v4788
    %v4834 = vunpack.c.l.b16 %v4789
    %v4835 = vunpack.c.l.b16 %v4790
    %v4836 = vunpack.c.l.b16 %v4791
    %v4837 = vunpack.c.l.b16 %v4792
    %v4838 = vunpack.c.l.b16 %v4793
    %v4839 = vunpack.c.l.b16 %v4794
    %v4840 = vunpack.c.l.b16 %v4795
    %v4841 = vunpack.c.l.b16 %v4796
    %v4842 = vunpack.c.l.b16 %v4797
    %v4843 = vunpack.c.l.b16 %v4798
    %v4844 = vunpack.c.l.b16 %v4799
    %v4845 = vunpack.c.l.b16 %v4800
    %v4846 = vunpack.c.l.b16 %v4801
    %v4847 = vunpack.c.l.b16 %v4802
    %v4848 = vunpack.c.l.b16 %v4803
    %v4849 = vunpack.c.l.b16 %v4804
    %v4850 = vunpack.c.l.b16 %v4805
    %v4851 = vunpack.c.l.b16 %v4806
    %v4852 = vunpack.c.l.b16 %v4807
    %v4853 = vunpack.c.l.b16 %v4808
    %v4854 = vpack.c.b16 %v4834, %v4833
    %v4855 = vpack.c.b16 %v4836, %v4835
    %v4856 = vpack.c.b16 %v4838, %v4837
    %v4857 = vpack.c.b16 %v4840, %v4839
    %v4858 = vpack.c.b16 %v4842, %v4841
    %v4859 = vpack.c.b16 %v4844, %v4843
    %v4860 = vpack.c.b16 %v4846, %v4845
    %v4861 = vpack.c.b16 %v4848, %v4847
    %v4862 = vpack.c.b16 %v4850, %v4849
    %v4863 = vpack.c.b16 %v4852, %v4851
    %v4864 = vpack.c.b16 %v4853, %v4853
    %v4869 = vunpack.c.l.b16 %v4770
    %v4870 = vunpack.c.l.b16 %v4771
    %v4871 = vunpack.c.l.b16 %v4772
    %v4872 = vunpack.c.l.b16 %v4773
    %v4873 = vpack.c.b16 %v4870, %v4869
    %v4874 = vpack.c.b16 %v4872, %v4871
    %v4878 = vsel %vm4299, %v4854, 0
    %v4881 = vsel %vm4299, %v4855, 0
    %v4884 = vsel %vm4299, %v4856, 0
    %v4887 = vsel %vm4299, %v4857, 0
    %v4890 = vsel %vm4299, %v4858, 0
    %v4893 = vsel %vm4299, %v4859, 0
    %v4896 = vsel %vm4299, %v4860, 0
    %v4899 = vsel %vm4299, %v4861, 0
    %v4902 = vsel %vm4299, %v4862, 0
    %v4905 = vsel %vm4299, %v4863, 0
    %v4908 = vsel %vm4299, %v4864, 0
    %4910 = vmatprep.subr.bf16.mxu0 0
    %4911 = vmatpush1.bf16.msra.mxu0 %v4873
    %4912 = vmatprep.subr.bf16.mxu0 0
    %4913 = vmatpush1.bf16.msra.mxu0 %v4874
    %4914 = vmatprep.subr.bf16.mxu0 0
    %4915 = vmatpush1.bf16.msra.mxu0 0
    %4916 = vmatprep.subr.bf16.mxu0 0
    %4917 = vmatpush1.bf16.msra.mxu0 0
    %4918 = vmatprep.subr.bf16.mxu0 0
    %4919 = vmatpush1.bf16.msra.mxu0 0
    %4920 = vmatprep.subr.bf16.mxu0 0
    %4921 = vmatpush1.bf16.msra.mxu0 0
    %4922 = vmatprep.subr.bf16.mxu0 0
    %4923 = vmatpush1.bf16.msra.mxu0 0
    %4924 = vmatprep.subr.bf16.mxu0 0
    %4925 = vmatpush1.bf16.msra.mxu0 0
    %4926 = vmatprep.subr.bf16.mxu0 0
    %4927 = vmatpush1.bf16.msra.mxu0 0
    %4928 = vmatprep.subr.bf16.mxu0 0
    %4929 = vmatpush1.bf16.msra.mxu0 0
    %4930 = vmatprep.subr.bf16.mxu0 0
    %4931 = vmatpush1.bf16.msra.mxu0 0
    %4932 = vmatprep.subr.bf16.mxu0 0
    %4933 = vmatpush1.bf16.msra.mxu0 0
    %4934 = vmatprep.subr.bf16.mxu0 0
    %4935 = vmatpush1.bf16.msra.mxu0 0
    %4936 = vmatprep.subr.bf16.mxu0 0
    %4937 = vmatpush1.bf16.msra.mxu0 0
    %4938 = vmatprep.subr.bf16.mxu0 0
    %4939 = vmatpush1.bf16.msra.mxu0 0
    %4940 = vmatprep.subr.bf16.mxu0 0
    %4941 = vmatpush1.bf16.msra.mxu0 0
    %4942 = vmatprep.mubr.bf16.mxu0 0
    %4943 = vmatmul.mubr.bf16.gmra.mrb[0].mxu0 %v4878
    %v4944 = vpop.f32.mrb[0].mxu0
    %v4945 = vadd.f32 0.0, %v4944
    %v4946 = vpop.f32.mrb[0].mxu0
    %v4947 = vpop.f32.mrb[0].mxu0
    %v4948 = vadd.f32 0.0, %v4947
    %v4949 = vpop.f32.mrb[0].mxu0
    %4950 = vmatprep.mubr.bf16.mxu0 0
    %4951 = vmatmul.mubr.bf16.gmra.mrb[0].mxu0 %v4881
    %v4952 = vpop.f32.mrb[0].mxu0
    %v4953 = vadd.f32 0.0, %v4952
    %v4954 = vpop.f32.mrb[0].mxu0
    %v4955 = vpop.f32.mrb[0].mxu0
    %v4956 = vadd.f32 0.0, %v4955
    %v4957 = vpop.f32.mrb[0].mxu0
    %4958 = vmatprep.mubr.bf16.mxu0 0
    %4959 = vmatmul.mubr.bf16.gmra.mrb[0].mxu0 %v4884
    %v4960 = vpop.f32.mrb[0].mxu0
    %v4961 = vadd.f32 0.0, %v4960
    %v4962 = vpop.f32.mrb[0].mxu0
    %v4963 = vpop.f32.mrb[0].mxu0
    %v4964 = vadd.f32 0.0, %v4963
    %v4965 = vpop.f32.mrb[0].mxu0
    %4966 = vmatprep.mubr.bf16.mxu0 0
    %4967 = vmatmul.mubr.bf16.gmra.mrb[0].mxu0 %v4887
    %v4968 = vpop.f32.mrb[0].mxu0
    %v4969 = vadd.f32 0.0, %v4968
    %v4970 = vpop.f32.mrb[0].mxu0
    %v4971 = vpop.f32.mrb[0].mxu0
    %v4972 = vadd.f32 0.0, %v4971
    %v4973 = vpop.f32.mrb[0].mxu0
    %4974 = vmatprep.mubr.bf16.mxu0 0
    %4975 = vmatmul.mubr.bf16.gmra.mrb[0].mxu0 %v4890
    %v4976 = vpop.f32.mrb[0].mxu0
    %v4977 = vadd.f32 0.0, %v4976
    %v4978 = vpop.f32.mrb[0].mxu0
    %v4979 = vpop.f32.mrb[0].mxu0
    %v4980 = vadd.f32 0.0, %v4979
    %v4981 = vpop.f32.mrb[0].mxu0
    %4982 = vmatprep.mubr.bf16.mxu0 0
    %4983 = vmatmul.mubr.bf16.gmra.mrb[0].mxu0 %v4893
    %v4984 = vpop.f32.mrb[0].mxu0
    %v4985 = vadd.f32 0.0, %v4984
    %v4986 = vpop.f32.mrb[0].mxu0
    %v4987 = vpop.f32.mrb[0].mxu0
    %v4988 = vadd.f32 0.0, %v4987
    %v4989 = vpop.f32.mrb[0].mxu0
    %4990 = vmatprep.mubr.bf16.mxu0 0
    %4991 = vmatmul.mubr.bf16.gmra.mrb[0].mxu0 %v4896
    %v4992 = vpop.f32.mrb[0].mxu0
    %v4993 = vadd.f32 0.0, %v4992
    %v4994 = vpop.f32.mrb[0].mxu0
    %v4995 = vpop.f32.mrb[0].mxu0
    %v4996 = vadd.f32 0.0, %v4995
    %v4997 = vpop.f32.mrb[0].mxu0
    %4998 = vmatprep.mubr.bf16.mxu0 0
    %4999 = vmatmul.mubr.bf16.gmra.mrb[0].mxu0 %v4899
    %v5000 = vpop.f32.mrb[0].mxu0
    %v5001 = vadd.f32 0.0, %v5000
    %v5002 = vpop.f32.mrb[0].mxu0
    %v5003 = vpop.f32.mrb[0].mxu0
    %v5004 = vadd.f32 0.0, %v5003
    %v5005 = vpop.f32.mrb[0].mxu0
    %5006 = vmatprep.mubr.bf16.mxu0 0
    %5007 = vmatmul.mubr.bf16.gmra.mrb[0].mxu0 %v4902
    %v5008 = vpop.f32.mrb[0].mxu0
    %v5009 = vadd.f32 0.0, %v5008
    %v5010 = vpop.f32.mrb[0].mxu0
    %v5011 = vpop.f32.mrb[0].mxu0
    %v5012 = vadd.f32 0.0, %v5011
    %v5013 = vpop.f32.mrb[0].mxu0
    %5014 = vmatprep.mubr.bf16.mxu0 0
    %5015 = vmatmul.mubr.bf16.gmra.mrb[0].mxu0 %v4905
    %v5016 = vpop.f32.mrb[0].mxu0
    %v5017 = vadd.f32 0.0, %v5016
    %v5018 = vpop.f32.mrb[0].mxu0
    %v5019 = vpop.f32.mrb[0].mxu0
    %v5020 = vadd.f32 0.0, %v5019
    %v5021 = vpop.f32.mrb[0].mxu0
    %5022 = vmatprep.mubr.bf16.mxu0 0
    %5023 = vmatmul.mubr.bf16.gmra.mrb[0].mxu0 %v4908
    %v5024 = vpop.f32.mrb[0].mxu0
    %v5025 = vadd.f32 0.0, %v5024
    %v5026 = vpop.f32.mrb[0].mxu0
    %v5027 = vpop.f32.mrb[0].mxu0
    %v5028 = vpop.f32.mrb[0].mxu0
    %5029 = vdwg.mxu0
    %v5031 = vunpack.c.l.b16 %v4787
    %v5032 = vpack.c.b16 %v4833, %v5031
    %v5033 = vpack.c.b16 %v4835, %v4834
    %v5034 = vpack.c.b16 %v4837, %v4836
    %v5035 = vpack.c.b16 %v4839, %v4838
    %v5036 = vpack.c.b16 %v4841, %v4840
    %v5037 = vpack.c.b16 %v4843, %v4842
    %v5038 = vpack.c.b16 %v4845, %v4844
    %v5039 = vpack.c.b16 %v4847, %v4846
    %v5040 = vpack.c.b16 %v4849, %v4848
    %v5041 = vpack.c.b16 %v4851, %v4850
    %v5042 = vpack.c.b16 %v4852, %v4852
    %v5047 = vunpack.c.l.b16 %v4766
    %v5048 = vunpack.c.l.b16 %v4767
    %v5049 = vunpack.c.l.b16 %v4768
    %v5050 = vunpack.c.l.b16 %v4769
    %v5051 = vpack.c.b16 %v5048, %v5047
    %v5052 = vpack.c.b16 %v5050, %v5049
    %v5056 = vsel %vm4299, %v5032, 0
    %v5059 = vsel %vm4299, %v5033, 0
    %v5062 = vsel %vm4299, %v5034, 0
    %v5065 = vsel %vm4299, %v5035, 0
    %v5068 = vsel %vm4299, %v5036, 0
    %v5071 = vsel %vm4299, %v5037, 0
    %v5074 = vsel %vm4299, %v5038, 0
    %v5077 = vsel %vm4299, %v5039, 0
    %v5080 = vsel %vm4299, %v5040, 0
    %v5083 = vsel %vm4299, %v5041, 0
    %v5086 = vsel %vm4299, %v5042, 0
    %5088 = vmatprep.subr.bf16.mxu0 0
    %5089 = vmatpush1.bf16.msra.mxu0 %v5051
    %5090 = vmatprep.subr.bf16.mxu0 0
    %5091 = vmatpush1.bf16.msra.mxu0 %v5052
    %5092 = vmatprep.subr.bf16.mxu0 0
    %5093 = vmatpush1.bf16.msra.mxu0 0
    %5094 = vmatprep.subr.bf16.mxu0 0
    %5095 = vmatpush1.bf16.msra.mxu0 0
    %5096 = vmatprep.subr.bf16.mxu0 0
    %5097 = vmatpush1.bf16.msra.mxu0 0
    %5098 = vmatprep.subr.bf16.mxu0 0
    %5099 = vmatpush1.bf16.msra.mxu0 0
    %5100 = vmatprep.subr.bf16.mxu0 0
    %5101 = vmatpush1.bf16.msra.mxu0 0
    %5102 = vmatprep.subr.bf16.mxu0 0
    %5103 = vmatpush1.bf16.msra.mxu0 0
    %5104 = vmatprep.subr.bf16.mxu0 0
    %5105 = vmatpush1.bf16.msra.mxu0 0
    %5106 = vmatprep.subr.bf16.mxu0 0
    %5107 = vmatpush1.bf16.msra.mxu0 0
    %5108 = vmatprep.subr.bf16.mxu0 0
    %5109 = vmatpush1.bf16.msra.mxu0 0
    %5110 = vmatprep.subr.bf16.mxu0 0
    %5111 = vmatpush1.bf16.msra.mxu0 0
    %5112 = vmatprep.subr.bf16.mxu0 0
    %5113 = vmatpush1.bf16.msra.mxu0 0
    %5114 = vmatprep.subr.bf16.mxu0 0
    %5115 = vmatpush1.bf16.msra.mxu0 0
    %5116 = vmatprep.subr.bf16.mxu0 0
    %5117 = vmatpush1.bf16.msra.mxu0 0
    %5118 = vmatprep.subr.bf16.mxu0 0
    %5119 = vmatpush1.bf16.msra.mxu0 0
    %5120 = vmatprep.mubr.bf16.mxu0 0
    %5121 = vmatmul.mubr.bf16.gmra.mrb[0].mxu0 %v5056
    %v5122 = vpop.f32.mrb[0].mxu0
    %v5123 = vadd.f32 %v4945, %v5122
    %v5124 = vpop.f32.mrb[0].mxu0
    %v5125 = vpop.f32.mrb[0].mxu0
    %v5126 = vadd.f32 %v4948, %v5125
    %v5127 = vpop.f32.mrb[0].mxu0
    %5128 = vmatprep.mubr.bf16.mxu0 0
    %5129 = vmatmul.mubr.bf16.gmra.mrb[0].mxu0 %v5059
    %v5130 = vpop.f32.mrb[0].mxu0
    %v5131 = vadd.f32 %v4953, %v5130
    %v5132 = vpop.f32.mrb[0].mxu0
    %v5133 = vpop.f32.mrb[0].mxu0
    %v5134 = vadd.f32 %v4956, %v5133
    %v5135 = vpop.f32.mrb[0].mxu0
    %5136 = vmatprep.mubr.bf16.mxu0 0
    %5137 = vmatmul.mubr.bf16.gmra.mrb[0].mxu0 %v5062
    %v5138 = vpop.f32.mrb[0].mxu0
    %v5139 = vadd.f32 %v4961, %v5138
    %v5140 = vpop.f32.mrb[0].mxu0
    %v5141 = vpop.f32.mrb[0].mxu0
    %v5142 = vadd.f32 %v4964, %v5141
    %v5143 = vpop.f32.mrb[0].mxu0
    %5144 = vmatprep.mubr.bf16.mxu0 0
    %5145 = vmatmul.mubr.bf16.gmra.mrb[0].mxu0 %v5065
    %v5146 = vpop.f32.mrb[0].mxu0
    %v5147 = vadd.f32 %v4969, %v5146
    %v5148 = vpop.f32.mrb[0].mxu0
    %v5149 = vpop.f32.mrb[0].mxu0
    %v5150 = vadd.f32 %v4972, %v5149
    %v5151 = vpop.f32.mrb[0].mxu0
    %5152 = vmatprep.mubr.bf16.mxu0 0
    %5153 = vmatmul.mubr.bf16.gmra.mrb[0].mxu0 %v5068
    %v5154 = vpop.f32.mrb[0].mxu0
    %v5155 = vadd.f32 %v4977, %v5154
    %v5156 = vpop.f32.mrb[0].mxu0
    %v5157 = vpop.f32.mrb[0].mxu0
    %v5158 = vadd.f32 %v4980, %v5157
    %v5159 = vpop.f32.mrb[0].mxu0
    %5160 = vmatprep.mubr.bf16.mxu0 0
    %5161 = vmatmul.mubr.bf16.gmra.mrb[0].mxu0 %v5071
    %v5162 = vpop.f32.mrb[0].mxu0
    %v5163 = vadd.f32 %v4985, %v5162
    %v5164 = vpop.f32.mrb[0].mxu0
    %v5165 = vpop.f32.mrb[0].mxu0
    %v5166 = vadd.f32 %v4988, %v5165
    %v5167 = vpop.f32.mrb[0].mxu0
    %5168 = vmatprep.mubr.bf16.mxu0 0
    %5169 = vmatmul.mubr.bf16.gmra.mrb[0].mxu0 %v5074
    %v5170 = vpop.f32.mrb[0].mxu0
    %v5171 = vadd.f32 %v4993, %v5170
    %v5172 = vpop.f32.mrb[0].mxu0
    %v5173 = vpop.f32.mrb[0].mxu0
    %v5174 = vadd.f32 %v4996, %v5173
    %v5175 = vpop.f32.mrb[0].mxu0
    %5176 = vmatprep.mubr.bf16.mxu0 0
    %5177 = vmatmul.mubr.bf16.gmra.mrb[0].mxu0 %v5077
    %v5178 = vpop.f32.mrb[0].mxu0
    %v5179 = vadd.f32 %v5001, %v5178
    %v5180 = vpop.f32.mrb[0].mxu0
    %v5181 = vpop.f32.mrb[0].mxu0
    %v5182 = vadd.f32 %v5004, %v5181
    %v5183 = vpop.f32.mrb[0].mxu0
    %5184 = vmatprep.mubr.bf16.mxu0 0
    %5185 = vmatmul.mubr.bf16.gmra.mrb[0].mxu0 %v5080
    %v5186 = vpop.f32.mrb[0].mxu0
    %v5187 = vadd.f32 %v5009, %v5186
    %v5188 = vpop.f32.mrb[0].mxu0
    %v5189 = vpop.f32.mrb[0].mxu0
    %v5190 = vadd.f32 %v5012, %v5189
    %v5191 = vpop.f32.mrb[0].mxu0
    %5192 = vmatprep.mubr.bf16.mxu0 0
    %5193 = vmatmul.mubr.bf16.gmra.mrb[0].mxu0 %v5083
    %v5194 = vpop.f32.mrb[0].mxu0
    %v5195 = vadd.f32 %v5017, %v5194
    %v5196 = vpop.f32.mrb[0].mxu0
    %v5197 = vpop.f32.mrb[0].mxu0
    %v5198 = vadd.f32 %v5020, %v5197
    %v5199 = vpop.f32.mrb[0].mxu0
    %5200 = vmatprep.mubr.bf16.mxu0 0
    %5201 = vmatmul.mubr.bf16.gmra.mrb[0].mxu0 %v5086
    %v5202 = vpop.f32.mrb[0].mxu0
    %v5203 = vadd.f32 %v5025, %v5202
    %v5204 = vpop.f32.mrb[0].mxu0
    %v5205 = vpop.f32.mrb[0].mxu0
    %v5206 = vpop.f32.mrb[0].mxu0
    %5207 = vdwg.mxu0
    %v5209 = vunpack.c.l.b16 %v4809
    %v5210 = vpack.c.b16 %v4853, %v4852
    %v5211 = vpack.c.b16 %v5209, %v5209
    %v5216 = vunpack.c.l.b16 %v4774
    %v5217 = vunpack.c.l.b16 %v4775
    %v5218 = vunpack.c.l.b16 %v4776
    %v5219 = vunpack.c.l.b16 %v4777
    %v5220 = vpack.c.b16 %v5217, %v5216
    %v5221 = vpack.c.b16 %v5219, %v5218
    %v5225 = vsel %vm4299, %v5210, 0
    %v5228 = vsel %vm4299, %v5211, 0
    %5230 = vmatprep.subr.bf16.mxu0 0
    %5231 = vmatpush1.bf16.msra.mxu0 %v5220
    %5232 = vmatprep.subr.bf16.mxu0 0
    %5233 = vmatpush1.bf16.msra.mxu0 %v5221
    %5234 = vmatprep.subr.bf16.mxu0 0
    %5235 = vmatpush1.bf16.msra.mxu0 0
    %5236 = vmatprep.subr.bf16.mxu0 0
    %5237 = vmatpush1.bf16.msra.mxu0 0
    %5238 = vmatprep.subr.bf16.mxu0 0
    %5239 = vmatpush1.bf16.msra.mxu0 0
    %5240 = vmatprep.subr.bf16.mxu0 0
    %5241 = vmatpush1.bf16.msra.mxu0 0
    %5242 = vmatprep.subr.bf16.mxu0 0
    %5243 = vmatpush1.bf16.msra.mxu0 0
    %5244 = vmatprep.subr.bf16.mxu0 0
    %5245 = vmatpush1.bf16.msra.mxu0 0
    %5246 = vmatprep.subr.bf16.mxu0 0
    %5247 = vmatpush1.bf16.msra.mxu0 0
    %5248 = vmatprep.subr.bf16.mxu0 0
    %5249 = vmatpush1.bf16.msra.mxu0 0
    %5250 = vmatprep.subr.bf16.mxu0 0
    %5251 = vmatpush1.bf16.msra.mxu0 0
    %5252 = vmatprep.subr.bf16.mxu0 0
    %5253 = vmatpush1.bf16.msra.mxu0 0
    %5254 = vmatprep.subr.bf16.mxu0 0
    %5255 = vmatpush1.bf16.msra.mxu0 0
    %5256 = vmatprep.subr.bf16.mxu0 0
    %5257 = vmatpush1.bf16.msra.mxu0 0
    %5258 = vmatprep.subr.bf16.mxu0 0
    %5259 = vmatpush1.bf16.msra.mxu0 0
    %5260 = vmatprep.subr.bf16.mxu0 0
    %5261 = vmatpush1.bf16.msra.mxu0 0
    %5262 = vmatprep.mubr.bf16.mxu0 0
    %5263 = vmatmul.mubr.bf16.gmra.mrb[0].mxu0 %v5059
    %v5264 = vpop.f32.mrb[0].mxu0
    %v5265 = vadd.f32 0.0, %v5264
    %v5266 = vpop.f32.mrb[0].mxu0
    %v5267 = vpop.f32.mrb[0].mxu0
    %v5268 = vadd.f32 0.0, %v5267
    %v5269 = vpop.f32.mrb[0].mxu0
    %5270 = vmatprep.mubr.bf16.mxu0 0
    %5271 = vmatmul.mubr.bf16.gmra.mrb[0].mxu0 %v5062
    %v5272 = vpop.f32.mrb[0].mxu0
    %v5273 = vadd.f32 0.0, %v5272
    %v5274 = vpop.f32.mrb[0].mxu0
    %v5275 = vpop.f32.mrb[0].mxu0
    %v5276 = vadd.f32 0.0, %v5275
    %v5277 = vpop.f32.mrb[0].mxu0
    %5278 = vmatprep.mubr.bf16.mxu0 0
    %5279 = vmatmul.mubr.bf16.gmra.mrb[0].mxu0 %v5065
    %v5280 = vpop.f32.mrb[0].mxu0
    %v5281 = vadd.f32 0.0, %v5280
    %v5282 = vpop.f32.mrb[0].mxu0
    %v5283 = vpop.f32.mrb[0].mxu0
    %v5284 = vadd.f32 0.0, %v5283
    %v5285 = vpop.f32.mrb[0].mxu0
    %5286 = vmatprep.mubr.bf16.mxu0 0
    %5287 = vmatmul.mubr.bf16.gmra.mrb[0].mxu0 %v5068
    %v5288 = vpop.f32.mrb[0].mxu0
    %v5289 = vadd.f32 0.0, %v5288
    %v5290 = vpop.f32.mrb[0].mxu0
    %v5291 = vpop.f32.mrb[0].mxu0
    %v5292 = vadd.f32 0.0, %v5291
    %v5293 = vpop.f32.mrb[0].mxu0
    %5294 = vmatprep.mubr.bf16.mxu0 0
    %5295 = vmatmul.mubr.bf16.gmra.mrb[0].mxu0 %v5071
    %v5296 = vpop.f32.mrb[0].mxu0
    %v5297 = vadd.f32 0.0, %v5296
    %v5298 = vpop.f32.mrb[0].mxu0
    %v5299 = vpop.f32.mrb[0].mxu0
    %v5300 = vadd.f32 0.0, %v5299
    %v5301 = vpop.f32.mrb[0].mxu0
    %5302 = vmatprep.mubr.bf16.mxu0 0
    %5303 = vmatmul.mubr.bf16.gmra.mrb[0].mxu0 %v5074
    %v5304 = vpop.f32.mrb[0].mxu0
    %v5305 = vadd.f32 0.0, %v5304
    %v5306 = vpop.f32.mrb[0].mxu0
    %v5307 = vpop.f32.mrb[0].mxu0
    %v5308 = vadd.f32 0.0, %v5307
    %v5309 = vpop.f32.mrb[0].mxu0
    %5310 = vmatprep.mubr.bf16.mxu0 0
    %5311 = vmatmul.mubr.bf16.gmra.mrb[0].mxu0 %v5077
    %v5312 = vpop.f32.mrb[0].mxu0
    %v5313 = vadd.f32 0.0, %v5312
    %v5314 = vpop.f32.mrb[0].mxu0
    %v5315 = vpop.f32.mrb[0].mxu0
    %v5316 = vadd.f32 0.0, %v5315
    %v5317 = vpop.f32.mrb[0].mxu0
    %5318 = vmatprep.mubr.bf16.mxu0 0
    %5319 = vmatmul.mubr.bf16.gmra.mrb[0].mxu0 %v5080
    %v5320 = vpop.f32.mrb[0].mxu0
    %v5321 = vadd.f32 0.0, %v5320
    %v5322 = vpop.f32.mrb[0].mxu0
    %v5323 = vpop.f32.mrb[0].mxu0
    %v5324 = vadd.f32 0.0, %v5323
    %v5325 = vpop.f32.mrb[0].mxu0
    %5326 = vmatprep.mubr.bf16.mxu0 0
    %5327 = vmatmul.mubr.bf16.gmra.mrb[0].mxu0 %v5083
    %v5328 = vpop.f32.mrb[0].mxu0
    %v5329 = vadd.f32 0.0, %v5328
    %v5330 = vpop.f32.mrb[0].mxu0
    %v5331 = vpop.f32.mrb[0].mxu0
    %v5332 = vadd.f32 0.0, %v5331
    %v5333 = vpop.f32.mrb[0].mxu0
    %5334 = vmatprep.mubr.bf16.mxu0 0
    %5335 = vmatmul.mubr.bf16.gmra.mrb[0].mxu0 %v5225
    %v5336 = vpop.f32.mrb[0].mxu0
    %v5337 = vadd.f32 0.0, %v5336
    %v5338 = vpop.f32.mrb[0].mxu0
    %v5339 = vpop.f32.mrb[0].mxu0
    %v5340 = vadd.f32 0.0, %v5339
    %v5341 = vpop.f32.mrb[0].mxu0
    %5342 = vmatprep.mubr.bf16.mxu0 0
    %5343 = vmatmul.mubr.bf16.gmra.mrb[0].mxu0 %v5228
    %v5344 = vpop.f32.mrb[0].mxu0
    %v5345 = vadd.f32 0.0, %v5344
    %v5346 = vpop.f32.mrb[0].mxu0
    %v5347 = vpop.f32.mrb[0].mxu0
    %v5348 = vpop.f32.mrb[0].mxu0
    %5349 = vdwg.mxu0
    %v5350 = vadd.f32 %v5123, %v5265
    %v5351 = vadd.f32 %v5126, %v5268
    %v5352 = vadd.f32 %v5131, %v5273
    %v5353 = vadd.f32 %v5134, %v5276
    %v5354 = vadd.f32 %v5139, %v5281
    %v5355 = vadd.f32 %v5142, %v5284
    %v5356 = vadd.f32 %v5147, %v5289
    %v5357 = vadd.f32 %v5150, %v5292
    %v5358 = vadd.f32 %v5155, %v5297
    %v5359 = vadd.f32 %v5158, %v5300
    %v5360 = vadd.f32 %v5163, %v5305
    %v5361 = vadd.f32 %v5166, %v5308
    %v5362 = vadd.f32 %v5171, %v5313
    %v5363 = vadd.f32 %v5174, %v5316
    %v5364 = vadd.f32 %v5179, %v5321
    %v5365 = vadd.f32 %v5182, %v5324
    %v5366 = vadd.f32 %v5187, %v5329
    %v5367 = vadd.f32 %v5190, %v5332
    %v5368 = vadd.f32 %v5195, %v5337
    %v5369 = vadd.f32 %v5198, %v5340
    %v5370 = vadd.f32 %v5203, %v5345
    %v5372 = vunpack.c.l.b16 %v4810
    %v5373 = vpack.c.b16 %v5209, %v4853
    %v5374 = vpack.c.b16 %v5372, %v5372
    %v5379 = vunpack.c.l.b16 %v4778
    %v5380 = vunpack.c.l.b16 %v4779
    %v5381 = vunpack.c.l.b16 %v4780
    %v5382 = vunpack.c.l.b16 %v4781
    %v5383 = vpack.c.b16 %v5380, %v5379
    %v5384 = vpack.c.b16 %v5382, %v5381
    %v5388 = vsel %vm4299, %v5373, 0
    %v5391 = vsel %vm4299, %v5374, 0
    %5393 = vmatprep.subr.bf16.mxu0 0
    %5394 = vmatpush1.bf16.msra.mxu0 %v5383
    %5395 = vmatprep.subr.bf16.mxu0 0
    %5396 = vmatpush1.bf16.msra.mxu0 %v5384
    %5397 = vmatprep.subr.bf16.mxu0 0
    %5398 = vmatpush1.bf16.msra.mxu0 0
    %5399 = vmatprep.subr.bf16.mxu0 0
    %5400 = vmatpush1.bf16.msra.mxu0 0
    %5401 = vmatprep.subr.bf16.mxu0 0
    %5402 = vmatpush1.bf16.msra.mxu0 0
    %5403 = vmatprep.subr.bf16.mxu0 0
    %5404 = vmatpush1.bf16.msra.mxu0 0
    %5405 = vmatprep.subr.bf16.mxu0 0
    %5406 = vmatpush1.bf16.msra.mxu0 0
    %5407 = vmatprep.subr.bf16.mxu0 0
    %5408 = vmatpush1.bf16.msra.mxu0 0
    %5409 = vmatprep.subr.bf16.mxu0 0
    %5410 = vmatpush1.bf16.msra.mxu0 0
    %5411 = vmatprep.subr.bf16.mxu0 0
    %5412 = vmatpush1.bf16.msra.mxu0 0
    %5413 = vmatprep.subr.bf16.mxu0 0
    %5414 = vmatpush1.bf16.msra.mxu0 0
    %5415 = vmatprep.subr.bf16.mxu0 0
    %5416 = vmatpush1.bf16.msra.mxu0 0
    %5417 = vmatprep.subr.bf16.mxu0 0
    %5418 = vmatpush1.bf16.msra.mxu0 0
    %5419 = vmatprep.subr.bf16.mxu0 0
    %5420 = vmatpush1.bf16.msra.mxu0 0
    %5421 = vmatprep.subr.bf16.mxu0 0
    %5422 = vmatpush1.bf16.msra.mxu0 0
    %5423 = vmatprep.subr.bf16.mxu0 0
    %5424 = vmatpush1.bf16.msra.mxu0 0
    %5425 = vmatprep.mubr.bf16.mxu0 0
    %5426 = vmatmul.mubr.bf16.gmra.mrb[0].mxu0 %v4881
    %v5427 = vpop.f32.mrb[0].mxu0
    %v5428 = vadd.f32 0.0, %v5427
    %v5429 = vpop.f32.mrb[0].mxu0
    %v5430 = vpop.f32.mrb[0].mxu0
    %v5431 = vadd.f32 0.0, %v5430
    %v5432 = vpop.f32.mrb[0].mxu0
    %5433 = vmatprep.mubr.bf16.mxu0 0
    %5434 = vmatmul.mubr.bf16.gmra.mrb[0].mxu0 %v4884
    %v5435 = vpop.f32.mrb[0].mxu0
    %v5436 = vadd.f32 0.0, %v5435
    %v5437 = vpop.f32.mrb[0].mxu0
    %v5438 = vpop.f32.mrb[0].mxu0
    %v5439 = vadd.f32 0.0, %v5438
    %v5440 = vpop.f32.mrb[0].mxu0
    %5441 = vmatprep.mubr.bf16.mxu0 0
    %5442 = vmatmul.mubr.bf16.gmra.mrb[0].mxu0 %v4887
    %v5443 = vpop.f32.mrb[0].mxu0
    %v5444 = vadd.f32 0.0, %v5443
    %v5445 = vpop.f32.mrb[0].mxu0
    %v5446 = vpop.f32.mrb[0].mxu0
    %v5447 = vadd.f32 0.0, %v5446
    %v5448 = vpop.f32.mrb[0].mxu0
    %5449 = vmatprep.mubr.bf16.mxu0 0
    %5450 = vmatmul.mubr.bf16.gmra.mrb[0].mxu0 %v4890
    %v5451 = vpop.f32.mrb[0].mxu0
    %v5452 = vadd.f32 0.0, %v5451
    %v5453 = vpop.f32.mrb[0].mxu0
    %v5454 = vpop.f32.mrb[0].mxu0
    %v5455 = vadd.f32 0.0, %v5454
    %v5456 = vpop.f32.mrb[0].mxu0
    %5457 = vmatprep.mubr.bf16.mxu0 0
    %5458 = vmatmul.mubr.bf16.gmra.mrb[0].mxu0 %v4893
    %v5459 = vpop.f32.mrb[0].mxu0
    %v5460 = vadd.f32 0.0, %v5459
    %v5461 = vpop.f32.mrb[0].mxu0
    %v5462 = vpop.f32.mrb[0].mxu0
    %v5463 = vadd.f32 0.0, %v5462
    %v5464 = vpop.f32.mrb[0].mxu0
    %5465 = vmatprep.mubr.bf16.mxu0 0
    %5466 = vmatmul.mubr.bf16.gmra.mrb[0].mxu0 %v4896
    %v5467 = vpop.f32.mrb[0].mxu0
    %v5468 = vadd.f32 0.0, %v5467
    %v5469 = vpop.f32.mrb[0].mxu0
    %v5470 = vpop.f32.mrb[0].mxu0
    %v5471 = vadd.f32 0.0, %v5470
    %v5472 = vpop.f32.mrb[0].mxu0
    %5473 = vmatprep.mubr.bf16.mxu0 0
    %5474 = vmatmul.mubr.bf16.gmra.mrb[0].mxu0 %v4899
    %v5475 = vpop.f32.mrb[0].mxu0
    %v5476 = vadd.f32 0.0, %v5475
    %v5477 = vpop.f32.mrb[0].mxu0
    %v5478 = vpop.f32.mrb[0].mxu0
    %v5479 = vadd.f32 0.0, %v5478
    %v5480 = vpop.f32.mrb[0].mxu0
    %5481 = vmatprep.mubr.bf16.mxu0 0
    %5482 = vmatmul.mubr.bf16.gmra.mrb[0].mxu0 %v4902
    %v5483 = vpop.f32.mrb[0].mxu0
    %v5484 = vadd.f32 0.0, %v5483
    %v5485 = vpop.f32.mrb[0].mxu0
    %v5486 = vpop.f32.mrb[0].mxu0
    %v5487 = vadd.f32 0.0, %v5486
    %v5488 = vpop.f32.mrb[0].mxu0
    %5489 = vmatprep.mubr.bf16.mxu0 0
    %5490 = vmatmul.mubr.bf16.gmra.mrb[0].mxu0 %v4905
    %v5491 = vpop.f32.mrb[0].mxu0
    %v5492 = vadd.f32 0.0, %v5491
    %v5493 = vpop.f32.mrb[0].mxu0
    %v5494 = vpop.f32.mrb[0].mxu0
    %v5495 = vadd.f32 0.0, %v5494
    %v5496 = vpop.f32.mrb[0].mxu0
    %5497 = vmatprep.mubr.bf16.mxu0 0
    %5498 = vmatmul.mubr.bf16.gmra.mrb[0].mxu0 %v5388
    %v5499 = vpop.f32.mrb[0].mxu0
    %v5500 = vadd.f32 0.0, %v5499
    %v5501 = vpop.f32.mrb[0].mxu0
    %v5502 = vpop.f32.mrb[0].mxu0
    %v5503 = vadd.f32 0.0, %v5502
    %v5504 = vpop.f32.mrb[0].mxu0
    %5505 = vmatprep.mubr.bf16.mxu0 0
    %5506 = vmatmul.mubr.bf16.gmra.mrb[0].mxu0 %v5391
    %v5507 = vpop.f32.mrb[0].mxu0
    %v5508 = vadd.f32 0.0, %v5507
    %v5509 = vpop.f32.mrb[0].mxu0
    %v5510 = vpop.f32.mrb[0].mxu0
    %v5511 = vpop.f32.mrb[0].mxu0
    %5512 = vdwg.mxu0
    %v5513 = vadd.f32 %v5350, %v5428
    %v5514 = vadd.f32 %v5351, %v5431
    %v5515 = vadd.f32 %v5352, %v5436
    %v5516 = vadd.f32 %v5353, %v5439
    %v5517 = vadd.f32 %v5354, %v5444
    %v5518 = vadd.f32 %v5355, %v5447
    %v5519 = vadd.f32 %v5356, %v5452
    %v5520 = vadd.f32 %v5357, %v5455
    %v5521 = vadd.f32 %v5358, %v5460
    %v5522 = vadd.f32 %v5359, %v5463
    %v5523 = vadd.f32 %v5360, %v5468
    %v5524 = vadd.f32 %v5361, %v5471
    %v5525 = vadd.f32 %v5362, %v5476
    %v5526 = vadd.f32 %v5363, %v5479
    %v5527 = vadd.f32 %v5364, %v5484
    %v5528 = vadd.f32 %v5365, %v5487
    %v5529 = vadd.f32 %v5366, %v5492
    %v5530 = vadd.f32 %v5367, %v5495
    %v5531 = vadd.f32 %v5368, %v5500
    %v5532 = vadd.f32 %v5369, %v5503
    %v5533 = vadd.f32 %v5370, %v5508
    %v5535 = vunpack.c.l.b16 %v4811
    %v5536 = vpack.c.b16 %v5372, %v5209
    %v5537 = vpack.c.b16 %v5535, %v5535
    %v5542 = vunpack.c.l.b16 %v4782
    %v5543 = vunpack.c.l.b16 %v4783
    %v5544 = vunpack.c.l.b16 %v4784
    %v5545 = vunpack.c.l.b16 %v4785
    %v5546 = vpack.c.b16 %v5543, %v5542
    %v5547 = vpack.c.b16 %v5545, %v5544
    %v5551 = vsel %vm4299, %v5536, 0
    %v5554 = vsel %vm4299, %v5537, 0
    %5556 = vmatprep.subr.bf16.mxu0 0
    %5557 = vmatpush1.bf16.msra.mxu0 %v5546
    %5558 = vmatprep.subr.bf16.mxu0 0
    %5559 = vmatpush1.bf16.msra.mxu0 %v5547
    %5560 = vmatprep.subr.bf16.mxu0 0
    %5561 = vmatpush1.bf16.msra.mxu0 0
    %5562 = vmatprep.subr.bf16.mxu0 0
    %5563 = vmatpush1.bf16.msra.mxu0 0
    %5564 = vmatprep.subr.bf16.mxu0 0
    %5565 = vmatpush1.bf16.msra.mxu0 0
    %5566 = vmatprep.subr.bf16.mxu0 0
    %5567 = vmatpush1.bf16.msra.mxu0 0
    %5568 = vmatprep.subr.bf16.mxu0 0
    %5569 = vmatpush1.bf16.msra.mxu0 0
    %5570 = vmatprep.subr.bf16.mxu0 0
    %5571 = vmatpush1.bf16.msra.mxu0 0
    %5572 = vmatprep.subr.bf16.mxu0 0
    %5573 = vmatpush1.bf16.msra.mxu0 0
    %5574 = vmatprep.subr.bf16.mxu0 0
    %5575 = vmatpush1.bf16.msra.mxu0 0
    %5576 = vmatprep.subr.bf16.mxu0 0
    %5577 = vmatpush1.bf16.msra.mxu0 0
    %5578 = vmatprep.subr.bf16.mxu0 0
    %5579 = vmatpush1.bf16.msra.mxu0 0
    %5580 = vmatprep.subr.bf16.mxu0 0
    %5581 = vmatpush1.bf16.msra.mxu0 0
    %5582 = vmatprep.subr.bf16.mxu0 0
    %5583 = vmatpush1.bf16.msra.mxu0 0
    %5584 = vmatprep.subr.bf16.mxu0 0
    %5585 = vmatpush1.bf16.msra.mxu0 0
    %5586 = vmatprep.subr.bf16.mxu0 0
    %5587 = vmatpush1.bf16.msra.mxu0 0
    %5588 = vmatprep.mubr.bf16.mxu0 0
    %5589 = vmatmul.mubr.bf16.gmra.mrb[0].mxu0 %v5062
    %v5590 = vpop.f32.mrb[0].mxu0
    %v5591 = vadd.f32 0.0, %v5590
    %v5592 = vpop.f32.mrb[0].mxu0
    %v5593 = vpop.f32.mrb[0].mxu0
    %v5594 = vadd.f32 0.0, %v5593
    %v5595 = vpop.f32.mrb[0].mxu0
    %5596 = vmatprep.mubr.bf16.mxu0 0
    %5597 = vmatmul.mubr.bf16.gmra.mrb[0].mxu0 %v5065
    %v5598 = vpop.f32.mrb[0].mxu0
    %v5599 = vadd.f32 0.0, %v5598
    %v5600 = vpop.f32.mrb[0].mxu0
    %v5601 = vpop.f32.mrb[0].mxu0
    %v5602 = vadd.f32 0.0, %v5601
    %v5603 = vpop.f32.mrb[0].mxu0
    %5604 = vmatprep.mubr.bf16.mxu0 0
    %5605 = vmatmul.mubr.bf16.gmra.mrb[0].mxu0 %v5068
    %v5606 = vpop.f32.mrb[0].mxu0
    %v5607 = vadd.f32 0.0, %v5606
    %v5608 = vpop.f32.mrb[0].mxu0
    %v5609 = vpop.f32.mrb[0].mxu0
    %v5610 = vadd.f32 0.0, %v5609
    %v5611 = vpop.f32.mrb[0].mxu0
    %5612 = vmatprep.mubr.bf16.mxu0 0
    %5613 = vmatmul.mubr.bf16.gmra.mrb[0].mxu0 %v5071
    %v5614 = vpop.f32.mrb[0].mxu0
    %v5615 = vadd.f32 0.0, %v5614
    %v5616 = vpop.f32.mrb[0].mxu0
    %v5617 = vpop.f32.mrb[0].mxu0
    %v5618 = vadd.f32 0.0, %v5617
    %v5619 = vpop.f32.mrb[0].mxu0
    %5620 = vmatprep.mubr.bf16.mxu0 0
    %5621 = vmatmul.mubr.bf16.gmra.mrb[0].mxu0 %v5074
    %v5622 = vpop.f32.mrb[0].mxu0
    %v5623 = vadd.f32 0.0, %v5622
    %v5624 = vpop.f32.mrb[0].mxu0
    %v5625 = vpop.f32.mrb[0].mxu0
    %v5626 = vadd.f32 0.0, %v5625
    %v5627 = vpop.f32.mrb[0].mxu0
    %5628 = vmatprep.mubr.bf16.mxu0 0
    %5629 = vmatmul.mubr.bf16.gmra.mrb[0].mxu0 %v5077
    %v5630 = vpop.f32.mrb[0].mxu0
    %v5631 = vadd.f32 0.0, %v5630
    %v5632 = vpop.f32.mrb[0].mxu0
    %v5633 = vpop.f32.mrb[0].mxu0
    %v5634 = vadd.f32 0.0, %v5633
    %v5635 = vpop.f32.mrb[0].mxu0
    %5636 = vmatprep.mubr.bf16.mxu0 0
    %5637 = vmatmul.mubr.bf16.gmra.mrb[0].mxu0 %v5080
    %v5638 = vpop.f32.mrb[0].mxu0
    %v5639 = vadd.f32 0.0, %v5638
    %v5640 = vpop.f32.mrb[0].mxu0
    %v5641 = vpop.f32.mrb[0].mxu0
    %v5642 = vadd.f32 0.0, %v5641
    %v5643 = vpop.f32.mrb[0].mxu0
    %5644 = vmatprep.mubr.bf16.mxu0 0
    %5645 = vmatmul.mubr.bf16.gmra.mrb[0].mxu0 %v5083
    %v5646 = vpop.f32.mrb[0].mxu0
    %v5647 = vadd.f32 0.0, %v5646
    %v5648 = vpop.f32.mrb[0].mxu0
    %v5649 = vpop.f32.mrb[0].mxu0
    %v5650 = vadd.f32 0.0, %v5649
    %v5651 = vpop.f32.mrb[0].mxu0
    %5652 = vmatprep.mubr.bf16.mxu0 0
    %5653 = vmatmul.mubr.bf16.gmra.mrb[0].mxu0 %v5225
    %v5654 = vpop.f32.mrb[0].mxu0
    %v5655 = vadd.f32 0.0, %v5654
    %v5656 = vpop.f32.mrb[0].mxu0
    %v5657 = vpop.f32.mrb[0].mxu0
    %v5658 = vadd.f32 0.0, %v5657
    %v5659 = vpop.f32.mrb[0].mxu0
    %5660 = vmatprep.mubr.bf16.mxu0 0
    %5661 = vmatmul.mubr.bf16.gmra.mrb[0].mxu0 %v5551
    %v5662 = vpop.f32.mrb[0].mxu0
    %v5663 = vadd.f32 0.0, %v5662
    %v5664 = vpop.f32.mrb[0].mxu0
    %v5665 = vpop.f32.mrb[0].mxu0
    %v5666 = vadd.f32 0.0, %v5665
    %v5667 = vpop.f32.mrb[0].mxu0
    %5668 = vmatprep.mubr.bf16.mxu0 0
    %5669 = vmatmul.mubr.bf16.gmra.mrb[0].mxu0 %v5554
    %v5670 = vpop.f32.mrb[0].mxu0
    %v5671 = vadd.f32 0.0, %v5670
    %v5672 = vpop.f32.mrb[0].mxu0
    %v5673 = vpop.f32.mrb[0].mxu0
    %v5674 = vpop.f32.mrb[0].mxu0
    %5675 = vdwg.mxu0
    %v5676 = vadd.f32 %v5513, %v5591
    %v5677 = vadd.f32 %v5514, %v5594
    %v5678 = vadd.f32 %v5515, %v5599
    %v5679 = vadd.f32 %v5516, %v5602
    %v5680 = vadd.f32 %v5517, %v5607
    %v5681 = vadd.f32 %v5518, %v5610
    %v5682 = vadd.f32 %v5519, %v5615
    %v5683 = vadd.f32 %v5520, %v5618
    %v5684 = vadd.f32 %v5521, %v5623
    %v5685 = vadd.f32 %v5522, %v5626
    %v5686 = vadd.f32 %v5523, %v5631
    %v5687 = vadd.f32 %v5524, %v5634
    %v5688 = vadd.f32 %v5525, %v5639
    %v5689 = vadd.f32 %v5526, %v5642
    %v5690 = vadd.f32 %v5527, %v5647
    %v5691 = vadd.f32 %v5528, %v5650
    %v5692 = vadd.f32 %v5529, %v5655
    %v5693 = vadd.f32 %v5530, %v5658
    %v5694 = vadd.f32 %v5531, %v5663
    %v5695 = vadd.f32 %v5532, %v5666
    %v5696 = vadd.f32 %v5533, %v5671
    %v5697 = vlaneseq
    %v5698 = vshrl.u32 %v5697, 7
    %v5699 = vsub.s32 0, %v5698
    %v5700 = vrot.slane %v4786, %v5699
    %v5701 = vadd.f32 %v5676, %v5700
    %v5702 = vadd.f32 %v5677, %v5700
    %v5703 = vadd.f32 %v5678, %v5700
    %v5704 = vadd.f32 %v5679, %v5700
    %v5705 = vadd.f32 %v5680, %v5700
    %v5706 = vadd.f32 %v5681, %v5700
    %v5707 = vadd.f32 %v5682, %v5700
    %v5708 = vadd.f32 %v5683, %v5700
    %v5709 = vadd.f32 %v5684, %v5700
    %v5710 = vadd.f32 %v5685, %v5700
    %v5711 = vadd.f32 %v5686, %v5700
    %v5712 = vadd.f32 %v5687, %v5700
    %v5713 = vadd.f32 %v5688, %v5700
    %v5714 = vadd.f32 %v5689, %v5700
    %v5715 = vadd.f32 %v5690, %v5700
    %v5716 = vadd.f32 %v5691, %v5700
    %v5717 = vadd.f32 %v5692, %v5700
    %v5718 = vadd.f32 %v5693, %v5700
    %v5719 = vadd.f32 %v5694, %v5700
    %v5720 = vadd.f32 %v5695, %v5700
    %v5721 = vadd.f32 %v5696, %v5700
    %vm5722 = vcmask 523264
    %v5723 = vsel %vm5722, %v5701, 0.0
    %v5724 = vsel %vm5722, %v5702, 0.0
    %v5725 = vadd.f32 %v5723, %v5724
    %v5726 = vsel %vm5722, %v5703, 0.0
    %v5727 = vadd.f32 %v5725, %v5726
    %v5728 = vsel %vm5722, %v5704, 0.0
    %v5729 = vadd.f32 %v5727, %v5728
    %v5730 = vsel %vm5722, %v5705, 0.0
    %v5731 = vadd.f32 %v5729, %v5730
    %v5732 = vsel %vm5722, %v5706, 0.0
    %v5733 = vadd.f32 %v5731, %v5732
    %v5734 = vsel %vm5722, %v5707, 0.0
    %v5735 = vadd.f32 %v5733, %v5734
    %v5736 = vsel %vm5722, %v5708, 0.0
    %v5737 = vadd.f32 %v5735, %v5736
    %v5738 = vsel %vm5722, %v5709, 0.0
    %v5739 = vadd.f32 %v5737, %v5738
    %v5740 = vsel %vm5722, %v5710, 0.0
    %v5741 = vadd.f32 %v5739, %v5740
    %v5742 = vsel %vm5722, %v5711, 0.0
    %v5743 = vadd.f32 %v5741, %v5742
    %v5744 = vsel %vm5722, %v5712, 0.0
    %v5745 = vadd.f32 %v5743, %v5744
    %v5746 = vsel %vm5722, %v5713, 0.0
    %v5747 = vadd.f32 %v5745, %v5746
    %v5748 = vsel %vm5722, %v5714, 0.0
    %v5749 = vadd.f32 %v5747, %v5748
    %v5750 = vsel %vm5722, %v5715, 0.0
    %v5751 = vadd.f32 %v5749, %v5750
    %v5752 = vsel %vm5722, %v5716, 0.0
    %v5753 = vadd.f32 %v5751, %v5752
    %v5754 = vsel %vm5722, %v5717, 0.0
    %v5755 = vadd.f32 %v5753, %v5754
    %v5756 = vsel %vm5722, %v5718, 0.0
    %v5757 = vadd.f32 %v5755, %v5756
    %v5758 = vsel %vm5722, %v5719, 0.0
    %v5759 = vadd.f32 %v5757, %v5758
    %v5760 = vsel %vm5722, %v5720, 0.0
    %v5761 = vadd.f32 %v5759, %v5760
    %v5762 = vsel %vm5722, %v5721, 0.0
    %v5763 = vadd.f32 %v5761, %v5762
    %v5764 = vrot.slane %v5763, 4
    %v5765 = vadd.f32 %v5763, %v5764
    %v5766 = vrot.slane %v5765, 2
    %v5767 = vadd.f32 %v5765, %v5766
    %v5768 = vrot.slane %v5767, 1
    %v5769 = vadd.f32 %v5767, %v5768
    %v5770 = vrcp.pop 168.0
    %v5771 = vmul.f32 %v5769, %v5770
    %v5772 = vsub.f32 %v5701, %v5771
    %v5773 = vsub.f32 %v5702, %v5771
    %v5774 = vsub.f32 %v5703, %v5771
    %v5775 = vsub.f32 %v5704, %v5771
    %v5776 = vsub.f32 %v5705, %v5771
    %v5777 = vsub.f32 %v5706, %v5771
    %v5778 = vsub.f32 %v5707, %v5771
    %v5779 = vsub.f32 %v5708, %v5771
    %v5780 = vsub.f32 %v5709, %v5771
    %v5781 = vsub.f32 %v5710, %v5771
    %v5782 = vsub.f32 %v5711, %v5771
    %v5783 = vsub.f32 %v5712, %v5771
    %v5784 = vsub.f32 %v5713, %v5771
    %v5785 = vsub.f32 %v5714, %v5771
    %v5786 = vsub.f32 %v5715, %v5771
    %v5787 = vsub.f32 %v5716, %v5771
    %v5788 = vsub.f32 %v5717, %v5771
    %v5789 = vsub.f32 %v5718, %v5771
    %v5790 = vsub.f32 %v5719, %v5771
    %v5791 = vsub.f32 %v5720, %v5771
    %v5792 = vsub.f32 %v5721, %v5771
    %v5793 = vmul.f32 %v5772, %v5772
    %v5794 = vmul.f32 %v5773, %v5773
    %v5795 = vmul.f32 %v5774, %v5774
    %v5796 = vmul.f32 %v5775, %v5775
    %v5797 = vmul.f32 %v5776, %v5776
    %v5798 = vmul.f32 %v5777, %v5777
    %v5799 = vmul.f32 %v5778, %v5778
    %v5800 = vmul.f32 %v5779, %v5779
    %v5801 = vmul.f32 %v5780, %v5780
    %v5802 = vmul.f32 %v5781, %v5781
    %v5803 = vmul.f32 %v5782, %v5782
    %v5804 = vmul.f32 %v5783, %v5783
    %v5805 = vmul.f32 %v5784, %v5784
    %v5806 = vmul.f32 %v5785, %v5785
    %v5807 = vmul.f32 %v5786, %v5786
    %v5808 = vmul.f32 %v5787, %v5787
    %v5809 = vmul.f32 %v5788, %v5788
    %v5810 = vmul.f32 %v5789, %v5789
    %v5811 = vmul.f32 %v5790, %v5790
    %v5812 = vmul.f32 %v5791, %v5791
    %v5813 = vmul.f32 %v5792, %v5792
    %v5814 = vsel %vm5722, %v5793, 0.0
    %v5815 = vsel %vm5722, %v5794, 0.0
    %v5816 = vadd.f32 %v5814, %v5815
    %v5817 = vsel %vm5722, %v5795, 0.0
    %v5818 = vadd.f32 %v5816, %v5817
    %v5819 = vsel %vm5722, %v5796, 0.0
    %v5820 = vadd.f32 %v5818, %v5819
    %v5821 = vsel %vm5722, %v5797, 0.0
    %v5822 = vadd.f32 %v5820, %v5821
    %v5823 = vsel %vm5722, %v5798, 0.0
    %v5824 = vadd.f32 %v5822, %v5823
    %v5825 = vsel %vm5722, %v5799, 0.0
    %v5826 = vadd.f32 %v5824, %v5825
    %v5827 = vsel %vm5722, %v5800, 0.0
    %v5828 = vadd.f32 %v5826, %v5827
    %v5829 = vsel %vm5722, %v5801, 0.0
    %v5830 = vadd.f32 %v5828, %v5829
    %v5831 = vsel %vm5722, %v5802, 0.0
    %v5832 = vadd.f32 %v5830, %v5831
    %v5833 = vsel %vm5722, %v5803, 0.0
    %v5834 = vadd.f32 %v5832, %v5833
    %v5835 = vsel %vm5722, %v5804, 0.0
    %v5836 = vadd.f32 %v5834, %v5835
    %v5837 = vsel %vm5722, %v5805, 0.0
    %v5838 = vadd.f32 %v5836, %v5837
    %v5839 = vsel %vm5722, %v5806, 0.0
    %v5840 = vadd.f32 %v5838, %v5839
    %v5841 = vsel %vm5722, %v5807, 0.0
    %v5842 = vadd.f32 %v5840, %v5841
    %v5843 = vsel %vm5722, %v5808, 0.0
    %v5844 = vadd.f32 %v5842, %v5843
    %v5845 = vsel %vm5722, %v5809, 0.0
    %v5846 = vadd.f32 %v5844, %v5845
    %v5847 = vsel %vm5722, %v5810, 0.0
    %v5848 = vadd.f32 %v5846, %v5847
    %v5849 = vsel %vm5722, %v5811, 0.0
    %v5850 = vadd.f32 %v5848, %v5849
    %v5851 = vsel %vm5722, %v5812, 0.0
    %v5852 = vadd.f32 %v5850, %v5851
    %v5853 = vsel %vm5722, %v5813, 0.0
    %v5854 = vadd.f32 %v5852, %v5853
    %v5855 = vrot.slane %v5854, 4
    %v5856 = vadd.f32 %v5854, %v5855
    %v5857 = vrot.slane %v5856, 2
    %v5858 = vadd.f32 %v5856, %v5857
    %v5859 = vrot.slane %v5858, 1
    %v5860 = vadd.f32 %v5858, %v5859
    %v5861 = vmul.f32 %v5860, %v5770
    %v5862 = vadd.f32 %v5861, 1e-05
    %v5863 = vrsqrt.pop %v5862
    %v5864 = vmul.f32 %v5772, %v5863
    %v5865 = vmul.f32 %v5773, %v5863
    %v5866 = vmul.f32 %v5774, %v5863
    %v5867 = vmul.f32 %v5775, %v5863
    %v5868 = vmul.f32 %v5776, %v5863
    %v5869 = vmul.f32 %v5777, %v5863
    %v5870 = vmul.f32 %v5778, %v5863
    %v5871 = vmul.f32 %v5779, %v5863
    %v5872 = vmul.f32 %v5780, %v5863
    %v5873 = vmul.f32 %v5781, %v5863
    %v5874 = vmul.f32 %v5782, %v5863
    %v5875 = vmul.f32 %v5783, %v5863
    %v5876 = vmul.f32 %v5784, %v5863
    %v5877 = vmul.f32 %v5785, %v5863
    %v5878 = vmul.f32 %v5786, %v5863
    %v5879 = vmul.f32 %v5787, %v5863
    %v5880 = vmul.f32 %v5788, %v5863
    %v5881 = vmul.f32 %v5789, %v5863
    %v5882 = vmul.f32 %v5790, %v5863
    %v5883 = vmul.f32 %v5791, %v5863
    %v5884 = vmul.f32 %v5792, %v5863
    %v5885 = vlaneseq
    %v5886 = vshrl.u32 %v5885, 7
    %v5887 = vsub.s32 1, %v5886
    %v5888 = vrot.slane %v4786, %v5887
    %v5889 = vmul.f32 %v5864, %v5888
    %v5890 = vmul.f32 %v5865, %v5888
    %v5891 = vmul.f32 %v5866, %v5888
    %v5892 = vmul.f32 %v5867, %v5888
    %v5893 = vmul.f32 %v5868, %v5888
    %v5894 = vmul.f32 %v5869, %v5888
    %v5895 = vmul.f32 %v5870, %v5888
    %v5896 = vmul.f32 %v5871, %v5888
    %v5897 = vmul.f32 %v5872, %v5888
    %v5898 = vmul.f32 %v5873, %v5888
    %v5899 = vmul.f32 %v5874, %v5888
    %v5900 = vmul.f32 %v5875, %v5888
    %v5901 = vmul.f32 %v5876, %v5888
    %v5902 = vmul.f32 %v5877, %v5888
    %v5903 = vmul.f32 %v5878, %v5888
    %v5904 = vmul.f32 %v5879, %v5888
    %v5905 = vmul.f32 %v5880, %v5888
    %v5906 = vmul.f32 %v5881, %v5888
    %v5907 = vmul.f32 %v5882, %v5888
    %v5908 = vmul.f32 %v5883, %v5888
    %v5909 = vmul.f32 %v5884, %v5888
    %v5910 = vlaneseq
    %v5911 = vshrl.u32 %v5910, 7
    %v5912 = vsub.s32 2, %v5911
    %v5913 = vrot.slane %v4786, %v5912
    %v5914 = vadd.f32 %v5889, %v5913
    %v5915 = vadd.f32 %v5890, %v5913
    %v5916 = vadd.f32 %v5891, %v5913
    %v5917 = vadd.f32 %v5892, %v5913
    %v5918 = vadd.f32 %v5893, %v5913
    %v5919 = vadd.f32 %v5894, %v5913
    %v5920 = vadd.f32 %v5895, %v5913
    %v5921 = vadd.f32 %v5896, %v5913
    %v5922 = vadd.f32 %v5897, %v5913
    %v5923 = vadd.f32 %v5898, %v5913
    %v5924 = vadd.f32 %v5899, %v5913
    %v5925 = vadd.f32 %v5900, %v5913
    %v5926 = vadd.f32 %v5901, %v5913
    %v5927 = vadd.f32 %v5902, %v5913
    %v5928 = vadd.f32 %v5903, %v5913
    %v5929 = vadd.f32 %v5904, %v5913
    %v5930 = vadd.f32 %v5905, %v5913
    %v5931 = vadd.f32 %v5906, %v5913
    %v5932 = vadd.f32 %v5907, %v5913
    %v5933 = vadd.f32 %v5908, %v5913
    %v5934 = vadd.f32 %v5909, %v5913
    %v5935 = vmax.f32 %v5914, 0.0
    %v5936 = vmax.f32 %v5915, 0.0
    %v5937 = vmax.f32 %v5916, 0.0
    %v5938 = vmax.f32 %v5917, 0.0
    %v5939 = vmax.f32 %v5918, 0.0
    %v5940 = vmax.f32 %v5919, 0.0
    %v5941 = vmax.f32 %v5920, 0.0
    %v5942 = vmax.f32 %v5921, 0.0
    %v5943 = vmax.f32 %v5922, 0.0
    %v5944 = vmax.f32 %v5923, 0.0
    %v5945 = vmax.f32 %v5924, 0.0
    %v5946 = vmax.f32 %v5925, 0.0
    %v5947 = vmax.f32 %v5926, 0.0
    %v5948 = vmax.f32 %v5927, 0.0
    %v5949 = vmax.f32 %v5928, 0.0
    %v5950 = vmax.f32 %v5929, 0.0
    %v5951 = vmax.f32 %v5930, 0.0
    %v5952 = vmax.f32 %v5931, 0.0
    %v5953 = vmax.f32 %v5932, 0.0
    %v5954 = vmax.f32 %v5933, 0.0
    %v5955 = vmax.f32 %v5934, 0.0
    %v5956 = vsel %vm5722, %v5935, 0.0
    %v5957 = vsel %vm5722, %v5936, 0.0
    %v5958 = vadd.f32 %v5956, %v5957
    %v5959 = vsel %vm5722, %v5937, 0.0
    %v5960 = vadd.f32 %v5958, %v5959
    %v5961 = vsel %vm5722, %v5938, 0.0
    %v5962 = vadd.f32 %v5960, %v5961
    %v5963 = vsel %vm5722, %v5939, 0.0
    %v5964 = vadd.f32 %v5962, %v5963
    %v5965 = vsel %vm5722, %v5940, 0.0
    %v5966 = vadd.f32 %v5964, %v5965
    %v5967 = vsel %vm5722, %v5941, 0.0
    %v5968 = vadd.f32 %v5966, %v5967
    %v5969 = vsel %vm5722, %v5942, 0.0
    %v5970 = vadd.f32 %v5968, %v5969
    %v5971 = vsel %vm5722, %v5943, 0.0
    %v5972 = vadd.f32 %v5970, %v5971
    %v5973 = vsel %vm5722, %v5944, 0.0
    %v5974 = vadd.f32 %v5972, %v5973
    %v5975 = vsel %vm5722, %v5945, 0.0
    %v5976 = vadd.f32 %v5974, %v5975
    %v5977 = vsel %vm5722, %v5946, 0.0
    %v5978 = vadd.f32 %v5976, %v5977
    %v5979 = vsel %vm5722, %v5947, 0.0
    %v5980 = vadd.f32 %v5978, %v5979
    %v5981 = vsel %vm5722, %v5948, 0.0
    %v5982 = vadd.f32 %v5980, %v5981
    %v5983 = vsel %vm5722, %v5949, 0.0
    %v5984 = vadd.f32 %v5982, %v5983
    %v5985 = vsel %vm5722, %v5950, 0.0
    %v5986 = vadd.f32 %v5984, %v5985
    %v5987 = vsel %vm5722, %v5951, 0.0
    %v5988 = vadd.f32 %v5986, %v5987
    %v5989 = vsel %vm5722, %v5952, 0.0
    %v5990 = vadd.f32 %v5988, %v5989
    %v5991 = vsel %vm5722, %v5953, 0.0
    %v5992 = vadd.f32 %v5990, %v5991
    %v5993 = vsel %vm5722, %v5954, 0.0
    %v5994 = vadd.f32 %v5992, %v5993
    %v5995 = vsel %vm5722, %v5955, 0.0
    %v5996 = vadd.f32 %v5994, %v5995
    %v5997 = vrcp.pop 21.0
    %v5998 = vmul.f32 %v5996, %v5997
    %v5999 = vpack.c.bf16 %v5998, %v5998
    %v6000 = vld [vmem:[%s11] sm:$0xf]
    %v6001 = vld [vmem:[%s11 + $0x4] sm:$0xf]
    %v6002 = vld [vmem:[%s11 + $0x8] sm:$0xf]
    %v6003 = vld [vmem:[%s11 + $0xc] sm:$0xf]
    %v6004 = vld [vmem:[%s11 + $0x10] sm:$0xf]
    %v6005 = vld [vmem:[%s11 + $0x14] sm:$0xf]
    %v6006 = vld [vmem:[%s11 + $0x18] sm:$0xf]
    %v6007 = vld [vmem:[%s11 + $0x1c] sm:$0xf]
    %v6016 = vunpack.c.l.b16 %v6000
    %v6017 = vunpack.c.l.b16 %v6001
    %v6018 = vunpack.c.l.b16 %v6002
    %v6019 = vunpack.c.l.b16 %v6003
    %v6020 = vunpack.c.l.b16 %v6004
    %v6021 = vunpack.c.l.b16 %v6005
    %v6022 = vunpack.c.l.b16 %v6006
    %v6023 = vunpack.c.l.b16 %v6007
    %v6024 = vpack.c.b16 %v6017, %v6016
    %v6025 = vpack.c.b16 %v6019, %v6018
    %v6026 = vpack.c.b16 %v6021, %v6020
    %v6027 = vpack.c.b16 %v6023, %v6022
    %v6033 = vsel %vm5722, %v5999, 0
    %6035 = vmatprep.subr.bf16.mxu0 0
    %6036 = vmatpush1.bf16.msra.mxu0 %v6024
    %6037 = vmatprep.subr.bf16.mxu0 0
    %6038 = vmatpush1.bf16.msra.mxu0 %v6025
    %6039 = vmatprep.subr.bf16.mxu0 0
    %6040 = vmatpush1.bf16.msra.mxu0 %v6026
    %6041 = vmatprep.subr.bf16.mxu0 0
    %6042 = vmatpush1.bf16.msra.mxu0 %v6027
    %6043 = vmatprep.subr.bf16.mxu0 0
    %6044 = vmatpush1.bf16.msra.mxu0 0
    %6045 = vmatprep.subr.bf16.mxu0 0
    %6046 = vmatpush1.bf16.msra.mxu0 0
    %6047 = vmatprep.subr.bf16.mxu0 0
    %6048 = vmatpush1.bf16.msra.mxu0 0
    %6049 = vmatprep.subr.bf16.mxu0 0
    %6050 = vmatpush1.bf16.msra.mxu0 0
    %6051 = vmatprep.subr.bf16.mxu0 0
    %6052 = vmatpush1.bf16.msra.mxu0 0
    %6053 = vmatprep.subr.bf16.mxu0 0
    %6054 = vmatpush1.bf16.msra.mxu0 0
    %6055 = vmatprep.subr.bf16.mxu0 0
    %6056 = vmatpush1.bf16.msra.mxu0 0
    %6057 = vmatprep.subr.bf16.mxu0 0
    %6058 = vmatpush1.bf16.msra.mxu0 0
    %6059 = vmatprep.subr.bf16.mxu0 0
    %6060 = vmatpush1.bf16.msra.mxu0 0
    %6061 = vmatprep.subr.bf16.mxu0 0
    %6062 = vmatpush1.bf16.msra.mxu0 0
    %6063 = vmatprep.subr.bf16.mxu0 0
    %6064 = vmatpush1.bf16.msra.mxu0 0
    %6065 = vmatprep.subr.bf16.mxu0 0
    %6066 = vmatpush1.bf16.msra.mxu0 0
    %6067 = vmatprep.mubr.bf16.mxu0 0
    %6068 = vmatmul.mubr.bf16.gmra.mrb[0].mxu0 %v6033
    %v6069 = vpop.f32.mrb[0].mxu0
    %v6070 = vadd.f32 0.0, %v6069
    %v6071 = vpop.f32.mrb[0].mxu0
    %v6072 = vpop.f32.mrb[0].mxu0
    %v6073 = vpop.f32.mrb[0].mxu0
    %6074 = vdwg.mxu0
    %v6075 = vmax.f32 %v6070, 0.0
    %v6076 = vpack.c.bf16 %v6075, %v6075
    %v6077 = vld [vmem:[%s12] sm:$0x3]
    %vm6078 = vcmask 31744
    %v6080 = vsel %vm6078, %v6076, 0
    %vm6082 = vcmask 1041408
    %v6084 = vsel %vm6082, %v6077, 0
    %6086 = vmatprep.subr.bf16.mxu0 0
    %6087 = vmatpush1.bf16.msra.mxu0 %v6084
    %6088 = vmatprep.subr.bf16.mxu0 0
    %6089 = vmatpush1.bf16.msra.mxu0 0
    %6090 = vmatprep.subr.bf16.mxu0 0
    %6091 = vmatpush1.bf16.msra.mxu0 0
    %6092 = vmatprep.subr.bf16.mxu0 0
    %6093 = vmatpush1.bf16.msra.mxu0 0
    %6094 = vmatprep.subr.bf16.mxu0 0
    %6095 = vmatpush1.bf16.msra.mxu0 0
    %6096 = vmatprep.subr.bf16.mxu0 0
    %6097 = vmatpush1.bf16.msra.mxu0 0
    %6098 = vmatprep.subr.bf16.mxu0 0
    %6099 = vmatpush1.bf16.msra.mxu0 0
    %6100 = vmatprep.subr.bf16.mxu0 0
    %6101 = vmatpush1.bf16.msra.mxu0 0
    %6102 = vmatprep.subr.bf16.mxu0 0
    %6103 = vmatpush1.bf16.msra.mxu0 0
    %6104 = vmatprep.subr.bf16.mxu0 0
    %6105 = vmatpush1.bf16.msra.mxu0 0
    %6106 = vmatprep.subr.bf16.mxu0 0
    %6107 = vmatpush1.bf16.msra.mxu0 0
    %6108 = vmatprep.subr.bf16.mxu0 0
    %6109 = vmatpush1.bf16.msra.mxu0 0
    %6110 = vmatprep.subr.bf16.mxu0 0
    %6111 = vmatpush1.bf16.msra.mxu0 0
    %6112 = vmatprep.subr.bf16.mxu0 0
    %6113 = vmatpush1.bf16.msra.mxu0 0
    %6114 = vmatprep.subr.bf16.mxu0 0
    %6115 = vmatpush1.bf16.msra.mxu0 0
    %6116 = vmatprep.subr.bf16.mxu0 0
    %6117 = vmatpush1.bf16.msra.mxu0 0
    %6118 = vmatprep.mubr.bf16.mxu0 0
    %6119 = vmatmul.mubr.bf16.gmra.mrb[0].mxu0 %v6080
    %v6120 = vpop.f32.mrb[0].mxu0
    %v6121 = vadd.f32 0.0, %v6120
    %v6122 = vpop.f32.mrb[0].mxu0
    %v6123 = vpop.f32.mrb[0].mxu0
    %v6124 = vpop.f32.mrb[0].mxu0
    %6125 = vdwg.mxu0
    %v6126 = vxor.u32 %v6121, 2147483648
    %v6127 = vmul.f32 %v6126, 1.442695
    %v6128 = vpow.pop %v6127
    %v6129 = vadd.f32 %v6128, 1.0
    %v6130 = vrcp.pop %v6129
    %v6131 = vmul.f32 1.0, %v6130
    %v6132 = vmul.f32 %v5935, %v6131
    %v6133 = vmul.f32 %v5936, %v6131
    %v6134 = vmul.f32 %v5937, %v6131
    %v6135 = vmul.f32 %v5938, %v6131
    %v6136 = vmul.f32 %v5939, %v6131
    %v6137 = vmul.f32 %v5940, %v6131
    %v6138 = vmul.f32 %v5941, %v6131
    %v6139 = vmul.f32 %v5942, %v6131
    %v6140 = vmul.f32 %v5943, %v6131
    %v6141 = vmul.f32 %v5944, %v6131
    %v6142 = vmul.f32 %v5945, %v6131
    %v6143 = vmul.f32 %v5946, %v6131
    %v6144 = vmul.f32 %v5947, %v6131
    %v6145 = vmul.f32 %v5948, %v6131
    %v6146 = vmul.f32 %v5949, %v6131
    %v6147 = vmul.f32 %v5950, %v6131
    %v6148 = vmul.f32 %v5951, %v6131
    %v6149 = vmul.f32 %v5952, %v6131
    %v6150 = vmul.f32 %v5953, %v6131
    %v6151 = vmul.f32 %v5954, %v6131
    %v6152 = vmul.f32 %v5955, %v6131
    %v6153 = vld [vmem:[%s13] sm:$0xf]
    %v6154 = vld [vmem:[%s13 + $0x4] sm:$0xf]
    %v6155 = vld [vmem:[%s13 + $0x8] sm:$0xf]
    %v6156 = vld [vmem:[%s13 + $0xc] sm:$0xf]
    %v6157 = vld [vmem:[%s13 + $0x10] sm:$0xf]
    %v6158 = vld [vmem:[%s13 + $0x14] sm:$0xf]
    %v6159 = vld [vmem:[%s13 + $0x18] sm:$0xf]
    %v6160 = vld [vmem:[%s13 + $0x1c] sm:$0xf]
    %v6161 = vld [vmem:[%s13 + $0x20] sm:$0xf]
    %v6162 = vld [vmem:[%s13 + $0x24] sm:$0xf]
    %v6163 = vld [vmem:[%s13 + $0x28] sm:$0xf]
    %v6164 = vld [vmem:[%s13 + $0x2c] sm:$0xf]
    %v6165 = vld [vmem:[%s13 + $0x30] sm:$0xf]
    %v6166 = vld [vmem:[%s13 + $0x34] sm:$0xf]
    %v6167 = vld [vmem:[%s13 + $0x38] sm:$0xf]
    %v6168 = vld [vmem:[%s13 + $0x3c] sm:$0xf]
    %v6169 = vld [vmem:[%s13 + $0x40] sm:$0xf]
    %v6170 = vld [vmem:[%s13 + $0x44] sm:$0xf]
    %v6171 = vld [vmem:[%s13 + $0x48] sm:$0xf]
    %v6172 = vld [vmem:[%s13 + $0x4c] sm:$0xf]
    %v6173 = vld [vmem:[%s13 + $0x50] sm:$0xf]
    %v6174 = vld [vmem:[%s13 + $0x54] sm:$0xf]
    %v6175 = vld [vmem:[%s13 + $0x58] sm:$0xf]
    %v6176 = vld [vmem:[%s13 + $0x5c] sm:$0xf]
    %v6177 = vld [vmem:[%s14] sm:$0x7]
    %v6178 = vpack.c.bf16 %v6132, %v6132
    %v6179 = vpack.c.bf16 %v6133, %v6133
    %v6180 = vpack.c.bf16 %v6134, %v6134
    %v6181 = vpack.c.bf16 %v6135, %v6135
    %v6182 = vpack.c.bf16 %v6136, %v6136
    %v6183 = vpack.c.bf16 %v6137, %v6137
    %v6184 = vpack.c.bf16 %v6138, %v6138
    %v6185 = vpack.c.bf16 %v6139, %v6139
    %v6186 = vpack.c.bf16 %v6140, %v6140
    %v6187 = vpack.c.bf16 %v6141, %v6141
    %v6188 = vpack.c.bf16 %v6142, %v6142
    %v6189 = vpack.c.bf16 %v6143, %v6143
    %v6190 = vpack.c.bf16 %v6144, %v6144
    %v6191 = vpack.c.bf16 %v6145, %v6145
    %v6192 = vpack.c.bf16 %v6146, %v6146
    %v6193 = vpack.c.bf16 %v6147, %v6147
    %v6194 = vpack.c.bf16 %v6148, %v6148
    %v6195 = vpack.c.bf16 %v6149, %v6149
    %v6196 = vpack.c.bf16 %v6150, %v6150
    %v6197 = vpack.c.bf16 %v6151, %v6151
    %v6198 = vpack.c.bf16 %v6152, %v6152
    %v6218 = vunpack.c.l.b16 %v6179
    %v6219 = vunpack.c.l.b16 %v6180
    %v6220 = vunpack.c.l.b16 %v6181
    %v6221 = vunpack.c.l.b16 %v6182
    %v6222 = vunpack.c.l.b16 %v6183
    %v6223 = vunpack.c.l.b16 %v6184
    %v6224 = vunpack.c.l.b16 %v6185
    %v6225 = vunpack.c.l.b16 %v6186
    %v6226 = vunpack.c.l.b16 %v6187
    %v6227 = vunpack.c.l.b16 %v6188
    %v6228 = vunpack.c.l.b16 %v6189
    %v6229 = vunpack.c.l.b16 %v6190
    %v6230 = vunpack.c.l.b16 %v6191
    %v6231 = vunpack.c.l.b16 %v6192
    %v6232 = vunpack.c.l.b16 %v6193
    %v6233 = vunpack.c.l.b16 %v6194
    %v6234 = vunpack.c.l.b16 %v6195
    %v6235 = vunpack.c.l.b16 %v6196
    %v6236 = vunpack.c.l.b16 %v6197
    %v6237 = vpack.c.b16 %v6219, %v6218
    %v6238 = vpack.c.b16 %v6221, %v6220
    %v6239 = vpack.c.b16 %v6223, %v6222
    %v6240 = vpack.c.b16 %v6225, %v6224
    %v6241 = vpack.c.b16 %v6227, %v6226
    %v6242 = vpack.c.b16 %v6229, %v6228
    %v6243 = vpack.c.b16 %v6231, %v6230
    %v6244 = vpack.c.b16 %v6233, %v6232
    %v6245 = vpack.c.b16 %v6235, %v6234
    %v6246 = vpack.c.b16 %v6236, %v6236
    %v6255 = vunpack.c.l.b16 %v6161
    %v6256 = vunpack.c.l.b16 %v6162
    %v6257 = vunpack.c.l.b16 %v6163
    %v6258 = vunpack.c.l.b16 %v6164
    %v6259 = vunpack.c.l.b16 %v6165
    %v6260 = vunpack.c.l.b16 %v6166
    %v6261 = vunpack.c.l.b16 %v6167
    %v6262 = vunpack.c.l.b16 %v6168
    %v6263 = vpack.c.b16 %v6256, %v6255
    %v6264 = vpack.c.b16 %v6258, %v6257
    %v6265 = vpack.c.b16 %v6260, %v6259
    %v6266 = vpack.c.b16 %v6262, %v6261
    %v6272 = vsel %vm5722, %v6237, 0
    %v6275 = vsel %vm5722, %v6238, 0
    %v6278 = vsel %vm5722, %v6239, 0
    %v6281 = vsel %vm5722, %v6240, 0
    %v6284 = vsel %vm5722, %v6241, 0
    %v6287 = vsel %vm5722, %v6242, 0
    %v6290 = vsel %vm5722, %v6243, 0
    %v6293 = vsel %vm5722, %v6244, 0
    %v6296 = vsel %vm5722, %v6245, 0
    %v6299 = vsel %vm5722, %v6246, 0
    %6301 = vmatprep.subr.bf16.mxu0 0
    %6302 = vmatpush1.bf16.msra.mxu0 %v6263
    %6303 = vmatprep.subr.bf16.mxu0 0
    %6304 = vmatpush1.bf16.msra.mxu0 %v6264
    %6305 = vmatprep.subr.bf16.mxu0 0
    %6306 = vmatpush1.bf16.msra.mxu0 %v6265
    %6307 = vmatprep.subr.bf16.mxu0 0
    %6308 = vmatpush1.bf16.msra.mxu0 %v6266
    %6309 = vmatprep.subr.bf16.mxu0 0
    %6310 = vmatpush1.bf16.msra.mxu0 0
    %6311 = vmatprep.subr.bf16.mxu0 0
    %6312 = vmatpush1.bf16.msra.mxu0 0
    %6313 = vmatprep.subr.bf16.mxu0 0
    %6314 = vmatpush1.bf16.msra.mxu0 0
    %6315 = vmatprep.subr.bf16.mxu0 0
    %6316 = vmatpush1.bf16.msra.mxu0 0
    %6317 = vmatprep.subr.bf16.mxu0 0
    %6318 = vmatpush1.bf16.msra.mxu0 0
    %6319 = vmatprep.subr.bf16.mxu0 0
    %6320 = vmatpush1.bf16.msra.mxu0 0
    %6321 = vmatprep.subr.bf16.mxu0 0
    %6322 = vmatpush1.bf16.msra.mxu0 0
    %6323 = vmatprep.subr.bf16.mxu0 0
    %6324 = vmatpush1.bf16.msra.mxu0 0
    %6325 = vmatprep.subr.bf16.mxu0 0
    %6326 = vmatpush1.bf16.msra.mxu0 0
    %6327 = vmatprep.subr.bf16.mxu0 0
    %6328 = vmatpush1.bf16.msra.mxu0 0
    %6329 = vmatprep.subr.bf16.mxu0 0
    %6330 = vmatpush1.bf16.msra.mxu0 0
    %6331 = vmatprep.subr.bf16.mxu0 0
    %6332 = vmatpush1.bf16.msra.mxu0 0
    %6333 = vmatprep.mubr.bf16.mxu0 0
    %6334 = vmatmul.mubr.bf16.gmra.mrb[0].mxu0 %v6272
    %v6335 = vpop.f32.mrb[0].mxu0
    %v6336 = vadd.f32 0.0, %v6335
    %v6337 = vpop.f32.mrb[0].mxu0
    %v6338 = vpop.f32.mrb[0].mxu0
    %v6339 = vadd.f32 0.0, %v6338
    %v6340 = vpop.f32.mrb[0].mxu0
    %6341 = vmatprep.mubr.bf16.mxu0 0
    %6342 = vmatmul.mubr.bf16.gmra.mrb[0].mxu0 %v6275
    %v6343 = vpop.f32.mrb[0].mxu0
    %v6344 = vadd.f32 0.0, %v6343
    %v6345 = vpop.f32.mrb[0].mxu0
    %v6346 = vpop.f32.mrb[0].mxu0
    %v6347 = vadd.f32 0.0, %v6346
    %v6348 = vpop.f32.mrb[0].mxu0
    %6349 = vmatprep.mubr.bf16.mxu0 0
    %6350 = vmatmul.mubr.bf16.gmra.mrb[0].mxu0 %v6278
    %v6351 = vpop.f32.mrb[0].mxu0
    %v6352 = vadd.f32 0.0, %v6351
    %v6353 = vpop.f32.mrb[0].mxu0
    %v6354 = vpop.f32.mrb[0].mxu0
    %v6355 = vadd.f32 0.0, %v6354
    %v6356 = vpop.f32.mrb[0].mxu0
    %6357 = vmatprep.mubr.bf16.mxu0 0
    %6358 = vmatmul.mubr.bf16.gmra.mrb[0].mxu0 %v6281
    %v6359 = vpop.f32.mrb[0].mxu0
    %v6360 = vadd.f32 0.0, %v6359
    %v6361 = vpop.f32.mrb[0].mxu0
    %v6362 = vpop.f32.mrb[0].mxu0
    %v6363 = vadd.f32 0.0, %v6362
    %v6364 = vpop.f32.mrb[0].mxu0
    %6365 = vmatprep.mubr.bf16.mxu0 0
    %6366 = vmatmul.mubr.bf16.gmra.mrb[0].mxu0 %v6284
    %v6367 = vpop.f32.mrb[0].mxu0
    %v6368 = vadd.f32 0.0, %v6367
    %v6369 = vpop.f32.mrb[0].mxu0
    %v6370 = vpop.f32.mrb[0].mxu0
    %v6371 = vadd.f32 0.0, %v6370
    %v6372 = vpop.f32.mrb[0].mxu0
    %6373 = vmatprep.mubr.bf16.mxu0 0
    %6374 = vmatmul.mubr.bf16.gmra.mrb[0].mxu0 %v6287
    %v6375 = vpop.f32.mrb[0].mxu0
    %v6376 = vadd.f32 0.0, %v6375
    %v6377 = vpop.f32.mrb[0].mxu0
    %v6378 = vpop.f32.mrb[0].mxu0
    %v6379 = vadd.f32 0.0, %v6378
    %v6380 = vpop.f32.mrb[0].mxu0
    %6381 = vmatprep.mubr.bf16.mxu0 0
    %6382 = vmatmul.mubr.bf16.gmra.mrb[0].mxu0 %v6290
    %v6383 = vpop.f32.mrb[0].mxu0
    %v6384 = vadd.f32 0.0, %v6383
    %v6385 = vpop.f32.mrb[0].mxu0
    %v6386 = vpop.f32.mrb[0].mxu0
    %v6387 = vadd.f32 0.0, %v6386
    %v6388 = vpop.f32.mrb[0].mxu0
    %6389 = vmatprep.mubr.bf16.mxu0 0
    %6390 = vmatmul.mubr.bf16.gmra.mrb[0].mxu0 %v6293
    %v6391 = vpop.f32.mrb[0].mxu0
    %v6392 = vadd.f32 0.0, %v6391
    %v6393 = vpop.f32.mrb[0].mxu0
    %v6394 = vpop.f32.mrb[0].mxu0
    %v6395 = vadd.f32 0.0, %v6394
    %v6396 = vpop.f32.mrb[0].mxu0
    %6397 = vmatprep.mubr.bf16.mxu0 0
    %6398 = vmatmul.mubr.bf16.gmra.mrb[0].mxu0 %v6296
    %v6399 = vpop.f32.mrb[0].mxu0
    %v6400 = vadd.f32 0.0, %v6399
    %v6401 = vpop.f32.mrb[0].mxu0
    %v6402 = vpop.f32.mrb[0].mxu0
    %v6403 = vadd.f32 0.0, %v6402
    %v6404 = vpop.f32.mrb[0].mxu0
    %6405 = vmatprep.mubr.bf16.mxu0 0
    %6406 = vmatmul.mubr.bf16.gmra.mrb[0].mxu0 %v6299
    %v6407 = vpop.f32.mrb[0].mxu0
    %v6408 = vadd.f32 0.0, %v6407
    %v6409 = vpop.f32.mrb[0].mxu0
    %v6410 = vpop.f32.mrb[0].mxu0
    %v6411 = vpop.f32.mrb[0].mxu0
    %6412 = vdwg.mxu0
    %v6414 = vunpack.c.l.b16 %v6178
    %v6415 = vpack.c.b16 %v6218, %v6414
    %v6416 = vpack.c.b16 %v6220, %v6219
    %v6417 = vpack.c.b16 %v6222, %v6221
    %v6418 = vpack.c.b16 %v6224, %v6223
    %v6419 = vpack.c.b16 %v6226, %v6225
    %v6420 = vpack.c.b16 %v6228, %v6227
    %v6421 = vpack.c.b16 %v6230, %v6229
    %v6422 = vpack.c.b16 %v6232, %v6231
    %v6423 = vpack.c.b16 %v6234, %v6233
    %v6424 = vpack.c.b16 %v6235, %v6235
    %v6433 = vunpack.c.l.b16 %v6153
    %v6434 = vunpack.c.l.b16 %v6154
    %v6435 = vunpack.c.l.b16 %v6155
    %v6436 = vunpack.c.l.b16 %v6156
    %v6437 = vunpack.c.l.b16 %v6157
    %v6438 = vunpack.c.l.b16 %v6158
    %v6439 = vunpack.c.l.b16 %v6159
    %v6440 = vunpack.c.l.b16 %v6160
    %v6441 = vpack.c.b16 %v6434, %v6433
    %v6442 = vpack.c.b16 %v6436, %v6435
    %v6443 = vpack.c.b16 %v6438, %v6437
    %v6444 = vpack.c.b16 %v6440, %v6439
    %v6450 = vsel %vm5722, %v6415, 0
    %v6453 = vsel %vm5722, %v6416, 0
    %v6456 = vsel %vm5722, %v6417, 0
    %v6459 = vsel %vm5722, %v6418, 0
    %v6462 = vsel %vm5722, %v6419, 0
    %v6465 = vsel %vm5722, %v6420, 0
    %v6468 = vsel %vm5722, %v6421, 0
    %v6471 = vsel %vm5722, %v6422, 0
    %v6474 = vsel %vm5722, %v6423, 0
    %v6477 = vsel %vm5722, %v6424, 0
    %6479 = vmatprep.subr.bf16.mxu0 0
    %6480 = vmatpush1.bf16.msra.mxu0 %v6441
    %6481 = vmatprep.subr.bf16.mxu0 0
    %6482 = vmatpush1.bf16.msra.mxu0 %v6442
    %6483 = vmatprep.subr.bf16.mxu0 0
    %6484 = vmatpush1.bf16.msra.mxu0 %v6443
    %6485 = vmatprep.subr.bf16.mxu0 0
    %6486 = vmatpush1.bf16.msra.mxu0 %v6444
    %6487 = vmatprep.subr.bf16.mxu0 0
    %6488 = vmatpush1.bf16.msra.mxu0 0
    %6489 = vmatprep.subr.bf16.mxu0 0
    %6490 = vmatpush1.bf16.msra.mxu0 0
    %6491 = vmatprep.subr.bf16.mxu0 0
    %6492 = vmatpush1.bf16.msra.mxu0 0
    %6493 = vmatprep.subr.bf16.mxu0 0
    %6494 = vmatpush1.bf16.msra.mxu0 0
    %6495 = vmatprep.subr.bf16.mxu0 0
    %6496 = vmatpush1.bf16.msra.mxu0 0
    %6497 = vmatprep.subr.bf16.mxu0 0
    %6498 = vmatpush1.bf16.msra.mxu0 0
    %6499 = vmatprep.subr.bf16.mxu0 0
    %6500 = vmatpush1.bf16.msra.mxu0 0
    %6501 = vmatprep.subr.bf16.mxu0 0
    %6502 = vmatpush1.bf16.msra.mxu0 0
    %6503 = vmatprep.subr.bf16.mxu0 0
    %6504 = vmatpush1.bf16.msra.mxu0 0
    %6505 = vmatprep.subr.bf16.mxu0 0
    %6506 = vmatpush1.bf16.msra.mxu0 0
    %6507 = vmatprep.subr.bf16.mxu0 0
    %6508 = vmatpush1.bf16.msra.mxu0 0
    %6509 = vmatprep.subr.bf16.mxu0 0
    %6510 = vmatpush1.bf16.msra.mxu0 0
    %6511 = vmatprep.mubr.bf16.mxu0 0
    %6512 = vmatmul.mubr.bf16.gmra.mrb[0].mxu0 %v6450
    %v6513 = vpop.f32.mrb[0].mxu0
    %v6514 = vadd.f32 %v6336, %v6513
    %v6515 = vpop.f32.mrb[0].mxu0
    %v6516 = vpop.f32.mrb[0].mxu0
    %v6517 = vadd.f32 %v6339, %v6516
    %v6518 = vpop.f32.mrb[0].mxu0
    %6519 = vmatprep.mubr.bf16.mxu0 0
    %6520 = vmatmul.mubr.bf16.gmra.mrb[0].mxu0 %v6453
    %v6521 = vpop.f32.mrb[0].mxu0
    %v6522 = vadd.f32 %v6344, %v6521
    %v6523 = vpop.f32.mrb[0].mxu0
    %v6524 = vpop.f32.mrb[0].mxu0
    %v6525 = vadd.f32 %v6347, %v6524
    %v6526 = vpop.f32.mrb[0].mxu0
    %6527 = vmatprep.mubr.bf16.mxu0 0
    %6528 = vmatmul.mubr.bf16.gmra.mrb[0].mxu0 %v6456
    %v6529 = vpop.f32.mrb[0].mxu0
    %v6530 = vadd.f32 %v6352, %v6529
    %v6531 = vpop.f32.mrb[0].mxu0
    %v6532 = vpop.f32.mrb[0].mxu0
    %v6533 = vadd.f32 %v6355, %v6532
    %v6534 = vpop.f32.mrb[0].mxu0
    %6535 = vmatprep.mubr.bf16.mxu0 0
    %6536 = vmatmul.mubr.bf16.gmra.mrb[0].mxu0 %v6459
    %v6537 = vpop.f32.mrb[0].mxu0
    %v6538 = vadd.f32 %v6360, %v6537
    %v6539 = vpop.f32.mrb[0].mxu0
    %v6540 = vpop.f32.mrb[0].mxu0
    %v6541 = vadd.f32 %v6363, %v6540
    %v6542 = vpop.f32.mrb[0].mxu0
    %6543 = vmatprep.mubr.bf16.mxu0 0
    %6544 = vmatmul.mubr.bf16.gmra.mrb[0].mxu0 %v6462
    %v6545 = vpop.f32.mrb[0].mxu0
    %v6546 = vadd.f32 %v6368, %v6545
    %v6547 = vpop.f32.mrb[0].mxu0
    %v6548 = vpop.f32.mrb[0].mxu0
    %v6549 = vadd.f32 %v6371, %v6548
    %v6550 = vpop.f32.mrb[0].mxu0
    %6551 = vmatprep.mubr.bf16.mxu0 0
    %6552 = vmatmul.mubr.bf16.gmra.mrb[0].mxu0 %v6465
    %v6553 = vpop.f32.mrb[0].mxu0
    %v6554 = vadd.f32 %v6376, %v6553
    %v6555 = vpop.f32.mrb[0].mxu0
    %v6556 = vpop.f32.mrb[0].mxu0
    %v6557 = vadd.f32 %v6379, %v6556
    %v6558 = vpop.f32.mrb[0].mxu0
    %6559 = vmatprep.mubr.bf16.mxu0 0
    %6560 = vmatmul.mubr.bf16.gmra.mrb[0].mxu0 %v6468
    %v6561 = vpop.f32.mrb[0].mxu0
    %v6562 = vadd.f32 %v6384, %v6561
    %v6563 = vpop.f32.mrb[0].mxu0
    %v6564 = vpop.f32.mrb[0].mxu0
    %v6565 = vadd.f32 %v6387, %v6564
    %v6566 = vpop.f32.mrb[0].mxu0
    %6567 = vmatprep.mubr.bf16.mxu0 0
    %6568 = vmatmul.mubr.bf16.gmra.mrb[0].mxu0 %v6471
    %v6569 = vpop.f32.mrb[0].mxu0
    %v6570 = vadd.f32 %v6392, %v6569
    %v6571 = vpop.f32.mrb[0].mxu0
    %v6572 = vpop.f32.mrb[0].mxu0
    %v6573 = vadd.f32 %v6395, %v6572
    %v6574 = vpop.f32.mrb[0].mxu0
    %6575 = vmatprep.mubr.bf16.mxu0 0
    %6576 = vmatmul.mubr.bf16.gmra.mrb[0].mxu0 %v6474
    %v6577 = vpop.f32.mrb[0].mxu0
    %v6578 = vadd.f32 %v6400, %v6577
    %v6579 = vpop.f32.mrb[0].mxu0
    %v6580 = vpop.f32.mrb[0].mxu0
    %v6581 = vadd.f32 %v6403, %v6580
    %v6582 = vpop.f32.mrb[0].mxu0
    %6583 = vmatprep.mubr.bf16.mxu0 0
    %6584 = vmatmul.mubr.bf16.gmra.mrb[0].mxu0 %v6477
    %v6585 = vpop.f32.mrb[0].mxu0
    %v6586 = vadd.f32 %v6408, %v6585
    %v6587 = vpop.f32.mrb[0].mxu0
    %v6588 = vpop.f32.mrb[0].mxu0
    %v6589 = vpop.f32.mrb[0].mxu0
    %6590 = vdwg.mxu0
    %v6592 = vunpack.c.l.b16 %v6198
    %v6593 = vpack.c.b16 %v6236, %v6235
    %v6594 = vpack.c.b16 %v6592, %v6592
    %v6603 = vunpack.c.l.b16 %v6169
    %v6604 = vunpack.c.l.b16 %v6170
    %v6605 = vunpack.c.l.b16 %v6171
    %v6606 = vunpack.c.l.b16 %v6172
    %v6607 = vunpack.c.l.b16 %v6173
    %v6608 = vunpack.c.l.b16 %v6174
    %v6609 = vunpack.c.l.b16 %v6175
    %v6610 = vunpack.c.l.b16 %v6176
    %v6611 = vpack.c.b16 %v6604, %v6603
    %v6612 = vpack.c.b16 %v6606, %v6605
    %v6613 = vpack.c.b16 %v6608, %v6607
    %v6614 = vpack.c.b16 %v6610, %v6609
    %v6620 = vsel %vm5722, %v6593, 0
    %v6623 = vsel %vm5722, %v6594, 0
    %6625 = vmatprep.subr.bf16.mxu0 0
    %6626 = vmatpush1.bf16.msra.mxu0 %v6611
    %6627 = vmatprep.subr.bf16.mxu0 0
    %6628 = vmatpush1.bf16.msra.mxu0 %v6612
    %6629 = vmatprep.subr.bf16.mxu0 0
    %6630 = vmatpush1.bf16.msra.mxu0 %v6613
    %6631 = vmatprep.subr.bf16.mxu0 0
    %6632 = vmatpush1.bf16.msra.mxu0 %v6614
    %6633 = vmatprep.subr.bf16.mxu0 0
    %6634 = vmatpush1.bf16.msra.mxu0 0
    %6635 = vmatprep.subr.bf16.mxu0 0
    %6636 = vmatpush1.bf16.msra.mxu0 0
    %6637 = vmatprep.subr.bf16.mxu0 0
    %6638 = vmatpush1.bf16.msra.mxu0 0
    %6639 = vmatprep.subr.bf16.mxu0 0
    %6640 = vmatpush1.bf16.msra.mxu0 0
    %6641 = vmatprep.subr.bf16.mxu0 0
    %6642 = vmatpush1.bf16.msra.mxu0 0
    %6643 = vmatprep.subr.bf16.mxu0 0
    %6644 = vmatpush1.bf16.msra.mxu0 0
    %6645 = vmatprep.subr.bf16.mxu0 0
    %6646 = vmatpush1.bf16.msra.mxu0 0
    %6647 = vmatprep.subr.bf16.mxu0 0
    %6648 = vmatpush1.bf16.msra.mxu0 0
    %6649 = vmatprep.subr.bf16.mxu0 0
    %6650 = vmatpush1.bf16.msra.mxu0 0
    %6651 = vmatprep.subr.bf16.mxu0 0
    %6652 = vmatpush1.bf16.msra.mxu0 0
    %6653 = vmatprep.subr.bf16.mxu0 0
    %6654 = vmatpush1.bf16.msra.mxu0 0
    %6655 = vmatprep.subr.bf16.mxu0 0
    %6656 = vmatpush1.bf16.msra.mxu0 0
    %6657 = vmatprep.mubr.bf16.mxu0 0
    %6658 = vmatmul.mubr.bf16.gmra.mrb[0].mxu0 %v6453
    %v6659 = vpop.f32.mrb[0].mxu0
    %v6660 = vadd.f32 0.0, %v6659
    %v6661 = vpop.f32.mrb[0].mxu0
    %v6662 = vpop.f32.mrb[0].mxu0
    %v6663 = vadd.f32 0.0, %v6662
    %v6664 = vpop.f32.mrb[0].mxu0
    %6665 = vmatprep.mubr.bf16.mxu0 0
    %6666 = vmatmul.mubr.bf16.gmra.mrb[0].mxu0 %v6456
    %v6667 = vpop.f32.mrb[0].mxu0
    %v6668 = vadd.f32 0.0, %v6667
    %v6669 = vpop.f32.mrb[0].mxu0
    %v6670 = vpop.f32.mrb[0].mxu0
    %v6671 = vadd.f32 0.0, %v6670
    %v6672 = vpop.f32.mrb[0].mxu0
    %6673 = vmatprep.mubr.bf16.mxu0 0
    %6674 = vmatmul.mubr.bf16.gmra.mrb[0].mxu0 %v6459
    %v6675 = vpop.f32.mrb[0].mxu0
    %v6676 = vadd.f32 0.0, %v6675
    %v6677 = vpop.f32.mrb[0].mxu0
    %v6678 = vpop.f32.mrb[0].mxu0
    %v6679 = vadd.f32 0.0, %v6678
    %v6680 = vpop.f32.mrb[0].mxu0
    %6681 = vmatprep.mubr.bf16.mxu0 0
    %6682 = vmatmul.mubr.bf16.gmra.mrb[0].mxu0 %v6462
    %v6683 = vpop.f32.mrb[0].mxu0
    %v6684 = vadd.f32 0.0, %v6683
    %v6685 = vpop.f32.mrb[0].mxu0
    %v6686 = vpop.f32.mrb[0].mxu0
    %v6687 = vadd.f32 0.0, %v6686
    %v6688 = vpop.f32.mrb[0].mxu0
    %6689 = vmatprep.mubr.bf16.mxu0 0
    %6690 = vmatmul.mubr.bf16.gmra.mrb[0].mxu0 %v6465
    %v6691 = vpop.f32.mrb[0].mxu0
    %v6692 = vadd.f32 0.0, %v6691
    %v6693 = vpop.f32.mrb[0].mxu0
    %v6694 = vpop.f32.mrb[0].mxu0
    %v6695 = vadd.f32 0.0, %v6694
    %v6696 = vpop.f32.mrb[0].mxu0
    %6697 = vmatprep.mubr.bf16.mxu0 0
    %6698 = vmatmul.mubr.bf16.gmra.mrb[0].mxu0 %v6468
    %v6699 = vpop.f32.mrb[0].mxu0
    %v6700 = vadd.f32 0.0, %v6699
    %v6701 = vpop.f32.mrb[0].mxu0
    %v6702 = vpop.f32.mrb[0].mxu0
    %v6703 = vadd.f32 0.0, %v6702
    %v6704 = vpop.f32.mrb[0].mxu0
    %6705 = vmatprep.mubr.bf16.mxu0 0
    %6706 = vmatmul.mubr.bf16.gmra.mrb[0].mxu0 %v6471
    %v6707 = vpop.f32.mrb[0].mxu0
    %v6708 = vadd.f32 0.0, %v6707
    %v6709 = vpop.f32.mrb[0].mxu0
    %v6710 = vpop.f32.mrb[0].mxu0
    %v6711 = vadd.f32 0.0, %v6710
    %v6712 = vpop.f32.mrb[0].mxu0
    %6713 = vmatprep.mubr.bf16.mxu0 0
    %6714 = vmatmul.mubr.bf16.gmra.mrb[0].mxu0 %v6474
    %v6715 = vpop.f32.mrb[0].mxu0
    %v6716 = vadd.f32 0.0, %v6715
    %v6717 = vpop.f32.mrb[0].mxu0
    %v6718 = vpop.f32.mrb[0].mxu0
    %v6719 = vadd.f32 0.0, %v6718
    %v6720 = vpop.f32.mrb[0].mxu0
    %6721 = vmatprep.mubr.bf16.mxu0 0
    %6722 = vmatmul.mubr.bf16.gmra.mrb[0].mxu0 %v6620
    %v6723 = vpop.f32.mrb[0].mxu0
    %v6724 = vadd.f32 0.0, %v6723
    %v6725 = vpop.f32.mrb[0].mxu0
    %v6726 = vpop.f32.mrb[0].mxu0
    %v6727 = vadd.f32 0.0, %v6726
    %v6728 = vpop.f32.mrb[0].mxu0
    %6729 = vmatprep.mubr.bf16.mxu0 0
    %6730 = vmatmul.mubr.bf16.gmra.mrb[0].mxu0 %v6623
    %v6731 = vpop.f32.mrb[0].mxu0
    %v6732 = vadd.f32 0.0, %v6731
    %v6733 = vpop.f32.mrb[0].mxu0
    %v6734 = vpop.f32.mrb[0].mxu0
    %v6735 = vpop.f32.mrb[0].mxu0
    %6736 = vdwg.mxu0
    %v6737 = vadd.f32 %v6514, %v6660
    %v6738 = vadd.f32 %v6517, %v6663
    %v6739 = vadd.f32 %v6522, %v6668
    %v6740 = vadd.f32 %v6525, %v6671
    %v6741 = vadd.f32 %v6530, %v6676
    %v6742 = vadd.f32 %v6533, %v6679
    %v6743 = vadd.f32 %v6538, %v6684
    %v6744 = vadd.f32 %v6541, %v6687
    %v6745 = vadd.f32 %v6546, %v6692
    %v6746 = vadd.f32 %v6549, %v6695
    %v6747 = vadd.f32 %v6554, %v6700
    %v6748 = vadd.f32 %v6557, %v6703
    %v6749 = vadd.f32 %v6562, %v6708
    %v6750 = vadd.f32 %v6565, %v6711
    %v6751 = vadd.f32 %v6570, %v6716
    %v6752 = vadd.f32 %v6573, %v6719
    %v6753 = vadd.f32 %v6578, %v6724
    %v6754 = vadd.f32 %v6581, %v6727
    %v6755 = vadd.f32 %v6586, %v6732
    %v6756 = vlaneseq
    %v6757 = vshrl.u32 %v6756, 7
    %v6758 = vsub.s32 0, %v6757
    %v6759 = vrot.slane %v6177, %v6758
    %v6760 = vadd.f32 %v6737, %v6759
    %v6761 = vadd.f32 %v6738, %v6759
    %v6762 = vadd.f32 %v6739, %v6759
    %v6763 = vadd.f32 %v6740, %v6759
    %v6764 = vadd.f32 %v6741, %v6759
    %v6765 = vadd.f32 %v6742, %v6759
    %v6766 = vadd.f32 %v6743, %v6759
    %v6767 = vadd.f32 %v6744, %v6759
    %v6768 = vadd.f32 %v6745, %v6759
    %v6769 = vadd.f32 %v6746, %v6759
    %v6770 = vadd.f32 %v6747, %v6759
    %v6771 = vadd.f32 %v6748, %v6759
    %v6772 = vadd.f32 %v6749, %v6759
    %v6773 = vadd.f32 %v6750, %v6759
    %v6774 = vadd.f32 %v6751, %v6759
    %v6775 = vadd.f32 %v6752, %v6759
    %v6776 = vadd.f32 %v6753, %v6759
    %v6777 = vadd.f32 %v6754, %v6759
    %v6778 = vadd.f32 %v6755, %v6759
    %v6779 = vsel %vm4299, %v6760, 0.0
    %v6780 = vsel %vm4299, %v6761, 0.0
    %v6781 = vadd.f32 %v6779, %v6780
    %v6782 = vsel %vm4299, %v6762, 0.0
    %v6783 = vadd.f32 %v6781, %v6782
    %v6784 = vsel %vm4299, %v6763, 0.0
    %v6785 = vadd.f32 %v6783, %v6784
    %v6786 = vsel %vm4299, %v6764, 0.0
    %v6787 = vadd.f32 %v6785, %v6786
    %v6788 = vsel %vm4299, %v6765, 0.0
    %v6789 = vadd.f32 %v6787, %v6788
    %v6790 = vsel %vm4299, %v6766, 0.0
    %v6791 = vadd.f32 %v6789, %v6790
    %v6792 = vsel %vm4299, %v6767, 0.0
    %v6793 = vadd.f32 %v6791, %v6792
    %v6794 = vsel %vm4299, %v6768, 0.0
    %v6795 = vadd.f32 %v6793, %v6794
    %v6796 = vsel %vm4299, %v6769, 0.0
    %v6797 = vadd.f32 %v6795, %v6796
    %v6798 = vsel %vm4299, %v6770, 0.0
    %v6799 = vadd.f32 %v6797, %v6798
    %v6800 = vsel %vm4299, %v6771, 0.0
    %v6801 = vadd.f32 %v6799, %v6800
    %v6802 = vsel %vm4299, %v6772, 0.0
    %v6803 = vadd.f32 %v6801, %v6802
    %v6804 = vsel %vm4299, %v6773, 0.0
    %v6805 = vadd.f32 %v6803, %v6804
    %v6806 = vsel %vm4299, %v6774, 0.0
    %v6807 = vadd.f32 %v6805, %v6806
    %v6808 = vsel %vm4299, %v6775, 0.0
    %v6809 = vadd.f32 %v6807, %v6808
    %v6810 = vsel %vm4299, %v6776, 0.0
    %v6811 = vadd.f32 %v6809, %v6810
    %v6812 = vsel %vm4299, %v6777, 0.0
    %v6813 = vadd.f32 %v6811, %v6812
    %v6814 = vsel %vm4299, %v6778, 0.0
    %v6815 = vadd.f32 %v6813, %v6814
    %v6816 = vrot.slane %v6815, 4
    %v6817 = vadd.f32 %v6815, %v6816
    %v6818 = vrot.slane %v6817, 2
    %v6819 = vadd.f32 %v6817, %v6818
    %v6820 = vrot.slane %v6819, 1
    %v6821 = vadd.f32 %v6819, %v6820
    %v6822 = vrcp.pop 152.0
    %v6823 = vmul.f32 %v6821, %v6822
    %v6824 = vsub.f32 %v6760, %v6823
    %v6825 = vsub.f32 %v6761, %v6823
    %v6826 = vsub.f32 %v6762, %v6823
    %v6827 = vsub.f32 %v6763, %v6823
    %v6828 = vsub.f32 %v6764, %v6823
    %v6829 = vsub.f32 %v6765, %v6823
    %v6830 = vsub.f32 %v6766, %v6823
    %v6831 = vsub.f32 %v6767, %v6823
    %v6832 = vsub.f32 %v6768, %v6823
    %v6833 = vsub.f32 %v6769, %v6823
    %v6834 = vsub.f32 %v6770, %v6823
    %v6835 = vsub.f32 %v6771, %v6823
    %v6836 = vsub.f32 %v6772, %v6823
    %v6837 = vsub.f32 %v6773, %v6823
    %v6838 = vsub.f32 %v6774, %v6823
    %v6839 = vsub.f32 %v6775, %v6823
    %v6840 = vsub.f32 %v6776, %v6823
    %v6841 = vsub.f32 %v6777, %v6823
    %v6842 = vsub.f32 %v6778, %v6823
    %v6843 = vmul.f32 %v6824, %v6824
    %v6844 = vmul.f32 %v6825, %v6825
    %v6845 = vmul.f32 %v6826, %v6826
    %v6846 = vmul.f32 %v6827, %v6827
    %v6847 = vmul.f32 %v6828, %v6828
    %v6848 = vmul.f32 %v6829, %v6829
    %v6849 = vmul.f32 %v6830, %v6830
    %v6850 = vmul.f32 %v6831, %v6831
    %v6851 = vmul.f32 %v6832, %v6832
    %v6852 = vmul.f32 %v6833, %v6833
    %v6853 = vmul.f32 %v6834, %v6834
    %v6854 = vmul.f32 %v6835, %v6835
    %v6855 = vmul.f32 %v6836, %v6836
    %v6856 = vmul.f32 %v6837, %v6837
    %v6857 = vmul.f32 %v6838, %v6838
    %v6858 = vmul.f32 %v6839, %v6839
    %v6859 = vmul.f32 %v6840, %v6840
    %v6860 = vmul.f32 %v6841, %v6841
    %v6861 = vmul.f32 %v6842, %v6842
    %v6862 = vsel %vm4299, %v6843, 0.0
    %v6863 = vsel %vm4299, %v6844, 0.0
    %v6864 = vadd.f32 %v6862, %v6863
    %v6865 = vsel %vm4299, %v6845, 0.0
    %v6866 = vadd.f32 %v6864, %v6865
    %v6867 = vsel %vm4299, %v6846, 0.0
    %v6868 = vadd.f32 %v6866, %v6867
    %v6869 = vsel %vm4299, %v6847, 0.0
    %v6870 = vadd.f32 %v6868, %v6869
    %v6871 = vsel %vm4299, %v6848, 0.0
    %v6872 = vadd.f32 %v6870, %v6871
    %v6873 = vsel %vm4299, %v6849, 0.0
    %v6874 = vadd.f32 %v6872, %v6873
    %v6875 = vsel %vm4299, %v6850, 0.0
    %v6876 = vadd.f32 %v6874, %v6875
    %v6877 = vsel %vm4299, %v6851, 0.0
    %v6878 = vadd.f32 %v6876, %v6877
    %v6879 = vsel %vm4299, %v6852, 0.0
    %v6880 = vadd.f32 %v6878, %v6879
    %v6881 = vsel %vm4299, %v6853, 0.0
    %v6882 = vadd.f32 %v6880, %v6881
    %v6883 = vsel %vm4299, %v6854, 0.0
    %v6884 = vadd.f32 %v6882, %v6883
    %v6885 = vsel %vm4299, %v6855, 0.0
    %v6886 = vadd.f32 %v6884, %v6885
    %v6887 = vsel %vm4299, %v6856, 0.0
    %v6888 = vadd.f32 %v6886, %v6887
    %v6889 = vsel %vm4299, %v6857, 0.0
    %v6890 = vadd.f32 %v6888, %v6889
    %v6891 = vsel %vm4299, %v6858, 0.0
    %v6892 = vadd.f32 %v6890, %v6891
    %v6893 = vsel %vm4299, %v6859, 0.0
    %v6894 = vadd.f32 %v6892, %v6893
    %v6895 = vsel %vm4299, %v6860, 0.0
    %v6896 = vadd.f32 %v6894, %v6895
    %v6897 = vsel %vm4299, %v6861, 0.0
    %v6898 = vadd.f32 %v6896, %v6897
    %v6899 = vrot.slane %v6898, 4
    %v6900 = vadd.f32 %v6898, %v6899
    %v6901 = vrot.slane %v6900, 2
    %v6902 = vadd.f32 %v6900, %v6901
    %v6903 = vrot.slane %v6902, 1
    %v6904 = vadd.f32 %v6902, %v6903
    %v6905 = vmul.f32 %v6904, %v6822
    %v6906 = vadd.f32 %v6905, 1e-05
    %v6907 = vrsqrt.pop %v6906
    %v6908 = vmul.f32 %v6824, %v6907
    %v6909 = vmul.f32 %v6825, %v6907
    %v6910 = vmul.f32 %v6826, %v6907
    %v6911 = vmul.f32 %v6827, %v6907
    %v6912 = vmul.f32 %v6828, %v6907
    %v6913 = vmul.f32 %v6829, %v6907
    %v6914 = vmul.f32 %v6830, %v6907
    %v6915 = vmul.f32 %v6831, %v6907
    %v6916 = vmul.f32 %v6832, %v6907
    %v6917 = vmul.f32 %v6833, %v6907
    %v6918 = vmul.f32 %v6834, %v6907
    %v6919 = vmul.f32 %v6835, %v6907
    %v6920 = vmul.f32 %v6836, %v6907
    %v6921 = vmul.f32 %v6837, %v6907
    %v6922 = vmul.f32 %v6838, %v6907
    %v6923 = vmul.f32 %v6839, %v6907
    %v6924 = vmul.f32 %v6840, %v6907
    %v6925 = vmul.f32 %v6841, %v6907
    %v6926 = vmul.f32 %v6842, %v6907
    %v6927 = vlaneseq
    %v6928 = vshrl.u32 %v6927, 7
    %v6929 = vsub.s32 1, %v6928
    %v6930 = vrot.slane %v6177, %v6929
    %v6931 = vmul.f32 %v6908, %v6930
    %v6932 = vmul.f32 %v6909, %v6930
    %v6933 = vmul.f32 %v6910, %v6930
    %v6934 = vmul.f32 %v6911, %v6930
    %v6935 = vmul.f32 %v6912, %v6930
    %v6936 = vmul.f32 %v6913, %v6930
    %v6937 = vmul.f32 %v6914, %v6930
    %v6938 = vmul.f32 %v6915, %v6930
    %v6939 = vmul.f32 %v6916, %v6930
    %v6940 = vmul.f32 %v6917, %v6930
    %v6941 = vmul.f32 %v6918, %v6930
    %v6942 = vmul.f32 %v6919, %v6930
    %v6943 = vmul.f32 %v6920, %v6930
    %v6944 = vmul.f32 %v6921, %v6930
    %v6945 = vmul.f32 %v6922, %v6930
    %v6946 = vmul.f32 %v6923, %v6930
    %v6947 = vmul.f32 %v6924, %v6930
    %v6948 = vmul.f32 %v6925, %v6930
    %v6949 = vmul.f32 %v6926, %v6930
    %v6950 = vlaneseq
    %v6951 = vshrl.u32 %v6950, 7
    %v6952 = vsub.s32 2, %v6951
    %v6953 = vrot.slane %v6177, %v6952
    %v6954 = vadd.f32 %v6931, %v6953
    %v6955 = vadd.f32 %v6932, %v6953
    %v6956 = vadd.f32 %v6933, %v6953
    %v6957 = vadd.f32 %v6934, %v6953
    %v6958 = vadd.f32 %v6935, %v6953
    %v6959 = vadd.f32 %v6936, %v6953
    %v6960 = vadd.f32 %v6937, %v6953
    %v6961 = vadd.f32 %v6938, %v6953
    %v6962 = vadd.f32 %v6939, %v6953
    %v6963 = vadd.f32 %v6940, %v6953
    %v6964 = vadd.f32 %v6941, %v6953
    %v6965 = vadd.f32 %v6942, %v6953
    %v6966 = vadd.f32 %v6943, %v6953
    %v6967 = vadd.f32 %v6944, %v6953
    %v6968 = vadd.f32 %v6945, %v6953
    %v6969 = vadd.f32 %v6946, %v6953
    %v6970 = vadd.f32 %v6947, %v6953
    %v6971 = vadd.f32 %v6948, %v6953
    %v6972 = vadd.f32 %v6949, %v6953
    %v6973 = vmax.f32 %v6954, 0.0
    %v6974 = vmax.f32 %v6955, 0.0
    %v6975 = vmax.f32 %v6956, 0.0
    %v6976 = vmax.f32 %v6957, 0.0
    %v6977 = vmax.f32 %v6958, 0.0
    %v6978 = vmax.f32 %v6959, 0.0
    %v6979 = vmax.f32 %v6960, 0.0
    %v6980 = vmax.f32 %v6961, 0.0
    %v6981 = vmax.f32 %v6962, 0.0
    %v6982 = vmax.f32 %v6963, 0.0
    %v6983 = vmax.f32 %v6964, 0.0
    %v6984 = vmax.f32 %v6965, 0.0
    %v6985 = vmax.f32 %v6966, 0.0
    %v6986 = vmax.f32 %v6967, 0.0
    %v6987 = vmax.f32 %v6968, 0.0
    %v6988 = vmax.f32 %v6969, 0.0
    %v6989 = vmax.f32 %v6970, 0.0
    %v6990 = vmax.f32 %v6971, 0.0
    %v6991 = vmax.f32 %v6972, 0.0
    %v6992 = vsel %vm4299, %v6973, 0.0
    %v6993 = vsel %vm4299, %v6974, 0.0
    %v6994 = vadd.f32 %v6992, %v6993
    %v6995 = vsel %vm4299, %v6975, 0.0
    %v6996 = vadd.f32 %v6994, %v6995
    %v6997 = vsel %vm4299, %v6976, 0.0
    %v6998 = vadd.f32 %v6996, %v6997
    %v6999 = vsel %vm4299, %v6977, 0.0
    %v7000 = vadd.f32 %v6998, %v6999
    %v7001 = vsel %vm4299, %v6978, 0.0
    %v7002 = vadd.f32 %v7000, %v7001
    %v7003 = vsel %vm4299, %v6979, 0.0
    %v7004 = vadd.f32 %v7002, %v7003
    %v7005 = vsel %vm4299, %v6980, 0.0
    %v7006 = vadd.f32 %v7004, %v7005
    %v7007 = vsel %vm4299, %v6981, 0.0
    %v7008 = vadd.f32 %v7006, %v7007
    %v7009 = vsel %vm4299, %v6982, 0.0
    %v7010 = vadd.f32 %v7008, %v7009
    %v7011 = vsel %vm4299, %v6983, 0.0
    %v7012 = vadd.f32 %v7010, %v7011
    %v7013 = vsel %vm4299, %v6984, 0.0
    %v7014 = vadd.f32 %v7012, %v7013
    %v7015 = vsel %vm4299, %v6985, 0.0
    %v7016 = vadd.f32 %v7014, %v7015
    %v7017 = vsel %vm4299, %v6986, 0.0
    %v7018 = vadd.f32 %v7016, %v7017
    %v7019 = vsel %vm4299, %v6987, 0.0
    %v7020 = vadd.f32 %v7018, %v7019
    %v7021 = vsel %vm4299, %v6988, 0.0
    %v7022 = vadd.f32 %v7020, %v7021
    %v7023 = vsel %vm4299, %v6989, 0.0
    %v7024 = vadd.f32 %v7022, %v7023
    %v7025 = vsel %vm4299, %v6990, 0.0
    %v7026 = vadd.f32 %v7024, %v7025
    %v7027 = vsel %vm4299, %v6991, 0.0
    %v7028 = vadd.f32 %v7026, %v7027
    %v7029 = vrcp.pop 19.0
    %v7030 = vmul.f32 %v7028, %v7029
    %v7031 = vpack.c.bf16 %v2906, %v2906
    %v7032 = vpack.c.bf16 %v7030, %v7030
    %v7033 = vld [vmem:[%s15] sm:$0xf]
    %v7034 = vld [vmem:[%s15 + $0x4] sm:$0xf]
    %v7035 = vld [vmem:[%s15 + $0x8] sm:$0xf]
    %v7036 = vld [vmem:[%s15 + $0xc] sm:$0xf]
    %v7037 = vld [vmem:[%s15 + $0x10] sm:$0xf]
    %v7038 = vld [vmem:[%s15 + $0x14] sm:$0xf]
    %v7039 = vld [vmem:[%s15 + $0x18] sm:$0xf]
    %v7040 = vld [vmem:[%s15 + $0x1c] sm:$0xf]
    %v7041 = vld [vmem:[%s15 + $0x20] sm:$0xf]
    %v7042 = vld [vmem:[%s15 + $0x24] sm:$0xf]
    %v7043 = vld [vmem:[%s15 + $0x28] sm:$0xf]
    %v7044 = vld [vmem:[%s15 + $0x2c] sm:$0xf]
    %v7045 = vld [vmem:[%s15 + $0x30] sm:$0xf]
    %v7046 = vld [vmem:[%s15 + $0x34] sm:$0xf]
    %v7047 = vld [vmem:[%s15 + $0x38] sm:$0xf]
    %v7048 = vld [vmem:[%s15 + $0x3c] sm:$0xf]
    %v7049 = vld [vmem:[%s15 + $0x40] sm:$0xf]
    %v7050 = vld [vmem:[%s15 + $0x44] sm:$0xf]
    %v7051 = vld [vmem:[%s15 + $0x48] sm:$0xf]
    %v7052 = vld [vmem:[%s15 + $0x4c] sm:$0xf]
    %v7053 = vld [vmem:[%s16] sm:$0x1]
    %v7055 = vlaneseq
    %v7056 = vshrl.u32 %v7055, 7
    %v7057 = vsub.s32 0, %v7056
    %v7058 = vrot.slane %v7053, %v7057
    %v7080 = vunpack.c.l.b16 %v7033
    %v7081 = vunpack.c.l.b16 %v7034
    %v7082 = vunpack.c.l.b16 %v7035
    %v7083 = vunpack.c.l.b16 %v7036
    %v7084 = vunpack.c.l.b16 %v7037
    %v7085 = vunpack.c.l.b16 %v7038
    %v7086 = vunpack.c.l.b16 %v7039
    %v7087 = vunpack.c.l.b16 %v7040
    %v7088 = vunpack.c.l.b16 %v7041
    %v7089 = vunpack.c.l.b16 %v7042
    %v7090 = vunpack.c.l.b16 %v7043
    %v7091 = vunpack.c.l.b16 %v7044
    %v7092 = vunpack.c.l.b16 %v7045
    %v7093 = vunpack.c.l.b16 %v7046
    %v7094 = vunpack.c.l.b16 %v7047
    %v7095 = vunpack.c.l.b16 %v7048
    %v7096 = vunpack.c.l.b16 %v7049
    %v7097 = vunpack.c.l.b16 %v7050
    %v7098 = vunpack.c.l.b16 %v7051
    %v7099 = vunpack.c.l.b16 %v7052
    %v7100 = vpack.c.b16 %v7081, %v7080
    %v7101 = vpack.c.b16 %v7083, %v7082
    %v7102 = vpack.c.b16 %v7085, %v7084
    %v7103 = vpack.c.b16 %v7087, %v7086
    %v7104 = vpack.c.b16 %v7089, %v7088
    %v7105 = vpack.c.b16 %v7091, %v7090
    %v7106 = vpack.c.b16 %v7093, %v7092
    %v7107 = vpack.c.b16 %v7095, %v7094
    %v7108 = vpack.c.b16 %v7097, %v7096
    %v7109 = vpack.c.b16 %v7099, %v7098
    %v7121 = vsel %vm4299, %v7032, 0
    %7123 = vmatprep.subr.bf16.mxu0 0
    %7124 = vmatpush1.bf16.msra.mxu0 %v7100
    %7125 = vmatprep.subr.bf16.mxu0 0
    %7126 = vmatpush1.bf16.msra.mxu0 %v7101
    %7127 = vmatprep.subr.bf16.mxu0 0
    %7128 = vmatpush1.bf16.msra.mxu0 %v7102
    %7129 = vmatprep.subr.bf16.mxu0 0
    %7130 = vmatpush1.bf16.msra.mxu0 %v7103
    %7131 = vmatprep.subr.bf16.mxu0 0
    %7132 = vmatpush1.bf16.msra.mxu0 %v7104
    %7133 = vmatprep.subr.bf16.mxu0 0
    %7134 = vmatpush1.bf16.msra.mxu0 %v7105
    %7135 = vmatprep.subr.bf16.mxu0 0
    %7136 = vmatpush1.bf16.msra.mxu0 %v7106
    %7137 = vmatprep.subr.bf16.mxu0 0
    %7138 = vmatpush1.bf16.msra.mxu0 %v7107
    %7139 = vmatprep.subr.bf16.mxu0 0
    %7140 = vmatpush1.bf16.msra.mxu0 %v7108
    %7141 = vmatprep.subr.bf16.mxu0 0
    %7142 = vmatpush1.bf16.msra.mxu0 %v7109
    %7143 = vmatprep.subr.bf16.mxu0 0
    %7144 = vmatpush1.bf16.msra.mxu0 0
    %7145 = vmatprep.subr.bf16.mxu0 0
    %7146 = vmatpush1.bf16.msra.mxu0 0
    %7147 = vmatprep.subr.bf16.mxu0 0
    %7148 = vmatpush1.bf16.msra.mxu0 0
    %7149 = vmatprep.subr.bf16.mxu0 0
    %7150 = vmatpush1.bf16.msra.mxu0 0
    %7151 = vmatprep.subr.bf16.mxu0 0
    %7152 = vmatpush1.bf16.msra.mxu0 0
    %7153 = vmatprep.subr.bf16.mxu0 0
    %7154 = vmatpush1.bf16.msra.mxu0 0
    %7155 = vmatprep.mubr.bf16.mxu0 %v7121
    %7156 = vmatmul.mubr.bf16.gmra.mrb[0].mxu0 %v7031
    %v7157 = vpop.f32.mrb[0].mxu0
    %v7158 = vadd.f32 %v7058, %v7157
    %v7159 = vpop.f32.mrb[0].mxu0
    %v7160 = vpop.f32.mrb[0].mxu0
    %v7161 = vpop.f32.mrb[0].mxu0
    %7162 = vdwg.mxu0
    %vm7163 = vcmask 39936
    %v7164 = vsel %vm7163, %v7158, -inf
    %7165 = vmax.xlane.f32.xlu0 %v7164
    %v7166 = vpop.xlane.xlu0 %7165
    %v7167 = vsub.f32 %v7158, %v7166
    %v7168 = vmul.f32 %v7167, 1.442695
    %v7169 = vpow.pop %v7168
    %v7170 = vsel %vm7163, %v7169, 0.0
    %7171 = vadd.xlane.f32.xlu0 %v7170
    %v7172 = vpop.xlane.xlu0 %7171
    %v7173 = vlog2.pop %v7172
    %v7174 = vmul.f32 %v7173, 0.6931472
    %v7175 = vsub.f32 %v7167, %v7174
    %7176 = vst.msk [vmem:[#allocation4] sm:$0xff] %vm7163, %v7175
    // Predicated region
    $region70: #{mlstm_fcn_forward.1} parent=1 // pred_check
      _
    $region71: #{mlstm_fcn_forward.1} parent=1 // pred_check_branch
      %7178 = sbr.rel (0) target = $region73
    $region72: #{mlstm_fcn_forward.1} parent=1 // pred_region
      %s7180 = ssub.s32 128, 128
      %7181 = vsyncadd [#allocation5], %s7180
      %s7183 = sshll.u32 [#allocation4], 4
      %s7184 = int_to_ptr.vmem [resolvable:$true] %s7183
      %7186 = dma.vmem_to_hbm [thread:$0]  %s7184, 128, %s17, [#allocation5]
    $region73: #{mlstm_fcn_forward.1} parent=1 // pred_fallthru
      _
    // Predicated region
    $region74: #{mlstm_fcn_forward.1} parent=1 // pred_check
      _
    $region75: #{mlstm_fcn_forward.1} parent=1 // pred_check_branch
      %7188 = sbr.rel (0) target = $region77
    $region76: #{mlstm_fcn_forward.1} parent=1 // pred_region
      %7189 = dma.done [#allocation5], 128
    $region77: #{mlstm_fcn_forward.1} parent=1 // pred_fallthru
      _
    %7190 = vsyncpa [#allocation5], 1

</llo_original>
